<compile_context>
chip_gen: v5e
topology: v5e:2x2
jax: 0.10.0
libtpu: 0.0.40
codegen_flags: <defaults>
</compile_context>

<pallas_src>
import functools

import jax
import jax.numpy as jnp
from jax.experimental import pallas as pl
from jax.experimental.pallas import tpu as pltpu


def _round_up(x, m):
    return ((x + m - 1) // m) * m


# ----------------------------------------------------------------------------
# Pallas kernel: one bidirectional LSTM layer (optionally + fused final Linear)
# ----------------------------------------------------------------------------
def _make_layer_kernel(T: int, BT: int, Hp: int, fuse_linear: bool):
    """Build a kernel for one bidirectional LSTM layer over a batch tile.

    Refs (inputs, outputs, scratch — all VMEM):
      x_ref     : (T, BT, Din)     time-major layer input (f32)
      wih_ref   : (Din, 8*Hp)      [W_ih_fwd^T | W_ih_rev^T]  (bf16)
      b_ref     : (1, 8*Hp)        fused b_ih + b_hh, both directions (f32)
      whhf_ref  : (Hp, 4*Hp)       W_hh_fwd^T (bf16)
      whhr_ref  : (Hp, 4*Hp)       W_hh_rev^T (bf16)
      h0_ref    : (2, BT, Hp)      initial hidden state (fwd, rev)
      c0_ref    : (2, BT, Hp)      initial cell state   (fwd, rev)
      mask_ref  : (T, BT, 1)       int32, !=0 where t < seq_len(b)
      [wlin_ref : (2*Hp, Op)       final linear weight (bf16)     -- fused variant]
      [blin_ref : (1, Op)          final linear bias   (f32)      -- fused variant]
      out ref   : (T, BT, 2*Hp) hidden output  OR  (T, BT, Op) logits (fused variant)
      xproj_ref : (T, BT, 8*Hp)    scratch: hoisted input projection (f32)
      [y_scr    : (T, BT, 2*Hp)    scratch: hidden output (fused variant)]
    """
    G = 4 * Hp  # per-direction gate width

    def lstm_body(x_ref, wih_ref, b_ref, whhf_ref, whhr_ref,
                  h0_ref, c0_ref, mask_ref, xproj_ref, y_ref):
        Din = x_ref.shape[-1]

        # ---- hoisted input projection: one large MXU matmul for BOTH directions ----
        x2d = x_ref[...].reshape(T * BT, Din).astype(jnp.bfloat16)
        proj = jnp.dot(x2d, wih_ref[...], preferred_element_type=jnp.float32)
        xproj_ref[...] = (proj + b_ref[...]).reshape(T, BT, 2 * G)

        whh_f = whhf_ref[...]
        whh_r = whhr_ref[...]

        def act(gates, c):
            # gate slices are 128-lane aligned (Hp is a multiple of 128)
            i_g = jax.nn.sigmoid(gates[:, 0 * Hp:1 * Hp])
            f_g = jax.nn.sigmoid(gates[:, 1 * Hp:2 * Hp])
            g_g = jnp.tanh(gates[:, 2 * Hp:3 * Hp])
            o_g = jax.nn.sigmoid(gates[:, 3 * Hp:4 * Hp])
            c_new = f_g * c + i_g * g_g
            h_new = o_g * jnp.tanh(c_new)
            return h_new, c_new

        def step(i, carry):
            hf, cf, hr, cr = carry
            tf = i           # forward direction walks 0..T-1
            tr = T - 1 - i   # reverse direction walks T-1..0

            # ---------------- forward direction ----------------
            mf = mask_ref[tf] != 0                                    # (BT, 1) bool
            gf = xproj_ref[tf, :, :G] + jnp.dot(
                hf.astype(jnp.bfloat16), whh_f,
                preferred_element_type=jnp.float32)
            hf_new, cf_new = act(gf, cf)
            y_ref[tf, :, :Hp] = jnp.where(mf, hf_new, 0.0).astype(y_ref.dtype)
            hf = jnp.where(mf, hf_new, hf)                            # frozen when padded
            cf = jnp.where(mf, cf_new, cf)

            # ---------------- reverse direction ----------------
            mr = mask_ref[tr] != 0
            gr = xproj_ref[tr, :, G:] + jnp.dot(
                hr.astype(jnp.bfloat16), whh_r,
                preferred_element_type=jnp.float32)
            hr_new, cr_new = act(gr, cr)
            y_ref[tr, :, Hp:] = jnp.where(mr, hr_new, 0.0).astype(y_ref.dtype)
            hr = jnp.where(mr, hr_new, hr)
            cr = jnp.where(mr, cr_new, cr)
            return hf, cf, hr, cr

        init = (h0_ref[0], c0_ref[0], h0_ref[1], c0_ref[1])
        jax.lax.fori_loop(0, T, step, init, unroll=True)

    if not fuse_linear:
        def kernel(x_ref, wih_ref, b_ref, whhf_ref, whhr_ref,
                   h0_ref, c0_ref, mask_ref, y_ref, xproj_ref):
            lstm_body(x_ref, wih_ref, b_ref, whhf_ref, whhr_ref,
                      h0_ref, c0_ref, mask_ref, xproj_ref, y_ref)
        return kernel

    def kernel(x_ref, wih_ref, b_ref, whhf_ref, whhr_ref,
               h0_ref, c0_ref, mask_ref, wlin_ref, blin_ref,
               o_ref, xproj_ref, y_scr):
        lstm_body(x_ref, wih_ref, b_ref, whhf_ref, whhr_ref,
                  h0_ref, c0_ref, mask_ref, xproj_ref, y_scr)
        # ---- epilogue: final Linear fused into the last layer (no HBM round-trip) ----
        Op = o_ref.shape[-1]
        y2d = y_scr[...].reshape(T * BT, 2 * Hp).astype(jnp.bfloat16)
        out = jnp.dot(y2d, wlin_ref[...], preferred_element_type=jnp.float32)
        o_ref[...] = (out + blin_ref[...]).reshape(T, BT, Op).astype(o_ref.dtype)

    return kernel


# ----------------------------------------------------------------------------
# Wrapper: one fused bidirectional layer (optionally + final linear)
# ----------------------------------------------------------------------------
def _run_bilstm_layer(x_tm, lp, mask_tm, wlin=None, blin=None):
    T, Bp, Din = x_tm.shape
    Hp, G = lp["w_hh_f"].shape                 # (Hp, 4*Hp)
    fuse_linear = wlin is not None

    # batch tile: multiple of 8 sublanes; whole batch when small, tiled (parallel grid)
    # otherwise (bounds VMEM on v7x and lets both TensorCores work on batch shards).
    BT = min(Bp, 128)
    while Bp % BT:
        BT -= 8
    num_b = Bp // BT

    kernel = _make_layer_kernel(T, BT, Hp, fuse_linear)

    def full2(shape):
        return pl.BlockSpec(shape, lambda b: (0, 0))

    def batch3(s0, s2):
        return pl.BlockSpec((s0, BT, s2), lambda b: (0, b, 0))

    in_specs = [
        batch3(T, Din),          # x
        full2((Din, 2 * G)),     # [W_ih_fwd^T | W_ih_rev^T]
        full2((1, 2 * G)),       # fused bias
        full2((Hp, G)),          # W_hh_fwd^T
        full2((Hp, G)),          # W_hh_rev^T
        batch3(2, Hp),           # h0 (fwd, rev)
        batch3(2, Hp),           # c0 (fwd, rev)
        batch3(T, 1),            # length mask
    ]
    args = [x_tm, lp["w_ih"], lp["b"], lp["w_hh_f"], lp["w_hh_r"],
            lp["h0"], lp["c0"], mask_tm]

    scratch = [pltpu.VMEM((T, BT, 2 * G), jnp.float32)]      # hoisted X @ W_ih

    if fuse_linear:
        Op = wlin.shape[1]
        in_specs += [full2(tuple(wlin.shape)), full2(tuple(blin.shape))]
        args += [wlin, blin]
        out_spec = batch3(T, Op)
        out_shape = jax.ShapeDtypeStruct((T, Bp, Op), jnp.float32)
        scratch.append(pltpu.VMEM((T, BT, 2 * Hp), jnp.float32))
    else:
        out_spec = batch3(T, 2 * Hp)
        out_shape = jax.ShapeDtypeStruct((T, Bp, 2 * Hp), jnp.float32)

    return pl.pallas_call(
        kernel,
        grid=(num_b,),
        in_specs=in_specs,
        out_specs=out_spec,
        out_shape=out_shape,
        scratch_shapes=scratch,
        compiler_params=pltpu.CompilerParams(dimension_semantics=("parallel",)),
    )(*args)


# ----------------------------------------------------------------------------
# Forward pass
# ----------------------------------------------------------------------------
@functools.partial(jax.jit, static_argnames=("output_dim",))
def bilstm_forward(packed, sentences, seq_length, *, output_dim):
    """Forward pass of the BiLSTM module (eval semantics).

    sentences : (B, T) int32 token ids
    seq_length: (B,)   int32 valid lengths
    returns   : (B, T, output_dim) float32
    """
    B, T = sentences.shape
    layers = packed["layers"]
    Bp = layers[0]["h0"].shape[1]
    pad_b = Bp - B

    # pad batch to the sublane-aligned size the params were packed for;
    # padded rows have length 0 -> fully masked, never contribute.
    sent_p = jnp.pad(sentences, ((0, pad_b), (0, 0)))
    len_p = jnp.pad(seq_length, ((0, pad_b),))

    # Embedding lookup (glue; gather stays in plain JAX).
    embed = jnp.take(packed["embedding"], sent_p, axis=0)                    # (Bp, T, E)

    # Length mask (replaces sort + pack_padded_sequence).
    mask = (jnp.arange(T)[None, :] < len_p[:, None]).astype(jnp.int32)       # (Bp, T)

    x_tm = jnp.transpose(embed, (1, 0, 2)).astype(jnp.float32)               # (T, Bp, E)
    mask_tm = jnp.transpose(mask)[:, :, None]                                # (T, Bp, 1)

    n_layers = len(layers)
    out_tm = None
    for l, lp in enumerate(layers):
        if l == n_layers - 1:
            # last layer: final Linear fused into the kernel epilogue
            out_tm = _run_bilstm_layer(x_tm, lp, mask_tm,
                                       wlin=packed["w_lin"], blin=packed["b_lin"])
        else:
            x_tm = _run_bilstm_layer(x_tm, lp, mask_tm)
        # TODO(synk): inter-layer LSTM dropout (p=0.1, training only) omitted.

    out = jnp.transpose(out_tm, (1, 0, 2))                                   # (Bp, T, Op)
    return out[:B, :, :output_dim]


# ----------------------------------------------------------------------------
# One-time parameter packing (pre-transpose, fuse directions, pad to lane/sublane tiles)
# ----------------------------------------------------------------------------
def pack_params(params, *, hidden, output_dim, num_layers, batch_size):
    """Pack PyTorch-layout params into the padded, pre-transposed bf16 layout the
    kernels consume.  Padding is exact: padded gate/hidden units have zero weights,
    bias and c0, so they stay identically zero through the recurrence."""
    H = hidden
    Hp = _round_up(H, 128)                     # lane-aligned per-gate width
    Op = _round_up(output_dim, 128)            # lane-dense linear output slab
    Bp = _round_up(max(batch_size, 8), 8)      # sublane-aligned batch

    def gate_pad(w):                           # leading dim 4H -> 4Hp (zero pad per gate)
        rest = w.shape[1:]
        w4 = w.reshape((4, H) + rest)
        w4 = jnp.pad(w4, [(0, 0), (0, Hp - H)] + [(0, 0)] * len(rest))
        return w4.reshape((4 * Hp,) + rest)

    def dir_pad_last(w):                       # last dim 2H -> 2Hp (zero pad per direction)
        lead = w.shape[:-1]
        w2 = w.reshape(lead + (2, H))
        w2 = jnp.pad(w2, [(0, 0)] * len(lead) + [(0, 0), (0, Hp - H)])
        return w2.reshape(lead + (2 * Hp,))

    layers = []
    for l in range(num_layers):
        wih_dirs, bias_dirs, whh_dirs, h0_dirs, c0_dirs = [], [], [], [], []
        for d in range(2):                     # 0: forward, 1: reverse
            idx = 2 * l + d
            wih = params["w_ih"][idx]          # (4H, Din)
            if l > 0:
                wih = dir_pad_last(wih)        # (4H, 2Hp)
            wih = gate_pad(wih)                # (4Hp, Din_pad)
            wih_dirs.append(wih.T)             # (Din_pad, 4Hp)

            whh = gate_pad(params["w_hh"][idx])            # (4Hp, H)
            whh = jnp.pad(whh, ((0, 0), (0, Hp - H)))      # (4Hp, Hp)
            whh_dirs.append(whh.T)                         # (Hp, 4Hp)

            bias_dirs.append(gate_pad(params["b_ih"][idx] + params["b_hh"][idx]))

            h0_dirs.append(jnp.pad(params["h0"][idx],
                                   ((0, Bp - batch_size), (0, Hp - H))))
            c0_dirs.append(jnp.pad(params["c0"][idx],
                                   ((0, Bp - batch_size), (0, Hp - H))))

        layers.append({
            "w_ih": jnp.concatenate(wih_dirs, axis=1).astype(jnp.bfloat16),   # (Din, 8Hp)
            "b": jnp.concatenate(bias_dirs)[None, :].astype(jnp.float32),     # (1, 8Hp)
            "w_hh_f": whh_dirs[0].astype(jnp.bfloat16),                       # (Hp, 4Hp)
            "w_hh_r": whh_dirs[1].astype(jnp.bfloat16),                       # (Hp, 4Hp)
            "h0": jnp.stack(h0_dirs).astype(jnp.float32),                     # (2, Bp, Hp)
            "c0": jnp.stack(c0_dirs).astype(jnp.float32),                     # (2, Bp, Hp)
        })

    wlin = dir_pad_last(params["w_lin"])                          # (O, 2Hp)
    wlin = jnp.pad(wlin, ((0, Op - output_dim), (0, 0)))          # (Op, 2Hp)
    blin = jnp.pad(params["b_lin"], ((0, Op - output_dim),))      # (Op,)

    return {
        "embedding": params["embedding"].astype(jnp.float32),
        "layers": layers,
        "w_lin": wlin.T.astype(jnp.bfloat16),                     # (2Hp, Op)
        "b_lin": blin[None, :].astype(jnp.float32),               # (1, Op)
    }


# ----------------------------------------------------------------------------
# Deterministic parameter construction (matches the PyTorch module's shapes)
# ----------------------------------------------------------------------------
def make_params(key, vocab, embed_dim, hidden, output_dim, batch_size, num_layers=2):
    keys = iter(jax.random.split(key, 64))
    k = 1.0 / jnp.sqrt(hidden)

    def unif(shape):
        return jax.random.uniform(next(keys), shape, jnp.float32, -k, k)

    params = {
        "embedding": jax.random.normal(next(keys), (vocab, embed_dim), jnp.float32) * 0.1,
        "w_ih": {}, "w_hh": {}, "b_ih": {}, "b_hh": {},
        "w_lin": unif((output_dim, 2 * hidden)),
        "b_lin": unif((output_dim,)),
    }
    for layer in range(num_layers):
        d_in = embed_dim if layer == 0 else 2 * hidden
        for d in range(2):  # 0: forward, 1: reverse
            idx = layer * 2 + d
            params["w_ih"][idx] = unif((4 * hidden, d_in))
            params["w_hh"][idx] = unif((4 * hidden, hidden))
            params["b_ih"][idx] = unif((4 * hidden,))
            params["b_hh"][idx] = unif((4 * hidden,))

    # init_hidden(): random initial states (deterministic here), shape
    # (num_layers * 2, batch, hidden); index = layer * 2 + direction (PyTorch convention).
    params["h0"] = jax.random.normal(next(keys), (num_layers * 2, batch_size, hidden), jnp.float32)
    params["c0"] = jax.random.normal(next(keys), (num_layers * 2, batch_size, hidden), jnp.float32)
    return params


# ----------------------------------------------------------------------------
if __name__ == "__main__":
    VOCAB = 50
    EMBED_DIM = 32
    HIDDEN = 32
    OUTPUT_DIM = 4
    BATCH = 2
    SEQ = 8
    NUM_LAYERS = 2
    PADDING_IDX = 0

    root = jax.random.PRNGKey(0)
    k_param, k_sent = jax.random.split(root)

    params = make_params(k_param, VOCAB, EMBED_DIM, HIDDEN, OUTPUT_DIM, BATCH, NUM_LAYERS)
    packed = pack_params(params, hidden=HIDDEN, output_dim=OUTPUT_DIM,
                         num_layers=NUM_LAYERS, batch_size=BATCH)

    sentences = jax.random.randint(k_sent, (BATCH, SEQ), 1, VOCAB, dtype=jnp.int32)
    seq_length = jnp.array([SEQ, 5], dtype=jnp.int32)
    # zero out padding positions in the token ids (as the data pipeline would)
    pad_mask = jnp.arange(SEQ)[None, :] < seq_length[:, None]
    sentences = jnp.where(pad_mask, sentences, PADDING_IDX)

    out = bilstm_forward(packed, sentences, seq_length, output_dim=OUTPUT_DIM)

    # pad_packed_sequence returns max(seq_length) timesteps; slice accordingly.
    max_len = int(jax.device_get(seq_length).max())
    out = out[:, :max_len, :]

    out = jax.block_until_ready(out)
    assert out.shape == (BATCH, max_len, OUTPUT_DIM), out.shape
    assert bool(jnp.all(jnp.isfinite(out)))
    print("KERNEL_OK")
</pallas_src>

<mosaic_0001>
module attributes {stable_mosaic.version = 11 : i64} {
  func.func @kernel(%arg0: i32, %arg1: memref<8x8x256xf32, #tpu.memory_space<vmem>>, %arg2: memref<256x1024xbf16, #tpu.memory_space<vmem>>, %arg3: memref<1x1024xf32, #tpu.memory_space<vmem>>, %arg4: memref<128x512xbf16, #tpu.memory_space<vmem>>, %arg5: memref<128x512xbf16, #tpu.memory_space<vmem>>, %arg6: memref<2x8x128xf32, #tpu.memory_space<vmem>>, %arg7: memref<2x8x128xf32, #tpu.memory_space<vmem>>, %arg8: memref<8x8x1xi32, #tpu.memory_space<vmem>>, %arg9: memref<256x128xbf16, #tpu.memory_space<vmem>>, %arg10: memref<1x128xf32, #tpu.memory_space<vmem>>, %arg11: memref<8x8x128xf32, #tpu.memory_space<vmem>>, %arg12: memref<8x8x1024xf32, #tpu.memory_space<vmem>>, %arg13: memref<8x8x256xf32, #tpu.memory_space<vmem>>) attributes {dimension_semantics = [#tpu.dimension_semantics<parallel>], iteration_bounds = array<i64: 1>, scalar_prefetch = 0 : i64, scratch_operands = 2 : i64, tpu.core_type = #tpu.core_type<tc>, window_params = [{transform_indices = @transform_0, window_bounds = array<i64: 8, 8, 256>}, {pipeline_mode = #tpu.pipeline_mode<synchronous>, transform_indices = @transform_1, window_bounds = array<i64: 256, 1024>}, {pipeline_mode = #tpu.pipeline_mode<synchronous>, transform_indices = @transform_2, window_bounds = array<i64: 1, 1024>}, {pipeline_mode = #tpu.pipeline_mode<synchronous>, transform_indices = @transform_3, window_bounds = array<i64: 128, 512>}, {pipeline_mode = #tpu.pipeline_mode<synchronous>, transform_indices = @transform_4, window_bounds = array<i64: 128, 512>}, {transform_indices = @transform_5, window_bounds = array<i64: 2, 8, 128>}, {transform_indices = @transform_6, window_bounds = array<i64: 2, 8, 128>}, {transform_indices = @transform_7, window_bounds = array<i64: 8, 8, 1>}, {pipeline_mode = #tpu.pipeline_mode<synchronous>, transform_indices = @transform_8, window_bounds = array<i64: 256, 128>}, {pipeline_mode = #tpu.pipeline_mode<synchronous>, transform_indices = @transform_9, window_bounds = array<i64: 1, 128>}, {transform_indices = @transform_10, window_bounds = array<i64: 8, 8, 128>}]} {
    %c0 = arith.constant 0 : index
    %c0_0 = arith.constant 0 : index
    %c0_1 = arith.constant 0 : index
    %0 = vector.load %arg1[%c0, %c0_0, %c0_1] : memref<8x8x256xf32, #tpu.memory_space<vmem>>, vector<8x8x256xf32>
    %1 = vector.shape_cast %0 : vector<8x8x256xf32> to vector<64x256xf32>
    %2 = arith.truncf %1 : vector<64x256xf32> to vector<64x256xbf16>
    %c0_2 = arith.constant 0 : index
    %c0_3 = arith.constant 0 : index
    %3 = vector.load %arg2[%c0_2, %c0_3] : memref<256x1024xbf16, #tpu.memory_space<vmem>>, vector<256x1024xbf16>
    %cst = arith.constant dense<0.000000e+00> : vector<64x1024xf32>
    %4 = tpu.matmul %2, %3, %cst {dimension_numbers = #tpu.dot_dimension_numbers<[1], [0], [0], [1], [0, 0, 1, 1], [], []>} : vector<64x256xbf16>, vector<256x1024xbf16>, vector<64x1024xf32> -> vector<64x1024xf32>
    %c0_4 = arith.constant 0 : index
    %c0_5 = arith.constant 0 : index
    %5 = vector.load %arg3[%c0_4, %c0_5] : memref<1x1024xf32, #tpu.memory_space<vmem>>, vector<1x1024xf32>
    %6 = vector.broadcast %5 : vector<1x1024xf32> to vector<64x1024xf32>
    %7 = arith.addf %4, %6 : vector<64x1024xf32>
    %8 = vector.shape_cast %7 : vector<64x1024xf32> to vector<8x8x1024xf32>
    %c0_6 = arith.constant 0 : index
    %c0_7 = arith.constant 0 : index
    %c0_8 = arith.constant 0 : index
    %9 = vector.load %arg12[%c0_6, %c0_7, %c0_8] : memref<8x8x1024xf32, #tpu.memory_space<vmem>>, vector<8x8x1024xf32>
    tpu.vector_store %arg12[%c0_6, %c0_7, %c0_8], %8 {strides = array<i32>} : memref<8x8x1024xf32, #tpu.memory_space<vmem>>, vector<8x8x1024xf32>,
    %c0_9 = arith.constant 0 : index
    %c0_10 = arith.constant 0 : index
    %10 = vector.load %arg4[%c0_9, %c0_10] : memref<128x512xbf16, #tpu.memory_space<vmem>>, vector<128x512xbf16>
    %c0_11 = arith.constant 0 : index
    %c0_12 = arith.constant 0 : index
    %11 = vector.load %arg5[%c0_11, %c0_12] : memref<128x512xbf16, #tpu.memory_space<vmem>>, vector<128x512xbf16>
    %c0_13 = arith.constant 0 : index
    %c0_14 = arith.constant 0 : index
    %c0_15 = arith.constant 0 : index
    %12 = vector.load %arg6[%c0_13, %c0_14, %c0_15] : memref<2x8x128xf32, #tpu.memory_space<vmem>>, vector<1x8x128xf32>
    %13 = vector.shape_cast %12 : vector<1x8x128xf32> to vector<8x128xf32>
    %c0_16 = arith.constant 0 : index
    %c0_17 = arith.constant 0 : index
    %c0_18 = arith.constant 0 : index
    %14 = vector.load %arg7[%c0_16, %c0_17, %c0_18] : memref<2x8x128xf32, #tpu.memory_space<vmem>>, vector<1x8x128xf32>
    %15 = vector.shape_cast %14 : vector<1x8x128xf32> to vector<8x128xf32>
    %c1 = arith.constant 1 : index
    %c0_19 = arith.constant 0 : index
    %c0_20 = arith.constant 0 : index
    %16 = vector.load %arg6[%c1, %c0_19, %c0_20] : memref<2x8x128xf32, #tpu.memory_space<vmem>>, vector<1x8x128xf32>
    %17 = vector.shape_cast %16 : vector<1x8x128xf32> to vector<8x128xf32>
    %c1_21 = arith.constant 1 : index
    %c0_22 = arith.constant 0 : index
    %c0_23 = arith.constant 0 : index
    %18 = vector.load %arg7[%c1_21, %c0_22, %c0_23] : memref<2x8x128xf32, #tpu.memory_space<vmem>>, vector<1x8x128xf32>
    %19 = vector.shape_cast %18 : vector<1x8x128xf32> to vector<8x128xf32>
    %c0_i32 = arith.constant 0 : i32
    %c7_i32 = arith.constant 7 : i32
    %20 = arith.subi %c7_i32, %c0_i32 : i32
    %21 = arith.index_cast %c0_i32 : i32 to index
    %c0_24 = arith.constant 0 : index
    %c0_25 = arith.constant 0 : index
    %22 = vector.load %arg8[%21, %c0_24, %c0_25] : memref<8x8x1xi32, #tpu.memory_space<vmem>>, vector<1x8x1xi32>
    %23 = vector.shape_cast %22 : vector<1x8x1xi32> to vector<8x1xi32>
    %c0_i32_26 = arith.constant 0 : i32
    %24 = vector.broadcast %c0_i32_26 : i32 to vector<8x1xi32>
    %25 = arith.cmpi ne, %23, %24 : vector<8x1xi32>
    %26 = arith.index_cast %c0_i32 : i32 to index
    %c0_27 = arith.constant 0 : index
    %c0_28 = arith.constant 0 : index
    %27 = vector.load %arg12[%26, %c0_27, %c0_28] : memref<8x8x1024xf32, #tpu.memory_space<vmem>>, vector<1x8x512xf32>
    %28 = vector.shape_cast %27 : vector<1x8x512xf32> to vector<8x512xf32>
    %29 = arith.truncf %13 : vector<8x128xf32> to vector<8x128xbf16>
    %cst_29 = arith.constant dense<0.000000e+00> : vector<8x512xf32>
    %30 = tpu.matmul %29, %10, %cst_29 {dimension_numbers = #tpu.dot_dimension_numbers<[1], [0], [0], [1], [0, 0, 1, 1], [], []>} : vector<8x128xbf16>, vector<128x512xbf16>, vector<8x512xf32> -> vector<8x512xf32>
    %31 = arith.addf %28, %30 : vector<8x512xf32>
    %32 = vector.extract_strided_slice %31 {offsets = [0, 0], sizes = [8, 128], strides = [1, 1]} : vector<8x512xf32> to vector<8x128xf32>
    %33 = arith.negf %32 : vector<8x128xf32>
    %34 = math.exp %33 : vector<8x128xf32>
    %cst_30 = arith.constant 1.000000e+00 : f32
    %35 = vector.broadcast %cst_30 : f32 to vector<8x128xf32>
    %36 = arith.addf %35, %34 : vector<8x128xf32>
    %37 = arith.divf %35, %36 : vector<8x128xf32>
    %38 = vector.extract_strided_slice %31 {offsets = [0, 128], sizes = [8, 128], strides = [1, 1]} : vector<8x512xf32> to vector<8x128xf32>
    %39 = arith.negf %38 : vector<8x128xf32>
    %40 = math.exp %39 : vector<8x128xf32>
    %cst_31 = arith.constant 1.000000e+00 : f32
    %41 = vector.broadcast %cst_31 : f32 to vector<8x128xf32>
    %42 = arith.addf %41, %40 : vector<8x128xf32>
    %43 = arith.divf %41, %42 : vector<8x128xf32>
    %44 = vector.extract_strided_slice %31 {offsets = [0, 256], sizes = [8, 128], strides = [1, 1]} : vector<8x512xf32> to vector<8x128xf32>
    %45 = math.tanh %44 : vector<8x128xf32>
    %46 = vector.extract_strided_slice %31 {offsets = [0, 384], sizes = [8, 128], strides = [1, 1]} : vector<8x512xf32> to vector<8x128xf32>
    %47 = arith.negf %46 : vector<8x128xf32>
    %48 = math.exp %47 : vector<8x128xf32>
    %cst_32 = arith.constant 1.000000e+00 : f32
    %49 = vector.broadcast %cst_32 : f32 to vector<8x128xf32>
    %50 = arith.addf %49, %48 : vector<8x128xf32>
    %51 = arith.divf %49, %50 : vector<8x128xf32>
    %52 = arith.mulf %43, %15 : vector<8x128xf32>
    %53 = arith.mulf %37, %45 : vector<8x128xf32>
    %54 = arith.addf %52, %53 : vector<8x128xf32>
    %55 = math.tanh %54 : vector<8x128xf32>
    %56 = arith.mulf %51, %55 : vector<8x128xf32>
    %cst_33 = arith.constant 0.000000e+00 : f32
    %57 = vector.shape_cast %25 : vector<8x1xi1> to vector<8x1xi1>
    %58 = vector.broadcast %57 : vector<8x1xi1> to vector<8x128xi1>
    %59 = vector.broadcast %cst_33 : f32 to vector<8x128xf32>
    %60 = arith.select %58, %56, %59 : vector<8x128xi1>, vector<8x128xf32>
    %61 = arith.index_cast %c0_i32 : i32 to index
    %c0_34 = arith.constant 0 : index
    %c0_35 = arith.constant 0 : index
    %62 = vector.load %arg13[%61, %c0_34, %c0_35] : memref<8x8x256xf32, #tpu.memory_space<vmem>>, vector<1x8x128xf32>
    %63 = vector.shape_cast %62 : vector<1x8x128xf32> to vector<8x128xf32>
    %64 = vector.shape_cast %60 : vector<8x128xf32> to vector<1x8x128xf32>
    tpu.vector_store %arg13[%61, %c0_34, %c0_35], %64 {strides = array<i32>} : memref<8x8x256xf32, #tpu.memory_space<vmem>>, vector<1x8x128xf32>,
    %65 = vector.shape_cast %25 : vector<8x1xi1> to vector<8x1xi1>
    %66 = vector.broadcast %65 : vector<8x1xi1> to vector<8x128xi1>
    %67 = arith.select %66, %56, %13 : vector<8x128xi1>, vector<8x128xf32>
    %68 = vector.shape_cast %25 : vector<8x1xi1> to vector<8x1xi1>
    %69 = vector.broadcast %68 : vector<8x1xi1> to vector<8x128xi1>
    %70 = arith.select %69, %54, %15 : vector<8x128xi1>, vector<8x128xf32>
    %71 = arith.index_cast %20 : i32 to index
    %c0_36 = arith.constant 0 : index
    %c0_37 = arith.constant 0 : index
    %72 = vector.load %arg8[%71, %c0_36, %c0_37] : memref<8x8x1xi32, #tpu.memory_space<vmem>>, vector<1x8x1xi32>
    %73 = vector.shape_cast %72 : vector<1x8x1xi32> to vector<8x1xi32>
    %c0_i32_38 = arith.constant 0 : i32
    %74 = vector.broadcast %c0_i32_38 : i32 to vector<8x1xi32>
    %75 = arith.cmpi ne, %73, %74 : vector<8x1xi32>
    %76 = arith.index_cast %20 : i32 to index
    %c0_39 = arith.constant 0 : index
    %c512 = arith.constant 512 : index
    %77 = vector.load %arg12[%76, %c0_39, %c512] : memref<8x8x1024xf32, #tpu.memory_space<vmem>>, vector<1x8x512xf32>
    %78 = vector.shape_cast %77 : vector<1x8x512xf32> to vector<8x512xf32>
    %79 = arith.truncf %17 : vector<8x128xf32> to vector<8x128xbf16>
    %cst_40 = arith.constant dense<0.000000e+00> : vector<8x512xf32>
    %80 = tpu.matmul %79, %11, %cst_40 {dimension_numbers = #tpu.dot_dimension_numbers<[1], [0], [0], [1], [0, 0, 1, 1], [], []>} : vector<8x128xbf16>, vector<128x512xbf16>, vector<8x512xf32> -> vector<8x512xf32>
    %81 = arith.addf %78, %80 : vector<8x512xf32>
    %82 = vector.extract_strided_slice %81 {offsets = [0, 0], sizes = [8, 128], strides = [1, 1]} : vector<8x512xf32> to vector<8x128xf32>
    %83 = arith.negf %82 : vector<8x128xf32>
    %84 = math.exp %83 : vector<8x128xf32>
    %cst_41 = arith.constant 1.000000e+00 : f32
    %85 = vector.broadcast %cst_41 : f32 to vector<8x128xf32>
    %86 = arith.addf %85, %84 : vector<8x128xf32>
    %87 = arith.divf %85, %86 : vector<8x128xf32>
    %88 = vector.extract_strided_slice %81 {offsets = [0, 128], sizes = [8, 128], strides = [1, 1]} : vector<8x512xf32> to vector<8x128xf32>
    %89 = arith.negf %88 : vector<8x128xf32>
    %90 = math.exp %89 : vector<8x128xf32>
    %cst_42 = arith.constant 1.000000e+00 : f32
    %91 = vector.broadcast %cst_42 : f32 to vector<8x128xf32>
    %92 = arith.addf %91, %90 : vector<8x128xf32>
    %93 = arith.divf %91, %92 : vector<8x128xf32>
    %94 = vector.extract_strided_slice %81 {offsets = [0, 256], sizes = [8, 128], strides = [1, 1]} : vector<8x512xf32> to vector<8x128xf32>
    %95 = math.tanh %94 : vector<8x128xf32>
    %96 = vector.extract_strided_slice %81 {offsets = [0, 384], sizes = [8, 128], strides = [1, 1]} : vector<8x512xf32> to vector<8x128xf32>
    %97 = arith.negf %96 : vector<8x128xf32>
    %98 = math.exp %97 : vector<8x128xf32>
    %cst_43 = arith.constant 1.000000e+00 : f32
    %99 = vector.broadcast %cst_43 : f32 to vector<8x128xf32>
    %100 = arith.addf %99, %98 : vector<8x128xf32>
    %101 = arith.divf %99, %100 : vector<8x128xf32>
    %102 = arith.mulf %93, %19 : vector<8x128xf32>
    %103 = arith.mulf %87, %95 : vector<8x128xf32>
    %104 = arith.addf %102, %103 : vector<8x128xf32>
    %105 = math.tanh %104 : vector<8x128xf32>
    %106 = arith.mulf %101, %105 : vector<8x128xf32>
    %cst_44 = arith.constant 0.000000e+00 : f32
    %107 = vector.shape_cast %75 : vector<8x1xi1> to vector<8x1xi1>
    %108 = vector.broadcast %107 : vector<8x1xi1> to vector<8x128xi1>
    %109 = vector.broadcast %cst_44 : f32 to vector<8x128xf32>
    %110 = arith.select %108, %106, %109 : vector<8x128xi1>, vector<8x128xf32>
    %111 = arith.index_cast %20 : i32 to index
    %c0_45 = arith.constant 0 : index
    %c128 = arith.constant 128 : index
    %112 = vector.load %arg13[%111, %c0_45, %c128] : memref<8x8x256xf32, #tpu.memory_space<vmem>>, vector<1x8x128xf32>
    %113 = vector.shape_cast %112 : vector<1x8x128xf32> to vector<8x128xf32>
    %114 = vector.shape_cast %110 : vector<8x128xf32> to vector<1x8x128xf32>
    tpu.vector_store %arg13[%111, %c0_45, %c128], %114 {strides = array<i32>} : memref<8x8x256xf32, #tpu.memory_space<vmem>>, vector<1x8x128xf32>,
    %115 = vector.shape_cast %75 : vector<8x1xi1> to vector<8x1xi1>
    %116 = vector.broadcast %115 : vector<8x1xi1> to vector<8x128xi1>
    %117 = arith.select %116, %106, %17 : vector<8x128xi1>, vector<8x128xf32>
    %118 = vector.shape_cast %75 : vector<8x1xi1> to vector<8x1xi1>
    %119 = vector.broadcast %118 : vector<8x1xi1> to vector<8x128xi1>
    %120 = arith.select %119, %104, %19 : vector<8x128xi1>, vector<8x128xf32>
    %c1_i32 = arith.constant 1 : i32
    %c7_i32_46 = arith.constant 7 : i32
    %121 = arith.subi %c7_i32_46, %c1_i32 : i32
    %122 = arith.index_cast %c1_i32 : i32 to index
    %c0_47 = arith.constant 0 : index
    %c0_48 = arith.constant 0 : index
    %123 = vector.load %arg8[%122, %c0_47, %c0_48] : memref<8x8x1xi32, #tpu.memory_space<vmem>>, vector<1x8x1xi32>
    %124 = vector.shape_cast %123 : vector<1x8x1xi32> to vector<8x1xi32>
    %c0_i32_49 = arith.constant 0 : i32
    %125 = vector.broadcast %c0_i32_49 : i32 to vector<8x1xi32>
    %126 = arith.cmpi ne, %124, %125 : vector<8x1xi32>
    %127 = arith.index_cast %c1_i32 : i32 to index
    %c0_50 = arith.constant 0 : index
    %c0_51 = arith.constant 0 : index
    %128 = vector.load %arg12[%127, %c0_50, %c0_51] : memref<8x8x1024xf32, #tpu.memory_space<vmem>>, vector<1x8x512xf32>
    %129 = vector.shape_cast %128 : vector<1x8x512xf32> to vector<8x512xf32>
    %130 = arith.truncf %67 : vector<8x128xf32> to vector<8x128xbf16>
    %cst_52 = arith.constant dense<0.000000e+00> : vector<8x512xf32>
    %131 = tpu.matmul %130, %10, %cst_52 {dimension_numbers = #tpu.dot_dimension_numbers<[1], [0], [0], [1], [0, 0, 1, 1], [], []>} : vector<8x128xbf16>, vector<128x512xbf16>, vector<8x512xf32> -> vector<8x512xf32>
    %132 = arith.addf %129, %131 : vector<8x512xf32>
    %133 = vector.extract_strided_slice %132 {offsets = [0, 0], sizes = [8, 128], strides = [1, 1]} : vector<8x512xf32> to vector<8x128xf32>
    %134 = arith.negf %133 : vector<8x128xf32>
    %135 = math.exp %134 : vector<8x128xf32>
    %cst_53 = arith.constant 1.000000e+00 : f32
    %136 = vector.broadcast %cst_53 : f32 to vector<8x128xf32>
    %137 = arith.addf %136, %135 : vector<8x128xf32>
    %138 = arith.divf %136, %137 : vector<8x128xf32>
    %139 = vector.extract_strided_slice %132 {offsets = [0, 128], sizes = [8, 128], strides = [1, 1]} : vector<8x512xf32> to vector<8x128xf32>
    %140 = arith.negf %139 : vector<8x128xf32>
    %141 = math.exp %140 : vector<8x128xf32>
    %cst_54 = arith.constant 1.000000e+00 : f32
    %142 = vector.broadcast %cst_54 : f32 to vector<8x128xf32>
    %143 = arith.addf %142, %141 : vector<8x128xf32>
    %144 = arith.divf %142, %143 : vector<8x128xf32>
    %145 = vector.extract_strided_slice %132 {offsets = [0, 256], sizes = [8, 128], strides = [1, 1]} : vector<8x512xf32> to vector<8x128xf32>
    %146 = math.tanh %145 : vector<8x128xf32>
    %147 = vector.extract_strided_slice %132 {offsets = [0, 384], sizes = [8, 128], strides = [1, 1]} : vector<8x512xf32> to vector<8x128xf32>
    %148 = arith.negf %147 : vector<8x128xf32>
    %149 = math.exp %148 : vector<8x128xf32>
    %cst_55 = arith.constant 1.000000e+00 : f32
    %150 = vector.broadcast %cst_55 : f32 to vector<8x128xf32>
    %151 = arith.addf %150, %149 : vector<8x128xf32>
    %152 = arith.divf %150, %151 : vector<8x128xf32>
    %153 = arith.mulf %144, %70 : vector<8x128xf32>
    %154 = arith.mulf %138, %146 : vector<8x128xf32>
    %155 = arith.addf %153, %154 : vector<8x128xf32>
    %156 = math.tanh %155 : vector<8x128xf32>
    %157 = arith.mulf %152, %156 : vector<8x128xf32>
    %cst_56 = arith.constant 0.000000e+00 : f32
    %158 = vector.shape_cast %126 : vector<8x1xi1> to vector<8x1xi1>
    %159 = vector.broadcast %158 : vector<8x1xi1> to vector<8x128xi1>
    %160 = vector.broadcast %cst_56 : f32 to vector<8x128xf32>
    %161 = arith.select %159, %157, %160 : vector<8x128xi1>, vector<8x128xf32>
    %162 = arith.index_cast %c1_i32 : i32 to index
    %c0_57 = arith.constant 0 : index
    %c0_58 = arith.constant 0 : index
    %163 = vector.load %arg13[%162, %c0_57, %c0_58] : memref<8x8x256xf32, #tpu.memory_space<vmem>>, vector<1x8x128xf32>
    %164 = vector.shape_cast %163 : vector<1x8x128xf32> to vector<8x128xf32>
    %165 = vector.shape_cast %161 : vector<8x128xf32> to vector<1x8x128xf32>
    tpu.vector_store %arg13[%162, %c0_57, %c0_58], %165 {strides = array<i32>} : memref<8x8x256xf32, #tpu.memory_space<vmem>>, vector<1x8x128xf32>,
    %166 = vector.shape_cast %126 : vector<8x1xi1> to vector<8x1xi1>
    %167 = vector.broadcast %166 : vector<8x1xi1> to vector<8x128xi1>
    %168 = arith.select %167, %157, %67 : vector<8x128xi1>, vector<8x128xf32>
    %169 = vector.shape_cast %126 : vector<8x1xi1> to vector<8x1xi1>
    %170 = vector.broadcast %169 : vector<8x1xi1> to vector<8x128xi1>
    %171 = arith.select %170, %155, %70 : vector<8x128xi1>, vector<8x128xf32>
    %172 = arith.index_cast %121 : i32 to index
    %c0_59 = arith.constant 0 : index
    %c0_60 = arith.constant 0 : index
    %173 = vector.load %arg8[%172, %c0_59, %c0_60] : memref<8x8x1xi32, #tpu.memory_space<vmem>>, vector<1x8x1xi32>
    %174 = vector.shape_cast %173 : vector<1x8x1xi32> to vector<8x1xi32>
    %c0_i32_61 = arith.constant 0 : i32
    %175 = vector.broadcast %c0_i32_61 : i32 to vector<8x1xi32>
    %176 = arith.cmpi ne, %174, %175 : vector<8x1xi32>
    %177 = arith.index_cast %121 : i32 to index
    %c0_62 = arith.constant 0 : index
    %c512_63 = arith.constant 512 : index
    %178 = vector.load %arg12[%177, %c0_62, %c512_63] : memref<8x8x1024xf32, #tpu.memory_space<vmem>>, vector<1x8x512xf32>
    %179 = vector.shape_cast %178 : vector<1x8x512xf32> to vector<8x512xf32>
    %180 = arith.truncf %117 : vector<8x128xf32> to vector<8x128xbf16>
    %cst_64 = arith.constant dense<0.000000e+00> : vector<8x512xf32>
    %181 = tpu.matmul %180, %11, %cst_64 {dimension_numbers = #tpu.dot_dimension_numbers<[1], [0], [0], [1], [0, 0, 1, 1], [], []>} : vector<8x128xbf16>, vector<128x512xbf16>, vector<8x512xf32> -> vector<8x512xf32>
    %182 = arith.addf %179, %181 : vector<8x512xf32>
    %183 = vector.extract_strided_slice %182 {offsets = [0, 0], sizes = [8, 128], strides = [1, 1]} : vector<8x512xf32> to vector<8x128xf32>
    %184 = arith.negf %183 : vector<8x128xf32>
    %185 = math.exp %184 : vector<8x128xf32>
    %cst_65 = arith.constant 1.000000e+00 : f32
    %186 = vector.broadcast %cst_65 : f32 to vector<8x128xf32>
    %187 = arith.addf %186, %185 : vector<8x128xf32>
    %188 = arith.divf %186, %187 : vector<8x128xf32>
    %189 = vector.extract_strided_slice %182 {offsets = [0, 128], sizes = [8, 128], strides = [1, 1]} : vector<8x512xf32> to vector<8x128xf32>
    %190 = arith.negf %189 : vector<8x128xf32>
    %191 = math.exp %190 : vector<8x128xf32>
    %cst_66 = arith.constant 1.000000e+00 : f32
    %192 = vector.broadcast %cst_66 : f32 to vector<8x128xf32>
    %193 = arith.addf %192, %191 : vector<8x128xf32>
    %194 = arith.divf %192, %193 : vector<8x128xf32>
    %195 = vector.extract_strided_slice %182 {offsets = [0, 256], sizes = [8, 128], strides = [1, 1]} : vector<8x512xf32> to vector<8x128xf32>
    %196 = math.tanh %195 : vector<8x128xf32>
    %197 = vector.extract_strided_slice %182 {offsets = [0, 384], sizes = [8, 128], strides = [1, 1]} : vector<8x512xf32> to vector<8x128xf32>
    %198 = arith.negf %197 : vector<8x128xf32>
    %199 = math.exp %198 : vector<8x128xf32>
    %cst_67 = arith.constant 1.000000e+00 : f32
    %200 = vector.broadcast %cst_67 : f32 to vector<8x128xf32>
    %201 = arith.addf %200, %199 : vector<8x128xf32>
    %202 = arith.divf %200, %201 : vector<8x128xf32>
    %203 = arith.mulf %194, %120 : vector<8x128xf32>
    %204 = arith.mulf %188, %196 : vector<8x128xf32>
    %205 = arith.addf %203, %204 : vector<8x128xf32>
    %206 = math.tanh %205 : vector<8x128xf32>
    %207 = arith.mulf %202, %206 : vector<8x128xf32>
    %cst_68 = arith.constant 0.000000e+00 : f32
    %208 = vector.shape_cast %176 : vector<8x1xi1> to vector<8x1xi1>
    %209 = vector.broadcast %208 : vector<8x1xi1> to vector<8x128xi1>
    %210 = vector.broadcast %cst_68 : f32 to vector<8x128xf32>
    %211 = arith.select %209, %207, %210 : vector<8x128xi1>, vector<8x128xf32>
    %212 = arith.index_cast %121 : i32 to index
    %c0_69 = arith.constant 0 : index
    %c128_70 = arith.constant 128 : index
    %213 = vector.load %arg13[%212, %c0_69, %c128_70] : memref<8x8x256xf32, #tpu.memory_space<vmem>>, vector<1x8x128xf32>
    %214 = vector.shape_cast %213 : vector<1x8x128xf32> to vector<8x128xf32>
    %215 = vector.shape_cast %211 : vector<8x128xf32> to vector<1x8x128xf32>
    tpu.vector_store %arg13[%212, %c0_69, %c128_70], %215 {strides = array<i32>} : memref<8x8x256xf32, #tpu.memory_space<vmem>>, vector<1x8x128xf32>,
    %216 = vector.shape_cast %176 : vector<8x1xi1> to vector<8x1xi1>
    %217 = vector.broadcast %216 : vector<8x1xi1> to vector<8x128xi1>
    %218 = arith.select %217, %207, %117 : vector<8x128xi1>, vector<8x128xf32>
    %219 = vector.shape_cast %176 : vector<8x1xi1> to vector<8x1xi1>
    %220 = vector.broadcast %219 : vector<8x1xi1> to vector<8x128xi1>
    %221 = arith.select %220, %205, %120 : vector<8x128xi1>, vector<8x128xf32>
    %c2_i32 = arith.constant 2 : i32
    %c7_i32_71 = arith.constant 7 : i32
    %222 = arith.subi %c7_i32_71, %c2_i32 : i32
    %223 = arith.index_cast %c2_i32 : i32 to index
    %c0_72 = arith.constant 0 : index
    %c0_73 = arith.constant 0 : index
    %224 = vector.load %arg8[%223, %c0_72, %c0_73] : memref<8x8x1xi32, #tpu.memory_space<vmem>>, vector<1x8x1xi32>
    %225 = vector.shape_cast %224 : vector<1x8x1xi32> to vector<8x1xi32>
    %c0_i32_74 = arith.constant 0 : i32
    %226 = vector.broadcast %c0_i32_74 : i32 to vector<8x1xi32>
    %227 = arith.cmpi ne, %225, %226 : vector<8x1xi32>
    %228 = arith.index_cast %c2_i32 : i32 to index
    %c0_75 = arith.constant 0 : index
    %c0_76 = arith.constant 0 : index
    %229 = vector.load %arg12[%228, %c0_75, %c0_76] : memref<8x8x1024xf32, #tpu.memory_space<vmem>>, vector<1x8x512xf32>
    %230 = vector.shape_cast %229 : vector<1x8x512xf32> to vector<8x512xf32>
    %231 = arith.truncf %168 : vector<8x128xf32> to vector<8x128xbf16>
    %cst_77 = arith.constant dense<0.000000e+00> : vector<8x512xf32>
    %232 = tpu.matmul %231, %10, %cst_77 {dimension_numbers = #tpu.dot_dimension_numbers<[1], [0], [0], [1], [0, 0, 1, 1], [], []>} : vector<8x128xbf16>, vector<128x512xbf16>, vector<8x512xf32> -> vector<8x512xf32>
    %233 = arith.addf %230, %232 : vector<8x512xf32>
    %234 = vector.extract_strided_slice %233 {offsets = [0, 0], sizes = [8, 128], strides = [1, 1]} : vector<8x512xf32> to vector<8x128xf32>
    %235 = arith.negf %234 : vector<8x128xf32>
    %236 = math.exp %235 : vector<8x128xf32>
    %cst_78 = arith.constant 1.000000e+00 : f32
    %237 = vector.broadcast %cst_78 : f32 to vector<8x128xf32>
    %238 = arith.addf %237, %236 : vector<8x128xf32>
    %239 = arith.divf %237, %238 : vector<8x128xf32>
    %240 = vector.extract_strided_slice %233 {offsets = [0, 128], sizes = [8, 128], strides = [1, 1]} : vector<8x512xf32> to vector<8x128xf32>
    %241 = arith.negf %240 : vector<8x128xf32>
    %242 = math.exp %241 : vector<8x128xf32>
    %cst_79 = arith.constant 1.000000e+00 : f32
    %243 = vector.broadcast %cst_79 : f32 to vector<8x128xf32>
    %244 = arith.addf %243, %242 : vector<8x128xf32>
    %245 = arith.divf %243, %244 : vector<8x128xf32>
    %246 = vector.extract_strided_slice %233 {offsets = [0, 256], sizes = [8, 128], strides = [1, 1]} : vector<8x512xf32> to vector<8x128xf32>
    %247 = math.tanh %246 : vector<8x128xf32>
    %248 = vector.extract_strided_slice %233 {offsets = [0, 384], sizes = [8, 128], strides = [1, 1]} : vector<8x512xf32> to vector<8x128xf32>
    %249 = arith.negf %248 : vector<8x128xf32>
    %250 = math.exp %249 : vector<8x128xf32>
    %cst_80 = arith.constant 1.000000e+00 : f32
    %251 = vector.broadcast %cst_80 : f32 to vector<8x128xf32>
    %252 = arith.addf %251, %250 : vector<8x128xf32>
    %253 = arith.divf %251, %252 : vector<8x128xf32>
    %254 = arith.mulf %245, %171 : vector<8x128xf32>
    %255 = arith.mulf %239, %247 : vector<8x128xf32>
    %256 = arith.addf %254, %255 : vector<8x128xf32>
    %257 = math.tanh %256 : vector<8x128xf32>
    %258 = arith.mulf %253, %257 : vector<8x128xf32>
    %cst_81 = arith.constant 0.000000e+00 : f32
    %259 = vector.shape_cast %227 : vector<8x1xi1> to vector<8x1xi1>
    %260 = vector.broadcast %259 : vector<8x1xi1> to vector<8x128xi1>
    %261 = vector.broadcast %cst_81 : f32 to vector<8x128xf32>
    %262 = arith.select %260, %258, %261 : vector<8x128xi1>, vector<8x128xf32>
    %263 = arith.index_cast %c2_i32 : i32 to index
    %c0_82 = arith.constant 0 : index
    %c0_83 = arith.constant 0 : index
    %264 = vector.load %arg13[%263, %c0_82, %c0_83] : memref<8x8x256xf32, #tpu.memory_space<vmem>>, vector<1x8x128xf32>
    %265 = vector.shape_cast %264 : vector<1x8x128xf32> to vector<8x128xf32>
    %266 = vector.shape_cast %262 : vector<8x128xf32> to vector<1x8x128xf32>
    tpu.vector_store %arg13[%263, %c0_82, %c0_83], %266 {strides = array<i32>} : memref<8x8x256xf32, #tpu.memory_space<vmem>>, vector<1x8x128xf32>,
    %267 = vector.shape_cast %227 : vector<8x1xi1> to vector<8x1xi1>
    %268 = vector.broadcast %267 : vector<8x1xi1> to vector<8x128xi1>
    %269 = arith.select %268, %258, %168 : vector<8x128xi1>, vector<8x128xf32>
    %270 = vector.shape_cast %227 : vector<8x1xi1> to vector<8x1xi1>
    %271 = vector.broadcast %270 : vector<8x1xi1> to vector<8x128xi1>
    %272 = arith.select %271, %256, %171 : vector<8x128xi1>, vector<8x128xf32>
    %273 = arith.index_cast %222 : i32 to index
    %c0_84 = arith.constant 0 : index
    %c0_85 = arith.constant 0 : index
    %274 = vector.load %arg8[%273, %c0_84, %c0_85] : memref<8x8x1xi32, #tpu.memory_space<vmem>>, vector<1x8x1xi32>
    %275 = vector.shape_cast %274 : vector<1x8x1xi32> to vector<8x1xi32>
    %c0_i32_86 = arith.constant 0 : i32
    %276 = vector.broadcast %c0_i32_86 : i32 to vector<8x1xi32>
    %277 = arith.cmpi ne, %275, %276 : vector<8x1xi32>
    %278 = arith.index_cast %222 : i32 to index
    %c0_87 = arith.constant 0 : index
    %c512_88 = arith.constant 512 : index
    %279 = vector.load %arg12[%278, %c0_87, %c512_88] : memref<8x8x1024xf32, #tpu.memory_space<vmem>>, vector<1x8x512xf32>
    %280 = vector.shape_cast %279 : vector<1x8x512xf32> to vector<8x512xf32>
    %281 = arith.truncf %218 : vector<8x128xf32> to vector<8x128xbf16>
    %cst_89 = arith.constant dense<0.000000e+00> : vector<8x512xf32>
    %282 = tpu.matmul %281, %11, %cst_89 {dimension_numbers = #tpu.dot_dimension_numbers<[1], [0], [0], [1], [0, 0, 1, 1], [], []>} : vector<8x128xbf16>, vector<128x512xbf16>, vector<8x512xf32> -> vector<8x512xf32>
    %283 = arith.addf %280, %282 : vector<8x512xf32>
    %284 = vector.extract_strided_slice %283 {offsets = [0, 0], sizes = [8, 128], strides = [1, 1]} : vector<8x512xf32> to vector<8x128xf32>
    %285 = arith.negf %284 : vector<8x128xf32>
    %286 = math.exp %285 : vector<8x128xf32>
    %cst_90 = arith.constant 1.000000e+00 : f32
    %287 = vector.broadcast %cst_90 : f32 to vector<8x128xf32>
    %288 = arith.addf %287, %286 : vector<8x128xf32>
    %289 = arith.divf %287, %288 : vector<8x128xf32>
    %290 = vector.extract_strided_slice %283 {offsets = [0, 128], sizes = [8, 128], strides = [1, 1]} : vector<8x512xf32> to vector<8x128xf32>
    %291 = arith.negf %290 : vector<8x128xf32>
    %292 = math.exp %291 : vector<8x128xf32>
    %cst_91 = arith.constant 1.000000e+00 : f32
    %293 = vector.broadcast %cst_91 : f32 to vector<8x128xf32>
    %294 = arith.addf %293, %292 : vector<8x128xf32>
    %295 = arith.divf %293, %294 : vector<8x128xf32>
    %296 = vector.extract_strided_slice %283 {offsets = [0, 256], sizes = [8, 128], strides = [1, 1]} : vector<8x512xf32> to vector<8x128xf32>
    %297 = math.tanh %296 : vector<8x128xf32>
    %298 = vector.extract_strided_slice %283 {offsets = [0, 384], sizes = [8, 128], strides = [1, 1]} : vector<8x512xf32> to vector<8x128xf32>
    %299 = arith.negf %298 : vector<8x128xf32>
    %300 = math.exp %299 : vector<8x128xf32>
    %cst_92 = arith.constant 1.000000e+00 : f32
    %301 = vector.broadcast %cst_92 : f32 to vector<8x128xf32>
    %302 = arith.addf %301, %300 : vector<8x128xf32>
    %303 = arith.divf %301, %302 : vector<8x128xf32>
    %304 = arith.mulf %295, %221 : vector<8x128xf32>
    %305 = arith.mulf %289, %297 : vector<8x128xf32>
    %306 = arith.addf %304, %305 : vector<8x128xf32>
    %307 = math.tanh %306 : vector<8x128xf32>
    %308 = arith.mulf %303, %307 : vector<8x128xf32>
    %cst_93 = arith.constant 0.000000e+00 : f32
    %309 = vector.shape_cast %277 : vector<8x1xi1> to vector<8x1xi1>
    %310 = vector.broadcast %309 : vector<8x1xi1> to vector<8x128xi1>
    %311 = vector.broadcast %cst_93 : f32 to vector<8x128xf32>
    %312 = arith.select %310, %308, %311 : vector<8x128xi1>, vector<8x128xf32>
    %313 = arith.index_cast %222 : i32 to index
    %c0_94 = arith.constant 0 : index
    %c128_95 = arith.constant 128 : index
    %314 = vector.load %arg13[%313, %c0_94, %c128_95] : memref<8x8x256xf32, #tpu.memory_space<vmem>>, vector<1x8x128xf32>
    %315 = vector.shape_cast %314 : vector<1x8x128xf32> to vector<8x128xf32>
    %316 = vector.shape_cast %312 : vector<8x128xf32> to vector<1x8x128xf32>
    tpu.vector_store %arg13[%313, %c0_94, %c128_95], %316 {strides = array<i32>} : memref<8x8x256xf32, #tpu.memory_space<vmem>>, vector<1x8x128xf32>,
    %317 = vector.shape_cast %277 : vector<8x1xi1> to vector<8x1xi1>
    %318 = vector.broadcast %317 : vector<8x1xi1> to vector<8x128xi1>
    %319 = arith.select %318, %308, %218 : vector<8x128xi1>, vector<8x128xf32>
    %320 = vector.shape_cast %277 : vector<8x1xi1> to vector<8x1xi1>
    %321 = vector.broadcast %320 : vector<8x1xi1> to vector<8x128xi1>
    %322 = arith.select %321, %306, %221 : vector<8x128xi1>, vector<8x128xf32>
    %c3_i32 = arith.constant 3 : i32
    %c7_i32_96 = arith.constant 7 : i32
    %323 = arith.subi %c7_i32_96, %c3_i32 : i32
    %324 = arith.index_cast %c3_i32 : i32 to index
    %c0_97 = arith.constant 0 : index
    %c0_98 = arith.constant 0 : index
    %325 = vector.load %arg8[%324, %c0_97, %c0_98] : memref<8x8x1xi32, #tpu.memory_space<vmem>>, vector<1x8x1xi32>
    %326 = vector.shape_cast %325 : vector<1x8x1xi32> to vector<8x1xi32>
    %c0_i32_99 = arith.constant 0 : i32
    %327 = vector.broadcast %c0_i32_99 : i32 to vector<8x1xi32>
    %328 = arith.cmpi ne, %326, %327 : vector<8x1xi32>
    %329 = arith.index_cast %c3_i32 : i32 to index
    %c0_100 = arith.constant 0 : index
    %c0_101 = arith.constant 0 : index
    %330 = vector.load %arg12[%329, %c0_100, %c0_101] : memref<8x8x1024xf32, #tpu.memory_space<vmem>>, vector<1x8x512xf32>
    %331 = vector.shape_cast %330 : vector<1x8x512xf32> to vector<8x512xf32>
    %332 = arith.truncf %269 : vector<8x128xf32> to vector<8x128xbf16>
    %cst_102 = arith.constant dense<0.000000e+00> : vector<8x512xf32>
    %333 = tpu.matmul %332, %10, %cst_102 {dimension_numbers = #tpu.dot_dimension_numbers<[1], [0], [0], [1], [0, 0, 1, 1], [], []>} : vector<8x128xbf16>, vector<128x512xbf16>, vector<8x512xf32> -> vector<8x512xf32>
    %334 = arith.addf %331, %333 : vector<8x512xf32>
    %335 = vector.extract_strided_slice %334 {offsets = [0, 0], sizes = [8, 128], strides = [1, 1]} : vector<8x512xf32> to vector<8x128xf32>
    %336 = arith.negf %335 : vector<8x128xf32>
    %337 = math.exp %336 : vector<8x128xf32>
    %cst_103 = arith.constant 1.000000e+00 : f32
    %338 = vector.broadcast %cst_103 : f32 to vector<8x128xf32>
    %339 = arith.addf %338, %337 : vector<8x128xf32>
    %340 = arith.divf %338, %339 : vector<8x128xf32>
    %341 = vector.extract_strided_slice %334 {offsets = [0, 128], sizes = [8, 128], strides = [1, 1]} : vector<8x512xf32> to vector<8x128xf32>
    %342 = arith.negf %341 : vector<8x128xf32>
    %343 = math.exp %342 : vector<8x128xf32>
    %cst_104 = arith.constant 1.000000e+00 : f32
    %344 = vector.broadcast %cst_104 : f32 to vector<8x128xf32>
    %345 = arith.addf %344, %343 : vector<8x128xf32>
    %346 = arith.divf %344, %345 : vector<8x128xf32>
    %347 = vector.extract_strided_slice %334 {offsets = [0, 256], sizes = [8, 128], strides = [1, 1]} : vector<8x512xf32> to vector<8x128xf32>
    %348 = math.tanh %347 : vector<8x128xf32>
    %349 = vector.extract_strided_slice %334 {offsets = [0, 384], sizes = [8, 128], strides = [1, 1]} : vector<8x512xf32> to vector<8x128xf32>
    %350 = arith.negf %349 : vector<8x128xf32>
    %351 = math.exp %350 : vector<8x128xf32>
    %cst_105 = arith.constant 1.000000e+00 : f32
    %352 = vector.broadcast %cst_105 : f32 to vector<8x128xf32>
    %353 = arith.addf %352, %351 : vector<8x128xf32>
    %354 = arith.divf %352, %353 : vector<8x128xf32>
    %355 = arith.mulf %346, %272 : vector<8x128xf32>
    %356 = arith.mulf %340, %348 : vector<8x128xf32>
    %357 = arith.addf %355, %356 : vector<8x128xf32>
    %358 = math.tanh %357 : vector<8x128xf32>
    %359 = arith.mulf %354, %358 : vector<8x128xf32>
    %cst_106 = arith.constant 0.000000e+00 : f32
    %360 = vector.shape_cast %328 : vector<8x1xi1> to vector<8x1xi1>
    %361 = vector.broadcast %360 : vector<8x1xi1> to vector<8x128xi1>
    %362 = vector.broadcast %cst_106 : f32 to vector<8x128xf32>
    %363 = arith.select %361, %359, %362 : vector<8x128xi1>, vector<8x128xf32>
    %364 = arith.index_cast %c3_i32 : i32 to index
    %c0_107 = arith.constant 0 : index
    %c0_108 = arith.constant 0 : index
    %365 = vector.load %arg13[%364, %c0_107, %c0_108] : memref<8x8x256xf32, #tpu.memory_space<vmem>>, vector<1x8x128xf32>
    %366 = vector.shape_cast %365 : vector<1x8x128xf32> to vector<8x128xf32>
    %367 = vector.shape_cast %363 : vector<8x128xf32> to vector<1x8x128xf32>
    tpu.vector_store %arg13[%364, %c0_107, %c0_108], %367 {strides = array<i32>} : memref<8x8x256xf32, #tpu.memory_space<vmem>>, vector<1x8x128xf32>,
    %368 = vector.shape_cast %328 : vector<8x1xi1> to vector<8x1xi1>
    %369 = vector.broadcast %368 : vector<8x1xi1> to vector<8x128xi1>
    %370 = arith.select %369, %359, %269 : vector<8x128xi1>, vector<8x128xf32>
    %371 = vector.shape_cast %328 : vector<8x1xi1> to vector<8x1xi1>
    %372 = vector.broadcast %371 : vector<8x1xi1> to vector<8x128xi1>
    %373 = arith.select %372, %357, %272 : vector<8x128xi1>, vector<8x128xf32>
    %374 = arith.index_cast %323 : i32 to index
    %c0_109 = arith.constant 0 : index
    %c0_110 = arith.constant 0 : index
    %375 = vector.load %arg8[%374, %c0_109, %c0_110] : memref<8x8x1xi32, #tpu.memory_space<vmem>>, vector<1x8x1xi32>
    %376 = vector.shape_cast %375 : vector<1x8x1xi32> to vector<8x1xi32>
    %c0_i32_111 = arith.constant 0 : i32
    %377 = vector.broadcast %c0_i32_111 : i32 to vector<8x1xi32>
    %378 = arith.cmpi ne, %376, %377 : vector<8x1xi32>
    %379 = arith.index_cast %323 : i32 to index
    %c0_112 = arith.constant 0 : index
    %c512_113 = arith.constant 512 : index
    %380 = vector.load %arg12[%379, %c0_112, %c512_113] : memref<8x8x1024xf32, #tpu.memory_space<vmem>>, vector<1x8x512xf32>
    %381 = vector.shape_cast %380 : vector<1x8x512xf32> to vector<8x512xf32>
    %382 = arith.truncf %319 : vector<8x128xf32> to vector<8x128xbf16>
    %cst_114 = arith.constant dense<0.000000e+00> : vector<8x512xf32>
    %383 = tpu.matmul %382, %11, %cst_114 {dimension_numbers = #tpu.dot_dimension_numbers<[1], [0], [0], [1], [0, 0, 1, 1], [], []>} : vector<8x128xbf16>, vector<128x512xbf16>, vector<8x512xf32> -> vector<8x512xf32>
    %384 = arith.addf %381, %383 : vector<8x512xf32>
    %385 = vector.extract_strided_slice %384 {offsets = [0, 0], sizes = [8, 128], strides = [1, 1]} : vector<8x512xf32> to vector<8x128xf32>
    %386 = arith.negf %385 : vector<8x128xf32>
    %387 = math.exp %386 : vector<8x128xf32>
    %cst_115 = arith.constant 1.000000e+00 : f32
    %388 = vector.broadcast %cst_115 : f32 to vector<8x128xf32>
    %389 = arith.addf %388, %387 : vector<8x128xf32>
    %390 = arith.divf %388, %389 : vector<8x128xf32>
    %391 = vector.extract_strided_slice %384 {offsets = [0, 128], sizes = [8, 128], strides = [1, 1]} : vector<8x512xf32> to vector<8x128xf32>
    %392 = arith.negf %391 : vector<8x128xf32>
    %393 = math.exp %392 : vector<8x128xf32>
    %cst_116 = arith.constant 1.000000e+00 : f32
    %394 = vector.broadcast %cst_116 : f32 to vector<8x128xf32>
    %395 = arith.addf %394, %393 : vector<8x128xf32>
    %396 = arith.divf %394, %395 : vector<8x128xf32>
    %397 = vector.extract_strided_slice %384 {offsets = [0, 256], sizes = [8, 128], strides = [1, 1]} : vector<8x512xf32> to vector<8x128xf32>
    %398 = math.tanh %397 : vector<8x128xf32>
    %399 = vector.extract_strided_slice %384 {offsets = [0, 384], sizes = [8, 128], strides = [1, 1]} : vector<8x512xf32> to vector<8x128xf32>
    %400 = arith.negf %399 : vector<8x128xf32>
    %401 = math.exp %400 : vector<8x128xf32>
    %cst_117 = arith.constant 1.000000e+00 : f32
    %402 = vector.broadcast %cst_117 : f32 to vector<8x128xf32>
    %403 = arith.addf %402, %401 : vector<8x128xf32>
    %404 = arith.divf %402, %403 : vector<8x128xf32>
    %405 = arith.mulf %396, %322 : vector<8x128xf32>
    %406 = arith.mulf %390, %398 : vector<8x128xf32>
    %407 = arith.addf %405, %406 : vector<8x128xf32>
    %408 = math.tanh %407 : vector<8x128xf32>
    %409 = arith.mulf %404, %408 : vector<8x128xf32>
    %cst_118 = arith.constant 0.000000e+00 : f32
    %410 = vector.shape_cast %378 : vector<8x1xi1> to vector<8x1xi1>
    %411 = vector.broadcast %410 : vector<8x1xi1> to vector<8x128xi1>
    %412 = vector.broadcast %cst_118 : f32 to vector<8x128xf32>
    %413 = arith.select %411, %409, %412 : vector<8x128xi1>, vector<8x128xf32>
    %414 = arith.index_cast %323 : i32 to index
    %c0_119 = arith.constant 0 : index
    %c128_120 = arith.constant 128 : index
    %415 = vector.load %arg13[%414, %c0_119, %c128_120] : memref<8x8x256xf32, #tpu.memory_space<vmem>>, vector<1x8x128xf32>
    %416 = vector.shape_cast %415 : vector<1x8x128xf32> to vector<8x128xf32>
    %417 = vector.shape_cast %413 : vector<8x128xf32> to vector<1x8x128xf32>
    tpu.vector_store %arg13[%414, %c0_119, %c128_120], %417 {strides = array<i32>} : memref<8x8x256xf32, #tpu.memory_space<vmem>>, vector<1x8x128xf32>,
    %418 = vector.shape_cast %378 : vector<8x1xi1> to vector<8x1xi1>
    %419 = vector.broadcast %418 : vector<8x1xi1> to vector<8x128xi1>
    %420 = arith.select %419, %409, %319 : vector<8x128xi1>, vector<8x128xf32>
    %421 = vector.shape_cast %378 : vector<8x1xi1> to vector<8x1xi1>
    %422 = vector.broadcast %421 : vector<8x1xi1> to vector<8x128xi1>
    %423 = arith.select %422, %407, %322 : vector<8x128xi1>, vector<8x128xf32>
    %c4_i32 = arith.constant 4 : i32
    %c7_i32_121 = arith.constant 7 : i32
    %424 = arith.subi %c7_i32_121, %c4_i32 : i32
    %425 = arith.index_cast %c4_i32 : i32 to index
    %c0_122 = arith.constant 0 : index
    %c0_123 = arith.constant 0 : index
    %426 = vector.load %arg8[%425, %c0_122, %c0_123] : memref<8x8x1xi32, #tpu.memory_space<vmem>>, vector<1x8x1xi32>
    %427 = vector.shape_cast %426 : vector<1x8x1xi32> to vector<8x1xi32>
    %c0_i32_124 = arith.constant 0 : i32
    %428 = vector.broadcast %c0_i32_124 : i32 to vector<8x1xi32>
    %429 = arith.cmpi ne, %427, %428 : vector<8x1xi32>
    %430 = arith.index_cast %c4_i32 : i32 to index
    %c0_125 = arith.constant 0 : index
    %c0_126 = arith.constant 0 : index
    %431 = vector.load %arg12[%430, %c0_125, %c0_126] : memref<8x8x1024xf32, #tpu.memory_space<vmem>>, vector<1x8x512xf32>
    %432 = vector.shape_cast %431 : vector<1x8x512xf32> to vector<8x512xf32>
    %433 = arith.truncf %370 : vector<8x128xf32> to vector<8x128xbf16>
    %cst_127 = arith.constant dense<0.000000e+00> : vector<8x512xf32>
    %434 = tpu.matmul %433, %10, %cst_127 {dimension_numbers = #tpu.dot_dimension_numbers<[1], [0], [0], [1], [0, 0, 1, 1], [], []>} : vector<8x128xbf16>, vector<128x512xbf16>, vector<8x512xf32> -> vector<8x512xf32>
    %435 = arith.addf %432, %434 : vector<8x512xf32>
    %436 = vector.extract_strided_slice %435 {offsets = [0, 0], sizes = [8, 128], strides = [1, 1]} : vector<8x512xf32> to vector<8x128xf32>
    %437 = arith.negf %436 : vector<8x128xf32>
    %438 = math.exp %437 : vector<8x128xf32>
    %cst_128 = arith.constant 1.000000e+00 : f32
    %439 = vector.broadcast %cst_128 : f32 to vector<8x128xf32>
    %440 = arith.addf %439, %438 : vector<8x128xf32>
    %441 = arith.divf %439, %440 : vector<8x128xf32>
    %442 = vector.extract_strided_slice %435 {offsets = [0, 128], sizes = [8, 128], strides = [1, 1]} : vector<8x512xf32> to vector<8x128xf32>
    %443 = arith.negf %442 : vector<8x128xf32>
    %444 = math.exp %443 : vector<8x128xf32>
    %cst_129 = arith.constant 1.000000e+00 : f32
    %445 = vector.broadcast %cst_129 : f32 to vector<8x128xf32>
    %446 = arith.addf %445, %444 : vector<8x128xf32>
    %447 = arith.divf %445, %446 : vector<8x128xf32>
    %448 = vector.extract_strided_slice %435 {offsets = [0, 256], sizes = [8, 128], strides = [1, 1]} : vector<8x512xf32> to vector<8x128xf32>
    %449 = math.tanh %448 : vector<8x128xf32>
    %450 = vector.extract_strided_slice %435 {offsets = [0, 384], sizes = [8, 128], strides = [1, 1]} : vector<8x512xf32> to vector<8x128xf32>
    %451 = arith.negf %450 : vector<8x128xf32>
    %452 = math.exp %451 : vector<8x128xf32>
    %cst_130 = arith.constant 1.000000e+00 : f32
    %453 = vector.broadcast %cst_130 : f32 to vector<8x128xf32>
    %454 = arith.addf %453, %452 : vector<8x128xf32>
    %455 = arith.divf %453, %454 : vector<8x128xf32>
    %456 = arith.mulf %447, %373 : vector<8x128xf32>
    %457 = arith.mulf %441, %449 : vector<8x128xf32>
    %458 = arith.addf %456, %457 : vector<8x128xf32>
    %459 = math.tanh %458 : vector<8x128xf32>
    %460 = arith.mulf %455, %459 : vector<8x128xf32>
    %cst_131 = arith.constant 0.000000e+00 : f32
    %461 = vector.shape_cast %429 : vector<8x1xi1> to vector<8x1xi1>
    %462 = vector.broadcast %461 : vector<8x1xi1> to vector<8x128xi1>
    %463 = vector.broadcast %cst_131 : f32 to vector<8x128xf32>
    %464 = arith.select %462, %460, %463 : vector<8x128xi1>, vector<8x128xf32>
    %465 = arith.index_cast %c4_i32 : i32 to index
    %c0_132 = arith.constant 0 : index
    %c0_133 = arith.constant 0 : index
    %466 = vector.load %arg13[%465, %c0_132, %c0_133] : memref<8x8x256xf32, #tpu.memory_space<vmem>>, vector<1x8x128xf32>
    %467 = vector.shape_cast %466 : vector<1x8x128xf32> to vector<8x128xf32>
    %468 = vector.shape_cast %464 : vector<8x128xf32> to vector<1x8x128xf32>
    tpu.vector_store %arg13[%465, %c0_132, %c0_133], %468 {strides = array<i32>} : memref<8x8x256xf32, #tpu.memory_space<vmem>>, vector<1x8x128xf32>,
    %469 = vector.shape_cast %429 : vector<8x1xi1> to vector<8x1xi1>
    %470 = vector.broadcast %469 : vector<8x1xi1> to vector<8x128xi1>
    %471 = arith.select %470, %460, %370 : vector<8x128xi1>, vector<8x128xf32>
    %472 = vector.shape_cast %429 : vector<8x1xi1> to vector<8x1xi1>
    %473 = vector.broadcast %472 : vector<8x1xi1> to vector<8x128xi1>
    %474 = arith.select %473, %458, %373 : vector<8x128xi1>, vector<8x128xf32>
    %475 = arith.index_cast %424 : i32 to index
    %c0_134 = arith.constant 0 : index
    %c0_135 = arith.constant 0 : index
    %476 = vector.load %arg8[%475, %c0_134, %c0_135] : memref<8x8x1xi32, #tpu.memory_space<vmem>>, vector<1x8x1xi32>
    %477 = vector.shape_cast %476 : vector<1x8x1xi32> to vector<8x1xi32>
    %c0_i32_136 = arith.constant 0 : i32
    %478 = vector.broadcast %c0_i32_136 : i32 to vector<8x1xi32>
    %479 = arith.cmpi ne, %477, %478 : vector<8x1xi32>
    %480 = arith.index_cast %424 : i32 to index
    %c0_137 = arith.constant 0 : index
    %c512_138 = arith.constant 512 : index
    %481 = vector.load %arg12[%480, %c0_137, %c512_138] : memref<8x8x1024xf32, #tpu.memory_space<vmem>>, vector<1x8x512xf32>
    %482 = vector.shape_cast %481 : vector<1x8x512xf32> to vector<8x512xf32>
    %483 = arith.truncf %420 : vector<8x128xf32> to vector<8x128xbf16>
    %cst_139 = arith.constant dense<0.000000e+00> : vector<8x512xf32>
    %484 = tpu.matmul %483, %11, %cst_139 {dimension_numbers = #tpu.dot_dimension_numbers<[1], [0], [0], [1], [0, 0, 1, 1], [], []>} : vector<8x128xbf16>, vector<128x512xbf16>, vector<8x512xf32> -> vector<8x512xf32>
    %485 = arith.addf %482, %484 : vector<8x512xf32>
    %486 = vector.extract_strided_slice %485 {offsets = [0, 0], sizes = [8, 128], strides = [1, 1]} : vector<8x512xf32> to vector<8x128xf32>
    %487 = arith.negf %486 : vector<8x128xf32>
    %488 = math.exp %487 : vector<8x128xf32>
    %cst_140 = arith.constant 1.000000e+00 : f32
    %489 = vector.broadcast %cst_140 : f32 to vector<8x128xf32>
    %490 = arith.addf %489, %488 : vector<8x128xf32>
    %491 = arith.divf %489, %490 : vector<8x128xf32>
    %492 = vector.extract_strided_slice %485 {offsets = [0, 128], sizes = [8, 128], strides = [1, 1]} : vector<8x512xf32> to vector<8x128xf32>
    %493 = arith.negf %492 : vector<8x128xf32>
    %494 = math.exp %493 : vector<8x128xf32>
    %cst_141 = arith.constant 1.000000e+00 : f32
    %495 = vector.broadcast %cst_141 : f32 to vector<8x128xf32>
    %496 = arith.addf %495, %494 : vector<8x128xf32>
    %497 = arith.divf %495, %496 : vector<8x128xf32>
    %498 = vector.extract_strided_slice %485 {offsets = [0, 256], sizes = [8, 128], strides = [1, 1]} : vector<8x512xf32> to vector<8x128xf32>
    %499 = math.tanh %498 : vector<8x128xf32>
    %500 = vector.extract_strided_slice %485 {offsets = [0, 384], sizes = [8, 128], strides = [1, 1]} : vector<8x512xf32> to vector<8x128xf32>
    %501 = arith.negf %500 : vector<8x128xf32>
    %502 = math.exp %501 : vector<8x128xf32>
    %cst_142 = arith.constant 1.000000e+00 : f32
    %503 = vector.broadcast %cst_142 : f32 to vector<8x128xf32>
    %504 = arith.addf %503, %502 : vector<8x128xf32>
    %505 = arith.divf %503, %504 : vector<8x128xf32>
    %506 = arith.mulf %497, %423 : vector<8x128xf32>
    %507 = arith.mulf %491, %499 : vector<8x128xf32>
    %508 = arith.addf %506, %507 : vector<8x128xf32>
    %509 = math.tanh %508 : vector<8x128xf32>
    %510 = arith.mulf %505, %509 : vector<8x128xf32>
    %cst_143 = arith.constant 0.000000e+00 : f32
    %511 = vector.shape_cast %479 : vector<8x1xi1> to vector<8x1xi1>
    %512 = vector.broadcast %511 : vector<8x1xi1> to vector<8x128xi1>
    %513 = vector.broadcast %cst_143 : f32 to vector<8x128xf32>
    %514 = arith.select %512, %510, %513 : vector<8x128xi1>, vector<8x128xf32>
    %515 = arith.index_cast %424 : i32 to index
    %c0_144 = arith.constant 0 : index
    %c128_145 = arith.constant 128 : index
    %516 = vector.load %arg13[%515, %c0_144, %c128_145] : memref<8x8x256xf32, #tpu.memory_space<vmem>>, vector<1x8x128xf32>
    %517 = vector.shape_cast %516 : vector<1x8x128xf32> to vector<8x128xf32>
    %518 = vector.shape_cast %514 : vector<8x128xf32> to vector<1x8x128xf32>
    tpu.vector_store %arg13[%515, %c0_144, %c128_145], %518 {strides = array<i32>} : memref<8x8x256xf32, #tpu.memory_space<vmem>>, vector<1x8x128xf32>,
    %519 = vector.shape_cast %479 : vector<8x1xi1> to vector<8x1xi1>
    %520 = vector.broadcast %519 : vector<8x1xi1> to vector<8x128xi1>
    %521 = arith.select %520, %510, %420 : vector<8x128xi1>, vector<8x128xf32>
    %522 = vector.shape_cast %479 : vector<8x1xi1> to vector<8x1xi1>
    %523 = vector.broadcast %522 : vector<8x1xi1> to vector<8x128xi1>
    %524 = arith.select %523, %508, %423 : vector<8x128xi1>, vector<8x128xf32>
    %c5_i32 = arith.constant 5 : i32
    %c7_i32_146 = arith.constant 7 : i32
    %525 = arith.subi %c7_i32_146, %c5_i32 : i32
    %526 = arith.index_cast %c5_i32 : i32 to index
    %c0_147 = arith.constant 0 : index
    %c0_148 = arith.constant 0 : index
    %527 = vector.load %arg8[%526, %c0_147, %c0_148] : memref<8x8x1xi32, #tpu.memory_space<vmem>>, vector<1x8x1xi32>
    %528 = vector.shape_cast %527 : vector<1x8x1xi32> to vector<8x1xi32>
    %c0_i32_149 = arith.constant 0 : i32
    %529 = vector.broadcast %c0_i32_149 : i32 to vector<8x1xi32>
    %530 = arith.cmpi ne, %528, %529 : vector<8x1xi32>
    %531 = arith.index_cast %c5_i32 : i32 to index
    %c0_150 = arith.constant 0 : index
    %c0_151 = arith.constant 0 : index
    %532 = vector.load %arg12[%531, %c0_150, %c0_151] : memref<8x8x1024xf32, #tpu.memory_space<vmem>>, vector<1x8x512xf32>
    %533 = vector.shape_cast %532 : vector<1x8x512xf32> to vector<8x512xf32>
    %534 = arith.truncf %471 : vector<8x128xf32> to vector<8x128xbf16>
    %cst_152 = arith.constant dense<0.000000e+00> : vector<8x512xf32>
    %535 = tpu.matmul %534, %10, %cst_152 {dimension_numbers = #tpu.dot_dimension_numbers<[1], [0], [0], [1], [0, 0, 1, 1], [], []>} : vector<8x128xbf16>, vector<128x512xbf16>, vector<8x512xf32> -> vector<8x512xf32>
    %536 = arith.addf %533, %535 : vector<8x512xf32>
    %537 = vector.extract_strided_slice %536 {offsets = [0, 0], sizes = [8, 128], strides = [1, 1]} : vector<8x512xf32> to vector<8x128xf32>
    %538 = arith.negf %537 : vector<8x128xf32>
    %539 = math.exp %538 : vector<8x128xf32>
    %cst_153 = arith.constant 1.000000e+00 : f32
    %540 = vector.broadcast %cst_153 : f32 to vector<8x128xf32>
    %541 = arith.addf %540, %539 : vector<8x128xf32>
    %542 = arith.divf %540, %541 : vector<8x128xf32>
    %543 = vector.extract_strided_slice %536 {offsets = [0, 128], sizes = [8, 128], strides = [1, 1]} : vector<8x512xf32> to vector<8x128xf32>
    %544 = arith.negf %543 : vector<8x128xf32>
    %545 = math.exp %544 : vector<8x128xf32>
    %cst_154 = arith.constant 1.000000e+00 : f32
    %546 = vector.broadcast %cst_154 : f32 to vector<8x128xf32>
    %547 = arith.addf %546, %545 : vector<8x128xf32>
    %548 = arith.divf %546, %547 : vector<8x128xf32>
    %549 = vector.extract_strided_slice %536 {offsets = [0, 256], sizes = [8, 128], strides = [1, 1]} : vector<8x512xf32> to vector<8x128xf32>
    %550 = math.tanh %549 : vector<8x128xf32>
    %551 = vector.extract_strided_slice %536 {offsets = [0, 384], sizes = [8, 128], strides = [1, 1]} : vector<8x512xf32> to vector<8x128xf32>
    %552 = arith.negf %551 : vector<8x128xf32>
    %553 = math.exp %552 : vector<8x128xf32>
    %cst_155 = arith.constant 1.000000e+00 : f32
    %554 = vector.broadcast %cst_155 : f32 to vector<8x128xf32>
    %555 = arith.addf %554, %553 : vector<8x128xf32>
    %556 = arith.divf %554, %555 : vector<8x128xf32>
    %557 = arith.mulf %548, %474 : vector<8x128xf32>
    %558 = arith.mulf %542, %550 : vector<8x128xf32>
    %559 = arith.addf %557, %558 : vector<8x128xf32>
    %560 = math.tanh %559 : vector<8x128xf32>
    %561 = arith.mulf %556, %560 : vector<8x128xf32>
    %cst_156 = arith.constant 0.000000e+00 : f32
    %562 = vector.shape_cast %530 : vector<8x1xi1> to vector<8x1xi1>
    %563 = vector.broadcast %562 : vector<8x1xi1> to vector<8x128xi1>
    %564 = vector.broadcast %cst_156 : f32 to vector<8x128xf32>
    %565 = arith.select %563, %561, %564 : vector<8x128xi1>, vector<8x128xf32>
    %566 = arith.index_cast %c5_i32 : i32 to index
    %c0_157 = arith.constant 0 : index
    %c0_158 = arith.constant 0 : index
    %567 = vector.load %arg13[%566, %c0_157, %c0_158] : memref<8x8x256xf32, #tpu.memory_space<vmem>>, vector<1x8x128xf32>
    %568 = vector.shape_cast %567 : vector<1x8x128xf32> to vector<8x128xf32>
    %569 = vector.shape_cast %565 : vector<8x128xf32> to vector<1x8x128xf32>
    tpu.vector_store %arg13[%566, %c0_157, %c0_158], %569 {strides = array<i32>} : memref<8x8x256xf32, #tpu.memory_space<vmem>>, vector<1x8x128xf32>,
    %570 = vector.shape_cast %530 : vector<8x1xi1> to vector<8x1xi1>
    %571 = vector.broadcast %570 : vector<8x1xi1> to vector<8x128xi1>
    %572 = arith.select %571, %561, %471 : vector<8x128xi1>, vector<8x128xf32>
    %573 = vector.shape_cast %530 : vector<8x1xi1> to vector<8x1xi1>
    %574 = vector.broadcast %573 : vector<8x1xi1> to vector<8x128xi1>
    %575 = arith.select %574, %559, %474 : vector<8x128xi1>, vector<8x128xf32>
    %576 = arith.index_cast %525 : i32 to index
    %c0_159 = arith.constant 0 : index
    %c0_160 = arith.constant 0 : index
    %577 = vector.load %arg8[%576, %c0_159, %c0_160] : memref<8x8x1xi32, #tpu.memory_space<vmem>>, vector<1x8x1xi32>
    %578 = vector.shape_cast %577 : vector<1x8x1xi32> to vector<8x1xi32>
    %c0_i32_161 = arith.constant 0 : i32
    %579 = vector.broadcast %c0_i32_161 : i32 to vector<8x1xi32>
    %580 = arith.cmpi ne, %578, %579 : vector<8x1xi32>
    %581 = arith.index_cast %525 : i32 to index
    %c0_162 = arith.constant 0 : index
    %c512_163 = arith.constant 512 : index
    %582 = vector.load %arg12[%581, %c0_162, %c512_163] : memref<8x8x1024xf32, #tpu.memory_space<vmem>>, vector<1x8x512xf32>
    %583 = vector.shape_cast %582 : vector<1x8x512xf32> to vector<8x512xf32>
    %584 = arith.truncf %521 : vector<8x128xf32> to vector<8x128xbf16>
    %cst_164 = arith.constant dense<0.000000e+00> : vector<8x512xf32>
    %585 = tpu.matmul %584, %11, %cst_164 {dimension_numbers = #tpu.dot_dimension_numbers<[1], [0], [0], [1], [0, 0, 1, 1], [], []>} : vector<8x128xbf16>, vector<128x512xbf16>, vector<8x512xf32> -> vector<8x512xf32>
    %586 = arith.addf %583, %585 : vector<8x512xf32>
    %587 = vector.extract_strided_slice %586 {offsets = [0, 0], sizes = [8, 128], strides = [1, 1]} : vector<8x512xf32> to vector<8x128xf32>
    %588 = arith.negf %587 : vector<8x128xf32>
    %589 = math.exp %588 : vector<8x128xf32>
    %cst_165 = arith.constant 1.000000e+00 : f32
    %590 = vector.broadcast %cst_165 : f32 to vector<8x128xf32>
    %591 = arith.addf %590, %589 : vector<8x128xf32>
    %592 = arith.divf %590, %591 : vector<8x128xf32>
    %593 = vector.extract_strided_slice %586 {offsets = [0, 128], sizes = [8, 128], strides = [1, 1]} : vector<8x512xf32> to vector<8x128xf32>
    %594 = arith.negf %593 : vector<8x128xf32>
    %595 = math.exp %594 : vector<8x128xf32>
    %cst_166 = arith.constant 1.000000e+00 : f32
    %596 = vector.broadcast %cst_166 : f32 to vector<8x128xf32>
    %597 = arith.addf %596, %595 : vector<8x128xf32>
    %598 = arith.divf %596, %597 : vector<8x128xf32>
    %599 = vector.extract_strided_slice %586 {offsets = [0, 256], sizes = [8, 128], strides = [1, 1]} : vector<8x512xf32> to vector<8x128xf32>
    %600 = math.tanh %599 : vector<8x128xf32>
    %601 = vector.extract_strided_slice %586 {offsets = [0, 384], sizes = [8, 128], strides = [1, 1]} : vector<8x512xf32> to vector<8x128xf32>
    %602 = arith.negf %601 : vector<8x128xf32>
    %603 = math.exp %602 : vector<8x128xf32>
    %cst_167 = arith.constant 1.000000e+00 : f32
    %604 = vector.broadcast %cst_167 : f32 to vector<8x128xf32>
    %605 = arith.addf %604, %603 : vector<8x128xf32>
    %606 = arith.divf %604, %605 : vector<8x128xf32>
    %607 = arith.mulf %598, %524 : vector<8x128xf32>
    %608 = arith.mulf %592, %600 : vector<8x128xf32>
    %609 = arith.addf %607, %608 : vector<8x128xf32>
    %610 = math.tanh %609 : vector<8x128xf32>
    %611 = arith.mulf %606, %610 : vector<8x128xf32>
    %cst_168 = arith.constant 0.000000e+00 : f32
    %612 = vector.shape_cast %580 : vector<8x1xi1> to vector<8x1xi1>
    %613 = vector.broadcast %612 : vector<8x1xi1> to vector<8x128xi1>
    %614 = vector.broadcast %cst_168 : f32 to vector<8x128xf32>
    %615 = arith.select %613, %611, %614 : vector<8x128xi1>, vector<8x128xf32>
    %616 = arith.index_cast %525 : i32 to index
    %c0_169 = arith.constant 0 : index
    %c128_170 = arith.constant 128 : index
    %617 = vector.load %arg13[%616, %c0_169, %c128_170] : memref<8x8x256xf32, #tpu.memory_space<vmem>>, vector<1x8x128xf32>
    %618 = vector.shape_cast %617 : vector<1x8x128xf32> to vector<8x128xf32>
    %619 = vector.shape_cast %615 : vector<8x128xf32> to vector<1x8x128xf32>
    tpu.vector_store %arg13[%616, %c0_169, %c128_170], %619 {strides = array<i32>} : memref<8x8x256xf32, #tpu.memory_space<vmem>>, vector<1x8x128xf32>,
    %620 = vector.shape_cast %580 : vector<8x1xi1> to vector<8x1xi1>
    %621 = vector.broadcast %620 : vector<8x1xi1> to vector<8x128xi1>
    %622 = arith.select %621, %611, %521 : vector<8x128xi1>, vector<8x128xf32>
    %623 = vector.shape_cast %580 : vector<8x1xi1> to vector<8x1xi1>
    %624 = vector.broadcast %623 : vector<8x1xi1> to vector<8x128xi1>
    %625 = arith.select %624, %609, %524 : vector<8x128xi1>, vector<8x128xf32>
    %c6_i32 = arith.constant 6 : i32
    %c7_i32_171 = arith.constant 7 : i32
    %626 = arith.subi %c7_i32_171, %c6_i32 : i32
    %627 = arith.index_cast %c6_i32 : i32 to index
    %c0_172 = arith.constant 0 : index
    %c0_173 = arith.constant 0 : index
    %628 = vector.load %arg8[%627, %c0_172, %c0_173] : memref<8x8x1xi32, #tpu.memory_space<vmem>>, vector<1x8x1xi32>
    %629 = vector.shape_cast %628 : vector<1x8x1xi32> to vector<8x1xi32>
    %c0_i32_174 = arith.constant 0 : i32
    %630 = vector.broadcast %c0_i32_174 : i32 to vector<8x1xi32>
    %631 = arith.cmpi ne, %629, %630 : vector<8x1xi32>
    %632 = arith.index_cast %c6_i32 : i32 to index
    %c0_175 = arith.constant 0 : index
    %c0_176 = arith.constant 0 : index
    %633 = vector.load %arg12[%632, %c0_175, %c0_176] : memref<8x8x1024xf32, #tpu.memory_space<vmem>>, vector<1x8x512xf32>
    %634 = vector.shape_cast %633 : vector<1x8x512xf32> to vector<8x512xf32>
    %635 = arith.truncf %572 : vector<8x128xf32> to vector<8x128xbf16>
    %cst_177 = arith.constant dense<0.000000e+00> : vector<8x512xf32>
    %636 = tpu.matmul %635, %10, %cst_177 {dimension_numbers = #tpu.dot_dimension_numbers<[1], [0], [0], [1], [0, 0, 1, 1], [], []>} : vector<8x128xbf16>, vector<128x512xbf16>, vector<8x512xf32> -> vector<8x512xf32>
    %637 = arith.addf %634, %636 : vector<8x512xf32>
    %638 = vector.extract_strided_slice %637 {offsets = [0, 0], sizes = [8, 128], strides = [1, 1]} : vector<8x512xf32> to vector<8x128xf32>
    %639 = arith.negf %638 : vector<8x128xf32>
    %640 = math.exp %639 : vector<8x128xf32>
    %cst_178 = arith.constant 1.000000e+00 : f32
    %641 = vector.broadcast %cst_178 : f32 to vector<8x128xf32>
    %642 = arith.addf %641, %640 : vector<8x128xf32>
    %643 = arith.divf %641, %642 : vector<8x128xf32>
    %644 = vector.extract_strided_slice %637 {offsets = [0, 128], sizes = [8, 128], strides = [1, 1]} : vector<8x512xf32> to vector<8x128xf32>
    %645 = arith.negf %644 : vector<8x128xf32>
    %646 = math.exp %645 : vector<8x128xf32>
    %cst_179 = arith.constant 1.000000e+00 : f32
    %647 = vector.broadcast %cst_179 : f32 to vector<8x128xf32>
    %648 = arith.addf %647, %646 : vector<8x128xf32>
    %649 = arith.divf %647, %648 : vector<8x128xf32>
    %650 = vector.extract_strided_slice %637 {offsets = [0, 256], sizes = [8, 128], strides = [1, 1]} : vector<8x512xf32> to vector<8x128xf32>
    %651 = math.tanh %650 : vector<8x128xf32>
    %652 = vector.extract_strided_slice %637 {offsets = [0, 384], sizes = [8, 128], strides = [1, 1]} : vector<8x512xf32> to vector<8x128xf32>
    %653 = arith.negf %652 : vector<8x128xf32>
    %654 = math.exp %653 : vector<8x128xf32>
    %cst_180 = arith.constant 1.000000e+00 : f32
    %655 = vector.broadcast %cst_180 : f32 to vector<8x128xf32>
    %656 = arith.addf %655, %654 : vector<8x128xf32>
    %657 = arith.divf %655, %656 : vector<8x128xf32>
    %658 = arith.mulf %649, %575 : vector<8x128xf32>
    %659 = arith.mulf %643, %651 : vector<8x128xf32>
    %660 = arith.addf %658, %659 : vector<8x128xf32>
    %661 = math.tanh %660 : vector<8x128xf32>
    %662 = arith.mulf %657, %661 : vector<8x128xf32>
    %cst_181 = arith.constant 0.000000e+00 : f32
    %663 = vector.shape_cast %631 : vector<8x1xi1> to vector<8x1xi1>
    %664 = vector.broadcast %663 : vector<8x1xi1> to vector<8x128xi1>
    %665 = vector.broadcast %cst_181 : f32 to vector<8x128xf32>
    %666 = arith.select %664, %662, %665 : vector<8x128xi1>, vector<8x128xf32>
    %667 = arith.index_cast %c6_i32 : i32 to index
    %c0_182 = arith.constant 0 : index
    %c0_183 = arith.constant 0 : index
    %668 = vector.load %arg13[%667, %c0_182, %c0_183] : memref<8x8x256xf32, #tpu.memory_space<vmem>>, vector<1x8x128xf32>
    %669 = vector.shape_cast %668 : vector<1x8x128xf32> to vector<8x128xf32>
    %670 = vector.shape_cast %666 : vector<8x128xf32> to vector<1x8x128xf32>
    tpu.vector_store %arg13[%667, %c0_182, %c0_183], %670 {strides = array<i32>} : memref<8x8x256xf32, #tpu.memory_space<vmem>>, vector<1x8x128xf32>,
    %671 = vector.shape_cast %631 : vector<8x1xi1> to vector<8x1xi1>
    %672 = vector.broadcast %671 : vector<8x1xi1> to vector<8x128xi1>
    %673 = arith.select %672, %662, %572 : vector<8x128xi1>, vector<8x128xf32>
    %674 = vector.shape_cast %631 : vector<8x1xi1> to vector<8x1xi1>
    %675 = vector.broadcast %674 : vector<8x1xi1> to vector<8x128xi1>
    %676 = arith.select %675, %660, %575 : vector<8x128xi1>, vector<8x128xf32>
    %677 = arith.index_cast %626 : i32 to index
    %c0_184 = arith.constant 0 : index
    %c0_185 = arith.constant 0 : index
    %678 = vector.load %arg8[%677, %c0_184, %c0_185] : memref<8x8x1xi32, #tpu.memory_space<vmem>>, vector<1x8x1xi32>
    %679 = vector.shape_cast %678 : vector<1x8x1xi32> to vector<8x1xi32>
    %c0_i32_186 = arith.constant 0 : i32
    %680 = vector.broadcast %c0_i32_186 : i32 to vector<8x1xi32>
    %681 = arith.cmpi ne, %679, %680 : vector<8x1xi32>
    %682 = arith.index_cast %626 : i32 to index
    %c0_187 = arith.constant 0 : index
    %c512_188 = arith.constant 512 : index
    %683 = vector.load %arg12[%682, %c0_187, %c512_188] : memref<8x8x1024xf32, #tpu.memory_space<vmem>>, vector<1x8x512xf32>
    %684 = vector.shape_cast %683 : vector<1x8x512xf32> to vector<8x512xf32>
    %685 = arith.truncf %622 : vector<8x128xf32> to vector<8x128xbf16>
    %cst_189 = arith.constant dense<0.000000e+00> : vector<8x512xf32>
    %686 = tpu.matmul %685, %11, %cst_189 {dimension_numbers = #tpu.dot_dimension_numbers<[1], [0], [0], [1], [0, 0, 1, 1], [], []>} : vector<8x128xbf16>, vector<128x512xbf16>, vector<8x512xf32> -> vector<8x512xf32>
    %687 = arith.addf %684, %686 : vector<8x512xf32>
    %688 = vector.extract_strided_slice %687 {offsets = [0, 0], sizes = [8, 128], strides = [1, 1]} : vector<8x512xf32> to vector<8x128xf32>
    %689 = arith.negf %688 : vector<8x128xf32>
    %690 = math.exp %689 : vector<8x128xf32>
    %cst_190 = arith.constant 1.000000e+00 : f32
    %691 = vector.broadcast %cst_190 : f32 to vector<8x128xf32>
    %692 = arith.addf %691, %690 : vector<8x128xf32>
    %693 = arith.divf %691, %692 : vector<8x128xf32>
    %694 = vector.extract_strided_slice %687 {offsets = [0, 128], sizes = [8, 128], strides = [1, 1]} : vector<8x512xf32> to vector<8x128xf32>
    %695 = arith.negf %694 : vector<8x128xf32>
    %696 = math.exp %695 : vector<8x128xf32>
    %cst_191 = arith.constant 1.000000e+00 : f32
    %697 = vector.broadcast %cst_191 : f32 to vector<8x128xf32>
    %698 = arith.addf %697, %696 : vector<8x128xf32>
    %699 = arith.divf %697, %698 : vector<8x128xf32>
    %700 = vector.extract_strided_slice %687 {offsets = [0, 256], sizes = [8, 128], strides = [1, 1]} : vector<8x512xf32> to vector<8x128xf32>
    %701 = math.tanh %700 : vector<8x128xf32>
    %702 = vector.extract_strided_slice %687 {offsets = [0, 384], sizes = [8, 128], strides = [1, 1]} : vector<8x512xf32> to vector<8x128xf32>
    %703 = arith.negf %702 : vector<8x128xf32>
    %704 = math.exp %703 : vector<8x128xf32>
    %cst_192 = arith.constant 1.000000e+00 : f32
    %705 = vector.broadcast %cst_192 : f32 to vector<8x128xf32>
    %706 = arith.addf %705, %704 : vector<8x128xf32>
    %707 = arith.divf %705, %706 : vector<8x128xf32>
    %708 = arith.mulf %699, %625 : vector<8x128xf32>
    %709 = arith.mulf %693, %701 : vector<8x128xf32>
    %710 = arith.addf %708, %709 : vector<8x128xf32>
    %711 = math.tanh %710 : vector<8x128xf32>
    %712 = arith.mulf %707, %711 : vector<8x128xf32>
    %cst_193 = arith.constant 0.000000e+00 : f32
    %713 = vector.shape_cast %681 : vector<8x1xi1> to vector<8x1xi1>
    %714 = vector.broadcast %713 : vector<8x1xi1> to vector<8x128xi1>
    %715 = vector.broadcast %cst_193 : f32 to vector<8x128xf32>
    %716 = arith.select %714, %712, %715 : vector<8x128xi1>, vector<8x128xf32>
    %717 = arith.index_cast %626 : i32 to index
    %c0_194 = arith.constant 0 : index
    %c128_195 = arith.constant 128 : index
    %718 = vector.load %arg13[%717, %c0_194, %c128_195] : memref<8x8x256xf32, #tpu.memory_space<vmem>>, vector<1x8x128xf32>
    %719 = vector.shape_cast %718 : vector<1x8x128xf32> to vector<8x128xf32>
    %720 = vector.shape_cast %716 : vector<8x128xf32> to vector<1x8x128xf32>
    tpu.vector_store %arg13[%717, %c0_194, %c128_195], %720 {strides = array<i32>} : memref<8x8x256xf32, #tpu.memory_space<vmem>>, vector<1x8x128xf32>,
    %721 = vector.shape_cast %681 : vector<8x1xi1> to vector<8x1xi1>
    %722 = vector.broadcast %721 : vector<8x1xi1> to vector<8x128xi1>
    %723 = arith.select %722, %712, %622 : vector<8x128xi1>, vector<8x128xf32>
    %724 = vector.shape_cast %681 : vector<8x1xi1> to vector<8x1xi1>
    %725 = vector.broadcast %724 : vector<8x1xi1> to vector<8x128xi1>
    %726 = arith.select %725, %710, %625 : vector<8x128xi1>, vector<8x128xf32>
    %c7_i32_196 = arith.constant 7 : i32
    %c7_i32_197 = arith.constant 7 : i32
    %727 = arith.subi %c7_i32_197, %c7_i32_196 : i32
    %728 = arith.index_cast %c7_i32_196 : i32 to index
    %c0_198 = arith.constant 0 : index
    %c0_199 = arith.constant 0 : index
    %729 = vector.load %arg8[%728, %c0_198, %c0_199] : memref<8x8x1xi32, #tpu.memory_space<vmem>>, vector<1x8x1xi32>
    %730 = vector.shape_cast %729 : vector<1x8x1xi32> to vector<8x1xi32>
    %c0_i32_200 = arith.constant 0 : i32
    %731 = vector.broadcast %c0_i32_200 : i32 to vector<8x1xi32>
    %732 = arith.cmpi ne, %730, %731 : vector<8x1xi32>
    %733 = arith.index_cast %c7_i32_196 : i32 to index
    %c0_201 = arith.constant 0 : index
    %c0_202 = arith.constant 0 : index
    %734 = vector.load %arg12[%733, %c0_201, %c0_202] : memref<8x8x1024xf32, #tpu.memory_space<vmem>>, vector<1x8x512xf32>
    %735 = vector.shape_cast %734 : vector<1x8x512xf32> to vector<8x512xf32>
    %736 = arith.truncf %673 : vector<8x128xf32> to vector<8x128xbf16>
    %cst_203 = arith.constant dense<0.000000e+00> : vector<8x512xf32>
    %737 = tpu.matmul %736, %10, %cst_203 {dimension_numbers = #tpu.dot_dimension_numbers<[1], [0], [0], [1], [0, 0, 1, 1], [], []>} : vector<8x128xbf16>, vector<128x512xbf16>, vector<8x512xf32> -> vector<8x512xf32>
    %738 = arith.addf %735, %737 : vector<8x512xf32>
    %739 = vector.extract_strided_slice %738 {offsets = [0, 0], sizes = [8, 128], strides = [1, 1]} : vector<8x512xf32> to vector<8x128xf32>
    %740 = arith.negf %739 : vector<8x128xf32>
    %741 = math.exp %740 : vector<8x128xf32>
    %cst_204 = arith.constant 1.000000e+00 : f32
    %742 = vector.broadcast %cst_204 : f32 to vector<8x128xf32>
    %743 = arith.addf %742, %741 : vector<8x128xf32>
    %744 = arith.divf %742, %743 : vector<8x128xf32>
    %745 = vector.extract_strided_slice %738 {offsets = [0, 128], sizes = [8, 128], strides = [1, 1]} : vector<8x512xf32> to vector<8x128xf32>
    %746 = arith.negf %745 : vector<8x128xf32>
    %747 = math.exp %746 : vector<8x128xf32>
    %cst_205 = arith.constant 1.000000e+00 : f32
    %748 = vector.broadcast %cst_205 : f32 to vector<8x128xf32>
    %749 = arith.addf %748, %747 : vector<8x128xf32>
    %750 = arith.divf %748, %749 : vector<8x128xf32>
    %751 = vector.extract_strided_slice %738 {offsets = [0, 256], sizes = [8, 128], strides = [1, 1]} : vector<8x512xf32> to vector<8x128xf32>
    %752 = math.tanh %751 : vector<8x128xf32>
    %753 = vector.extract_strided_slice %738 {offsets = [0, 384], sizes = [8, 128], strides = [1, 1]} : vector<8x512xf32> to vector<8x128xf32>
    %754 = arith.negf %753 : vector<8x128xf32>
    %755 = math.exp %754 : vector<8x128xf32>
    %cst_206 = arith.constant 1.000000e+00 : f32
    %756 = vector.broadcast %cst_206 : f32 to vector<8x128xf32>
    %757 = arith.addf %756, %755 : vector<8x128xf32>
    %758 = arith.divf %756, %757 : vector<8x128xf32>
    %759 = arith.mulf %750, %676 : vector<8x128xf32>
    %760 = arith.mulf %744, %752 : vector<8x128xf32>
    %761 = arith.addf %759, %760 : vector<8x128xf32>
    %762 = math.tanh %761 : vector<8x128xf32>
    %763 = arith.mulf %758, %762 : vector<8x128xf32>
    %cst_207 = arith.constant 0.000000e+00 : f32
    %764 = vector.shape_cast %732 : vector<8x1xi1> to vector<8x1xi1>
    %765 = vector.broadcast %764 : vector<8x1xi1> to vector<8x128xi1>
    %766 = vector.broadcast %cst_207 : f32 to vector<8x128xf32>
    %767 = arith.select %765, %763, %766 : vector<8x128xi1>, vector<8x128xf32>
    %768 = arith.index_cast %c7_i32_196 : i32 to index
    %c0_208 = arith.constant 0 : index
    %c0_209 = arith.constant 0 : index
    %769 = vector.load %arg13[%768, %c0_208, %c0_209] : memref<8x8x256xf32, #tpu.memory_space<vmem>>, vector<1x8x128xf32>
    %770 = vector.shape_cast %769 : vector<1x8x128xf32> to vector<8x128xf32>
    %771 = vector.shape_cast %767 : vector<8x128xf32> to vector<1x8x128xf32>
    tpu.vector_store %arg13[%768, %c0_208, %c0_209], %771 {strides = array<i32>} : memref<8x8x256xf32, #tpu.memory_space<vmem>>, vector<1x8x128xf32>,
    %772 = vector.shape_cast %732 : vector<8x1xi1> to vector<8x1xi1>
    %773 = vector.broadcast %772 : vector<8x1xi1> to vector<8x128xi1>
    %774 = arith.select %773, %763, %673 : vector<8x128xi1>, vector<8x128xf32>
    %775 = vector.shape_cast %732 : vector<8x1xi1> to vector<8x1xi1>
    %776 = vector.broadcast %775 : vector<8x1xi1> to vector<8x128xi1>
    %777 = arith.select %776, %761, %676 : vector<8x128xi1>, vector<8x128xf32>
    %778 = arith.index_cast %727 : i32 to index
    %c0_210 = arith.constant 0 : index
    %c0_211 = arith.constant 0 : index
    %779 = vector.load %arg8[%778, %c0_210, %c0_211] : memref<8x8x1xi32, #tpu.memory_space<vmem>>, vector<1x8x1xi32>
    %780 = vector.shape_cast %779 : vector<1x8x1xi32> to vector<8x1xi32>
    %c0_i32_212 = arith.constant 0 : i32
    %781 = vector.broadcast %c0_i32_212 : i32 to vector<8x1xi32>
    %782 = arith.cmpi ne, %780, %781 : vector<8x1xi32>
    %783 = arith.index_cast %727 : i32 to index
    %c0_213 = arith.constant 0 : index
    %c512_214 = arith.constant 512 : index
    %784 = vector.load %arg12[%783, %c0_213, %c512_214] : memref<8x8x1024xf32, #tpu.memory_space<vmem>>, vector<1x8x512xf32>
    %785 = vector.shape_cast %784 : vector<1x8x512xf32> to vector<8x512xf32>
    %786 = arith.truncf %723 : vector<8x128xf32> to vector<8x128xbf16>
    %cst_215 = arith.constant dense<0.000000e+00> : vector<8x512xf32>
    %787 = tpu.matmul %786, %11, %cst_215 {dimension_numbers = #tpu.dot_dimension_numbers<[1], [0], [0], [1], [0, 0, 1, 1], [], []>} : vector<8x128xbf16>, vector<128x512xbf16>, vector<8x512xf32> -> vector<8x512xf32>
    %788 = arith.addf %785, %787 : vector<8x512xf32>
    %789 = vector.extract_strided_slice %788 {offsets = [0, 0], sizes = [8, 128], strides = [1, 1]} : vector<8x512xf32> to vector<8x128xf32>
    %790 = arith.negf %789 : vector<8x128xf32>
    %791 = math.exp %790 : vector<8x128xf32>
    %cst_216 = arith.constant 1.000000e+00 : f32
    %792 = vector.broadcast %cst_216 : f32 to vector<8x128xf32>
    %793 = arith.addf %792, %791 : vector<8x128xf32>
    %794 = arith.divf %792, %793 : vector<8x128xf32>
    %795 = vector.extract_strided_slice %788 {offsets = [0, 128], sizes = [8, 128], strides = [1, 1]} : vector<8x512xf32> to vector<8x128xf32>
    %796 = arith.negf %795 : vector<8x128xf32>
    %797 = math.exp %796 : vector<8x128xf32>
    %cst_217 = arith.constant 1.000000e+00 : f32
    %798 = vector.broadcast %cst_217 : f32 to vector<8x128xf32>
    %799 = arith.addf %798, %797 : vector<8x128xf32>
    %800 = arith.divf %798, %799 : vector<8x128xf32>
    %801 = vector.extract_strided_slice %788 {offsets = [0, 256], sizes = [8, 128], strides = [1, 1]} : vector<8x512xf32> to vector<8x128xf32>
    %802 = math.tanh %801 : vector<8x128xf32>
    %803 = vector.extract_strided_slice %788 {offsets = [0, 384], sizes = [8, 128], strides = [1, 1]} : vector<8x512xf32> to vector<8x128xf32>
    %804 = arith.negf %803 : vector<8x128xf32>
    %805 = math.exp %804 : vector<8x128xf32>
    %cst_218 = arith.constant 1.000000e+00 : f32
    %806 = vector.broadcast %cst_218 : f32 to vector<8x128xf32>
    %807 = arith.addf %806, %805 : vector<8x128xf32>
    %808 = arith.divf %806, %807 : vector<8x128xf32>
    %809 = arith.mulf %800, %726 : vector<8x128xf32>
    %810 = arith.mulf %794, %802 : vector<8x128xf32>
    %811 = arith.addf %809, %810 : vector<8x128xf32>
    %812 = math.tanh %811 : vector<8x128xf32>
    %813 = arith.mulf %808, %812 : vector<8x128xf32>
    %cst_219 = arith.constant 0.000000e+00 : f32
    %814 = vector.shape_cast %782 : vector<8x1xi1> to vector<8x1xi1>
    %815 = vector.broadcast %814 : vector<8x1xi1> to vector<8x128xi1>
    %816 = vector.broadcast %cst_219 : f32 to vector<8x128xf32>
    %817 = arith.select %815, %813, %816 : vector<8x128xi1>, vector<8x128xf32>
    %818 = arith.index_cast %727 : i32 to index
    %c0_220 = arith.constant 0 : index
    %c128_221 = arith.constant 128 : index
    %819 = vector.load %arg13[%818, %c0_220, %c128_221] : memref<8x8x256xf32, #tpu.memory_space<vmem>>, vector<1x8x128xf32>
    %820 = vector.shape_cast %819 : vector<1x8x128xf32> to vector<8x128xf32>
    %821 = vector.shape_cast %817 : vector<8x128xf32> to vector<1x8x128xf32>
    tpu.vector_store %arg13[%818, %c0_220, %c128_221], %821 {strides = array<i32>} : memref<8x8x256xf32, #tpu.memory_space<vmem>>, vector<1x8x128xf32>,
    %822 = vector.shape_cast %782 : vector<8x1xi1> to vector<8x1xi1>
    %823 = vector.broadcast %822 : vector<8x1xi1> to vector<8x128xi1>
    %824 = arith.select %823, %813, %723 : vector<8x128xi1>, vector<8x128xf32>
    %825 = vector.shape_cast %782 : vector<8x1xi1> to vector<8x1xi1>
    %826 = vector.broadcast %825 : vector<8x1xi1> to vector<8x128xi1>
    %827 = arith.select %826, %811, %726 : vector<8x128xi1>, vector<8x128xf32>
    %c8_i32 = arith.constant 8 : i32
    %c0_222 = arith.constant 0 : index
    %c0_223 = arith.constant 0 : index
    %c0_224 = arith.constant 0 : index
    %828 = vector.load %arg13[%c0_222, %c0_223, %c0_224] : memref<8x8x256xf32, #tpu.memory_space<vmem>>, vector<8x8x256xf32>
    %829 = vector.shape_cast %828 : vector<8x8x256xf32> to vector<64x256xf32>
    %830 = arith.truncf %829 : vector<64x256xf32> to vector<64x256xbf16>
    %c0_225 = arith.constant 0 : index
    %c0_226 = arith.constant 0 : index
    %831 = vector.load %arg9[%c0_225, %c0_226] : memref<256x128xbf16, #tpu.memory_space<vmem>>, vector<256x128xbf16>
    %cst_227 = arith.constant dense<0.000000e+00> : vector<64x128xf32>
    %832 = tpu.matmul %830, %831, %cst_227 {dimension_numbers = #tpu.dot_dimension_numbers<[1], [0], [0], [1], [0, 0, 1, 1], [], []>} : vector<64x256xbf16>, vector<256x128xbf16>, vector<64x128xf32> -> vector<64x128xf32>
    %c0_228 = arith.constant 0 : index
    %c0_229 = arith.constant 0 : index
    %833 = vector.load %arg10[%c0_228, %c0_229] : memref<1x128xf32, #tpu.memory_space<vmem>>, vector<1x128xf32>
    %834 = vector.broadcast %833 : vector<1x128xf32> to vector<64x128xf32>
    %835 = arith.addf %832, %834 : vector<64x128xf32>
    %836 = vector.shape_cast %835 : vector<64x128xf32> to vector<8x8x128xf32>
    %c0_230 = arith.constant 0 : index
    %c0_231 = arith.constant 0 : index
    %c0_232 = arith.constant 0 : index
    %837 = vector.load %arg11[%c0_230, %c0_231, %c0_232] : memref<8x8x128xf32, #tpu.memory_space<vmem>>, vector<8x8x128xf32>
    tpu.vector_store %arg11[%c0_230, %c0_231, %c0_232], %836 {strides = array<i32>} : memref<8x8x128xf32, #tpu.memory_space<vmem>>, vector<8x8x128xf32>,
    return
  }
  func.func @transform_0(%arg0: i32) -> (i32, i32, i32) {
    %c0_i32 = arith.constant 0 : i32
    %c0_i32_0 = arith.constant 0 : i32
    %c0_i32_1 = arith.constant 0 : i32
    return %c0_i32, %arg0, %c0_i32_0 : i32, i32, i32
  }
  func.func @transform_1(%arg0: i32) -> (i32, i32) {
    %c0_i32 = arith.constant 0 : i32
    %c0_i32_0 = arith.constant 0 : i32
    %c0_i32_1 = arith.constant 0 : i32
    return %c0_i32, %c0_i32_0 : i32, i32
  }
  func.func @transform_2(%arg0: i32) -> (i32, i32) {
    %c0_i32 = arith.constant 0 : i32
    %c0_i32_0 = arith.constant 0 : i32
    %c0_i32_1 = arith.constant 0 : i32
    return %c0_i32, %c0_i32_0 : i32, i32
  }
  func.func @transform_3(%arg0: i32) -> (i32, i32) {
    %c0_i32 = arith.constant 0 : i32
    %c0_i32_0 = arith.constant 0 : i32
    %c0_i32_1 = arith.constant 0 : i32
    return %c0_i32, %c0_i32_0 : i32, i32
  }
  func.func @transform_4(%arg0: i32) -> (i32, i32) {
    %c0_i32 = arith.constant 0 : i32
    %c0_i32_0 = arith.constant 0 : i32
    %c0_i32_1 = arith.constant 0 : i32
    return %c0_i32, %c0_i32_0 : i32, i32
  }
  func.func @transform_5(%arg0: i32) -> (i32, i32, i32) {
    %c0_i32 = arith.constant 0 : i32
    %c0_i32_0 = arith.constant 0 : i32
    %c0_i32_1 = arith.constant 0 : i32
    return %c0_i32, %arg0, %c0_i32_0 : i32, i32, i32
  }
  func.func @transform_6(%arg0: i32) -> (i32, i32, i32) {
    %c0_i32 = arith.constant 0 : i32
    %c0_i32_0 = arith.constant 0 : i32
    %c0_i32_1 = arith.constant 0 : i32
    return %c0_i32, %arg0, %c0_i32_0 : i32, i32, i32
  }
  func.func @transform_7(%arg0: i32) -> (i32, i32, i32) {
    %c0_i32 = arith.constant 0 : i32
    %c0_i32_0 = arith.constant 0 : i32
    %c0_i32_1 = arith.constant 0 : i32
    return %c0_i32, %arg0, %c0_i32_0 : i32, i32, i32
  }
  func.func @transform_8(%arg0: i32) -> (i32, i32) {
    %c0_i32 = arith.constant 0 : i32
    %c0_i32_0 = arith.constant 0 : i32
    %c0_i32_1 = arith.constant 0 : i32
    return %c0_i32, %c0_i32_0 : i32, i32
  }
  func.func @transform_9(%arg0: i32) -> (i32, i32) {
    %c0_i32 = arith.constant 0 : i32
    %c0_i32_0 = arith.constant 0 : i32
    %c0_i32_1 = arith.constant 0 : i32
    return %c0_i32, %c0_i32_0 : i32, i32
  }
  func.func @transform_10(%arg0: i32) -> (i32, i32, i32) {
    %c0_i32 = arith.constant 0 : i32
    %c0_i32_0 = arith.constant 0 : i32
    %c0_i32_1 = arith.constant 0 : i32
    return %c0_i32, %arg0, %c0_i32_0 : i32, i32, i32
  }
}

module attributes {stable_mosaic.version = 11 : i64} {
  func.func @kernel(%arg0: i32, %arg1: memref<8x8x32xf32, #tpu.memory_space<vmem>>, %arg2: memref<32x1024xbf16, #tpu.memory_space<vmem>>, %arg3: memref<1x1024xf32, #tpu.memory_space<vmem>>, %arg4: memref<128x512xbf16, #tpu.memory_space<vmem>>, %arg5: memref<128x512xbf16, #tpu.memory_space<vmem>>, %arg6: memref<2x8x128xf32, #tpu.memory_space<vmem>>, %arg7: memref<2x8x128xf32, #tpu.memory_space<vmem>>, %arg8: memref<8x8x1xi32, #tpu.memory_space<vmem>>, %arg9: memref<8x8x256xf32, #tpu.memory_space<vmem>>, %arg10: memref<8x8x1024xf32, #tpu.memory_space<vmem>>) attributes {dimension_semantics = [#tpu.dimension_semantics<parallel>], iteration_bounds = array<i64: 1>, scalar_prefetch = 0 : i64, scratch_operands = 1 : i64, tpu.core_type = #tpu.core_type<tc>, window_params = [{transform_indices = @transform_0, window_bounds = array<i64: 8, 8, 32>}, {pipeline_mode = #tpu.pipeline_mode<synchronous>, transform_indices = @transform_1, window_bounds = array<i64: 32, 1024>}, {pipeline_mode = #tpu.pipeline_mode<synchronous>, transform_indices = @transform_2, window_bounds = array<i64: 1, 1024>}, {pipeline_mode = #tpu.pipeline_mode<synchronous>, transform_indices = @transform_3, window_bounds = array<i64: 128, 512>}, {pipeline_mode = #tpu.pipeline_mode<synchronous>, transform_indices = @transform_4, window_bounds = array<i64: 128, 512>}, {transform_indices = @transform_5, window_bounds = array<i64: 2, 8, 128>}, {transform_indices = @transform_6, window_bounds = array<i64: 2, 8, 128>}, {transform_indices = @transform_7, window_bounds = array<i64: 8, 8, 1>}, {transform_indices = @transform_8, window_bounds = array<i64: 8, 8, 256>}]} {
    %c0 = arith.constant 0 : index
    %c0_0 = arith.constant 0 : index
    %c0_1 = arith.constant 0 : index
    %0 = vector.load %arg1[%c0, %c0_0, %c0_1] : memref<8x8x32xf32, #tpu.memory_space<vmem>>, vector<8x8x32xf32>
    %1 = vector.shape_cast %0 : vector<8x8x32xf32> to vector<64x32xf32>
    %2 = arith.truncf %1 : vector<64x32xf32> to vector<64x32xbf16>
    %c0_2 = arith.constant 0 : index
    %c0_3 = arith.constant 0 : index
    %3 = vector.load %arg2[%c0_2, %c0_3] : memref<32x1024xbf16, #tpu.memory_space<vmem>>, vector<32x1024xbf16>
    %cst = arith.constant dense<0.000000e+00> : vector<64x1024xf32>
    %4 = tpu.matmul %2, %3, %cst {dimension_numbers = #tpu.dot_dimension_numbers<[1], [0], [0], [1], [0, 0, 1, 1], [], []>} : vector<64x32xbf16>, vector<32x1024xbf16>, vector<64x1024xf32> -> vector<64x1024xf32>
    %c0_4 = arith.constant 0 : index
    %c0_5 = arith.constant 0 : index
    %5 = vector.load %arg3[%c0_4, %c0_5] : memref<1x1024xf32, #tpu.memory_space<vmem>>, vector<1x1024xf32>
    %6 = vector.broadcast %5 : vector<1x1024xf32> to vector<64x1024xf32>
    %7 = arith.addf %4, %6 : vector<64x1024xf32>
    %8 = vector.shape_cast %7 : vector<64x1024xf32> to vector<8x8x1024xf32>
    %c0_6 = arith.constant 0 : index
    %c0_7 = arith.constant 0 : index
    %c0_8 = arith.constant 0 : index
    %9 = vector.load %arg10[%c0_6, %c0_7, %c0_8] : memref<8x8x1024xf32, #tpu.memory_space<vmem>>, vector<8x8x1024xf32>
    tpu.vector_store %arg10[%c0_6, %c0_7, %c0_8], %8 {strides = array<i32>} : memref<8x8x1024xf32, #tpu.memory_space<vmem>>, vector<8x8x1024xf32>,
    %c0_9 = arith.constant 0 : index
    %c0_10 = arith.constant 0 : index
    %10 = vector.load %arg4[%c0_9, %c0_10] : memref<128x512xbf16, #tpu.memory_space<vmem>>, vector<128x512xbf16>
    %c0_11 = arith.constant 0 : index
    %c0_12 = arith.constant 0 : index
    %11 = vector.load %arg5[%c0_11, %c0_12] : memref<128x512xbf16, #tpu.memory_space<vmem>>, vector<128x512xbf16>
    %c0_13 = arith.constant 0 : index
    %c0_14 = arith.constant 0 : index
    %c0_15 = arith.constant 0 : index
    %12 = vector.load %arg6[%c0_13, %c0_14, %c0_15] : memref<2x8x128xf32, #tpu.memory_space<vmem>>, vector<1x8x128xf32>
    %13 = vector.shape_cast %12 : vector<1x8x128xf32> to vector<8x128xf32>
    %c0_16 = arith.constant 0 : index
    %c0_17 = arith.constant 0 : index
    %c0_18 = arith.constant 0 : index
    %14 = vector.load %arg7[%c0_16, %c0_17, %c0_18] : memref<2x8x128xf32, #tpu.memory_space<vmem>>, vector<1x8x128xf32>
    %15 = vector.shape_cast %14 : vector<1x8x128xf32> to vector<8x128xf32>
    %c1 = arith.constant 1 : index
    %c0_19 = arith.constant 0 : index
    %c0_20 = arith.constant 0 : index
    %16 = vector.load %arg6[%c1, %c0_19, %c0_20] : memref<2x8x128xf32, #tpu.memory_space<vmem>>, vector<1x8x128xf32>
    %17 = vector.shape_cast %16 : vector<1x8x128xf32> to vector<8x128xf32>
    %c1_21 = arith.constant 1 : index
    %c0_22 = arith.constant 0 : index
    %c0_23 = arith.constant 0 : index
    %18 = vector.load %arg7[%c1_21, %c0_22, %c0_23] : memref<2x8x128xf32, #tpu.memory_space<vmem>>, vector<1x8x128xf32>
    %19 = vector.shape_cast %18 : vector<1x8x128xf32> to vector<8x128xf32>
    %c0_i32 = arith.constant 0 : i32
    %c7_i32 = arith.constant 7 : i32
    %20 = arith.subi %c7_i32, %c0_i32 : i32
    %21 = arith.index_cast %c0_i32 : i32 to index
    %c0_24 = arith.constant 0 : index
    %c0_25 = arith.constant 0 : index
    %22 = vector.load %arg8[%21, %c0_24, %c0_25] : memref<8x8x1xi32, #tpu.memory_space<vmem>>, vector<1x8x1xi32>
    %23 = vector.shape_cast %22 : vector<1x8x1xi32> to vector<8x1xi32>
    %c0_i32_26 = arith.constant 0 : i32
    %24 = vector.broadcast %c0_i32_26 : i32 to vector<8x1xi32>
    %25 = arith.cmpi ne, %23, %24 : vector<8x1xi32>
    %26 = arith.index_cast %c0_i32 : i32 to index
    %c0_27 = arith.constant 0 : index
    %c0_28 = arith.constant 0 : index
    %27 = vector.load %arg10[%26, %c0_27, %c0_28] : memref<8x8x1024xf32, #tpu.memory_space<vmem>>, vector<1x8x512xf32>
    %28 = vector.shape_cast %27 : vector<1x8x512xf32> to vector<8x512xf32>
    %29 = arith.truncf %13 : vector<8x128xf32> to vector<8x128xbf16>
    %cst_29 = arith.constant dense<0.000000e+00> : vector<8x512xf32>
    %30 = tpu.matmul %29, %10, %cst_29 {dimension_numbers = #tpu.dot_dimension_numbers<[1], [0], [0], [1], [0, 0, 1, 1], [], []>} : vector<8x128xbf16>, vector<128x512xbf16>, vector<8x512xf32> -> vector<8x512xf32>
    %31 = arith.addf %28, %30 : vector<8x512xf32>
    %32 = vector.extract_strided_slice %31 {offsets = [0, 0], sizes = [8, 128], strides = [1, 1]} : vector<8x512xf32> to vector<8x128xf32>
    %33 = arith.negf %32 : vector<8x128xf32>
    %34 = math.exp %33 : vector<8x128xf32>
    %cst_30 = arith.constant 1.000000e+00 : f32
    %35 = vector.broadcast %cst_30 : f32 to vector<8x128xf32>
    %36 = arith.addf %35, %34 : vector<8x128xf32>
    %37 = arith.divf %35, %36 : vector<8x128xf32>
    %38 = vector.extract_strided_slice %31 {offsets = [0, 128], sizes = [8, 128], strides = [1, 1]} : vector<8x512xf32> to vector<8x128xf32>
    %39 = arith.negf %38 : vector<8x128xf32>
    %40 = math.exp %39 : vector<8x128xf32>
    %cst_31 = arith.constant 1.000000e+00 : f32
    %41 = vector.broadcast %cst_31 : f32 to vector<8x128xf32>
    %42 = arith.addf %41, %40 : vector<8x128xf32>
    %43 = arith.divf %41, %42 : vector<8x128xf32>
    %44 = vector.extract_strided_slice %31 {offsets = [0, 256], sizes = [8, 128], strides = [1, 1]} : vector<8x512xf32> to vector<8x128xf32>
    %45 = math.tanh %44 : vector<8x128xf32>
    %46 = vector.extract_strided_slice %31 {offsets = [0, 384], sizes = [8, 128], strides = [1, 1]} : vector<8x512xf32> to vector<8x128xf32>
    %47 = arith.negf %46 : vector<8x128xf32>
    %48 = math.exp %47 : vector<8x128xf32>
    %cst_32 = arith.constant 1.000000e+00 : f32
    %49 = vector.broadcast %cst_32 : f32 to vector<8x128xf32>
    %50 = arith.addf %49, %48 : vector<8x128xf32>
    %51 = arith.divf %49, %50 : vector<8x128xf32>
    %52 = arith.mulf %43, %15 : vector<8x128xf32>
    %53 = arith.mulf %37, %45 : vector<8x128xf32>
    %54 = arith.addf %52, %53 : vector<8x128xf32>
    %55 = math.tanh %54 : vector<8x128xf32>
    %56 = arith.mulf %51, %55 : vector<8x128xf32>
    %cst_33 = arith.constant 0.000000e+00 : f32
    %57 = vector.shape_cast %25 : vector<8x1xi1> to vector<8x1xi1>
    %58 = vector.broadcast %57 : vector<8x1xi1> to vector<8x128xi1>
    %59 = vector.broadcast %cst_33 : f32 to vector<8x128xf32>
    %60 = arith.select %58, %56, %59 : vector<8x128xi1>, vector<8x128xf32>
    %61 = arith.index_cast %c0_i32 : i32 to index
    %c0_34 = arith.constant 0 : index
    %c0_35 = arith.constant 0 : index
    %62 = vector.load %arg9[%61, %c0_34, %c0_35] : memref<8x8x256xf32, #tpu.memory_space<vmem>>, vector<1x8x128xf32>
    %63 = vector.shape_cast %62 : vector<1x8x128xf32> to vector<8x128xf32>
    %64 = vector.shape_cast %60 : vector<8x128xf32> to vector<1x8x128xf32>
    tpu.vector_store %arg9[%61, %c0_34, %c0_35], %64 {strides = array<i32>} : memref<8x8x256xf32, #tpu.memory_space<vmem>>, vector<1x8x128xf32>,
    %65 = vector.shape_cast %25 : vector<8x1xi1> to vector<8x1xi1>
    %66 = vector.broadcast %65 : vector<8x1xi1> to vector<8x128xi1>
    %67 = arith.select %66, %56, %13 : vector<8x128xi1>, vector<8x128xf32>
    %68 = vector.shape_cast %25 : vector<8x1xi1> to vector<8x1xi1>
    %69 = vector.broadcast %68 : vector<8x1xi1> to vector<8x128xi1>
    %70 = arith.select %69, %54, %15 : vector<8x128xi1>, vector<8x128xf32>
    %71 = arith.index_cast %20 : i32 to index
    %c0_36 = arith.constant 0 : index
    %c0_37 = arith.constant 0 : index
    %72 = vector.load %arg8[%71, %c0_36, %c0_37] : memref<8x8x1xi32, #tpu.memory_space<vmem>>, vector<1x8x1xi32>
    %73 = vector.shape_cast %72 : vector<1x8x1xi32> to vector<8x1xi32>
    %c0_i32_38 = arith.constant 0 : i32
    %74 = vector.broadcast %c0_i32_38 : i32 to vector<8x1xi32>
    %75 = arith.cmpi ne, %73, %74 : vector<8x1xi32>
    %76 = arith.index_cast %20 : i32 to index
    %c0_39 = arith.constant 0 : index
    %c512 = arith.constant 512 : index
    %77 = vector.load %arg10[%76, %c0_39, %c512] : memref<8x8x1024xf32, #tpu.memory_space<vmem>>, vector<1x8x512xf32>
    %78 = vector.shape_cast %77 : vector<1x8x512xf32> to vector<8x512xf32>
    %79 = arith.truncf %17 : vector<8x128xf32> to vector<8x128xbf16>
    %cst_40 = arith.constant dense<0.000000e+00> : vector<8x512xf32>
    %80 = tpu.matmul %79, %11, %cst_40 {dimension_numbers = #tpu.dot_dimension_numbers<[1], [0], [0], [1], [0, 0, 1, 1], [], []>} : vector<8x128xbf16>, vector<128x512xbf16>, vector<8x512xf32> -> vector<8x512xf32>
    %81 = arith.addf %78, %80 : vector<8x512xf32>
    %82 = vector.extract_strided_slice %81 {offsets = [0, 0], sizes = [8, 128], strides = [1, 1]} : vector<8x512xf32> to vector<8x128xf32>
    %83 = arith.negf %82 : vector<8x128xf32>
    %84 = math.exp %83 : vector<8x128xf32>
    %cst_41 = arith.constant 1.000000e+00 : f32
    %85 = vector.broadcast %cst_41 : f32 to vector<8x128xf32>
    %86 = arith.addf %85, %84 : vector<8x128xf32>
    %87 = arith.divf %85, %86 : vector<8x128xf32>
    %88 = vector.extract_strided_slice %81 {offsets = [0, 128], sizes = [8, 128], strides = [1, 1]} : vector<8x512xf32> to vector<8x128xf32>
    %89 = arith.negf %88 : vector<8x128xf32>
    %90 = math.exp %89 : vector<8x128xf32>
    %cst_42 = arith.constant 1.000000e+00 : f32
    %91 = vector.broadcast %cst_42 : f32 to vector<8x128xf32>
    %92 = arith.addf %91, %90 : vector<8x128xf32>
    %93 = arith.divf %91, %92 : vector<8x128xf32>
    %94 = vector.extract_strided_slice %81 {offsets = [0, 256], sizes = [8, 128], strides = [1, 1]} : vector<8x512xf32> to vector<8x128xf32>
    %95 = math.tanh %94 : vector<8x128xf32>
    %96 = vector.extract_strided_slice %81 {offsets = [0, 384], sizes = [8, 128], strides = [1, 1]} : vector<8x512xf32> to vector<8x128xf32>
    %97 = arith.negf %96 : vector<8x128xf32>
    %98 = math.exp %97 : vector<8x128xf32>
    %cst_43 = arith.constant 1.000000e+00 : f32
    %99 = vector.broadcast %cst_43 : f32 to vector<8x128xf32>
    %100 = arith.addf %99, %98 : vector<8x128xf32>
    %101 = arith.divf %99, %100 : vector<8x128xf32>
    %102 = arith.mulf %93, %19 : vector<8x128xf32>
    %103 = arith.mulf %87, %95 : vector<8x128xf32>
    %104 = arith.addf %102, %103 : vector<8x128xf32>
    %105 = math.tanh %104 : vector<8x128xf32>
    %106 = arith.mulf %101, %105 : vector<8x128xf32>
    %cst_44 = arith.constant 0.000000e+00 : f32
    %107 = vector.shape_cast %75 : vector<8x1xi1> to vector<8x1xi1>
    %108 = vector.broadcast %107 : vector<8x1xi1> to vector<8x128xi1>
    %109 = vector.broadcast %cst_44 : f32 to vector<8x128xf32>
    %110 = arith.select %108, %106, %109 : vector<8x128xi1>, vector<8x128xf32>
    %111 = arith.index_cast %20 : i32 to index
    %c0_45 = arith.constant 0 : index
    %c128 = arith.constant 128 : index
    %112 = vector.load %arg9[%111, %c0_45, %c128] : memref<8x8x256xf32, #tpu.memory_space<vmem>>, vector<1x8x128xf32>
    %113 = vector.shape_cast %112 : vector<1x8x128xf32> to vector<8x128xf32>
    %114 = vector.shape_cast %110 : vector<8x128xf32> to vector<1x8x128xf32>
    tpu.vector_store %arg9[%111, %c0_45, %c128], %114 {strides = array<i32>} : memref<8x8x256xf32, #tpu.memory_space<vmem>>, vector<1x8x128xf32>,
    %115 = vector.shape_cast %75 : vector<8x1xi1> to vector<8x1xi1>
    %116 = vector.broadcast %115 : vector<8x1xi1> to vector<8x128xi1>
    %117 = arith.select %116, %106, %17 : vector<8x128xi1>, vector<8x128xf32>
    %118 = vector.shape_cast %75 : vector<8x1xi1> to vector<8x1xi1>
    %119 = vector.broadcast %118 : vector<8x1xi1> to vector<8x128xi1>
    %120 = arith.select %119, %104, %19 : vector<8x128xi1>, vector<8x128xf32>
    %c1_i32 = arith.constant 1 : i32
    %c7_i32_46 = arith.constant 7 : i32
    %121 = arith.subi %c7_i32_46, %c1_i32 : i32
    %122 = arith.index_cast %c1_i32 : i32 to index
    %c0_47 = arith.constant 0 : index
    %c0_48 = arith.constant 0 : index
    %123 = vector.load %arg8[%122, %c0_47, %c0_48] : memref<8x8x1xi32, #tpu.memory_space<vmem>>, vector<1x8x1xi32>
    %124 = vector.shape_cast %123 : vector<1x8x1xi32> to vector<8x1xi32>
    %c0_i32_49 = arith.constant 0 : i32
    %125 = vector.broadcast %c0_i32_49 : i32 to vector<8x1xi32>
    %126 = arith.cmpi ne, %124, %125 : vector<8x1xi32>
    %127 = arith.index_cast %c1_i32 : i32 to index
    %c0_50 = arith.constant 0 : index
    %c0_51 = arith.constant 0 : index
    %128 = vector.load %arg10[%127, %c0_50, %c0_51] : memref<8x8x1024xf32, #tpu.memory_space<vmem>>, vector<1x8x512xf32>
    %129 = vector.shape_cast %128 : vector<1x8x512xf32> to vector<8x512xf32>
    %130 = arith.truncf %67 : vector<8x128xf32> to vector<8x128xbf16>
    %cst_52 = arith.constant dense<0.000000e+00> : vector<8x512xf32>
    %131 = tpu.matmul %130, %10, %cst_52 {dimension_numbers = #tpu.dot_dimension_numbers<[1], [0], [0], [1], [0, 0, 1, 1], [], []>} : vector<8x128xbf16>, vector<128x512xbf16>, vector<8x512xf32> -> vector<8x512xf32>
    %132 = arith.addf %129, %131 : vector<8x512xf32>
    %133 = vector.extract_strided_slice %132 {offsets = [0, 0], sizes = [8, 128], strides = [1, 1]} : vector<8x512xf32> to vector<8x128xf32>
    %134 = arith.negf %133 : vector<8x128xf32>
    %135 = math.exp %134 : vector<8x128xf32>
    %cst_53 = arith.constant 1.000000e+00 : f32
    %136 = vector.broadcast %cst_53 : f32 to vector<8x128xf32>
    %137 = arith.addf %136, %135 : vector<8x128xf32>
    %138 = arith.divf %136, %137 : vector<8x128xf32>
    %139 = vector.extract_strided_slice %132 {offsets = [0, 128], sizes = [8, 128], strides = [1, 1]} : vector<8x512xf32> to vector<8x128xf32>
    %140 = arith.negf %139 : vector<8x128xf32>
    %141 = math.exp %140 : vector<8x128xf32>
    %cst_54 = arith.constant 1.000000e+00 : f32
    %142 = vector.broadcast %cst_54 : f32 to vector<8x128xf32>
    %143 = arith.addf %142, %141 : vector<8x128xf32>
    %144 = arith.divf %142, %143 : vector<8x128xf32>
    %145 = vector.extract_strided_slice %132 {offsets = [0, 256], sizes = [8, 128], strides = [1, 1]} : vector<8x512xf32> to vector<8x128xf32>
    %146 = math.tanh %145 : vector<8x128xf32>
    %147 = vector.extract_strided_slice %132 {offsets = [0, 384], sizes = [8, 128], strides = [1, 1]} : vector<8x512xf32> to vector<8x128xf32>
    %148 = arith.negf %147 : vector<8x128xf32>
    %149 = math.exp %148 : vector<8x128xf32>
    %cst_55 = arith.constant 1.000000e+00 : f32
    %150 = vector.broadcast %cst_55 : f32 to vector<8x128xf32>
    %151 = arith.addf %150, %149 : vector<8x128xf32>
    %152 = arith.divf %150, %151 : vector<8x128xf32>
    %153 = arith.mulf %144, %70 : vector<8x128xf32>
    %154 = arith.mulf %138, %146 : vector<8x128xf32>
    %155 = arith.addf %153, %154 : vector<8x128xf32>
    %156 = math.tanh %155 : vector<8x128xf32>
    %157 = arith.mulf %152, %156 : vector<8x128xf32>
    %cst_56 = arith.constant 0.000000e+00 : f32
    %158 = vector.shape_cast %126 : vector<8x1xi1> to vector<8x1xi1>
    %159 = vector.broadcast %158 : vector<8x1xi1> to vector<8x128xi1>
    %160 = vector.broadcast %cst_56 : f32 to vector<8x128xf32>
    %161 = arith.select %159, %157, %160 : vector<8x128xi1>, vector<8x128xf32>
    %162 = arith.index_cast %c1_i32 : i32 to index
    %c0_57 = arith.constant 0 : index
    %c0_58 = arith.constant 0 : index
    %163 = vector.load %arg9[%162, %c0_57, %c0_58] : memref<8x8x256xf32, #tpu.memory_space<vmem>>, vector<1x8x128xf32>
    %164 = vector.shape_cast %163 : vector<1x8x128xf32> to vector<8x128xf32>
    %165 = vector.shape_cast %161 : vector<8x128xf32> to vector<1x8x128xf32>
    tpu.vector_store %arg9[%162, %c0_57, %c0_58], %165 {strides = array<i32>} : memref<8x8x256xf32, #tpu.memory_space<vmem>>, vector<1x8x128xf32>,
    %166 = vector.shape_cast %126 : vector<8x1xi1> to vector<8x1xi1>
    %167 = vector.broadcast %166 : vector<8x1xi1> to vector<8x128xi1>
    %168 = arith.select %167, %157, %67 : vector<8x128xi1>, vector<8x128xf32>
    %169 = vector.shape_cast %126 : vector<8x1xi1> to vector<8x1xi1>
    %170 = vector.broadcast %169 : vector<8x1xi1> to vector<8x128xi1>
    %171 = arith.select %170, %155, %70 : vector<8x128xi1>, vector<8x128xf32>
    %172 = arith.index_cast %121 : i32 to index
    %c0_59 = arith.constant 0 : index
    %c0_60 = arith.constant 0 : index
    %173 = vector.load %arg8[%172, %c0_59, %c0_60] : memref<8x8x1xi32, #tpu.memory_space<vmem>>, vector<1x8x1xi32>
    %174 = vector.shape_cast %173 : vector<1x8x1xi32> to vector<8x1xi32>
    %c0_i32_61 = arith.constant 0 : i32
    %175 = vector.broadcast %c0_i32_61 : i32 to vector<8x1xi32>
    %176 = arith.cmpi ne, %174, %175 : vector<8x1xi32>
    %177 = arith.index_cast %121 : i32 to index
    %c0_62 = arith.constant 0 : index
    %c512_63 = arith.constant 512 : index
    %178 = vector.load %arg10[%177, %c0_62, %c512_63] : memref<8x8x1024xf32, #tpu.memory_space<vmem>>, vector<1x8x512xf32>
    %179 = vector.shape_cast %178 : vector<1x8x512xf32> to vector<8x512xf32>
    %180 = arith.truncf %117 : vector<8x128xf32> to vector<8x128xbf16>
    %cst_64 = arith.constant dense<0.000000e+00> : vector<8x512xf32>
    %181 = tpu.matmul %180, %11, %cst_64 {dimension_numbers = #tpu.dot_dimension_numbers<[1], [0], [0], [1], [0, 0, 1, 1], [], []>} : vector<8x128xbf16>, vector<128x512xbf16>, vector<8x512xf32> -> vector<8x512xf32>
    %182 = arith.addf %179, %181 : vector<8x512xf32>
    %183 = vector.extract_strided_slice %182 {offsets = [0, 0], sizes = [8, 128], strides = [1, 1]} : vector<8x512xf32> to vector<8x128xf32>
    %184 = arith.negf %183 : vector<8x128xf32>
    %185 = math.exp %184 : vector<8x128xf32>
    %cst_65 = arith.constant 1.000000e+00 : f32
    %186 = vector.broadcast %cst_65 : f32 to vector<8x128xf32>
    %187 = arith.addf %186, %185 : vector<8x128xf32>
    %188 = arith.divf %186, %187 : vector<8x128xf32>
    %189 = vector.extract_strided_slice %182 {offsets = [0, 128], sizes = [8, 128], strides = [1, 1]} : vector<8x512xf32> to vector<8x128xf32>
    %190 = arith.negf %189 : vector<8x128xf32>
    %191 = math.exp %190 : vector<8x128xf32>
    %cst_66 = arith.constant 1.000000e+00 : f32
    %192 = vector.broadcast %cst_66 : f32 to vector<8x128xf32>
    %193 = arith.addf %192, %191 : vector<8x128xf32>
    %194 = arith.divf %192, %193 : vector<8x128xf32>
    %195 = vector.extract_strided_slice %182 {offsets = [0, 256], sizes = [8, 128], strides = [1, 1]} : vector<8x512xf32> to vector<8x128xf32>
    %196 = math.tanh %195 : vector<8x128xf32>
    %197 = vector.extract_strided_slice %182 {offsets = [0, 384], sizes = [8, 128], strides = [1, 1]} : vector<8x512xf32> to vector<8x128xf32>
    %198 = arith.negf %197 : vector<8x128xf32>
    %199 = math.exp %198 : vector<8x128xf32>
    %cst_67 = arith.constant 1.000000e+00 : f32
    %200 = vector.broadcast %cst_67 : f32 to vector<8x128xf32>
    %201 = arith.addf %200, %199 : vector<8x128xf32>
    %202 = arith.divf %200, %201 : vector<8x128xf32>
    %203 = arith.mulf %194, %120 : vector<8x128xf32>
    %204 = arith.mulf %188, %196 : vector<8x128xf32>
    %205 = arith.addf %203, %204 : vector<8x128xf32>
    %206 = math.tanh %205 : vector<8x128xf32>
    %207 = arith.mulf %202, %206 : vector<8x128xf32>
    %cst_68 = arith.constant 0.000000e+00 : f32
    %208 = vector.shape_cast %176 : vector<8x1xi1> to vector<8x1xi1>
    %209 = vector.broadcast %208 : vector<8x1xi1> to vector<8x128xi1>
    %210 = vector.broadcast %cst_68 : f32 to vector<8x128xf32>
    %211 = arith.select %209, %207, %210 : vector<8x128xi1>, vector<8x128xf32>
    %212 = arith.index_cast %121 : i32 to index
    %c0_69 = arith.constant 0 : index
    %c128_70 = arith.constant 128 : index
    %213 = vector.load %arg9[%212, %c0_69, %c128_70] : memref<8x8x256xf32, #tpu.memory_space<vmem>>, vector<1x8x128xf32>
    %214 = vector.shape_cast %213 : vector<1x8x128xf32> to vector<8x128xf32>
    %215 = vector.shape_cast %211 : vector<8x128xf32> to vector<1x8x128xf32>
    tpu.vector_store %arg9[%212, %c0_69, %c128_70], %215 {strides = array<i32>} : memref<8x8x256xf32, #tpu.memory_space<vmem>>, vector<1x8x128xf32>,
    %216 = vector.shape_cast %176 : vector<8x1xi1> to vector<8x1xi1>
    %217 = vector.broadcast %216 : vector<8x1xi1> to vector<8x128xi1>
    %218 = arith.select %217, %207, %117 : vector<8x128xi1>, vector<8x128xf32>
    %219 = vector.shape_cast %176 : vector<8x1xi1> to vector<8x1xi1>
    %220 = vector.broadcast %219 : vector<8x1xi1> to vector<8x128xi1>
    %221 = arith.select %220, %205, %120 : vector<8x128xi1>, vector<8x128xf32>
    %c2_i32 = arith.constant 2 : i32
    %c7_i32_71 = arith.constant 7 : i32
    %222 = arith.subi %c7_i32_71, %c2_i32 : i32
    %223 = arith.index_cast %c2_i32 : i32 to index
    %c0_72 = arith.constant 0 : index
    %c0_73 = arith.constant 0 : index
    %224 = vector.load %arg8[%223, %c0_72, %c0_73] : memref<8x8x1xi32, #tpu.memory_space<vmem>>, vector<1x8x1xi32>
    %225 = vector.shape_cast %224 : vector<1x8x1xi32> to vector<8x1xi32>
    %c0_i32_74 = arith.constant 0 : i32
    %226 = vector.broadcast %c0_i32_74 : i32 to vector<8x1xi32>
    %227 = arith.cmpi ne, %225, %226 : vector<8x1xi32>
    %228 = arith.index_cast %c2_i32 : i32 to index
    %c0_75 = arith.constant 0 : index
    %c0_76 = arith.constant 0 : index
    %229 = vector.load %arg10[%228, %c0_75, %c0_76] : memref<8x8x1024xf32, #tpu.memory_space<vmem>>, vector<1x8x512xf32>
    %230 = vector.shape_cast %229 : vector<1x8x512xf32> to vector<8x512xf32>
    %231 = arith.truncf %168 : vector<8x128xf32> to vector<8x128xbf16>
    %cst_77 = arith.constant dense<0.000000e+00> : vector<8x512xf32>
    %232 = tpu.matmul %231, %10, %cst_77 {dimension_numbers = #tpu.dot_dimension_numbers<[1], [0], [0], [1], [0, 0, 1, 1], [], []>} : vector<8x128xbf16>, vector<128x512xbf16>, vector<8x512xf32> -> vector<8x512xf32>
    %233 = arith.addf %230, %232 : vector<8x512xf32>
    %234 = vector.extract_strided_slice %233 {offsets = [0, 0], sizes = [8, 128], strides = [1, 1]} : vector<8x512xf32> to vector<8x128xf32>
    %235 = arith.negf %234 : vector<8x128xf32>
    %236 = math.exp %235 : vector<8x128xf32>
    %cst_78 = arith.constant 1.000000e+00 : f32
    %237 = vector.broadcast %cst_78 : f32 to vector<8x128xf32>
    %238 = arith.addf %237, %236 : vector<8x128xf32>
    %239 = arith.divf %237, %238 : vector<8x128xf32>
    %240 = vector.extract_strided_slice %233 {offsets = [0, 128], sizes = [8, 128], strides = [1, 1]} : vector<8x512xf32> to vector<8x128xf32>
    %241 = arith.negf %240 : vector<8x128xf32>
    %242 = math.exp %241 : vector<8x128xf32>
    %cst_79 = arith.constant 1.000000e+00 : f32
    %243 = vector.broadcast %cst_79 : f32 to vector<8x128xf32>
    %244 = arith.addf %243, %242 : vector<8x128xf32>
    %245 = arith.divf %243, %244 : vector<8x128xf32>
    %246 = vector.extract_strided_slice %233 {offsets = [0, 256], sizes = [8, 128], strides = [1, 1]} : vector<8x512xf32> to vector<8x128xf32>
    %247 = math.tanh %246 : vector<8x128xf32>
    %248 = vector.extract_strided_slice %233 {offsets = [0, 384], sizes = [8, 128], strides = [1, 1]} : vector<8x512xf32> to vector<8x128xf32>
    %249 = arith.negf %248 : vector<8x128xf32>
    %250 = math.exp %249 : vector<8x128xf32>
    %cst_80 = arith.constant 1.000000e+00 : f32
    %251 = vector.broadcast %cst_80 : f32 to vector<8x128xf32>
    %252 = arith.addf %251, %250 : vector<8x128xf32>
    %253 = arith.divf %251, %252 : vector<8x128xf32>
    %254 = arith.mulf %245, %171 : vector<8x128xf32>
    %255 = arith.mulf %239, %247 : vector<8x128xf32>
    %256 = arith.addf %254, %255 : vector<8x128xf32>
    %257 = math.tanh %256 : vector<8x128xf32>
    %258 = arith.mulf %253, %257 : vector<8x128xf32>
    %cst_81 = arith.constant 0.000000e+00 : f32
    %259 = vector.shape_cast %227 : vector<8x1xi1> to vector<8x1xi1>
    %260 = vector.broadcast %259 : vector<8x1xi1> to vector<8x128xi1>
    %261 = vector.broadcast %cst_81 : f32 to vector<8x128xf32>
    %262 = arith.select %260, %258, %261 : vector<8x128xi1>, vector<8x128xf32>
    %263 = arith.index_cast %c2_i32 : i32 to index
    %c0_82 = arith.constant 0 : index
    %c0_83 = arith.constant 0 : index
    %264 = vector.load %arg9[%263, %c0_82, %c0_83] : memref<8x8x256xf32, #tpu.memory_space<vmem>>, vector<1x8x128xf32>
    %265 = vector.shape_cast %264 : vector<1x8x128xf32> to vector<8x128xf32>
    %266 = vector.shape_cast %262 : vector<8x128xf32> to vector<1x8x128xf32>
    tpu.vector_store %arg9[%263, %c0_82, %c0_83], %266 {strides = array<i32>} : memref<8x8x256xf32, #tpu.memory_space<vmem>>, vector<1x8x128xf32>,
    %267 = vector.shape_cast %227 : vector<8x1xi1> to vector<8x1xi1>
    %268 = vector.broadcast %267 : vector<8x1xi1> to vector<8x128xi1>
    %269 = arith.select %268, %258, %168 : vector<8x128xi1>, vector<8x128xf32>
    %270 = vector.shape_cast %227 : vector<8x1xi1> to vector<8x1xi1>
    %271 = vector.broadcast %270 : vector<8x1xi1> to vector<8x128xi1>
    %272 = arith.select %271, %256, %171 : vector<8x128xi1>, vector<8x128xf32>
    %273 = arith.index_cast %222 : i32 to index
    %c0_84 = arith.constant 0 : index
    %c0_85 = arith.constant 0 : index
    %274 = vector.load %arg8[%273, %c0_84, %c0_85] : memref<8x8x1xi32, #tpu.memory_space<vmem>>, vector<1x8x1xi32>
    %275 = vector.shape_cast %274 : vector<1x8x1xi32> to vector<8x1xi32>
    %c0_i32_86 = arith.constant 0 : i32
    %276 = vector.broadcast %c0_i32_86 : i32 to vector<8x1xi32>
    %277 = arith.cmpi ne, %275, %276 : vector<8x1xi32>
    %278 = arith.index_cast %222 : i32 to index
    %c0_87 = arith.constant 0 : index
    %c512_88 = arith.constant 512 : index
    %279 = vector.load %arg10[%278, %c0_87, %c512_88] : memref<8x8x1024xf32, #tpu.memory_space<vmem>>, vector<1x8x512xf32>
    %280 = vector.shape_cast %279 : vector<1x8x512xf32> to vector<8x512xf32>
    %281 = arith.truncf %218 : vector<8x128xf32> to vector<8x128xbf16>
    %cst_89 = arith.constant dense<0.000000e+00> : vector<8x512xf32>
    %282 = tpu.matmul %281, %11, %cst_89 {dimension_numbers = #tpu.dot_dimension_numbers<[1], [0], [0], [1], [0, 0, 1, 1], [], []>} : vector<8x128xbf16>, vector<128x512xbf16>, vector<8x512xf32> -> vector<8x512xf32>
    %283 = arith.addf %280, %282 : vector<8x512xf32>
    %284 = vector.extract_strided_slice %283 {offsets = [0, 0], sizes = [8, 128], strides = [1, 1]} : vector<8x512xf32> to vector<8x128xf32>
    %285 = arith.negf %284 : vector<8x128xf32>
    %286 = math.exp %285 : vector<8x128xf32>
    %cst_90 = arith.constant 1.000000e+00 : f32
    %287 = vector.broadcast %cst_90 : f32 to vector<8x128xf32>
    %288 = arith.addf %287, %286 : vector<8x128xf32>
    %289 = arith.divf %287, %288 : vector<8x128xf32>
    %290 = vector.extract_strided_slice %283 {offsets = [0, 128], sizes = [8, 128], strides = [1, 1]} : vector<8x512xf32> to vector<8x128xf32>
    %291 = arith.negf %290 : vector<8x128xf32>
    %292 = math.exp %291 : vector<8x128xf32>
    %cst_91 = arith.constant 1.000000e+00 : f32
    %293 = vector.broadcast %cst_91 : f32 to vector<8x128xf32>
    %294 = arith.addf %293, %292 : vector<8x128xf32>
    %295 = arith.divf %293, %294 : vector<8x128xf32>
    %296 = vector.extract_strided_slice %283 {offsets = [0, 256], sizes = [8, 128], strides = [1, 1]} : vector<8x512xf32> to vector<8x128xf32>
    %297 = math.tanh %296 : vector<8x128xf32>
    %298 = vector.extract_strided_slice %283 {offsets = [0, 384], sizes = [8, 128], strides = [1, 1]} : vector<8x512xf32> to vector<8x128xf32>
    %299 = arith.negf %298 : vector<8x128xf32>
    %300 = math.exp %299 : vector<8x128xf32>
    %cst_92 = arith.constant 1.000000e+00 : f32
    %301 = vector.broadcast %cst_92 : f32 to vector<8x128xf32>
    %302 = arith.addf %301, %300 : vector<8x128xf32>
    %303 = arith.divf %301, %302 : vector<8x128xf32>
    %304 = arith.mulf %295, %221 : vector<8x128xf32>
    %305 = arith.mulf %289, %297 : vector<8x128xf32>
    %306 = arith.addf %304, %305 : vector<8x128xf32>
    %307 = math.tanh %306 : vector<8x128xf32>
    %308 = arith.mulf %303, %307 : vector<8x128xf32>
    %cst_93 = arith.constant 0.000000e+00 : f32
    %309 = vector.shape_cast %277 : vector<8x1xi1> to vector<8x1xi1>
    %310 = vector.broadcast %309 : vector<8x1xi1> to vector<8x128xi1>
    %311 = vector.broadcast %cst_93 : f32 to vector<8x128xf32>
    %312 = arith.select %310, %308, %311 : vector<8x128xi1>, vector<8x128xf32>
    %313 = arith.index_cast %222 : i32 to index
    %c0_94 = arith.constant 0 : index
    %c128_95 = arith.constant 128 : index
    %314 = vector.load %arg9[%313, %c0_94, %c128_95] : memref<8x8x256xf32, #tpu.memory_space<vmem>>, vector<1x8x128xf32>
    %315 = vector.shape_cast %314 : vector<1x8x128xf32> to vector<8x128xf32>
    %316 = vector.shape_cast %312 : vector<8x128xf32> to vector<1x8x128xf32>
    tpu.vector_store %arg9[%313, %c0_94, %c128_95], %316 {strides = array<i32>} : memref<8x8x256xf32, #tpu.memory_space<vmem>>, vector<1x8x128xf32>,
    %317 = vector.shape_cast %277 : vector<8x1xi1> to vector<8x1xi1>
    %318 = vector.broadcast %317 : vector<8x1xi1> to vector<8x128xi1>
    %319 = arith.select %318, %308, %218 : vector<8x128xi1>, vector<8x128xf32>
    %320 = vector.shape_cast %277 : vector<8x1xi1> to vector<8x1xi1>
    %321 = vector.broadcast %320 : vector<8x1xi1> to vector<8x128xi1>
    %322 = arith.select %321, %306, %221 : vector<8x128xi1>, vector<8x128xf32>
    %c3_i32 = arith.constant 3 : i32
    %c7_i32_96 = arith.constant 7 : i32
    %323 = arith.subi %c7_i32_96, %c3_i32 : i32
    %324 = arith.index_cast %c3_i32 : i32 to index
    %c0_97 = arith.constant 0 : index
    %c0_98 = arith.constant 0 : index
    %325 = vector.load %arg8[%324, %c0_97, %c0_98] : memref<8x8x1xi32, #tpu.memory_space<vmem>>, vector<1x8x1xi32>
    %326 = vector.shape_cast %325 : vector<1x8x1xi32> to vector<8x1xi32>
    %c0_i32_99 = arith.constant 0 : i32
    %327 = vector.broadcast %c0_i32_99 : i32 to vector<8x1xi32>
    %328 = arith.cmpi ne, %326, %327 : vector<8x1xi32>
    %329 = arith.index_cast %c3_i32 : i32 to index
    %c0_100 = arith.constant 0 : index
    %c0_101 = arith.constant 0 : index
    %330 = vector.load %arg10[%329, %c0_100, %c0_101] : memref<8x8x1024xf32, #tpu.memory_space<vmem>>, vector<1x8x512xf32>
    %331 = vector.shape_cast %330 : vector<1x8x512xf32> to vector<8x512xf32>
    %332 = arith.truncf %269 : vector<8x128xf32> to vector<8x128xbf16>
    %cst_102 = arith.constant dense<0.000000e+00> : vector<8x512xf32>
    %333 = tpu.matmul %332, %10, %cst_102 {dimension_numbers = #tpu.dot_dimension_numbers<[1], [0], [0], [1], [0, 0, 1, 1], [], []>} : vector<8x128xbf16>, vector<128x512xbf16>, vector<8x512xf32> -> vector<8x512xf32>
    %334 = arith.addf %331, %333 : vector<8x512xf32>
    %335 = vector.extract_strided_slice %334 {offsets = [0, 0], sizes = [8, 128], strides = [1, 1]} : vector<8x512xf32> to vector<8x128xf32>
    %336 = arith.negf %335 : vector<8x128xf32>
    %337 = math.exp %336 : vector<8x128xf32>
    %cst_103 = arith.constant 1.000000e+00 : f32
    %338 = vector.broadcast %cst_103 : f32 to vector<8x128xf32>
    %339 = arith.addf %338, %337 : vector<8x128xf32>
    %340 = arith.divf %338, %339 : vector<8x128xf32>
    %341 = vector.extract_strided_slice %334 {offsets = [0, 128], sizes = [8, 128], strides = [1, 1]} : vector<8x512xf32> to vector<8x128xf32>
    %342 = arith.negf %341 : vector<8x128xf32>
    %343 = math.exp %342 : vector<8x128xf32>
    %cst_104 = arith.constant 1.000000e+00 : f32
    %344 = vector.broadcast %cst_104 : f32 to vector<8x128xf32>
    %345 = arith.addf %344, %343 : vector<8x128xf32>
    %346 = arith.divf %344, %345 : vector<8x128xf32>
    %347 = vector.extract_strided_slice %334 {offsets = [0, 256], sizes = [8, 128], strides = [1, 1]} : vector<8x512xf32> to vector<8x128xf32>
    %348 = math.tanh %347 : vector<8x128xf32>
    %349 = vector.extract_strided_slice %334 {offsets = [0, 384], sizes = [8, 128], strides = [1, 1]} : vector<8x512xf32> to vector<8x128xf32>
    %350 = arith.negf %349 : vector<8x128xf32>
    %351 = math.exp %350 : vector<8x128xf32>
    %cst_105 = arith.constant 1.000000e+00 : f32
    %352 = vector.broadcast %cst_105 : f32 to vector<8x128xf32>
    %353 = arith.addf %352, %351 : vector<8x128xf32>
    %354 = arith.divf %352, %353 : vector<8x128xf32>
    %355 = arith.mulf %346, %272 : vector<8x128xf32>
    %356 = arith.mulf %340, %348 : vector<8x128xf32>
    %357 = arith.addf %355, %356 : vector<8x128xf32>
    %358 = math.tanh %357 : vector<8x128xf32>
    %359 = arith.mulf %354, %358 : vector<8x128xf32>
    %cst_106 = arith.constant 0.000000e+00 : f32
    %360 = vector.shape_cast %328 : vector<8x1xi1> to vector<8x1xi1>
    %361 = vector.broadcast %360 : vector<8x1xi1> to vector<8x128xi1>
    %362 = vector.broadcast %cst_106 : f32 to vector<8x128xf32>
    %363 = arith.select %361, %359, %362 : vector<8x128xi1>, vector<8x128xf32>
    %364 = arith.index_cast %c3_i32 : i32 to index
    %c0_107 = arith.constant 0 : index
    %c0_108 = arith.constant 0 : index
    %365 = vector.load %arg9[%364, %c0_107, %c0_108] : memref<8x8x256xf32, #tpu.memory_space<vmem>>, vector<1x8x128xf32>
    %366 = vector.shape_cast %365 : vector<1x8x128xf32> to vector<8x128xf32>
    %367 = vector.shape_cast %363 : vector<8x128xf32> to vector<1x8x128xf32>
    tpu.vector_store %arg9[%364, %c0_107, %c0_108], %367 {strides = array<i32>} : memref<8x8x256xf32, #tpu.memory_space<vmem>>, vector<1x8x128xf32>,
    %368 = vector.shape_cast %328 : vector<8x1xi1> to vector<8x1xi1>
    %369 = vector.broadcast %368 : vector<8x1xi1> to vector<8x128xi1>
    %370 = arith.select %369, %359, %269 : vector<8x128xi1>, vector<8x128xf32>
    %371 = vector.shape_cast %328 : vector<8x1xi1> to vector<8x1xi1>
    %372 = vector.broadcast %371 : vector<8x1xi1> to vector<8x128xi1>
    %373 = arith.select %372, %357, %272 : vector<8x128xi1>, vector<8x128xf32>
    %374 = arith.index_cast %323 : i32 to index
    %c0_109 = arith.constant 0 : index
    %c0_110 = arith.constant 0 : index
    %375 = vector.load %arg8[%374, %c0_109, %c0_110] : memref<8x8x1xi32, #tpu.memory_space<vmem>>, vector<1x8x1xi32>
    %376 = vector.shape_cast %375 : vector<1x8x1xi32> to vector<8x1xi32>
    %c0_i32_111 = arith.constant 0 : i32
    %377 = vector.broadcast %c0_i32_111 : i32 to vector<8x1xi32>
    %378 = arith.cmpi ne, %376, %377 : vector<8x1xi32>
    %379 = arith.index_cast %323 : i32 to index
    %c0_112 = arith.constant 0 : index
    %c512_113 = arith.constant 512 : index
    %380 = vector.load %arg10[%379, %c0_112, %c512_113] : memref<8x8x1024xf32, #tpu.memory_space<vmem>>, vector<1x8x512xf32>
    %381 = vector.shape_cast %380 : vector<1x8x512xf32> to vector<8x512xf32>
    %382 = arith.truncf %319 : vector<8x128xf32> to vector<8x128xbf16>
    %cst_114 = arith.constant dense<0.000000e+00> : vector<8x512xf32>
    %383 = tpu.matmul %382, %11, %cst_114 {dimension_numbers = #tpu.dot_dimension_numbers<[1], [0], [0], [1], [0, 0, 1, 1], [], []>} : vector<8x128xbf16>, vector<128x512xbf16>, vector<8x512xf32> -> vector<8x512xf32>
    %384 = arith.addf %381, %383 : vector<8x512xf32>
    %385 = vector.extract_strided_slice %384 {offsets = [0, 0], sizes = [8, 128], strides = [1, 1]} : vector<8x512xf32> to vector<8x128xf32>
    %386 = arith.negf %385 : vector<8x128xf32>
    %387 = math.exp %386 : vector<8x128xf32>
    %cst_115 = arith.constant 1.000000e+00 : f32
    %388 = vector.broadcast %cst_115 : f32 to vector<8x128xf32>
    %389 = arith.addf %388, %387 : vector<8x128xf32>
    %390 = arith.divf %388, %389 : vector<8x128xf32>
    %391 = vector.extract_strided_slice %384 {offsets = [0, 128], sizes = [8, 128], strides = [1, 1]} : vector<8x512xf32> to vector<8x128xf32>
    %392 = arith.negf %391 : vector<8x128xf32>
    %393 = math.exp %392 : vector<8x128xf32>
    %cst_116 = arith.constant 1.000000e+00 : f32
    %394 = vector.broadcast %cst_116 : f32 to vector<8x128xf32>
    %395 = arith.addf %394, %393 : vector<8x128xf32>
    %396 = arith.divf %394, %395 : vector<8x128xf32>
    %397 = vector.extract_strided_slice %384 {offsets = [0, 256], sizes = [8, 128], strides = [1, 1]} : vector<8x512xf32> to vector<8x128xf32>
    %398 = math.tanh %397 : vector<8x128xf32>
    %399 = vector.extract_strided_slice %384 {offsets = [0, 384], sizes = [8, 128], strides = [1, 1]} : vector<8x512xf32> to vector<8x128xf32>
    %400 = arith.negf %399 : vector<8x128xf32>
    %401 = math.exp %400 : vector<8x128xf32>
    %cst_117 = arith.constant 1.000000e+00 : f32
    %402 = vector.broadcast %cst_117 : f32 to vector<8x128xf32>
    %403 = arith.addf %402, %401 : vector<8x128xf32>
    %404 = arith.divf %402, %403 : vector<8x128xf32>
    %405 = arith.mulf %396, %322 : vector<8x128xf32>
    %406 = arith.mulf %390, %398 : vector<8x128xf32>
    %407 = arith.addf %405, %406 : vector<8x128xf32>
    %408 = math.tanh %407 : vector<8x128xf32>
    %409 = arith.mulf %404, %408 : vector<8x128xf32>
    %cst_118 = arith.constant 0.000000e+00 : f32
    %410 = vector.shape_cast %378 : vector<8x1xi1> to vector<8x1xi1>
    %411 = vector.broadcast %410 : vector<8x1xi1> to vector<8x128xi1>
    %412 = vector.broadcast %cst_118 : f32 to vector<8x128xf32>
    %413 = arith.select %411, %409, %412 : vector<8x128xi1>, vector<8x128xf32>
    %414 = arith.index_cast %323 : i32 to index
    %c0_119 = arith.constant 0 : index
    %c128_120 = arith.constant 128 : index
    %415 = vector.load %arg9[%414, %c0_119, %c128_120] : memref<8x8x256xf32, #tpu.memory_space<vmem>>, vector<1x8x128xf32>
    %416 = vector.shape_cast %415 : vector<1x8x128xf32> to vector<8x128xf32>
    %417 = vector.shape_cast %413 : vector<8x128xf32> to vector<1x8x128xf32>
    tpu.vector_store %arg9[%414, %c0_119, %c128_120], %417 {strides = array<i32>} : memref<8x8x256xf32, #tpu.memory_space<vmem>>, vector<1x8x128xf32>,
    %418 = vector.shape_cast %378 : vector<8x1xi1> to vector<8x1xi1>
    %419 = vector.broadcast %418 : vector<8x1xi1> to vector<8x128xi1>
    %420 = arith.select %419, %409, %319 : vector<8x128xi1>, vector<8x128xf32>
    %421 = vector.shape_cast %378 : vector<8x1xi1> to vector<8x1xi1>
    %422 = vector.broadcast %421 : vector<8x1xi1> to vector<8x128xi1>
    %423 = arith.select %422, %407, %322 : vector<8x128xi1>, vector<8x128xf32>
    %c4_i32 = arith.constant 4 : i32
    %c7_i32_121 = arith.constant 7 : i32
    %424 = arith.subi %c7_i32_121, %c4_i32 : i32
    %425 = arith.index_cast %c4_i32 : i32 to index
    %c0_122 = arith.constant 0 : index
    %c0_123 = arith.constant 0 : index
    %426 = vector.load %arg8[%425, %c0_122, %c0_123] : memref<8x8x1xi32, #tpu.memory_space<vmem>>, vector<1x8x1xi32>
    %427 = vector.shape_cast %426 : vector<1x8x1xi32> to vector<8x1xi32>
    %c0_i32_124 = arith.constant 0 : i32
    %428 = vector.broadcast %c0_i32_124 : i32 to vector<8x1xi32>
    %429 = arith.cmpi ne, %427, %428 : vector<8x1xi32>
    %430 = arith.index_cast %c4_i32 : i32 to index
    %c0_125 = arith.constant 0 : index
    %c0_126 = arith.constant 0 : index
    %431 = vector.load %arg10[%430, %c0_125, %c0_126] : memref<8x8x1024xf32, #tpu.memory_space<vmem>>, vector<1x8x512xf32>
    %432 = vector.shape_cast %431 : vector<1x8x512xf32> to vector<8x512xf32>
    %433 = arith.truncf %370 : vector<8x128xf32> to vector<8x128xbf16>
    %cst_127 = arith.constant dense<0.000000e+00> : vector<8x512xf32>
    %434 = tpu.matmul %433, %10, %cst_127 {dimension_numbers = #tpu.dot_dimension_numbers<[1], [0], [0], [1], [0, 0, 1, 1], [], []>} : vector<8x128xbf16>, vector<128x512xbf16>, vector<8x512xf32> -> vector<8x512xf32>
    %435 = arith.addf %432, %434 : vector<8x512xf32>
    %436 = vector.extract_strided_slice %435 {offsets = [0, 0], sizes = [8, 128], strides = [1, 1]} : vector<8x512xf32> to vector<8x128xf32>
    %437 = arith.negf %436 : vector<8x128xf32>
    %438 = math.exp %437 : vector<8x128xf32>
    %cst_128 = arith.constant 1.000000e+00 : f32
    %439 = vector.broadcast %cst_128 : f32 to vector<8x128xf32>
    %440 = arith.addf %439, %438 : vector<8x128xf32>
    %441 = arith.divf %439, %440 : vector<8x128xf32>
    %442 = vector.extract_strided_slice %435 {offsets = [0, 128], sizes = [8, 128], strides = [1, 1]} : vector<8x512xf32> to vector<8x128xf32>
    %443 = arith.negf %442 : vector<8x128xf32>
    %444 = math.exp %443 : vector<8x128xf32>
    %cst_129 = arith.constant 1.000000e+00 : f32
    %445 = vector.broadcast %cst_129 : f32 to vector<8x128xf32>
    %446 = arith.addf %445, %444 : vector<8x128xf32>
    %447 = arith.divf %445, %446 : vector<8x128xf32>
    %448 = vector.extract_strided_slice %435 {offsets = [0, 256], sizes = [8, 128], strides = [1, 1]} : vector<8x512xf32> to vector<8x128xf32>
    %449 = math.tanh %448 : vector<8x128xf32>
    %450 = vector.extract_strided_slice %435 {offsets = [0, 384], sizes = [8, 128], strides = [1, 1]} : vector<8x512xf32> to vector<8x128xf32>
    %451 = arith.negf %450 : vector<8x128xf32>
    %452 = math.exp %451 : vector<8x128xf32>
    %cst_130 = arith.constant 1.000000e+00 : f32
    %453 = vector.broadcast %cst_130 : f32 to vector<8x128xf32>
    %454 = arith.addf %453, %452 : vector<8x128xf32>
    %455 = arith.divf %453, %454 : vector<8x128xf32>
    %456 = arith.mulf %447, %373 : vector<8x128xf32>
    %457 = arith.mulf %441, %449 : vector<8x128xf32>
    %458 = arith.addf %456, %457 : vector<8x128xf32>
    %459 = math.tanh %458 : vector<8x128xf32>
    %460 = arith.mulf %455, %459 : vector<8x128xf32>
    %cst_131 = arith.constant 0.000000e+00 : f32
    %461 = vector.shape_cast %429 : vector<8x1xi1> to vector<8x1xi1>
    %462 = vector.broadcast %461 : vector<8x1xi1> to vector<8x128xi1>
    %463 = vector.broadcast %cst_131 : f32 to vector<8x128xf32>
    %464 = arith.select %462, %460, %463 : vector<8x128xi1>, vector<8x128xf32>
    %465 = arith.index_cast %c4_i32 : i32 to index
    %c0_132 = arith.constant 0 : index
    %c0_133 = arith.constant 0 : index
    %466 = vector.load %arg9[%465, %c0_132, %c0_133] : memref<8x8x256xf32, #tpu.memory_space<vmem>>, vector<1x8x128xf32>
    %467 = vector.shape_cast %466 : vector<1x8x128xf32> to vector<8x128xf32>
    %468 = vector.shape_cast %464 : vector<8x128xf32> to vector<1x8x128xf32>
    tpu.vector_store %arg9[%465, %c0_132, %c0_133], %468 {strides = array<i32>} : memref<8x8x256xf32, #tpu.memory_space<vmem>>, vector<1x8x128xf32>,
    %469 = vector.shape_cast %429 : vector<8x1xi1> to vector<8x1xi1>
    %470 = vector.broadcast %469 : vector<8x1xi1> to vector<8x128xi1>
    %471 = arith.select %470, %460, %370 : vector<8x128xi1>, vector<8x128xf32>
    %472 = vector.shape_cast %429 : vector<8x1xi1> to vector<8x1xi1>
    %473 = vector.broadcast %472 : vector<8x1xi1> to vector<8x128xi1>
    %474 = arith.select %473, %458, %373 : vector<8x128xi1>, vector<8x128xf32>
    %475 = arith.index_cast %424 : i32 to index
    %c0_134 = arith.constant 0 : index
    %c0_135 = arith.constant 0 : index
    %476 = vector.load %arg8[%475, %c0_134, %c0_135] : memref<8x8x1xi32, #tpu.memory_space<vmem>>, vector<1x8x1xi32>
    %477 = vector.shape_cast %476 : vector<1x8x1xi32> to vector<8x1xi32>
    %c0_i32_136 = arith.constant 0 : i32
    %478 = vector.broadcast %c0_i32_136 : i32 to vector<8x1xi32>
    %479 = arith.cmpi ne, %477, %478 : vector<8x1xi32>
    %480 = arith.index_cast %424 : i32 to index
    %c0_137 = arith.constant 0 : index
    %c512_138 = arith.constant 512 : index
    %481 = vector.load %arg10[%480, %c0_137, %c512_138] : memref<8x8x1024xf32, #tpu.memory_space<vmem>>, vector<1x8x512xf32>
    %482 = vector.shape_cast %481 : vector<1x8x512xf32> to vector<8x512xf32>
    %483 = arith.truncf %420 : vector<8x128xf32> to vector<8x128xbf16>
    %cst_139 = arith.constant dense<0.000000e+00> : vector<8x512xf32>
    %484 = tpu.matmul %483, %11, %cst_139 {dimension_numbers = #tpu.dot_dimension_numbers<[1], [0], [0], [1], [0, 0, 1, 1], [], []>} : vector<8x128xbf16>, vector<128x512xbf16>, vector<8x512xf32> -> vector<8x512xf32>
    %485 = arith.addf %482, %484 : vector<8x512xf32>
    %486 = vector.extract_strided_slice %485 {offsets = [0, 0], sizes = [8, 128], strides = [1, 1]} : vector<8x512xf32> to vector<8x128xf32>
    %487 = arith.negf %486 : vector<8x128xf32>
    %488 = math.exp %487 : vector<8x128xf32>
    %cst_140 = arith.constant 1.000000e+00 : f32
    %489 = vector.broadcast %cst_140 : f32 to vector<8x128xf32>
    %490 = arith.addf %489, %488 : vector<8x128xf32>
    %491 = arith.divf %489, %490 : vector<8x128xf32>
    %492 = vector.extract_strided_slice %485 {offsets = [0, 128], sizes = [8, 128], strides = [1, 1]} : vector<8x512xf32> to vector<8x128xf32>
    %493 = arith.negf %492 : vector<8x128xf32>
    %494 = math.exp %493 : vector<8x128xf32>
    %cst_141 = arith.constant 1.000000e+00 : f32
    %495 = vector.broadcast %cst_141 : f32 to vector<8x128xf32>
    %496 = arith.addf %495, %494 : vector<8x128xf32>
    %497 = arith.divf %495, %496 : vector<8x128xf32>
    %498 = vector.extract_strided_slice %485 {offsets = [0, 256], sizes = [8, 128], strides = [1, 1]} : vector<8x512xf32> to vector<8x128xf32>
    %499 = math.tanh %498 : vector<8x128xf32>
    %500 = vector.extract_strided_slice %485 {offsets = [0, 384], sizes = [8, 128], strides = [1, 1]} : vector<8x512xf32> to vector<8x128xf32>
    %501 = arith.negf %500 : vector<8x128xf32>
    %502 = math.exp %501 : vector<8x128xf32>
    %cst_142 = arith.constant 1.000000e+00 : f32
    %503 = vector.broadcast %cst_142 : f32 to vector<8x128xf32>
    %504 = arith.addf %503, %502 : vector<8x128xf32>
    %505 = arith.divf %503, %504 : vector<8x128xf32>
    %506 = arith.mulf %497, %423 : vector<8x128xf32>
    %507 = arith.mulf %491, %499 : vector<8x128xf32>
    %508 = arith.addf %506, %507 : vector<8x128xf32>
    %509 = math.tanh %508 : vector<8x128xf32>
    %510 = arith.mulf %505, %509 : vector<8x128xf32>
    %cst_143 = arith.constant 0.000000e+00 : f32
    %511 = vector.shape_cast %479 : vector<8x1xi1> to vector<8x1xi1>
    %512 = vector.broadcast %511 : vector<8x1xi1> to vector<8x128xi1>
    %513 = vector.broadcast %cst_143 : f32 to vector<8x128xf32>
    %514 = arith.select %512, %510, %513 : vector<8x128xi1>, vector<8x128xf32>
    %515 = arith.index_cast %424 : i32 to index
    %c0_144 = arith.constant 0 : index
    %c128_145 = arith.constant 128 : index
    %516 = vector.load %arg9[%515, %c0_144, %c128_145] : memref<8x8x256xf32, #tpu.memory_space<vmem>>, vector<1x8x128xf32>
    %517 = vector.shape_cast %516 : vector<1x8x128xf32> to vector<8x128xf32>
    %518 = vector.shape_cast %514 : vector<8x128xf32> to vector<1x8x128xf32>
    tpu.vector_store %arg9[%515, %c0_144, %c128_145], %518 {strides = array<i32>} : memref<8x8x256xf32, #tpu.memory_space<vmem>>, vector<1x8x128xf32>,
    %519 = vector.shape_cast %479 : vector<8x1xi1> to vector<8x1xi1>
    %520 = vector.broadcast %519 : vector<8x1xi1> to vector<8x128xi1>
    %521 = arith.select %520, %510, %420 : vector<8x128xi1>, vector<8x128xf32>
    %522 = vector.shape_cast %479 : vector<8x1xi1> to vector<8x1xi1>
    %523 = vector.broadcast %522 : vector<8x1xi1> to vector<8x128xi1>
    %524 = arith.select %523, %508, %423 : vector<8x128xi1>, vector<8x128xf32>
    %c5_i32 = arith.constant 5 : i32
    %c7_i32_146 = arith.constant 7 : i32
    %525 = arith.subi %c7_i32_146, %c5_i32 : i32
    %526 = arith.index_cast %c5_i32 : i32 to index
    %c0_147 = arith.constant 0 : index
    %c0_148 = arith.constant 0 : index
    %527 = vector.load %arg8[%526, %c0_147, %c0_148] : memref<8x8x1xi32, #tpu.memory_space<vmem>>, vector<1x8x1xi32>
    %528 = vector.shape_cast %527 : vector<1x8x1xi32> to vector<8x1xi32>
    %c0_i32_149 = arith.constant 0 : i32
    %529 = vector.broadcast %c0_i32_149 : i32 to vector<8x1xi32>
    %530 = arith.cmpi ne, %528, %529 : vector<8x1xi32>
    %531 = arith.index_cast %c5_i32 : i32 to index
    %c0_150 = arith.constant 0 : index
    %c0_151 = arith.constant 0 : index
    %532 = vector.load %arg10[%531, %c0_150, %c0_151] : memref<8x8x1024xf32, #tpu.memory_space<vmem>>, vector<1x8x512xf32>
    %533 = vector.shape_cast %532 : vector<1x8x512xf32> to vector<8x512xf32>
    %534 = arith.truncf %471 : vector<8x128xf32> to vector<8x128xbf16>
    %cst_152 = arith.constant dense<0.000000e+00> : vector<8x512xf32>
    %535 = tpu.matmul %534, %10, %cst_152 {dimension_numbers = #tpu.dot_dimension_numbers<[1], [0], [0], [1], [0, 0, 1, 1], [], []>} : vector<8x128xbf16>, vector<128x512xbf16>, vector<8x512xf32> -> vector<8x512xf32>
    %536 = arith.addf %533, %535 : vector<8x512xf32>
    %537 = vector.extract_strided_slice %536 {offsets = [0, 0], sizes = [8, 128], strides = [1, 1]} : vector<8x512xf32> to vector<8x128xf32>
    %538 = arith.negf %537 : vector<8x128xf32>
    %539 = math.exp %538 : vector<8x128xf32>
    %cst_153 = arith.constant 1.000000e+00 : f32
    %540 = vector.broadcast %cst_153 : f32 to vector<8x128xf32>
    %541 = arith.addf %540, %539 : vector<8x128xf32>
    %542 = arith.divf %540, %541 : vector<8x128xf32>
    %543 = vector.extract_strided_slice %536 {offsets = [0, 128], sizes = [8, 128], strides = [1, 1]} : vector<8x512xf32> to vector<8x128xf32>
    %544 = arith.negf %543 : vector<8x128xf32>
    %545 = math.exp %544 : vector<8x128xf32>
    %cst_154 = arith.constant 1.000000e+00 : f32
    %546 = vector.broadcast %cst_154 : f32 to vector<8x128xf32>
    %547 = arith.addf %546, %545 : vector<8x128xf32>
    %548 = arith.divf %546, %547 : vector<8x128xf32>
    %549 = vector.extract_strided_slice %536 {offsets = [0, 256], sizes = [8, 128], strides = [1, 1]} : vector<8x512xf32> to vector<8x128xf32>
    %550 = math.tanh %549 : vector<8x128xf32>
    %551 = vector.extract_strided_slice %536 {offsets = [0, 384], sizes = [8, 128], strides = [1, 1]} : vector<8x512xf32> to vector<8x128xf32>
    %552 = arith.negf %551 : vector<8x128xf32>
    %553 = math.exp %552 : vector<8x128xf32>
    %cst_155 = arith.constant 1.000000e+00 : f32
    %554 = vector.broadcast %cst_155 : f32 to vector<8x128xf32>
    %555 = arith.addf %554, %553 : vector<8x128xf32>
    %556 = arith.divf %554, %555 : vector<8x128xf32>
    %557 = arith.mulf %548, %474 : vector<8x128xf32>
    %558 = arith.mulf %542, %550 : vector<8x128xf32>
    %559 = arith.addf %557, %558 : vector<8x128xf32>
    %560 = math.tanh %559 : vector<8x128xf32>
    %561 = arith.mulf %556, %560 : vector<8x128xf32>
    %cst_156 = arith.constant 0.000000e+00 : f32
    %562 = vector.shape_cast %530 : vector<8x1xi1> to vector<8x1xi1>
    %563 = vector.broadcast %562 : vector<8x1xi1> to vector<8x128xi1>
    %564 = vector.broadcast %cst_156 : f32 to vector<8x128xf32>
    %565 = arith.select %563, %561, %564 : vector<8x128xi1>, vector<8x128xf32>
    %566 = arith.index_cast %c5_i32 : i32 to index
    %c0_157 = arith.constant 0 : index
    %c0_158 = arith.constant 0 : index
    %567 = vector.load %arg9[%566, %c0_157, %c0_158] : memref<8x8x256xf32, #tpu.memory_space<vmem>>, vector<1x8x128xf32>
    %568 = vector.shape_cast %567 : vector<1x8x128xf32> to vector<8x128xf32>
    %569 = vector.shape_cast %565 : vector<8x128xf32> to vector<1x8x128xf32>
    tpu.vector_store %arg9[%566, %c0_157, %c0_158], %569 {strides = array<i32>} : memref<8x8x256xf32, #tpu.memory_space<vmem>>, vector<1x8x128xf32>,
    %570 = vector.shape_cast %530 : vector<8x1xi1> to vector<8x1xi1>
    %571 = vector.broadcast %570 : vector<8x1xi1> to vector<8x128xi1>
    %572 = arith.select %571, %561, %471 : vector<8x128xi1>, vector<8x128xf32>
    %573 = vector.shape_cast %530 : vector<8x1xi1> to vector<8x1xi1>
    %574 = vector.broadcast %573 : vector<8x1xi1> to vector<8x128xi1>
    %575 = arith.select %574, %559, %474 : vector<8x128xi1>, vector<8x128xf32>
    %576 = arith.index_cast %525 : i32 to index
    %c0_159 = arith.constant 0 : index
    %c0_160 = arith.constant 0 : index
    %577 = vector.load %arg8[%576, %c0_159, %c0_160] : memref<8x8x1xi32, #tpu.memory_space<vmem>>, vector<1x8x1xi32>
    %578 = vector.shape_cast %577 : vector<1x8x1xi32> to vector<8x1xi32>
    %c0_i32_161 = arith.constant 0 : i32
    %579 = vector.broadcast %c0_i32_161 : i32 to vector<8x1xi32>
    %580 = arith.cmpi ne, %578, %579 : vector<8x1xi32>
    %581 = arith.index_cast %525 : i32 to index
    %c0_162 = arith.constant 0 : index
    %c512_163 = arith.constant 512 : index
    %582 = vector.load %arg10[%581, %c0_162, %c512_163] : memref<8x8x1024xf32, #tpu.memory_space<vmem>>, vector<1x8x512xf32>
    %583 = vector.shape_cast %582 : vector<1x8x512xf32> to vector<8x512xf32>
    %584 = arith.truncf %521 : vector<8x128xf32> to vector<8x128xbf16>
    %cst_164 = arith.constant dense<0.000000e+00> : vector<8x512xf32>
    %585 = tpu.matmul %584, %11, %cst_164 {dimension_numbers = #tpu.dot_dimension_numbers<[1], [0], [0], [1], [0, 0, 1, 1], [], []>} : vector<8x128xbf16>, vector<128x512xbf16>, vector<8x512xf32> -> vector<8x512xf32>
    %586 = arith.addf %583, %585 : vector<8x512xf32>
    %587 = vector.extract_strided_slice %586 {offsets = [0, 0], sizes = [8, 128], strides = [1, 1]} : vector<8x512xf32> to vector<8x128xf32>
    %588 = arith.negf %587 : vector<8x128xf32>
    %589 = math.exp %588 : vector<8x128xf32>
    %cst_165 = arith.constant 1.000000e+00 : f32
    %590 = vector.broadcast %cst_165 : f32 to vector<8x128xf32>
    %591 = arith.addf %590, %589 : vector<8x128xf32>
    %592 = arith.divf %590, %591 : vector<8x128xf32>
    %593 = vector.extract_strided_slice %586 {offsets = [0, 128], sizes = [8, 128], strides = [1, 1]} : vector<8x512xf32> to vector<8x128xf32>
    %594 = arith.negf %593 : vector<8x128xf32>
    %595 = math.exp %594 : vector<8x128xf32>
    %cst_166 = arith.constant 1.000000e+00 : f32
    %596 = vector.broadcast %cst_166 : f32 to vector<8x128xf32>
    %597 = arith.addf %596, %595 : vector<8x128xf32>
    %598 = arith.divf %596, %597 : vector<8x128xf32>
    %599 = vector.extract_strided_slice %586 {offsets = [0, 256], sizes = [8, 128], strides = [1, 1]} : vector<8x512xf32> to vector<8x128xf32>
    %600 = math.tanh %599 : vector<8x128xf32>
    %601 = vector.extract_strided_slice %586 {offsets = [0, 384], sizes = [8, 128], strides = [1, 1]} : vector<8x512xf32> to vector<8x128xf32>
    %602 = arith.negf %601 : vector<8x128xf32>
    %603 = math.exp %602 : vector<8x128xf32>
    %cst_167 = arith.constant 1.000000e+00 : f32
    %604 = vector.broadcast %cst_167 : f32 to vector<8x128xf32>
    %605 = arith.addf %604, %603 : vector<8x128xf32>
    %606 = arith.divf %604, %605 : vector<8x128xf32>
    %607 = arith.mulf %598, %524 : vector<8x128xf32>
    %608 = arith.mulf %592, %600 : vector<8x128xf32>
    %609 = arith.addf %607, %608 : vector<8x128xf32>
    %610 = math.tanh %609 : vector<8x128xf32>
    %611 = arith.mulf %606, %610 : vector<8x128xf32>
    %cst_168 = arith.constant 0.000000e+00 : f32
    %612 = vector.shape_cast %580 : vector<8x1xi1> to vector<8x1xi1>
    %613 = vector.broadcast %612 : vector<8x1xi1> to vector<8x128xi1>
    %614 = vector.broadcast %cst_168 : f32 to vector<8x128xf32>
    %615 = arith.select %613, %611, %614 : vector<8x128xi1>, vector<8x128xf32>
    %616 = arith.index_cast %525 : i32 to index
    %c0_169 = arith.constant 0 : index
    %c128_170 = arith.constant 128 : index
    %617 = vector.load %arg9[%616, %c0_169, %c128_170] : memref<8x8x256xf32, #tpu.memory_space<vmem>>, vector<1x8x128xf32>
    %618 = vector.shape_cast %617 : vector<1x8x128xf32> to vector<8x128xf32>
    %619 = vector.shape_cast %615 : vector<8x128xf32> to vector<1x8x128xf32>
    tpu.vector_store %arg9[%616, %c0_169, %c128_170], %619 {strides = array<i32>} : memref<8x8x256xf32, #tpu.memory_space<vmem>>, vector<1x8x128xf32>,
    %620 = vector.shape_cast %580 : vector<8x1xi1> to vector<8x1xi1>
    %621 = vector.broadcast %620 : vector<8x1xi1> to vector<8x128xi1>
    %622 = arith.select %621, %611, %521 : vector<8x128xi1>, vector<8x128xf32>
    %623 = vector.shape_cast %580 : vector<8x1xi1> to vector<8x1xi1>
    %624 = vector.broadcast %623 : vector<8x1xi1> to vector<8x128xi1>
    %625 = arith.select %624, %609, %524 : vector<8x128xi1>, vector<8x128xf32>
    %c6_i32 = arith.constant 6 : i32
    %c7_i32_171 = arith.constant 7 : i32
    %626 = arith.subi %c7_i32_171, %c6_i32 : i32
    %627 = arith.index_cast %c6_i32 : i32 to index
    %c0_172 = arith.constant 0 : index
    %c0_173 = arith.constant 0 : index
    %628 = vector.load %arg8[%627, %c0_172, %c0_173] : memref<8x8x1xi32, #tpu.memory_space<vmem>>, vector<1x8x1xi32>
    %629 = vector.shape_cast %628 : vector<1x8x1xi32> to vector<8x1xi32>
    %c0_i32_174 = arith.constant 0 : i32
    %630 = vector.broadcast %c0_i32_174 : i32 to vector<8x1xi32>
    %631 = arith.cmpi ne, %629, %630 : vector<8x1xi32>
    %632 = arith.index_cast %c6_i32 : i32 to index
    %c0_175 = arith.constant 0 : index
    %c0_176 = arith.constant 0 : index
    %633 = vector.load %arg10[%632, %c0_175, %c0_176] : memref<8x8x1024xf32, #tpu.memory_space<vmem>>, vector<1x8x512xf32>
    %634 = vector.shape_cast %633 : vector<1x8x512xf32> to vector<8x512xf32>
    %635 = arith.truncf %572 : vector<8x128xf32> to vector<8x128xbf16>
    %cst_177 = arith.constant dense<0.000000e+00> : vector<8x512xf32>
    %636 = tpu.matmul %635, %10, %cst_177 {dimension_numbers = #tpu.dot_dimension_numbers<[1], [0], [0], [1], [0, 0, 1, 1], [], []>} : vector<8x128xbf16>, vector<128x512xbf16>, vector<8x512xf32> -> vector<8x512xf32>
    %637 = arith.addf %634, %636 : vector<8x512xf32>
    %638 = vector.extract_strided_slice %637 {offsets = [0, 0], sizes = [8, 128], strides = [1, 1]} : vector<8x512xf32> to vector<8x128xf32>
    %639 = arith.negf %638 : vector<8x128xf32>
    %640 = math.exp %639 : vector<8x128xf32>
    %cst_178 = arith.constant 1.000000e+00 : f32
    %641 = vector.broadcast %cst_178 : f32 to vector<8x128xf32>
    %642 = arith.addf %641, %640 : vector<8x128xf32>
    %643 = arith.divf %641, %642 : vector<8x128xf32>
    %644 = vector.extract_strided_slice %637 {offsets = [0, 128], sizes = [8, 128], strides = [1, 1]} : vector<8x512xf32> to vector<8x128xf32>
    %645 = arith.negf %644 : vector<8x128xf32>
    %646 = math.exp %645 : vector<8x128xf32>
    %cst_179 = arith.constant 1.000000e+00 : f32
    %647 = vector.broadcast %cst_179 : f32 to vector<8x128xf32>
    %648 = arith.addf %647, %646 : vector<8x128xf32>
    %649 = arith.divf %647, %648 : vector<8x128xf32>
    %650 = vector.extract_strided_slice %637 {offsets = [0, 256], sizes = [8, 128], strides = [1, 1]} : vector<8x512xf32> to vector<8x128xf32>
    %651 = math.tanh %650 : vector<8x128xf32>
    %652 = vector.extract_strided_slice %637 {offsets = [0, 384], sizes = [8, 128], strides = [1, 1]} : vector<8x512xf32> to vector<8x128xf32>
    %653 = arith.negf %652 : vector<8x128xf32>
    %654 = math.exp %653 : vector<8x128xf32>
    %cst_180 = arith.constant 1.000000e+00 : f32
    %655 = vector.broadcast %cst_180 : f32 to vector<8x128xf32>
    %656 = arith.addf %655, %654 : vector<8x128xf32>
    %657 = arith.divf %655, %656 : vector<8x128xf32>
    %658 = arith.mulf %649, %575 : vector<8x128xf32>
    %659 = arith.mulf %643, %651 : vector<8x128xf32>
    %660 = arith.addf %658, %659 : vector<8x128xf32>
    %661 = math.tanh %660 : vector<8x128xf32>
    %662 = arith.mulf %657, %661 : vector<8x128xf32>
    %cst_181 = arith.constant 0.000000e+00 : f32
    %663 = vector.shape_cast %631 : vector<8x1xi1> to vector<8x1xi1>
    %664 = vector.broadcast %663 : vector<8x1xi1> to vector<8x128xi1>
    %665 = vector.broadcast %cst_181 : f32 to vector<8x128xf32>
    %666 = arith.select %664, %662, %665 : vector<8x128xi1>, vector<8x128xf32>
    %667 = arith.index_cast %c6_i32 : i32 to index
    %c0_182 = arith.constant 0 : index
    %c0_183 = arith.constant 0 : index
    %668 = vector.load %arg9[%667, %c0_182, %c0_183] : memref<8x8x256xf32, #tpu.memory_space<vmem>>, vector<1x8x128xf32>
    %669 = vector.shape_cast %668 : vector<1x8x128xf32> to vector<8x128xf32>
    %670 = vector.shape_cast %666 : vector<8x128xf32> to vector<1x8x128xf32>
    tpu.vector_store %arg9[%667, %c0_182, %c0_183], %670 {strides = array<i32>} : memref<8x8x256xf32, #tpu.memory_space<vmem>>, vector<1x8x128xf32>,
    %671 = vector.shape_cast %631 : vector<8x1xi1> to vector<8x1xi1>
    %672 = vector.broadcast %671 : vector<8x1xi1> to vector<8x128xi1>
    %673 = arith.select %672, %662, %572 : vector<8x128xi1>, vector<8x128xf32>
    %674 = vector.shape_cast %631 : vector<8x1xi1> to vector<8x1xi1>
    %675 = vector.broadcast %674 : vector<8x1xi1> to vector<8x128xi1>
    %676 = arith.select %675, %660, %575 : vector<8x128xi1>, vector<8x128xf32>
    %677 = arith.index_cast %626 : i32 to index
    %c0_184 = arith.constant 0 : index
    %c0_185 = arith.constant 0 : index
    %678 = vector.load %arg8[%677, %c0_184, %c0_185] : memref<8x8x1xi32, #tpu.memory_space<vmem>>, vector<1x8x1xi32>
    %679 = vector.shape_cast %678 : vector<1x8x1xi32> to vector<8x1xi32>
    %c0_i32_186 = arith.constant 0 : i32
    %680 = vector.broadcast %c0_i32_186 : i32 to vector<8x1xi32>
    %681 = arith.cmpi ne, %679, %680 : vector<8x1xi32>
    %682 = arith.index_cast %626 : i32 to index
    %c0_187 = arith.constant 0 : index
    %c512_188 = arith.constant 512 : index
    %683 = vector.load %arg10[%682, %c0_187, %c512_188] : memref<8x8x1024xf32, #tpu.memory_space<vmem>>, vector<1x8x512xf32>
    %684 = vector.shape_cast %683 : vector<1x8x512xf32> to vector<8x512xf32>
    %685 = arith.truncf %622 : vector<8x128xf32> to vector<8x128xbf16>
    %cst_189 = arith.constant dense<0.000000e+00> : vector<8x512xf32>
    %686 = tpu.matmul %685, %11, %cst_189 {dimension_numbers = #tpu.dot_dimension_numbers<[1], [0], [0], [1], [0, 0, 1, 1], [], []>} : vector<8x128xbf16>, vector<128x512xbf16>, vector<8x512xf32> -> vector<8x512xf32>
    %687 = arith.addf %684, %686 : vector<8x512xf32>
    %688 = vector.extract_strided_slice %687 {offsets = [0, 0], sizes = [8, 128], strides = [1, 1]} : vector<8x512xf32> to vector<8x128xf32>
    %689 = arith.negf %688 : vector<8x128xf32>
    %690 = math.exp %689 : vector<8x128xf32>
    %cst_190 = arith.constant 1.000000e+00 : f32
    %691 = vector.broadcast %cst_190 : f32 to vector<8x128xf32>
    %692 = arith.addf %691, %690 : vector<8x128xf32>
    %693 = arith.divf %691, %692 : vector<8x128xf32>
    %694 = vector.extract_strided_slice %687 {offsets = [0, 128], sizes = [8, 128], strides = [1, 1]} : vector<8x512xf32> to vector<8x128xf32>
    %695 = arith.negf %694 : vector<8x128xf32>
    %696 = math.exp %695 : vector<8x128xf32>
    %cst_191 = arith.constant 1.000000e+00 : f32
    %697 = vector.broadcast %cst_191 : f32 to vector<8x128xf32>
    %698 = arith.addf %697, %696 : vector<8x128xf32>
    %699 = arith.divf %697, %698 : vector<8x128xf32>
    %700 = vector.extract_strided_slice %687 {offsets = [0, 256], sizes = [8, 128], strides = [1, 1]} : vector<8x512xf32> to vector<8x128xf32>
    %701 = math.tanh %700 : vector<8x128xf32>
    %702 = vector.extract_strided_slice %687 {offsets = [0, 384], sizes = [8, 128], strides = [1, 1]} : vector<8x512xf32> to vector<8x128xf32>
    %703 = arith.negf %702 : vector<8x128xf32>
    %704 = math.exp %703 : vector<8x128xf32>
    %cst_192 = arith.constant 1.000000e+00 : f32
    %705 = vector.broadcast %cst_192 : f32 to vector<8x128xf32>
    %706 = arith.addf %705, %704 : vector<8x128xf32>
    %707 = arith.divf %705, %706 : vector<8x128xf32>
    %708 = arith.mulf %699, %625 : vector<8x128xf32>
    %709 = arith.mulf %693, %701 : vector<8x128xf32>
    %710 = arith.addf %708, %709 : vector<8x128xf32>
    %711 = math.tanh %710 : vector<8x128xf32>
    %712 = arith.mulf %707, %711 : vector<8x128xf32>
    %cst_193 = arith.constant 0.000000e+00 : f32
    %713 = vector.shape_cast %681 : vector<8x1xi1> to vector<8x1xi1>
    %714 = vector.broadcast %713 : vector<8x1xi1> to vector<8x128xi1>
    %715 = vector.broadcast %cst_193 : f32 to vector<8x128xf32>
    %716 = arith.select %714, %712, %715 : vector<8x128xi1>, vector<8x128xf32>
    %717 = arith.index_cast %626 : i32 to index
    %c0_194 = arith.constant 0 : index
    %c128_195 = arith.constant 128 : index
    %718 = vector.load %arg9[%717, %c0_194, %c128_195] : memref<8x8x256xf32, #tpu.memory_space<vmem>>, vector<1x8x128xf32>
    %719 = vector.shape_cast %718 : vector<1x8x128xf32> to vector<8x128xf32>
    %720 = vector.shape_cast %716 : vector<8x128xf32> to vector<1x8x128xf32>
    tpu.vector_store %arg9[%717, %c0_194, %c128_195], %720 {strides = array<i32>} : memref<8x8x256xf32, #tpu.memory_space<vmem>>, vector<1x8x128xf32>,
    %721 = vector.shape_cast %681 : vector<8x1xi1> to vector<8x1xi1>
    %722 = vector.broadcast %721 : vector<8x1xi1> to vector<8x128xi1>
    %723 = arith.select %722, %712, %622 : vector<8x128xi1>, vector<8x128xf32>
    %724 = vector.shape_cast %681 : vector<8x1xi1> to vector<8x1xi1>
    %725 = vector.broadcast %724 : vector<8x1xi1> to vector<8x128xi1>
    %726 = arith.select %725, %710, %625 : vector<8x128xi1>, vector<8x128xf32>
    %c7_i32_196 = arith.constant 7 : i32
    %c7_i32_197 = arith.constant 7 : i32
    %727 = arith.subi %c7_i32_197, %c7_i32_196 : i32
    %728 = arith.index_cast %c7_i32_196 : i32 to index
    %c0_198 = arith.constant 0 : index
    %c0_199 = arith.constant 0 : index
    %729 = vector.load %arg8[%728, %c0_198, %c0_199] : memref<8x8x1xi32, #tpu.memory_space<vmem>>, vector<1x8x1xi32>
    %730 = vector.shape_cast %729 : vector<1x8x1xi32> to vector<8x1xi32>
    %c0_i32_200 = arith.constant 0 : i32
    %731 = vector.broadcast %c0_i32_200 : i32 to vector<8x1xi32>
    %732 = arith.cmpi ne, %730, %731 : vector<8x1xi32>
    %733 = arith.index_cast %c7_i32_196 : i32 to index
    %c0_201 = arith.constant 0 : index
    %c0_202 = arith.constant 0 : index
    %734 = vector.load %arg10[%733, %c0_201, %c0_202] : memref<8x8x1024xf32, #tpu.memory_space<vmem>>, vector<1x8x512xf32>
    %735 = vector.shape_cast %734 : vector<1x8x512xf32> to vector<8x512xf32>
    %736 = arith.truncf %673 : vector<8x128xf32> to vector<8x128xbf16>
    %cst_203 = arith.constant dense<0.000000e+00> : vector<8x512xf32>
    %737 = tpu.matmul %736, %10, %cst_203 {dimension_numbers = #tpu.dot_dimension_numbers<[1], [0], [0], [1], [0, 0, 1, 1], [], []>} : vector<8x128xbf16>, vector<128x512xbf16>, vector<8x512xf32> -> vector<8x512xf32>
    %738 = arith.addf %735, %737 : vector<8x512xf32>
    %739 = vector.extract_strided_slice %738 {offsets = [0, 0], sizes = [8, 128], strides = [1, 1]} : vector<8x512xf32> to vector<8x128xf32>
    %740 = arith.negf %739 : vector<8x128xf32>
    %741 = math.exp %740 : vector<8x128xf32>
    %cst_204 = arith.constant 1.000000e+00 : f32
    %742 = vector.broadcast %cst_204 : f32 to vector<8x128xf32>
    %743 = arith.addf %742, %741 : vector<8x128xf32>
    %744 = arith.divf %742, %743 : vector<8x128xf32>
    %745 = vector.extract_strided_slice %738 {offsets = [0, 128], sizes = [8, 128], strides = [1, 1]} : vector<8x512xf32> to vector<8x128xf32>
    %746 = arith.negf %745 : vector<8x128xf32>
    %747 = math.exp %746 : vector<8x128xf32>
    %cst_205 = arith.constant 1.000000e+00 : f32
    %748 = vector.broadcast %cst_205 : f32 to vector<8x128xf32>
    %749 = arith.addf %748, %747 : vector<8x128xf32>
    %750 = arith.divf %748, %749 : vector<8x128xf32>
    %751 = vector.extract_strided_slice %738 {offsets = [0, 256], sizes = [8, 128], strides = [1, 1]} : vector<8x512xf32> to vector<8x128xf32>
    %752 = math.tanh %751 : vector<8x128xf32>
    %753 = vector.extract_strided_slice %738 {offsets = [0, 384], sizes = [8, 128], strides = [1, 1]} : vector<8x512xf32> to vector<8x128xf32>
    %754 = arith.negf %753 : vector<8x128xf32>
    %755 = math.exp %754 : vector<8x128xf32>
    %cst_206 = arith.constant 1.000000e+00 : f32
    %756 = vector.broadcast %cst_206 : f32 to vector<8x128xf32>
    %757 = arith.addf %756, %755 : vector<8x128xf32>
    %758 = arith.divf %756, %757 : vector<8x128xf32>
    %759 = arith.mulf %750, %676 : vector<8x128xf32>
    %760 = arith.mulf %744, %752 : vector<8x128xf32>
    %761 = arith.addf %759, %760 : vector<8x128xf32>
    %762 = math.tanh %761 : vector<8x128xf32>
    %763 = arith.mulf %758, %762 : vector<8x128xf32>
    %cst_207 = arith.constant 0.000000e+00 : f32
    %764 = vector.shape_cast %732 : vector<8x1xi1> to vector<8x1xi1>
    %765 = vector.broadcast %764 : vector<8x1xi1> to vector<8x128xi1>
    %766 = vector.broadcast %cst_207 : f32 to vector<8x128xf32>
    %767 = arith.select %765, %763, %766 : vector<8x128xi1>, vector<8x128xf32>
    %768 = arith.index_cast %c7_i32_196 : i32 to index
    %c0_208 = arith.constant 0 : index
    %c0_209 = arith.constant 0 : index
    %769 = vector.load %arg9[%768, %c0_208, %c0_209] : memref<8x8x256xf32, #tpu.memory_space<vmem>>, vector<1x8x128xf32>
    %770 = vector.shape_cast %769 : vector<1x8x128xf32> to vector<8x128xf32>
    %771 = vector.shape_cast %767 : vector<8x128xf32> to vector<1x8x128xf32>
    tpu.vector_store %arg9[%768, %c0_208, %c0_209], %771 {strides = array<i32>} : memref<8x8x256xf32, #tpu.memory_space<vmem>>, vector<1x8x128xf32>,
    %772 = vector.shape_cast %732 : vector<8x1xi1> to vector<8x1xi1>
    %773 = vector.broadcast %772 : vector<8x1xi1> to vector<8x128xi1>
    %774 = arith.select %773, %763, %673 : vector<8x128xi1>, vector<8x128xf32>
    %775 = vector.shape_cast %732 : vector<8x1xi1> to vector<8x1xi1>
    %776 = vector.broadcast %775 : vector<8x1xi1> to vector<8x128xi1>
    %777 = arith.select %776, %761, %676 : vector<8x128xi1>, vector<8x128xf32>
    %778 = arith.index_cast %727 : i32 to index
    %c0_210 = arith.constant 0 : index
    %c0_211 = arith.constant 0 : index
    %779 = vector.load %arg8[%778, %c0_210, %c0_211] : memref<8x8x1xi32, #tpu.memory_space<vmem>>, vector<1x8x1xi32>
    %780 = vector.shape_cast %779 : vector<1x8x1xi32> to vector<8x1xi32>
    %c0_i32_212 = arith.constant 0 : i32
    %781 = vector.broadcast %c0_i32_212 : i32 to vector<8x1xi32>
    %782 = arith.cmpi ne, %780, %781 : vector<8x1xi32>
    %783 = arith.index_cast %727 : i32 to index
    %c0_213 = arith.constant 0 : index
    %c512_214 = arith.constant 512 : index
    %784 = vector.load %arg10[%783, %c0_213, %c512_214] : memref<8x8x1024xf32, #tpu.memory_space<vmem>>, vector<1x8x512xf32>
    %785 = vector.shape_cast %784 : vector<1x8x512xf32> to vector<8x512xf32>
    %786 = arith.truncf %723 : vector<8x128xf32> to vector<8x128xbf16>
    %cst_215 = arith.constant dense<0.000000e+00> : vector<8x512xf32>
    %787 = tpu.matmul %786, %11, %cst_215 {dimension_numbers = #tpu.dot_dimension_numbers<[1], [0], [0], [1], [0, 0, 1, 1], [], []>} : vector<8x128xbf16>, vector<128x512xbf16>, vector<8x512xf32> -> vector<8x512xf32>
    %788 = arith.addf %785, %787 : vector<8x512xf32>
    %789 = vector.extract_strided_slice %788 {offsets = [0, 0], sizes = [8, 128], strides = [1, 1]} : vector<8x512xf32> to vector<8x128xf32>
    %790 = arith.negf %789 : vector<8x128xf32>
    %791 = math.exp %790 : vector<8x128xf32>
    %cst_216 = arith.constant 1.000000e+00 : f32
    %792 = vector.broadcast %cst_216 : f32 to vector<8x128xf32>
    %793 = arith.addf %792, %791 : vector<8x128xf32>
    %794 = arith.divf %792, %793 : vector<8x128xf32>
    %795 = vector.extract_strided_slice %788 {offsets = [0, 128], sizes = [8, 128], strides = [1, 1]} : vector<8x512xf32> to vector<8x128xf32>
    %796 = arith.negf %795 : vector<8x128xf32>
    %797 = math.exp %796 : vector<8x128xf32>
    %cst_217 = arith.constant 1.000000e+00 : f32
    %798 = vector.broadcast %cst_217 : f32 to vector<8x128xf32>
    %799 = arith.addf %798, %797 : vector<8x128xf32>
    %800 = arith.divf %798, %799 : vector<8x128xf32>
    %801 = vector.extract_strided_slice %788 {offsets = [0, 256], sizes = [8, 128], strides = [1, 1]} : vector<8x512xf32> to vector<8x128xf32>
    %802 = math.tanh %801 : vector<8x128xf32>
    %803 = vector.extract_strided_slice %788 {offsets = [0, 384], sizes = [8, 128], strides = [1, 1]} : vector<8x512xf32> to vector<8x128xf32>
    %804 = arith.negf %803 : vector<8x128xf32>
    %805 = math.exp %804 : vector<8x128xf32>
    %cst_218 = arith.constant 1.000000e+00 : f32
    %806 = vector.broadcast %cst_218 : f32 to vector<8x128xf32>
    %807 = arith.addf %806, %805 : vector<8x128xf32>
    %808 = arith.divf %806, %807 : vector<8x128xf32>
    %809 = arith.mulf %800, %726 : vector<8x128xf32>
    %810 = arith.mulf %794, %802 : vector<8x128xf32>
    %811 = arith.addf %809, %810 : vector<8x128xf32>
    %812 = math.tanh %811 : vector<8x128xf32>
    %813 = arith.mulf %808, %812 : vector<8x128xf32>
    %cst_219 = arith.constant 0.000000e+00 : f32
    %814 = vector.shape_cast %782 : vector<8x1xi1> to vector<8x1xi1>
    %815 = vector.broadcast %814 : vector<8x1xi1> to vector<8x128xi1>
    %816 = vector.broadcast %cst_219 : f32 to vector<8x128xf32>
    %817 = arith.select %815, %813, %816 : vector<8x128xi1>, vector<8x128xf32>
    %818 = arith.index_cast %727 : i32 to index
    %c0_220 = arith.constant 0 : index
    %c128_221 = arith.constant 128 : index
    %819 = vector.load %arg9[%818, %c0_220, %c128_221] : memref<8x8x256xf32, #tpu.memory_space<vmem>>, vector<1x8x128xf32>
    %820 = vector.shape_cast %819 : vector<1x8x128xf32> to vector<8x128xf32>
    %821 = vector.shape_cast %817 : vector<8x128xf32> to vector<1x8x128xf32>
    tpu.vector_store %arg9[%818, %c0_220, %c128_221], %821 {strides = array<i32>} : memref<8x8x256xf32, #tpu.memory_space<vmem>>, vector<1x8x128xf32>,
    %822 = vector.shape_cast %782 : vector<8x1xi1> to vector<8x1xi1>
    %823 = vector.broadcast %822 : vector<8x1xi1> to vector<8x128xi1>
    %824 = arith.select %823, %813, %723 : vector<8x128xi1>, vector<8x128xf32>
    %825 = vector.shape_cast %782 : vector<8x1xi1> to vector<8x1xi1>
    %826 = vector.broadcast %825 : vector<8x1xi1> to vector<8x128xi1>
    %827 = arith.select %826, %811, %726 : vector<8x128xi1>, vector<8x128xf32>
    %c8_i32 = arith.constant 8 : i32
    return
  }
  func.func @transform_0(%arg0: i32) -> (i32, i32, i32) {
    %c0_i32 = arith.constant 0 : i32
    %c0_i32_0 = arith.constant 0 : i32
    %c0_i32_1 = arith.constant 0 : i32
    return %c0_i32, %arg0, %c0_i32_0 : i32, i32, i32
  }
  func.func @transform_1(%arg0: i32) -> (i32, i32) {
    %c0_i32 = arith.constant 0 : i32
    %c0_i32_0 = arith.constant 0 : i32
    %c0_i32_1 = arith.constant 0 : i32
    return %c0_i32, %c0_i32_0 : i32, i32
  }
  func.func @transform_2(%arg0: i32) -> (i32, i32) {
    %c0_i32 = arith.constant 0 : i32
    %c0_i32_0 = arith.constant 0 : i32
    %c0_i32_1 = arith.constant 0 : i32
    return %c0_i32, %c0_i32_0 : i32, i32
  }
  func.func @transform_3(%arg0: i32) -> (i32, i32) {
    %c0_i32 = arith.constant 0 : i32
    %c0_i32_0 = arith.constant 0 : i32
    %c0_i32_1 = arith.constant 0 : i32
    return %c0_i32, %c0_i32_0 : i32, i32
  }
  func.func @transform_4(%arg0: i32) -> (i32, i32) {
    %c0_i32 = arith.constant 0 : i32
    %c0_i32_0 = arith.constant 0 : i32
    %c0_i32_1 = arith.constant 0 : i32
    return %c0_i32, %c0_i32_0 : i32, i32
  }
  func.func @transform_5(%arg0: i32) -> (i32, i32, i32) {
    %c0_i32 = arith.constant 0 : i32
    %c0_i32_0 = arith.constant 0 : i32
    %c0_i32_1 = arith.constant 0 : i32
    return %c0_i32, %arg0, %c0_i32_0 : i32, i32, i32
  }
  func.func @transform_6(%arg0: i32) -> (i32, i32, i32) {
    %c0_i32 = arith.constant 0 : i32
    %c0_i32_0 = arith.constant 0 : i32
    %c0_i32_1 = arith.constant 0 : i32
    return %c0_i32, %arg0, %c0_i32_0 : i32, i32, i32
  }
  func.func @transform_7(%arg0: i32) -> (i32, i32, i32) {
    %c0_i32 = arith.constant 0 : i32
    %c0_i32_0 = arith.constant 0 : i32
    %c0_i32_1 = arith.constant 0 : i32
    return %c0_i32, %arg0, %c0_i32_0 : i32, i32, i32
  }
  func.func @transform_8(%arg0: i32) -> (i32, i32, i32) {
    %c0_i32 = arith.constant 0 : i32
    %c0_i32_0 = arith.constant 0 : i32
    %c0_i32_1 = arith.constant 0 : i32
    return %c0_i32, %arg0, %c0_i32_0 : i32, i32, i32
  }
}

</mosaic_0001>

<llo_original>
// kernel: bilstm_forward.2
$region0: #{bilstm_forward.2}
  #allocation0 [shape = 'u32[]', space=smem, size = 0x4, offset = 0x4, fixed_abs, tag = 'smem constant byte address 0x4 - core index']
  #allocation1 [shape = 'u32[72,128]{1,0:T(1,128)}', space=vmem, size = 0x9000, scoped, tag = 'internal scratch']
  #allocation2 [shape = 'f32[8,8,1024]{2,1,0:T(8,128)}', space=vmem, size = 0x40000, scoped, tag = 'scratch operand']
  %s0 = inlined_call_operand.vmem [shape: f32[8,8,32], index: 0, kind: input, shape index: {}]
  %s1 = inlined_call_operand.hbm [shape: bf16[32,1024], index: 1, kind: input, shape index: {}]
  %s2 = inlined_call_operand.vmem [shape: f32[1,1024], index: 2, kind: input, shape index: {}]
  %s3 = inlined_call_operand.vmem [shape: bf16[128,512], index: 3, kind: input, shape index: {}]
  %s4 = inlined_call_operand.vmem [shape: bf16[128,512], index: 4, kind: input, shape index: {}]
  %s5 = inlined_call_operand.vmem [shape: f32[2,8,128], index: 5, kind: input, shape index: {}]
  %s6 = inlined_call_operand.vmem [shape: f32[2,8,128], index: 6, kind: input, shape index: {}]
  %s7 = inlined_call_operand.vmem [shape: s32[8,8,1], index: 7, kind: input, shape index: {}]
  %s8 = inlined_call_operand.vmem [shape: f32[8,8,256], index: 8, kind: output, shape index: {}]
  %s9 = sld [smem:[#allocation0]]
  $region46: #{bilstm_forward.2} parent=0
    _
  %s11 = ssub.s32 1, %s9
  %s12 = scalar_select 0, %s11, %s9
  $region1: #{bilstm_forward.2} parent=0
    #allocation3 [shape = 'u8[65536]{0}', space=vmem, size = 0x10000, scoped, tag = 'input window, operand 1, single buffered']
    #allocation4 [shape = 's32[1]{0}', space=sflag, size = 0x4, scoped, tag = 'scoped memory for bilstm_forward.2']
    %13 = vsyncpa [#allocation4], 0
    // Predicated region
    $region2: #{bilstm_forward.2} parent=1 // pred_check
      _
    $region3: #{bilstm_forward.2} parent=1 // pred_check_branch
      %15 = sbr.rel (0) target = $region5
    $region4: #{bilstm_forward.2} parent=1 // pred_region
      _
    $region5: #{bilstm_forward.2} parent=1 // pred_fallthru
      _
    // Predicated region
    $region6: #{bilstm_forward.2} parent=1 // pred_check
      _
    $region7: #{bilstm_forward.2} parent=1 // pred_check_branch
      %17 = sbr.rel (0) target = $region9
    $region8: #{bilstm_forward.2} parent=1 // pred_region
      %19 = vsyncadd [#allocation4], 0
      %s20 = sshll.u32 %s1, 4
      %s21 = int_to_ptr.hbm [resolvable:$true] %s20
      %s22 = sshll.u32 [#allocation3], 4
      %s23 = int_to_ptr.vmem [resolvable:$true] %s22
      %28 = dma.hbm_to_vmem [thread:$0]  %s21, 2048, %s23, [#allocation4], 512, 512, 32
    $region9: #{bilstm_forward.2} parent=1 // pred_fallthru
      _
    // Predicated region
    $region10: #{bilstm_forward.2} parent=1 // pred_check
      _
    $region11: #{bilstm_forward.2} parent=1 // pred_check_branch
      %30 = sbr.rel (0) target = $region13
    $region12: #{bilstm_forward.2} parent=1 // pred_region
      _
    $region13: #{bilstm_forward.2} parent=1 // pred_fallthru
      _
    // Predicated region
    $region14: #{bilstm_forward.2} parent=1 // pred_check
      _
    $region15: #{bilstm_forward.2} parent=1 // pred_check_branch
      %32 = sbr.rel (0) target = $region17
    $region16: #{bilstm_forward.2} parent=1 // pred_region
      _
    $region17: #{bilstm_forward.2} parent=1 // pred_fallthru
      _
    // Predicated region
    $region18: #{bilstm_forward.2} parent=1 // pred_check
      _
    $region19: #{bilstm_forward.2} parent=1 // pred_check_branch
      %34 = sbr.rel (0) target = $region21
    $region20: #{bilstm_forward.2} parent=1 // pred_region
      _
    $region21: #{bilstm_forward.2} parent=1 // pred_fallthru
      _
    // Predicated region
    $region22: #{bilstm_forward.2} parent=1 // pred_check
      _
    $region23: #{bilstm_forward.2} parent=1 // pred_check_branch
      %36 = sbr.rel (0) target = $region25
    $region24: #{bilstm_forward.2} parent=1 // pred_region
      _
    $region25: #{bilstm_forward.2} parent=1 // pred_fallthru
      _
    // Predicated region
    $region26: #{bilstm_forward.2} parent=1 // pred_check
      _
    $region27: #{bilstm_forward.2} parent=1 // pred_check_branch
      %38 = sbr.rel (0) target = $region29
    $region28: #{bilstm_forward.2} parent=1 // pred_region
      _
    $region29: #{bilstm_forward.2} parent=1 // pred_fallthru
      _
    // Predicated region
    $region30: #{bilstm_forward.2} parent=1 // pred_check
      _
    $region31: #{bilstm_forward.2} parent=1 // pred_check_branch
      %40 = sbr.rel (0) target = $region33
    $region32: #{bilstm_forward.2} parent=1 // pred_region
      _
    $region33: #{bilstm_forward.2} parent=1 // pred_fallthru
      _
    // Predicated region
    $region34: #{bilstm_forward.2} parent=1 // pred_check
      _
    $region35: #{bilstm_forward.2} parent=1 // pred_check_branch
      %42 = sbr.rel (0) target = $region37
    $region36: #{bilstm_forward.2} parent=1 // pred_region
      %44 = dma.done [#allocation4], 2048
    $region37: #{bilstm_forward.2} parent=1 // pred_fallthru
      _
    %v46 = vld [vmem:[%s0] sm:$0xff]
    %v47 = vld [vmem:[%s0 + $0x8] sm:$0xff]
    %v48 = vld [vmem:[%s0 + $0x10] sm:$0xff]
    %v49 = vld [vmem:[%s0 + $0x18] sm:$0xff]
    %v50 = vld [vmem:[%s0 + $0x20] sm:$0xff]
    %v51 = vld [vmem:[%s0 + $0x28] sm:$0xff]
    %v52 = vld [vmem:[%s0 + $0x30] sm:$0xff]
    %v53 = vld [vmem:[%s0 + $0x38] sm:$0xff]
    %v54 = vpack.c.bf16 %v47, %v46
    %v55 = vpack.c.bf16 %v49, %v48
    %v56 = vpack.c.bf16 %v51, %v50
    %v57 = vpack.c.bf16 %v53, %v52
    %v58 = vld [vmem:[#allocation3] sm:$0xff]
    %v59 = vld [vmem:[#allocation3 + $0x8] sm:$0xff]
    %v60 = vld [vmem:[#allocation3 + $0x10] sm:$0xff]
    %v61 = vld [vmem:[#allocation3 + $0x18] sm:$0xff]
    %v62 = vld [vmem:[#allocation3 + $0x20] sm:$0xff]
    %v63 = vld [vmem:[#allocation3 + $0x28] sm:$0xff]
    %v64 = vld [vmem:[#allocation3 + $0x30] sm:$0xff]
    %v65 = vld [vmem:[#allocation3 + $0x38] sm:$0xff]
    %v66 = vld [vmem:[#allocation3 + $0x40] sm:$0xff]
    %v67 = vld [vmem:[#allocation3 + $0x48] sm:$0xff]
    %v68 = vld [vmem:[#allocation3 + $0x50] sm:$0xff]
    %v69 = vld [vmem:[#allocation3 + $0x58] sm:$0xff]
    %v70 = vld [vmem:[#allocation3 + $0x60] sm:$0xff]
    %v71 = vld [vmem:[#allocation3 + $0x68] sm:$0xff]
    %v72 = vld [vmem:[#allocation3 + $0x70] sm:$0xff]
    %v73 = vld [vmem:[#allocation3 + $0x78] sm:$0xff]
    %v74 = vld [vmem:[%s2] sm:$0xff]
    %v76 = vperm.slane %v74, 0
    %v77 = vperm.slane %v74, 1
    %v78 = vperm.slane %v74, 2
    %v79 = vperm.slane %v74, 3
    %v80 = vperm.slane %v74, 4
    %v81 = vperm.slane %v74, 5
    %v82 = vperm.slane %v74, 6
    %v83 = vperm.slane %v74, 7
    %v108 = vunpack.c.l.b16 %v58
    %v109 = vunpack.c.h.b16 %v58
    %v110 = vunpack.c.l.b16 %v59
    %v111 = vunpack.c.h.b16 %v59
    %v112 = vunpack.c.l.b16 %v60
    %v113 = vunpack.c.h.b16 %v60
    %v114 = vunpack.c.l.b16 %v61
    %v115 = vunpack.c.h.b16 %v61
    %v116 = vunpack.c.l.b16 %v62
    %v117 = vunpack.c.h.b16 %v62
    %v118 = vunpack.c.l.b16 %v63
    %v119 = vunpack.c.h.b16 %v63
    %v120 = vunpack.c.l.b16 %v64
    %v121 = vunpack.c.h.b16 %v64
    %v122 = vunpack.c.l.b16 %v65
    %v123 = vunpack.c.h.b16 %v65
    %v124 = vunpack.c.l.b16 %v66
    %v125 = vunpack.c.h.b16 %v66
    %v126 = vunpack.c.l.b16 %v67
    %v127 = vunpack.c.h.b16 %v67
    %v128 = vunpack.c.l.b16 %v68
    %v129 = vunpack.c.h.b16 %v68
    %v130 = vunpack.c.l.b16 %v69
    %v131 = vunpack.c.h.b16 %v69
    %v132 = vunpack.c.l.b16 %v70
    %v133 = vunpack.c.h.b16 %v70
    %v134 = vunpack.c.l.b16 %v71
    %v135 = vunpack.c.h.b16 %v71
    %v136 = vunpack.c.l.b16 %v72
    %v137 = vunpack.c.h.b16 %v72
    %v138 = vunpack.c.l.b16 %v73
    %v139 = vunpack.c.h.b16 %v73
    %v140 = vpack.c.b16 %v116, %v108
    %v141 = vpack.c.b16 %v117, %v109
    %v142 = vpack.c.b16 %v118, %v110
    %v143 = vpack.c.b16 %v119, %v111
    %v144 = vpack.c.b16 %v120, %v112
    %v145 = vpack.c.b16 %v121, %v113
    %v146 = vpack.c.b16 %v122, %v114
    %v147 = vpack.c.b16 %v123, %v115
    %v148 = vpack.c.b16 %v132, %v124
    %v149 = vpack.c.b16 %v133, %v125
    %v150 = vpack.c.b16 %v134, %v126
    %v151 = vpack.c.b16 %v135, %v127
    %v152 = vpack.c.b16 %v136, %v128
    %v153 = vpack.c.b16 %v137, %v129
    %v154 = vpack.c.b16 %v138, %v130
    %v155 = vpack.c.b16 %v139, %v131
    %vm172 = vcmask 261120
    %v174 = vsel %vm172, %v54, 0
    %v177 = vsel %vm172, %v55, 0
    %v180 = vsel %vm172, %v56, 0
    %v183 = vsel %vm172, %v57, 0
    %185 = vmatpush.bf16.msra.mxu0 0
    %186 = vmatpush.bf16.msra.mxu0 0
    %187 = vmatpush.bf16.msra.mxu0 0
    %188 = vmatpush.bf16.msra.mxu0 0
    %189 = vmatpush.bf16.msra.mxu0 0
    %190 = vmatpush.bf16.msra.mxu0 0
    %191 = vmatpush.bf16.msra.mxu0 %v148
    %192 = vmatpush.bf16.msra.mxu0 %v140
    %193 = vmatmul.bf16.gmra.mxu0 %v174
    %v194 = vpop.f32.mrf.mxu0
    %v195 = vadd.f32 %v76, %v194
    %v196 = vpop.f32.mrf.mxu0
    %v197 = vadd.f32 %v76, %v196
    %198 = vmatmul.bf16.gmra.mxu0 %v177
    %v199 = vpop.f32.mrf.mxu0
    %v200 = vadd.f32 %v76, %v199
    %v201 = vpop.f32.mrf.mxu0
    %v202 = vadd.f32 %v76, %v201
    %203 = vmatmul.bf16.gmra.mxu0 %v180
    %v204 = vpop.f32.mrf.mxu0
    %v205 = vadd.f32 %v76, %v204
    %v206 = vpop.f32.mrf.mxu0
    %v207 = vadd.f32 %v76, %v206
    %208 = vmatmul.bf16.gmra.mxu0 %v183
    %v209 = vpop.f32.mrf.mxu0
    %v210 = vadd.f32 %v76, %v209
    %v211 = vpop.f32.mrf.mxu0
    %v212 = vadd.f32 %v76, %v211
    %213 = vdwg.mxu0
    %214 = vmatpush.bf16.msra.mxu0 0
    %215 = vmatpush.bf16.msra.mxu0 0
    %216 = vmatpush.bf16.msra.mxu0 0
    %217 = vmatpush.bf16.msra.mxu0 0
    %218 = vmatpush.bf16.msra.mxu0 0
    %219 = vmatpush.bf16.msra.mxu0 0
    %220 = vmatpush.bf16.msra.mxu0 %v149
    %221 = vmatpush.bf16.msra.mxu0 %v141
    %222 = vmatmul.bf16.gmra.mxu0 %v174
    %v223 = vpop.f32.mrf.mxu0
    %v224 = vadd.f32 %v77, %v223
    %v225 = vpop.f32.mrf.mxu0
    %v226 = vadd.f32 %v77, %v225
    %227 = vmatmul.bf16.gmra.mxu0 %v177
    %v228 = vpop.f32.mrf.mxu0
    %v229 = vadd.f32 %v77, %v228
    %v230 = vpop.f32.mrf.mxu0
    %v231 = vadd.f32 %v77, %v230
    %232 = vmatmul.bf16.gmra.mxu0 %v180
    %v233 = vpop.f32.mrf.mxu0
    %v234 = vadd.f32 %v77, %v233
    %v235 = vpop.f32.mrf.mxu0
    %v236 = vadd.f32 %v77, %v235
    %237 = vmatmul.bf16.gmra.mxu0 %v183
    %v238 = vpop.f32.mrf.mxu0
    %v239 = vadd.f32 %v77, %v238
    %v240 = vpop.f32.mrf.mxu0
    %v241 = vadd.f32 %v77, %v240
    %242 = vdwg.mxu0
    %243 = vmatpush.bf16.msra.mxu0 0
    %244 = vmatpush.bf16.msra.mxu0 0
    %245 = vmatpush.bf16.msra.mxu0 0
    %246 = vmatpush.bf16.msra.mxu0 0
    %247 = vmatpush.bf16.msra.mxu0 0
    %248 = vmatpush.bf16.msra.mxu0 0
    %249 = vmatpush.bf16.msra.mxu0 %v150
    %250 = vmatpush.bf16.msra.mxu0 %v142
    %251 = vmatmul.bf16.gmra.mxu0 %v174
    %v252 = vpop.f32.mrf.mxu0
    %v253 = vadd.f32 %v78, %v252
    %v254 = vpop.f32.mrf.mxu0
    %v255 = vadd.f32 %v78, %v254
    %256 = vmatmul.bf16.gmra.mxu0 %v177
    %v257 = vpop.f32.mrf.mxu0
    %v258 = vadd.f32 %v78, %v257
    %v259 = vpop.f32.mrf.mxu0
    %v260 = vadd.f32 %v78, %v259
    %261 = vmatmul.bf16.gmra.mxu0 %v180
    %v262 = vpop.f32.mrf.mxu0
    %v263 = vadd.f32 %v78, %v262
    %v264 = vpop.f32.mrf.mxu0
    %v265 = vadd.f32 %v78, %v264
    %266 = vmatmul.bf16.gmra.mxu0 %v183
    %v267 = vpop.f32.mrf.mxu0
    %v268 = vadd.f32 %v78, %v267
    %v269 = vpop.f32.mrf.mxu0
    %v270 = vadd.f32 %v78, %v269
    %271 = vdwg.mxu0
    %272 = vmatpush.bf16.msra.mxu0 0
    %273 = vmatpush.bf16.msra.mxu0 0
    %274 = vmatpush.bf16.msra.mxu0 0
    %275 = vmatpush.bf16.msra.mxu0 0
    %276 = vmatpush.bf16.msra.mxu0 0
    %277 = vmatpush.bf16.msra.mxu0 0
    %278 = vmatpush.bf16.msra.mxu0 %v151
    %279 = vmatpush.bf16.msra.mxu0 %v143
    %280 = vmatmul.bf16.gmra.mxu0 %v174
    %v281 = vpop.f32.mrf.mxu0
    %v282 = vadd.f32 %v79, %v281
    %v283 = vpop.f32.mrf.mxu0
    %v284 = vadd.f32 %v79, %v283
    %285 = vmatmul.bf16.gmra.mxu0 %v177
    %v286 = vpop.f32.mrf.mxu0
    %v287 = vadd.f32 %v79, %v286
    %v288 = vpop.f32.mrf.mxu0
    %v289 = vadd.f32 %v79, %v288
    %290 = vmatmul.bf16.gmra.mxu0 %v180
    %v291 = vpop.f32.mrf.mxu0
    %v292 = vadd.f32 %v79, %v291
    %v293 = vpop.f32.mrf.mxu0
    %v294 = vadd.f32 %v79, %v293
    %295 = vmatmul.bf16.gmra.mxu0 %v183
    %v296 = vpop.f32.mrf.mxu0
    %v297 = vadd.f32 %v79, %v296
    %v298 = vpop.f32.mrf.mxu0
    %v299 = vadd.f32 %v79, %v298
    %300 = vdwg.mxu0
    %301 = vmatpush.bf16.msra.mxu0 0
    %302 = vmatpush.bf16.msra.mxu0 0
    %303 = vmatpush.bf16.msra.mxu0 0
    %304 = vmatpush.bf16.msra.mxu0 0
    %305 = vmatpush.bf16.msra.mxu0 0
    %306 = vmatpush.bf16.msra.mxu0 0
    %307 = vmatpush.bf16.msra.mxu0 %v152
    %308 = vmatpush.bf16.msra.mxu0 %v144
    %309 = vmatmul.bf16.gmra.mxu0 %v174
    %v310 = vpop.f32.mrf.mxu0
    %v311 = vadd.f32 %v80, %v310
    %v312 = vpop.f32.mrf.mxu0
    %v313 = vadd.f32 %v80, %v312
    %314 = vmatmul.bf16.gmra.mxu0 %v177
    %v315 = vpop.f32.mrf.mxu0
    %v316 = vadd.f32 %v80, %v315
    %v317 = vpop.f32.mrf.mxu0
    %v318 = vadd.f32 %v80, %v317
    %319 = vmatmul.bf16.gmra.mxu0 %v180
    %v320 = vpop.f32.mrf.mxu0
    %v321 = vadd.f32 %v80, %v320
    %v322 = vpop.f32.mrf.mxu0
    %v323 = vadd.f32 %v80, %v322
    %324 = vmatmul.bf16.gmra.mxu0 %v183
    %v325 = vpop.f32.mrf.mxu0
    %v326 = vadd.f32 %v80, %v325
    %v327 = vpop.f32.mrf.mxu0
    %v328 = vadd.f32 %v80, %v327
    %329 = vdwg.mxu0
    %330 = vmatpush.bf16.msra.mxu0 0
    %331 = vmatpush.bf16.msra.mxu0 0
    %332 = vmatpush.bf16.msra.mxu0 0
    %333 = vmatpush.bf16.msra.mxu0 0
    %334 = vmatpush.bf16.msra.mxu0 0
    %335 = vmatpush.bf16.msra.mxu0 0
    %336 = vmatpush.bf16.msra.mxu0 %v153
    %337 = vmatpush.bf16.msra.mxu0 %v145
    %338 = vmatmul.bf16.gmra.mxu0 %v174
    %v339 = vpop.f32.mrf.mxu0
    %v340 = vadd.f32 %v81, %v339
    %v341 = vpop.f32.mrf.mxu0
    %v342 = vadd.f32 %v81, %v341
    %343 = vmatmul.bf16.gmra.mxu0 %v177
    %v344 = vpop.f32.mrf.mxu0
    %v345 = vadd.f32 %v81, %v344
    %v346 = vpop.f32.mrf.mxu0
    %v347 = vadd.f32 %v81, %v346
    %348 = vmatmul.bf16.gmra.mxu0 %v180
    %v349 = vpop.f32.mrf.mxu0
    %v350 = vadd.f32 %v81, %v349
    %v351 = vpop.f32.mrf.mxu0
    %v352 = vadd.f32 %v81, %v351
    %353 = vmatmul.bf16.gmra.mxu0 %v183
    %v354 = vpop.f32.mrf.mxu0
    %v355 = vadd.f32 %v81, %v354
    %v356 = vpop.f32.mrf.mxu0
    %v357 = vadd.f32 %v81, %v356
    %358 = vdwg.mxu0
    %359 = vmatpush.bf16.msra.mxu0 0
    %360 = vmatpush.bf16.msra.mxu0 0
    %361 = vmatpush.bf16.msra.mxu0 0
    %362 = vmatpush.bf16.msra.mxu0 0
    %363 = vmatpush.bf16.msra.mxu0 0
    %364 = vmatpush.bf16.msra.mxu0 0
    %365 = vmatpush.bf16.msra.mxu0 %v154
    %366 = vmatpush.bf16.msra.mxu0 %v146
    %367 = vmatmul.bf16.gmra.mxu0 %v174
    %v368 = vpop.f32.mrf.mxu0
    %v369 = vadd.f32 %v82, %v368
    %v370 = vpop.f32.mrf.mxu0
    %v371 = vadd.f32 %v82, %v370
    %372 = vmatmul.bf16.gmra.mxu0 %v177
    %v373 = vpop.f32.mrf.mxu0
    %v374 = vadd.f32 %v82, %v373
    %v375 = vpop.f32.mrf.mxu0
    %v376 = vadd.f32 %v82, %v375
    %377 = vmatmul.bf16.gmra.mxu0 %v180
    %v378 = vpop.f32.mrf.mxu0
    %v379 = vadd.f32 %v82, %v378
    %v380 = vpop.f32.mrf.mxu0
    %v381 = vadd.f32 %v82, %v380
    %382 = vmatmul.bf16.gmra.mxu0 %v183
    %v383 = vpop.f32.mrf.mxu0
    %v384 = vadd.f32 %v82, %v383
    %v385 = vpop.f32.mrf.mxu0
    %v386 = vadd.f32 %v82, %v385
    %387 = vdwg.mxu0
    %388 = vmatpush.bf16.msra.mxu0 0
    %389 = vmatpush.bf16.msra.mxu0 0
    %390 = vmatpush.bf16.msra.mxu0 0
    %391 = vmatpush.bf16.msra.mxu0 0
    %392 = vmatpush.bf16.msra.mxu0 0
    %393 = vmatpush.bf16.msra.mxu0 0
    %394 = vmatpush.bf16.msra.mxu0 %v155
    %395 = vmatpush.bf16.msra.mxu0 %v147
    %396 = vmatmul.bf16.gmra.mxu0 %v174
    %v397 = vpop.f32.mrf.mxu0
    %v398 = vadd.f32 %v83, %v397
    %v399 = vpop.f32.mrf.mxu0
    %v400 = vadd.f32 %v83, %v399
    %401 = vmatmul.bf16.gmra.mxu0 %v177
    %v402 = vpop.f32.mrf.mxu0
    %v403 = vadd.f32 %v83, %v402
    %v404 = vpop.f32.mrf.mxu0
    %v405 = vadd.f32 %v83, %v404
    %406 = vmatmul.bf16.gmra.mxu0 %v180
    %v407 = vpop.f32.mrf.mxu0
    %v408 = vadd.f32 %v83, %v407
    %v409 = vpop.f32.mrf.mxu0
    %v410 = vadd.f32 %v83, %v409
    %411 = vmatmul.bf16.gmra.mxu0 %v183
    %v412 = vpop.f32.mrf.mxu0
    %v413 = vadd.f32 %v83, %v412
    %v414 = vpop.f32.mrf.mxu0
    %v415 = vadd.f32 %v83, %v414
    %416 = vdwg.mxu0
    %417 = vst [vmem:[#allocation2] sm:$0xff] %v195
    %418 = vst [vmem:[#allocation2 + $0x8] sm:$0xff] %v224
    %419 = vst [vmem:[#allocation2 + $0x10] sm:$0xff] %v253
    %420 = vst [vmem:[#allocation2 + $0x18] sm:$0xff] %v282
    %421 = vst [vmem:[#allocation2 + $0x20] sm:$0xff] %v311
    %422 = vst [vmem:[#allocation2 + $0x28] sm:$0xff] %v340
    %423 = vst [vmem:[#allocation2 + $0x30] sm:$0xff] %v369
    %424 = vst [vmem:[#allocation2 + $0x38] sm:$0xff] %v398
    %425 = vst [vmem:[#allocation2 + $0x40] sm:$0xff] %v197
    %426 = vst [vmem:[#allocation2 + $0x48] sm:$0xff] %v226
    %427 = vst [vmem:[#allocation2 + $0x50] sm:$0xff] %v255
    %428 = vst [vmem:[#allocation2 + $0x58] sm:$0xff] %v284
    %429 = vst [vmem:[#allocation2 + $0x60] sm:$0xff] %v313
    %430 = vst [vmem:[#allocation2 + $0x68] sm:$0xff] %v342
    %431 = vst [vmem:[#allocation2 + $0x70] sm:$0xff] %v371
    %432 = vst [vmem:[#allocation2 + $0x78] sm:$0xff] %v400
    %433 = vst [vmem:[#allocation2 + $0x80] sm:$0xff] %v200
    %434 = vst [vmem:[#allocation2 + $0x88] sm:$0xff] %v229
    %435 = vst [vmem:[#allocation2 + $0x90] sm:$0xff] %v258
    %436 = vst [vmem:[#allocation2 + $0x98] sm:$0xff] %v287
    %437 = vst [vmem:[#allocation2 + $0xa0] sm:$0xff] %v316
    %438 = vst [vmem:[#allocation2 + $0xa8] sm:$0xff] %v345
    %439 = vst [vmem:[#allocation2 + $0xb0] sm:$0xff] %v374
    %440 = vst [vmem:[#allocation2 + $0xb8] sm:$0xff] %v403
    %441 = vst [vmem:[#allocation2 + $0xc0] sm:$0xff] %v202
    %442 = vst [vmem:[#allocation2 + $0xc8] sm:$0xff] %v231
    %443 = vst [vmem:[#allocation2 + $0xd0] sm:$0xff] %v260
    %444 = vst [vmem:[#allocation2 + $0xd8] sm:$0xff] %v289
    %445 = vst [vmem:[#allocation2 + $0xe0] sm:$0xff] %v318
    %446 = vst [vmem:[#allocation2 + $0xe8] sm:$0xff] %v347
    %447 = vst [vmem:[#allocation2 + $0xf0] sm:$0xff] %v376
    %448 = vst [vmem:[#allocation2 + $0xf8] sm:$0xff] %v405
    %449 = vst [vmem:[#allocation2 + $0x100] sm:$0xff] %v205
    %450 = vst [vmem:[#allocation2 + $0x108] sm:$0xff] %v234
    %451 = vst [vmem:[#allocation2 + $0x110] sm:$0xff] %v263
    %452 = vst [vmem:[#allocation2 + $0x118] sm:$0xff] %v292
    %453 = vst [vmem:[#allocation2 + $0x120] sm:$0xff] %v321
    %454 = vst [vmem:[#allocation2 + $0x128] sm:$0xff] %v350
    %455 = vst [vmem:[#allocation2 + $0x130] sm:$0xff] %v379
    %456 = vst [vmem:[#allocation2 + $0x138] sm:$0xff] %v408
    %457 = vst [vmem:[#allocation2 + $0x140] sm:$0xff] %v207
    %458 = vst [vmem:[#allocation2 + $0x148] sm:$0xff] %v236
    %459 = vst [vmem:[#allocation2 + $0x150] sm:$0xff] %v265
    %460 = vst [vmem:[#allocation2 + $0x158] sm:$0xff] %v294
    %461 = vst [vmem:[#allocation2 + $0x160] sm:$0xff] %v323
    %462 = vst [vmem:[#allocation2 + $0x168] sm:$0xff] %v352
    %463 = vst [vmem:[#allocation2 + $0x170] sm:$0xff] %v381
    %464 = vst [vmem:[#allocation2 + $0x178] sm:$0xff] %v410
    %465 = vst [vmem:[#allocation2 + $0x180] sm:$0xff] %v210
    %466 = vst [vmem:[#allocation2 + $0x188] sm:$0xff] %v239
    %467 = vst [vmem:[#allocation2 + $0x190] sm:$0xff] %v268
    %468 = vst [vmem:[#allocation2 + $0x198] sm:$0xff] %v297
    %469 = vst [vmem:[#allocation2 + $0x1a0] sm:$0xff] %v326
    %470 = vst [vmem:[#allocation2 + $0x1a8] sm:$0xff] %v355
    %471 = vst [vmem:[#allocation2 + $0x1b0] sm:$0xff] %v384
    %472 = vst [vmem:[#allocation2 + $0x1b8] sm:$0xff] %v413
    %473 = vst [vmem:[#allocation2 + $0x1c0] sm:$0xff] %v212
    %474 = vst [vmem:[#allocation2 + $0x1c8] sm:$0xff] %v241
    %475 = vst [vmem:[#allocation2 + $0x1d0] sm:$0xff] %v270
    %476 = vst [vmem:[#allocation2 + $0x1d8] sm:$0xff] %v299
    %477 = vst [vmem:[#allocation2 + $0x1e0] sm:$0xff] %v328
    %478 = vst [vmem:[#allocation2 + $0x1e8] sm:$0xff] %v357
    %479 = vst [vmem:[#allocation2 + $0x1f0] sm:$0xff] %v386
    %480 = vst [vmem:[#allocation2 + $0x1f8] sm:$0xff] %v415
    %v481 = vld [vmem:[%s3] sm:$0xff]
    %v482 = vld [vmem:[%s3 + $0x8] sm:$0xff]
    %v483 = vld [vmem:[%s3 + $0x10] sm:$0xff]
    %v484 = vld [vmem:[%s3 + $0x18] sm:$0xff]
    %v485 = vld [vmem:[%s3 + $0x20] sm:$0xff]
    %v486 = vld [vmem:[%s3 + $0x28] sm:$0xff]
    %v487 = vld [vmem:[%s3 + $0x30] sm:$0xff]
    %v488 = vld [vmem:[%s3 + $0x38] sm:$0xff]
    %v489 = vld [vmem:[%s3 + $0x40] sm:$0xff]
    %v490 = vld [vmem:[%s3 + $0x48] sm:$0xff]
    %v491 = vld [vmem:[%s3 + $0x50] sm:$0xff]
    %v492 = vld [vmem:[%s3 + $0x58] sm:$0xff]
    %v493 = vld [vmem:[%s3 + $0x60] sm:$0xff]
    %v494 = vld [vmem:[%s3 + $0x68] sm:$0xff]
    %v495 = vld [vmem:[%s3 + $0x70] sm:$0xff]
    %v496 = vld [vmem:[%s3 + $0x78] sm:$0xff]
    %v497 = vld [vmem:[%s3 + $0x80] sm:$0xff]
    %v498 = vld [vmem:[%s3 + $0x88] sm:$0xff]
    %v499 = vld [vmem:[%s3 + $0x90] sm:$0xff]
    %v500 = vld [vmem:[%s3 + $0x98] sm:$0xff]
    %v501 = vld [vmem:[%s3 + $0xa0] sm:$0xff]
    %v502 = vld [vmem:[%s3 + $0xa8] sm:$0xff]
    %v503 = vld [vmem:[%s3 + $0xb0] sm:$0xff]
    %v504 = vld [vmem:[%s3 + $0xb8] sm:$0xff]
    %v505 = vld [vmem:[%s3 + $0xc0] sm:$0xff]
    %v506 = vld [vmem:[%s3 + $0xc8] sm:$0xff]
    %v507 = vld [vmem:[%s3 + $0xd0] sm:$0xff]
    %v508 = vld [vmem:[%s3 + $0xd8] sm:$0xff]
    %v509 = vld [vmem:[%s3 + $0xe0] sm:$0xff]
    %v510 = vld [vmem:[%s3 + $0xe8] sm:$0xff]
    %v511 = vld [vmem:[%s3 + $0xf0] sm:$0xff]
    %v512 = vld [vmem:[%s3 + $0xf8] sm:$0xff]
    %v513 = vld [vmem:[%s4] sm:$0xff]
    %v514 = vld [vmem:[%s4 + $0x8] sm:$0xff]
    %v515 = vld [vmem:[%s4 + $0x10] sm:$0xff]
    %v516 = vld [vmem:[%s4 + $0x18] sm:$0xff]
    %v517 = vld [vmem:[%s4 + $0x20] sm:$0xff]
    %v518 = vld [vmem:[%s4 + $0x28] sm:$0xff]
    %v519 = vld [vmem:[%s4 + $0x30] sm:$0xff]
    %v520 = vld [vmem:[%s4 + $0x38] sm:$0xff]
    %v521 = vld [vmem:[%s4 + $0x40] sm:$0xff]
    %v522 = vld [vmem:[%s4 + $0x48] sm:$0xff]
    %v523 = vld [vmem:[%s4 + $0x50] sm:$0xff]
    %v524 = vld [vmem:[%s4 + $0x58] sm:$0xff]
    %v525 = vld [vmem:[%s4 + $0x60] sm:$0xff]
    %v526 = vld [vmem:[%s4 + $0x68] sm:$0xff]
    %v527 = vld [vmem:[%s4 + $0x70] sm:$0xff]
    %v528 = vld [vmem:[%s4 + $0x78] sm:$0xff]
    %v529 = vld [vmem:[%s4 + $0x80] sm:$0xff]
    %v530 = vld [vmem:[%s4 + $0x88] sm:$0xff]
    %v531 = vld [vmem:[%s4 + $0x90] sm:$0xff]
    %v532 = vld [vmem:[%s4 + $0x98] sm:$0xff]
    %v533 = vld [vmem:[%s4 + $0xa0] sm:$0xff]
    %v534 = vld [vmem:[%s4 + $0xa8] sm:$0xff]
    %v535 = vld [vmem:[%s4 + $0xb0] sm:$0xff]
    %v536 = vld [vmem:[%s4 + $0xb8] sm:$0xff]
    %v537 = vld [vmem:[%s4 + $0xc0] sm:$0xff]
    %v538 = vld [vmem:[%s4 + $0xc8] sm:$0xff]
    %v539 = vld [vmem:[%s4 + $0xd0] sm:$0xff]
    %v540 = vld [vmem:[%s4 + $0xd8] sm:$0xff]
    %v541 = vld [vmem:[%s4 + $0xe0] sm:$0xff]
    %v542 = vld [vmem:[%s4 + $0xe8] sm:$0xff]
    %v543 = vld [vmem:[%s4 + $0xf0] sm:$0xff]
    %v544 = vld [vmem:[%s4 + $0xf8] sm:$0xff]
    %v545 = vld [vmem:[%s5] sm:$0xff]
    %v546 = vld [vmem:[%s6] sm:$0xff]
    %s547 = scalar_lea.vmem %s5, 8
    %v548 = vld [vmem:[%s547] sm:$0xff]
    %s549 = scalar_lea.vmem %s6, 8
    %v550 = vld [vmem:[%s549] sm:$0xff]
    %v551 = vld [vmem:[%s7] sm:$0xff]
    %vm552 = vcmp.ne.s32.totalorder %v551, 0
    %v553 = vld [vmem:[#allocation2] sm:$0xff]
    %v554 = vld [vmem:[#allocation2 + $0x8] sm:$0xff]
    %v555 = vld [vmem:[#allocation2 + $0x10] sm:$0xff]
    %v556 = vld [vmem:[#allocation2 + $0x18] sm:$0xff]
    %v557 = vpack.c.bf16 %v545, %v545
    %v590 = vunpack.c.l.b16 %v481
    %v591 = vunpack.c.h.b16 %v481
    %v592 = vunpack.c.l.b16 %v482
    %v593 = vunpack.c.h.b16 %v482
    %v594 = vunpack.c.l.b16 %v483
    %v595 = vunpack.c.h.b16 %v483
    %v596 = vunpack.c.l.b16 %v484
    %v597 = vunpack.c.h.b16 %v484
    %v598 = vunpack.c.l.b16 %v485
    %v599 = vunpack.c.h.b16 %v485
    %v600 = vunpack.c.l.b16 %v486
    %v601 = vunpack.c.h.b16 %v486
    %v602 = vunpack.c.l.b16 %v487
    %v603 = vunpack.c.h.b16 %v487
    %v604 = vunpack.c.l.b16 %v488
    %v605 = vunpack.c.h.b16 %v488
    %v606 = vunpack.c.l.b16 %v489
    %v607 = vunpack.c.h.b16 %v489
    %v608 = vunpack.c.l.b16 %v490
    %v609 = vunpack.c.h.b16 %v490
    %v610 = vunpack.c.l.b16 %v491
    %v611 = vunpack.c.h.b16 %v491
    %v612 = vunpack.c.l.b16 %v492
    %v613 = vunpack.c.h.b16 %v492
    %v614 = vunpack.c.l.b16 %v493
    %v615 = vunpack.c.h.b16 %v493
    %v616 = vunpack.c.l.b16 %v494
    %v617 = vunpack.c.h.b16 %v494
    %v618 = vunpack.c.l.b16 %v495
    %v619 = vunpack.c.h.b16 %v495
    %v620 = vunpack.c.l.b16 %v496
    %v621 = vunpack.c.h.b16 %v496
    %v622 = vunpack.c.l.b16 %v497
    %v623 = vunpack.c.h.b16 %v497
    %v624 = vunpack.c.l.b16 %v498
    %v625 = vunpack.c.h.b16 %v498
    %v626 = vunpack.c.l.b16 %v499
    %v627 = vunpack.c.h.b16 %v499
    %v628 = vunpack.c.l.b16 %v500
    %v629 = vunpack.c.h.b16 %v500
    %v630 = vunpack.c.l.b16 %v501
    %v631 = vunpack.c.h.b16 %v501
    %v632 = vunpack.c.l.b16 %v502
    %v633 = vunpack.c.h.b16 %v502
    %v634 = vunpack.c.l.b16 %v503
    %v635 = vunpack.c.h.b16 %v503
    %v636 = vunpack.c.l.b16 %v504
    %v637 = vunpack.c.h.b16 %v504
    %v638 = vunpack.c.l.b16 %v505
    %v639 = vunpack.c.h.b16 %v505
    %v640 = vunpack.c.l.b16 %v506
    %v641 = vunpack.c.h.b16 %v506
    %v642 = vunpack.c.l.b16 %v507
    %v643 = vunpack.c.h.b16 %v507
    %v644 = vunpack.c.l.b16 %v508
    %v645 = vunpack.c.h.b16 %v508
    %v646 = vunpack.c.l.b16 %v509
    %v647 = vunpack.c.h.b16 %v509
    %v648 = vunpack.c.l.b16 %v510
    %v649 = vunpack.c.h.b16 %v510
    %v650 = vunpack.c.l.b16 %v511
    %v651 = vunpack.c.h.b16 %v511
    %v652 = vunpack.c.l.b16 %v512
    %v653 = vunpack.c.h.b16 %v512
    %v654 = vpack.c.b16 %v594, %v590
    %v655 = vpack.c.b16 %v595, %v591
    %v656 = vpack.c.b16 %v596, %v592
    %v657 = vpack.c.b16 %v597, %v593
    %v658 = vpack.c.b16 %v602, %v598
    %v659 = vpack.c.b16 %v603, %v599
    %v660 = vpack.c.b16 %v604, %v600
    %v661 = vpack.c.b16 %v605, %v601
    %v662 = vpack.c.b16 %v610, %v606
    %v663 = vpack.c.b16 %v611, %v607
    %v664 = vpack.c.b16 %v612, %v608
    %v665 = vpack.c.b16 %v613, %v609
    %v666 = vpack.c.b16 %v618, %v614
    %v667 = vpack.c.b16 %v619, %v615
    %v668 = vpack.c.b16 %v620, %v616
    %v669 = vpack.c.b16 %v621, %v617
    %v670 = vpack.c.b16 %v626, %v622
    %v671 = vpack.c.b16 %v627, %v623
    %v672 = vpack.c.b16 %v628, %v624
    %v673 = vpack.c.b16 %v629, %v625
    %v674 = vpack.c.b16 %v634, %v630
    %v675 = vpack.c.b16 %v635, %v631
    %v676 = vpack.c.b16 %v636, %v632
    %v677 = vpack.c.b16 %v637, %v633
    %v678 = vpack.c.b16 %v642, %v638
    %v679 = vpack.c.b16 %v643, %v639
    %v680 = vpack.c.b16 %v644, %v640
    %v681 = vpack.c.b16 %v645, %v641
    %v682 = vpack.c.b16 %v650, %v646
    %v683 = vpack.c.b16 %v651, %v647
    %v684 = vpack.c.b16 %v652, %v648
    %v685 = vpack.c.b16 %v653, %v649
    %718 = vmatpush.bf16.msra.mxu0 %v682
    %719 = vmatpush.bf16.msra.mxu0 %v678
    %720 = vmatpush.bf16.msra.mxu0 %v674
    %721 = vmatpush.bf16.msra.mxu0 %v670
    %722 = vmatpush.bf16.msra.mxu0 %v666
    %723 = vmatpush.bf16.msra.mxu0 %v662
    %724 = vmatpush.bf16.msra.mxu0 %v658
    %725 = vmatpush.bf16.msra.mxu0 %v654
    %726 = vmatmul.bf16.gmra.mxu0 %v557
    %v727 = vpop.f32.mrf.mxu0
    %v728 = vadd.f32 0.0, %v727
    %v729 = vpop.f32.mrf.mxu0
    %730 = vdwg.mxu0
    %731 = vmatpush.bf16.msra.mxu0 %v683
    %732 = vmatpush.bf16.msra.mxu0 %v679
    %733 = vmatpush.bf16.msra.mxu0 %v675
    %734 = vmatpush.bf16.msra.mxu0 %v671
    %735 = vmatpush.bf16.msra.mxu0 %v667
    %736 = vmatpush.bf16.msra.mxu0 %v663
    %737 = vmatpush.bf16.msra.mxu0 %v659
    %738 = vmatpush.bf16.msra.mxu0 %v655
    %739 = vmatmul.bf16.gmra.mxu0 %v557
    %v740 = vpop.f32.mrf.mxu0
    %v741 = vadd.f32 0.0, %v740
    %v742 = vpop.f32.mrf.mxu0
    %743 = vdwg.mxu0
    %744 = vmatpush.bf16.msra.mxu0 %v684
    %745 = vmatpush.bf16.msra.mxu0 %v680
    %746 = vmatpush.bf16.msra.mxu0 %v676
    %747 = vmatpush.bf16.msra.mxu0 %v672
    %748 = vmatpush.bf16.msra.mxu0 %v668
    %749 = vmatpush.bf16.msra.mxu0 %v664
    %750 = vmatpush.bf16.msra.mxu0 %v660
    %751 = vmatpush.bf16.msra.mxu0 %v656
    %752 = vmatmul.bf16.gmra.mxu0 %v557
    %v753 = vpop.f32.mrf.mxu0
    %v754 = vadd.f32 0.0, %v753
    %v755 = vpop.f32.mrf.mxu0
    %756 = vdwg.mxu0
    %757 = vmatpush.bf16.msra.mxu0 %v685
    %758 = vmatpush.bf16.msra.mxu0 %v681
    %759 = vmatpush.bf16.msra.mxu0 %v677
    %760 = vmatpush.bf16.msra.mxu0 %v673
    %761 = vmatpush.bf16.msra.mxu0 %v669
    %762 = vmatpush.bf16.msra.mxu0 %v665
    %763 = vmatpush.bf16.msra.mxu0 %v661
    %764 = vmatpush.bf16.msra.mxu0 %v657
    %765 = vmatmul.bf16.gmra.mxu0 %v557
    %v766 = vpop.f32.mrf.mxu0
    %v767 = vadd.f32 0.0, %v766
    %v768 = vpop.f32.mrf.mxu0
    %769 = vdwg.mxu0
    %v770 = vadd.f32 %v553, %v728
    %v771 = vadd.f32 %v554, %v741
    %v772 = vadd.f32 %v555, %v754
    %v773 = vadd.f32 %v556, %v767
    %v774 = vxor.u32 %v770, 2147483648
    %v775 = vmul.f32 %v774, 1.442695
    %v776 = vpow.pop %v775
    %v777 = vadd.f32 %v776, 1.0
    %v778 = vrcp.pop %v777
    %v779 = vmul.f32 %v777, %v778
    %v780 = vsub.f32 1.0, %v779
    %v781 = vmul.f32 %v778, %v780
    %v782 = vadd.f32 %v778, %v781
    %vm783 = vweird.f32 %v777
    %vm784 = vweird.f32 %v778
    %vm785 = vmor %vm783, %vm784
    %v786 = vsel %vm785, %v778, %v782
    %v787 = vand.u32 2147483647, %v777
    %vm788 = vcmp.eq.f32.partialorder %v787, 8.507059e+37
    %v789 = vand.u32 %v777, 2147483648
    %v790 = vor.u32 1.1754944e-38, %v789
    %v791 = vsel %vm788, %v790, %v786
    %v792 = vmul.f32 1.0, %v791
    %v793 = vxor.u32 %v771, 2147483648
    %v794 = vmul.f32 %v793, 1.442695
    %v795 = vpow.pop %v794
    %v796 = vadd.f32 %v795, 1.0
    %v797 = vrcp.pop %v796
    %v798 = vmul.f32 %v796, %v797
    %v799 = vsub.f32 1.0, %v798
    %v800 = vmul.f32 %v797, %v799
    %v801 = vadd.f32 %v797, %v800
    %vm802 = vweird.f32 %v796
    %vm803 = vweird.f32 %v797
    %vm804 = vmor %vm802, %vm803
    %v805 = vsel %vm804, %v797, %v801
    %v806 = vand.u32 2147483647, %v796
    %vm807 = vcmp.eq.f32.partialorder %v806, 8.507059e+37
    %v808 = vand.u32 %v796, 2147483648
    %v809 = vor.u32 1.1754944e-38, %v808
    %v810 = vsel %vm807, %v809, %v805
    %v811 = vmul.f32 1.0, %v810
    %v812 = vtanh.pop %v772
    %v813 = vxor.u32 %v773, 2147483648
    %v814 = vmul.f32 %v813, 1.442695
    %v815 = vpow.pop %v814
    %v816 = vadd.f32 %v815, 1.0
    %v817 = vrcp.pop %v816
    %v818 = vmul.f32 %v816, %v817
    %v819 = vsub.f32 1.0, %v818
    %v820 = vmul.f32 %v817, %v819
    %v821 = vadd.f32 %v817, %v820
    %vm822 = vweird.f32 %v816
    %vm823 = vweird.f32 %v817
    %vm824 = vmor %vm822, %vm823
    %v825 = vsel %vm824, %v817, %v821
    %v826 = vand.u32 2147483647, %v816
    %vm827 = vcmp.eq.f32.partialorder %v826, 8.507059e+37
    %v828 = vand.u32 %v816, 2147483648
    %v829 = vor.u32 1.1754944e-38, %v828
    %v830 = vsel %vm827, %v829, %v825
    %v831 = vmul.f32 1.0, %v830
    %v832 = vmul.f32 %v811, %v546
    %v833 = vmul.f32 %v792, %v812
    %v834 = vadd.f32 %v832, %v833
    %v835 = vtanh.pop %v834
    %v836 = vmul.f32 %v831, %v835
    %v837 = vsel %vm552, 1, 0
    %838 = vset.pattern.permute.xlu0 0
    %839 = vperm.xlu0 %838, %v837
    %v840 = vpop.permute.xlu0 %839
    %vm841 = vcmp.eq.s32.totalorder %v840, 1
    %v842 = vsel %vm841, %v836, 0.0
    %843 = vst [vmem:[%s8] sm:$0xff] %v842
    %v844 = vsel %vm841, %v836, %v545
    %v845 = vsel %vm841, %v834, %v546
    %s846 = scalar_lea.vmem %s7, 56
    %v847 = vld [vmem:[%s846] sm:$0xff]
    %vm848 = vcmp.ne.s32.totalorder %v847, 0
    %s849 = scalar_lea.vmem [#allocation2], 448
    %v850 = vld [vmem:[%s849 + $0x20] sm:$0xff]
    %v851 = vld [vmem:[%s849 + $0x28] sm:$0xff]
    %v852 = vld [vmem:[%s849 + $0x30] sm:$0xff]
    %v853 = vld [vmem:[%s849 + $0x38] sm:$0xff]
    %v854 = vpack.c.bf16 %v548, %v548
    %v887 = vunpack.c.l.b16 %v513
    %v888 = vunpack.c.h.b16 %v513
    %v889 = vunpack.c.l.b16 %v514
    %v890 = vunpack.c.h.b16 %v514
    %v891 = vunpack.c.l.b16 %v515
    %v892 = vunpack.c.h.b16 %v515
    %v893 = vunpack.c.l.b16 %v516
    %v894 = vunpack.c.h.b16 %v516
    %v895 = vunpack.c.l.b16 %v517
    %v896 = vunpack.c.h.b16 %v517
    %v897 = vunpack.c.l.b16 %v518
    %v898 = vunpack.c.h.b16 %v518
    %v899 = vunpack.c.l.b16 %v519
    %v900 = vunpack.c.h.b16 %v519
    %v901 = vunpack.c.l.b16 %v520
    %v902 = vunpack.c.h.b16 %v520
    %v903 = vunpack.c.l.b16 %v521
    %v904 = vunpack.c.h.b16 %v521
    %v905 = vunpack.c.l.b16 %v522
    %v906 = vunpack.c.h.b16 %v522
    %v907 = vunpack.c.l.b16 %v523
    %v908 = vunpack.c.h.b16 %v523
    %v909 = vunpack.c.l.b16 %v524
    %v910 = vunpack.c.h.b16 %v524
    %v911 = vunpack.c.l.b16 %v525
    %v912 = vunpack.c.h.b16 %v525
    %v913 = vunpack.c.l.b16 %v526
    %v914 = vunpack.c.h.b16 %v526
    %v915 = vunpack.c.l.b16 %v527
    %v916 = vunpack.c.h.b16 %v527
    %v917 = vunpack.c.l.b16 %v528
    %v918 = vunpack.c.h.b16 %v528
    %v919 = vunpack.c.l.b16 %v529
    %v920 = vunpack.c.h.b16 %v529
    %v921 = vunpack.c.l.b16 %v530
    %v922 = vunpack.c.h.b16 %v530
    %v923 = vunpack.c.l.b16 %v531
    %v924 = vunpack.c.h.b16 %v531
    %v925 = vunpack.c.l.b16 %v532
    %v926 = vunpack.c.h.b16 %v532
    %v927 = vunpack.c.l.b16 %v533
    %v928 = vunpack.c.h.b16 %v533
    %v929 = vunpack.c.l.b16 %v534
    %v930 = vunpack.c.h.b16 %v534
    %v931 = vunpack.c.l.b16 %v535
    %v932 = vunpack.c.h.b16 %v535
    %v933 = vunpack.c.l.b16 %v536
    %v934 = vunpack.c.h.b16 %v536
    %v935 = vunpack.c.l.b16 %v537
    %v936 = vunpack.c.h.b16 %v537
    %v937 = vunpack.c.l.b16 %v538
    %v938 = vunpack.c.h.b16 %v538
    %v939 = vunpack.c.l.b16 %v539
    %v940 = vunpack.c.h.b16 %v539
    %v941 = vunpack.c.l.b16 %v540
    %v942 = vunpack.c.h.b16 %v540
    %v943 = vunpack.c.l.b16 %v541
    %v944 = vunpack.c.h.b16 %v541
    %v945 = vunpack.c.l.b16 %v542
    %v946 = vunpack.c.h.b16 %v542
    %v947 = vunpack.c.l.b16 %v543
    %v948 = vunpack.c.h.b16 %v543
    %v949 = vunpack.c.l.b16 %v544
    %v950 = vunpack.c.h.b16 %v544
    %v951 = vpack.c.b16 %v891, %v887
    %v952 = vpack.c.b16 %v892, %v888
    %v953 = vpack.c.b16 %v893, %v889
    %v954 = vpack.c.b16 %v894, %v890
    %v955 = vpack.c.b16 %v899, %v895
    %v956 = vpack.c.b16 %v900, %v896
    %v957 = vpack.c.b16 %v901, %v897
    %v958 = vpack.c.b16 %v902, %v898
    %v959 = vpack.c.b16 %v907, %v903
    %v960 = vpack.c.b16 %v908, %v904
    %v961 = vpack.c.b16 %v909, %v905
    %v962 = vpack.c.b16 %v910, %v906
    %v963 = vpack.c.b16 %v915, %v911
    %v964 = vpack.c.b16 %v916, %v912
    %v965 = vpack.c.b16 %v917, %v913
    %v966 = vpack.c.b16 %v918, %v914
    %v967 = vpack.c.b16 %v923, %v919
    %v968 = vpack.c.b16 %v924, %v920
    %v969 = vpack.c.b16 %v925, %v921
    %v970 = vpack.c.b16 %v926, %v922
    %v971 = vpack.c.b16 %v931, %v927
    %v972 = vpack.c.b16 %v932, %v928
    %v973 = vpack.c.b16 %v933, %v929
    %v974 = vpack.c.b16 %v934, %v930
    %v975 = vpack.c.b16 %v939, %v935
    %v976 = vpack.c.b16 %v940, %v936
    %v977 = vpack.c.b16 %v941, %v937
    %v978 = vpack.c.b16 %v942, %v938
    %v979 = vpack.c.b16 %v947, %v943
    %v980 = vpack.c.b16 %v948, %v944
    %v981 = vpack.c.b16 %v949, %v945
    %v982 = vpack.c.b16 %v950, %v946
    %1015 = vmatpush.bf16.msra.mxu0 %v979
    %1016 = vmatpush.bf16.msra.mxu0 %v975
    %1017 = vmatpush.bf16.msra.mxu0 %v971
    %1018 = vmatpush.bf16.msra.mxu0 %v967
    %1019 = vmatpush.bf16.msra.mxu0 %v963
    %1020 = vmatpush.bf16.msra.mxu0 %v959
    %1021 = vmatpush.bf16.msra.mxu0 %v955
    %1022 = vmatpush.bf16.msra.mxu0 %v951
    %1023 = vmatmul.bf16.gmra.mxu0 %v854
    %v1024 = vpop.f32.mrf.mxu0
    %v1025 = vadd.f32 0.0, %v1024
    %v1026 = vpop.f32.mrf.mxu0
    %1027 = vdwg.mxu0
    %1028 = vmatpush.bf16.msra.mxu0 %v980
    %1029 = vmatpush.bf16.msra.mxu0 %v976
    %1030 = vmatpush.bf16.msra.mxu0 %v972
    %1031 = vmatpush.bf16.msra.mxu0 %v968
    %1032 = vmatpush.bf16.msra.mxu0 %v964
    %1033 = vmatpush.bf16.msra.mxu0 %v960
    %1034 = vmatpush.bf16.msra.mxu0 %v956
    %1035 = vmatpush.bf16.msra.mxu0 %v952
    %1036 = vmatmul.bf16.gmra.mxu0 %v854
    %v1037 = vpop.f32.mrf.mxu0
    %v1038 = vadd.f32 0.0, %v1037
    %v1039 = vpop.f32.mrf.mxu0
    %1040 = vdwg.mxu0
    %1041 = vmatpush.bf16.msra.mxu0 %v981
    %1042 = vmatpush.bf16.msra.mxu0 %v977
    %1043 = vmatpush.bf16.msra.mxu0 %v973
    %1044 = vmatpush.bf16.msra.mxu0 %v969
    %1045 = vmatpush.bf16.msra.mxu0 %v965
    %1046 = vmatpush.bf16.msra.mxu0 %v961
    %1047 = vmatpush.bf16.msra.mxu0 %v957
    %1048 = vmatpush.bf16.msra.mxu0 %v953
    %1049 = vmatmul.bf16.gmra.mxu0 %v854
    %v1050 = vpop.f32.mrf.mxu0
    %v1051 = vadd.f32 0.0, %v1050
    %v1052 = vpop.f32.mrf.mxu0
    %1053 = vdwg.mxu0
    %1054 = vmatpush.bf16.msra.mxu0 %v982
    %1055 = vmatpush.bf16.msra.mxu0 %v978
    %1056 = vmatpush.bf16.msra.mxu0 %v974
    %1057 = vmatpush.bf16.msra.mxu0 %v970
    %1058 = vmatpush.bf16.msra.mxu0 %v966
    %1059 = vmatpush.bf16.msra.mxu0 %v962
    %1060 = vmatpush.bf16.msra.mxu0 %v958
    %1061 = vmatpush.bf16.msra.mxu0 %v954
    %1062 = vmatmul.bf16.gmra.mxu0 %v854
    %v1063 = vpop.f32.mrf.mxu0
    %v1064 = vadd.f32 0.0, %v1063
    %v1065 = vpop.f32.mrf.mxu0
    %1066 = vdwg.mxu0
    %v1067 = vadd.f32 %v850, %v1025
    %v1068 = vadd.f32 %v851, %v1038
    %v1069 = vadd.f32 %v852, %v1051
    %v1070 = vadd.f32 %v853, %v1064
    %v1071 = vxor.u32 %v1067, 2147483648
    %v1072 = vmul.f32 %v1071, 1.442695
    %v1073 = vpow.pop %v1072
    %v1074 = vadd.f32 %v1073, 1.0
    %v1075 = vrcp.pop %v1074
    %v1076 = vmul.f32 %v1074, %v1075
    %v1077 = vsub.f32 1.0, %v1076
    %v1078 = vmul.f32 %v1075, %v1077
    %v1079 = vadd.f32 %v1075, %v1078
    %vm1080 = vweird.f32 %v1074
    %vm1081 = vweird.f32 %v1075
    %vm1082 = vmor %vm1080, %vm1081
    %v1083 = vsel %vm1082, %v1075, %v1079
    %v1084 = vand.u32 2147483647, %v1074
    %vm1085 = vcmp.eq.f32.partialorder %v1084, 8.507059e+37
    %v1086 = vand.u32 %v1074, 2147483648
    %v1087 = vor.u32 1.1754944e-38, %v1086
    %v1088 = vsel %vm1085, %v1087, %v1083
    %v1089 = vmul.f32 1.0, %v1088
    %v1090 = vxor.u32 %v1068, 2147483648
    %v1091 = vmul.f32 %v1090, 1.442695
    %v1092 = vpow.pop %v1091
    %v1093 = vadd.f32 %v1092, 1.0
    %v1094 = vrcp.pop %v1093
    %v1095 = vmul.f32 %v1093, %v1094
    %v1096 = vsub.f32 1.0, %v1095
    %v1097 = vmul.f32 %v1094, %v1096
    %v1098 = vadd.f32 %v1094, %v1097
    %vm1099 = vweird.f32 %v1093
    %vm1100 = vweird.f32 %v1094
    %vm1101 = vmor %vm1099, %vm1100
    %v1102 = vsel %vm1101, %v1094, %v1098
    %v1103 = vand.u32 2147483647, %v1093
    %vm1104 = vcmp.eq.f32.partialorder %v1103, 8.507059e+37
    %v1105 = vand.u32 %v1093, 2147483648
    %v1106 = vor.u32 1.1754944e-38, %v1105
    %v1107 = vsel %vm1104, %v1106, %v1102
    %v1108 = vmul.f32 1.0, %v1107
    %v1109 = vtanh.pop %v1069
    %v1110 = vxor.u32 %v1070, 2147483648
    %v1111 = vmul.f32 %v1110, 1.442695
    %v1112 = vpow.pop %v1111
    %v1113 = vadd.f32 %v1112, 1.0
    %v1114 = vrcp.pop %v1113
    %v1115 = vmul.f32 %v1113, %v1114
    %v1116 = vsub.f32 1.0, %v1115
    %v1117 = vmul.f32 %v1114, %v1116
    %v1118 = vadd.f32 %v1114, %v1117
    %vm1119 = vweird.f32 %v1113
    %vm1120 = vweird.f32 %v1114
    %vm1121 = vmor %vm1119, %vm1120
    %v1122 = vsel %vm1121, %v1114, %v1118
    %v1123 = vand.u32 2147483647, %v1113
    %vm1124 = vcmp.eq.f32.partialorder %v1123, 8.507059e+37
    %v1125 = vand.u32 %v1113, 2147483648
    %v1126 = vor.u32 1.1754944e-38, %v1125
    %v1127 = vsel %vm1124, %v1126, %v1122
    %v1128 = vmul.f32 1.0, %v1127
    %v1129 = vmul.f32 %v1108, %v550
    %v1130 = vmul.f32 %v1089, %v1109
    %v1131 = vadd.f32 %v1129, %v1130
    %v1132 = vtanh.pop %v1131
    %v1133 = vmul.f32 %v1128, %v1132
    %v1134 = vsel %vm848, 1, 0
    %1135 = vset.pattern.permute.xlu0 0
    %1136 = vperm.xlu0 %1135, %v1134
    %v1137 = vpop.permute.xlu0 %1136
    %vm1138 = vcmp.eq.s32.totalorder %v1137, 1
    %v1139 = vsel %vm1138, %v1133, 0.0
    %s1140 = scalar_lea.vmem %s8, 112
    %1141 = vst [vmem:[%s1140 + $0x8] sm:$0xff] %v1139
    %v1142 = vsel %vm1138, %v1133, %v548
    %v1143 = vsel %vm1138, %v1131, %v550
    %s1144 = scalar_lea.vmem %s7, 8
    %v1145 = vld [vmem:[%s1144] sm:$0xff]
    %vm1146 = vcmp.ne.s32.totalorder %v1145, 0
    %s1147 = scalar_lea.vmem [#allocation2], 64
    %v1148 = vld [vmem:[%s1147] sm:$0xff]
    %v1149 = vld [vmem:[%s1147 + $0x8] sm:$0xff]
    %v1150 = vld [vmem:[%s1147 + $0x10] sm:$0xff]
    %v1151 = vld [vmem:[%s1147 + $0x18] sm:$0xff]
    %v1152 = vpack.c.bf16 %v844, %v844
    %1153 = vmatpush.bf16.msra.mxu0 %v682
    %1154 = vmatpush.bf16.msra.mxu0 %v678
    %1155 = vmatpush.bf16.msra.mxu0 %v674
    %1156 = vmatpush.bf16.msra.mxu0 %v670
    %1157 = vmatpush.bf16.msra.mxu0 %v666
    %1158 = vmatpush.bf16.msra.mxu0 %v662
    %1159 = vmatpush.bf16.msra.mxu0 %v658
    %1160 = vmatpush.bf16.msra.mxu0 %v654
    %1161 = vmatmul.bf16.gmra.mxu0 %v1152
    %v1162 = vpop.f32.mrf.mxu0
    %v1163 = vadd.f32 0.0, %v1162
    %v1164 = vpop.f32.mrf.mxu0
    %1165 = vdwg.mxu0
    %1166 = vmatpush.bf16.msra.mxu0 %v683
    %1167 = vmatpush.bf16.msra.mxu0 %v679
    %1168 = vmatpush.bf16.msra.mxu0 %v675
    %1169 = vmatpush.bf16.msra.mxu0 %v671
    %1170 = vmatpush.bf16.msra.mxu0 %v667
    %1171 = vmatpush.bf16.msra.mxu0 %v663
    %1172 = vmatpush.bf16.msra.mxu0 %v659
    %1173 = vmatpush.bf16.msra.mxu0 %v655
    %1174 = vmatmul.bf16.gmra.mxu0 %v1152
    %v1175 = vpop.f32.mrf.mxu0
    %v1176 = vadd.f32 0.0, %v1175
    %v1177 = vpop.f32.mrf.mxu0
    %1178 = vdwg.mxu0
    %1179 = vmatpush.bf16.msra.mxu0 %v684
    %1180 = vmatpush.bf16.msra.mxu0 %v680
    %1181 = vmatpush.bf16.msra.mxu0 %v676
    %1182 = vmatpush.bf16.msra.mxu0 %v672
    %1183 = vmatpush.bf16.msra.mxu0 %v668
    %1184 = vmatpush.bf16.msra.mxu0 %v664
    %1185 = vmatpush.bf16.msra.mxu0 %v660
    %1186 = vmatpush.bf16.msra.mxu0 %v656
    %1187 = vmatmul.bf16.gmra.mxu0 %v1152
    %v1188 = vpop.f32.mrf.mxu0
    %v1189 = vadd.f32 0.0, %v1188
    %v1190 = vpop.f32.mrf.mxu0
    %1191 = vdwg.mxu0
    %1192 = vmatpush.bf16.msra.mxu0 %v685
    %1193 = vmatpush.bf16.msra.mxu0 %v681
    %1194 = vmatpush.bf16.msra.mxu0 %v677
    %1195 = vmatpush.bf16.msra.mxu0 %v673
    %1196 = vmatpush.bf16.msra.mxu0 %v669
    %1197 = vmatpush.bf16.msra.mxu0 %v665
    %1198 = vmatpush.bf16.msra.mxu0 %v661
    %1199 = vmatpush.bf16.msra.mxu0 %v657
    %1200 = vmatmul.bf16.gmra.mxu0 %v1152
    %v1201 = vpop.f32.mrf.mxu0
    %v1202 = vadd.f32 0.0, %v1201
    %v1203 = vpop.f32.mrf.mxu0
    %1204 = vdwg.mxu0
    %v1205 = vadd.f32 %v1148, %v1163
    %v1206 = vadd.f32 %v1149, %v1176
    %v1207 = vadd.f32 %v1150, %v1189
    %v1208 = vadd.f32 %v1151, %v1202
    %v1209 = vxor.u32 %v1205, 2147483648
    %v1210 = vmul.f32 %v1209, 1.442695
    %v1211 = vpow.pop %v1210
    %v1212 = vadd.f32 %v1211, 1.0
    %v1213 = vrcp.pop %v1212
    %v1214 = vmul.f32 %v1212, %v1213
    %v1215 = vsub.f32 1.0, %v1214
    %v1216 = vmul.f32 %v1213, %v1215
    %v1217 = vadd.f32 %v1213, %v1216
    %vm1218 = vweird.f32 %v1212
    %vm1219 = vweird.f32 %v1213
    %vm1220 = vmor %vm1218, %vm1219
    %v1221 = vsel %vm1220, %v1213, %v1217
    %v1222 = vand.u32 2147483647, %v1212
    %vm1223 = vcmp.eq.f32.partialorder %v1222, 8.507059e+37
    %v1224 = vand.u32 %v1212, 2147483648
    %v1225 = vor.u32 1.1754944e-38, %v1224
    %v1226 = vsel %vm1223, %v1225, %v1221
    %v1227 = vmul.f32 1.0, %v1226
    %v1228 = vxor.u32 %v1206, 2147483648
    %v1229 = vmul.f32 %v1228, 1.442695
    %v1230 = vpow.pop %v1229
    %v1231 = vadd.f32 %v1230, 1.0
    %v1232 = vrcp.pop %v1231
    %v1233 = vmul.f32 %v1231, %v1232
    %v1234 = vsub.f32 1.0, %v1233
    %v1235 = vmul.f32 %v1232, %v1234
    %v1236 = vadd.f32 %v1232, %v1235
    %vm1237 = vweird.f32 %v1231
    %vm1238 = vweird.f32 %v1232
    %vm1239 = vmor %vm1237, %vm1238
    %v1240 = vsel %vm1239, %v1232, %v1236
    %v1241 = vand.u32 2147483647, %v1231
    %vm1242 = vcmp.eq.f32.partialorder %v1241, 8.507059e+37
    %v1243 = vand.u32 %v1231, 2147483648
    %v1244 = vor.u32 1.1754944e-38, %v1243
    %v1245 = vsel %vm1242, %v1244, %v1240
    %v1246 = vmul.f32 1.0, %v1245
    %v1247 = vtanh.pop %v1207
    %v1248 = vxor.u32 %v1208, 2147483648
    %v1249 = vmul.f32 %v1248, 1.442695
    %v1250 = vpow.pop %v1249
    %v1251 = vadd.f32 %v1250, 1.0
    %v1252 = vrcp.pop %v1251
    %v1253 = vmul.f32 %v1251, %v1252
    %v1254 = vsub.f32 1.0, %v1253
    %v1255 = vmul.f32 %v1252, %v1254
    %v1256 = vadd.f32 %v1252, %v1255
    %vm1257 = vweird.f32 %v1251
    %vm1258 = vweird.f32 %v1252
    %vm1259 = vmor %vm1257, %vm1258
    %v1260 = vsel %vm1259, %v1252, %v1256
    %v1261 = vand.u32 2147483647, %v1251
    %vm1262 = vcmp.eq.f32.partialorder %v1261, 8.507059e+37
    %v1263 = vand.u32 %v1251, 2147483648
    %v1264 = vor.u32 1.1754944e-38, %v1263
    %v1265 = vsel %vm1262, %v1264, %v1260
    %v1266 = vmul.f32 1.0, %v1265
    %v1267 = vmul.f32 %v1246, %v845
    %v1268 = vmul.f32 %v1227, %v1247
    %v1269 = vadd.f32 %v1267, %v1268
    %v1270 = vtanh.pop %v1269
    %v1271 = vmul.f32 %v1266, %v1270
    %v1272 = vsel %vm1146, 1, 0
    %1273 = vset.pattern.permute.xlu0 0
    %1274 = vperm.xlu0 %1273, %v1272
    %v1275 = vpop.permute.xlu0 %1274
    %vm1276 = vcmp.eq.s32.totalorder %v1275, 1
    %v1277 = vsel %vm1276, %v1271, 0.0
    %s1278 = scalar_lea.vmem %s8, 16
    %1279 = vst [vmem:[%s1278] sm:$0xff] %v1277
    %v1280 = vsel %vm1276, %v1271, %v844
    %v1281 = vsel %vm1276, %v1269, %v845
    %s1282 = scalar_lea.vmem %s7, 48
    %v1283 = vld [vmem:[%s1282] sm:$0xff]
    %vm1284 = vcmp.ne.s32.totalorder %v1283, 0
    %s1285 = scalar_lea.vmem [#allocation2], 384
    %v1286 = vld [vmem:[%s1285 + $0x20] sm:$0xff]
    %v1287 = vld [vmem:[%s1285 + $0x28] sm:$0xff]
    %v1288 = vld [vmem:[%s1285 + $0x30] sm:$0xff]
    %v1289 = vld [vmem:[%s1285 + $0x38] sm:$0xff]
    %v1290 = vpack.c.bf16 %v1142, %v1142
    %1291 = vmatpush.bf16.msra.mxu0 %v979
    %1292 = vmatpush.bf16.msra.mxu0 %v975
    %1293 = vmatpush.bf16.msra.mxu0 %v971
    %1294 = vmatpush.bf16.msra.mxu0 %v967
    %1295 = vmatpush.bf16.msra.mxu0 %v963
    %1296 = vmatpush.bf16.msra.mxu0 %v959
    %1297 = vmatpush.bf16.msra.mxu0 %v955
    %1298 = vmatpush.bf16.msra.mxu0 %v951
    %1299 = vmatmul.bf16.gmra.mxu0 %v1290
    %v1300 = vpop.f32.mrf.mxu0
    %v1301 = vadd.f32 0.0, %v1300
    %v1302 = vpop.f32.mrf.mxu0
    %1303 = vdwg.mxu0
    %1304 = vmatpush.bf16.msra.mxu0 %v980
    %1305 = vmatpush.bf16.msra.mxu0 %v976
    %1306 = vmatpush.bf16.msra.mxu0 %v972
    %1307 = vmatpush.bf16.msra.mxu0 %v968
    %1308 = vmatpush.bf16.msra.mxu0 %v964
    %1309 = vmatpush.bf16.msra.mxu0 %v960
    %1310 = vmatpush.bf16.msra.mxu0 %v956
    %1311 = vmatpush.bf16.msra.mxu0 %v952
    %1312 = vmatmul.bf16.gmra.mxu0 %v1290
    %v1313 = vpop.f32.mrf.mxu0
    %v1314 = vadd.f32 0.0, %v1313
    %v1315 = vpop.f32.mrf.mxu0
    %1316 = vdwg.mxu0
    %1317 = vmatpush.bf16.msra.mxu0 %v981
    %1318 = vmatpush.bf16.msra.mxu0 %v977
    %1319 = vmatpush.bf16.msra.mxu0 %v973
    %1320 = vmatpush.bf16.msra.mxu0 %v969
    %1321 = vmatpush.bf16.msra.mxu0 %v965
    %1322 = vmatpush.bf16.msra.mxu0 %v961
    %1323 = vmatpush.bf16.msra.mxu0 %v957
    %1324 = vmatpush.bf16.msra.mxu0 %v953
    %1325 = vmatmul.bf16.gmra.mxu0 %v1290
    %v1326 = vpop.f32.mrf.mxu0
    %v1327 = vadd.f32 0.0, %v1326
    %v1328 = vpop.f32.mrf.mxu0
    %1329 = vdwg.mxu0
    %1330 = vmatpush.bf16.msra.mxu0 %v982
    %1331 = vmatpush.bf16.msra.mxu0 %v978
    %1332 = vmatpush.bf16.msra.mxu0 %v974
    %1333 = vmatpush.bf16.msra.mxu0 %v970
    %1334 = vmatpush.bf16.msra.mxu0 %v966
    %1335 = vmatpush.bf16.msra.mxu0 %v962
    %1336 = vmatpush.bf16.msra.mxu0 %v958
    %1337 = vmatpush.bf16.msra.mxu0 %v954
    %1338 = vmatmul.bf16.gmra.mxu0 %v1290
    %v1339 = vpop.f32.mrf.mxu0
    %v1340 = vadd.f32 0.0, %v1339
    %v1341 = vpop.f32.mrf.mxu0
    %1342 = vdwg.mxu0
    %v1343 = vadd.f32 %v1286, %v1301
    %v1344 = vadd.f32 %v1287, %v1314
    %v1345 = vadd.f32 %v1288, %v1327
    %v1346 = vadd.f32 %v1289, %v1340
    %v1347 = vxor.u32 %v1343, 2147483648
    %v1348 = vmul.f32 %v1347, 1.442695
    %v1349 = vpow.pop %v1348
    %v1350 = vadd.f32 %v1349, 1.0
    %v1351 = vrcp.pop %v1350
    %v1352 = vmul.f32 %v1350, %v1351
    %v1353 = vsub.f32 1.0, %v1352
    %v1354 = vmul.f32 %v1351, %v1353
    %v1355 = vadd.f32 %v1351, %v1354
    %vm1356 = vweird.f32 %v1350
    %vm1357 = vweird.f32 %v1351
    %vm1358 = vmor %vm1356, %vm1357
    %v1359 = vsel %vm1358, %v1351, %v1355
    %v1360 = vand.u32 2147483647, %v1350
    %vm1361 = vcmp.eq.f32.partialorder %v1360, 8.507059e+37
    %v1362 = vand.u32 %v1350, 2147483648
    %v1363 = vor.u32 1.1754944e-38, %v1362
    %v1364 = vsel %vm1361, %v1363, %v1359
    %v1365 = vmul.f32 1.0, %v1364
    %v1366 = vxor.u32 %v1344, 2147483648
    %v1367 = vmul.f32 %v1366, 1.442695
    %v1368 = vpow.pop %v1367
    %v1369 = vadd.f32 %v1368, 1.0
    %v1370 = vrcp.pop %v1369
    %v1371 = vmul.f32 %v1369, %v1370
    %v1372 = vsub.f32 1.0, %v1371
    %v1373 = vmul.f32 %v1370, %v1372
    %v1374 = vadd.f32 %v1370, %v1373
    %vm1375 = vweird.f32 %v1369
    %vm1376 = vweird.f32 %v1370
    %vm1377 = vmor %vm1375, %vm1376
    %v1378 = vsel %vm1377, %v1370, %v1374
    %v1379 = vand.u32 2147483647, %v1369
    %vm1380 = vcmp.eq.f32.partialorder %v1379, 8.507059e+37
    %v1381 = vand.u32 %v1369, 2147483648
    %v1382 = vor.u32 1.1754944e-38, %v1381
    %v1383 = vsel %vm1380, %v1382, %v1378
    %v1384 = vmul.f32 1.0, %v1383
    %v1385 = vtanh.pop %v1345
    %v1386 = vxor.u32 %v1346, 2147483648
    %v1387 = vmul.f32 %v1386, 1.442695
    %v1388 = vpow.pop %v1387
    %v1389 = vadd.f32 %v1388, 1.0
    %v1390 = vrcp.pop %v1389
    %v1391 = vmul.f32 %v1389, %v1390
    %v1392 = vsub.f32 1.0, %v1391
    %v1393 = vmul.f32 %v1390, %v1392
    %v1394 = vadd.f32 %v1390, %v1393
    %vm1395 = vweird.f32 %v1389
    %vm1396 = vweird.f32 %v1390
    %vm1397 = vmor %vm1395, %vm1396
    %v1398 = vsel %vm1397, %v1390, %v1394
    %v1399 = vand.u32 2147483647, %v1389
    %vm1400 = vcmp.eq.f32.partialorder %v1399, 8.507059e+37
    %v1401 = vand.u32 %v1389, 2147483648
    %v1402 = vor.u32 1.1754944e-38, %v1401
    %v1403 = vsel %vm1400, %v1402, %v1398
    %v1404 = vmul.f32 1.0, %v1403
    %v1405 = vmul.f32 %v1384, %v1143
    %v1406 = vmul.f32 %v1365, %v1385
    %v1407 = vadd.f32 %v1405, %v1406
    %v1408 = vtanh.pop %v1407
    %v1409 = vmul.f32 %v1404, %v1408
    %v1410 = vsel %vm1284, 1, 0
    %1411 = vset.pattern.permute.xlu0 0
    %1412 = vperm.xlu0 %1411, %v1410
    %v1413 = vpop.permute.xlu0 %1412
    %vm1414 = vcmp.eq.s32.totalorder %v1413, 1
    %v1415 = vsel %vm1414, %v1409, 0.0
    %s1416 = scalar_lea.vmem %s8, 96
    %1417 = vst [vmem:[%s1416 + $0x8] sm:$0xff] %v1415
    %v1418 = vsel %vm1414, %v1409, %v1142
    %v1419 = vsel %vm1414, %v1407, %v1143
    %s1420 = scalar_lea.vmem %s7, 16
    %v1421 = vld [vmem:[%s1420] sm:$0xff]
    %vm1422 = vcmp.ne.s32.totalorder %v1421, 0
    %s1423 = scalar_lea.vmem [#allocation2], 128
    %v1424 = vld [vmem:[%s1423] sm:$0xff]
    %v1425 = vld [vmem:[%s1423 + $0x8] sm:$0xff]
    %v1426 = vld [vmem:[%s1423 + $0x10] sm:$0xff]
    %v1427 = vld [vmem:[%s1423 + $0x18] sm:$0xff]
    %v1428 = vpack.c.bf16 %v1280, %v1280
    %1429 = vmatpush.bf16.msra.mxu0 %v682
    %1430 = vmatpush.bf16.msra.mxu0 %v678
    %1431 = vmatpush.bf16.msra.mxu0 %v674
    %1432 = vmatpush.bf16.msra.mxu0 %v670
    %1433 = vmatpush.bf16.msra.mxu0 %v666
    %1434 = vmatpush.bf16.msra.mxu0 %v662
    %1435 = vmatpush.bf16.msra.mxu0 %v658
    %1436 = vmatpush.bf16.msra.mxu0 %v654
    %1437 = vmatmul.bf16.gmra.mxu0 %v1428
    %v1438 = vpop.f32.mrf.mxu0
    %v1439 = vadd.f32 0.0, %v1438
    %v1440 = vpop.f32.mrf.mxu0
    %1441 = vdwg.mxu0
    %1442 = vmatpush.bf16.msra.mxu0 %v683
    %1443 = vmatpush.bf16.msra.mxu0 %v679
    %1444 = vmatpush.bf16.msra.mxu0 %v675
    %1445 = vmatpush.bf16.msra.mxu0 %v671
    %1446 = vmatpush.bf16.msra.mxu0 %v667
    %1447 = vmatpush.bf16.msra.mxu0 %v663
    %1448 = vmatpush.bf16.msra.mxu0 %v659
    %1449 = vmatpush.bf16.msra.mxu0 %v655
    %1450 = vmatmul.bf16.gmra.mxu0 %v1428
    %v1451 = vpop.f32.mrf.mxu0
    %v1452 = vadd.f32 0.0, %v1451
    %v1453 = vpop.f32.mrf.mxu0
    %1454 = vdwg.mxu0
    %1455 = vmatpush.bf16.msra.mxu0 %v684
    %1456 = vmatpush.bf16.msra.mxu0 %v680
    %1457 = vmatpush.bf16.msra.mxu0 %v676
    %1458 = vmatpush.bf16.msra.mxu0 %v672
    %1459 = vmatpush.bf16.msra.mxu0 %v668
    %1460 = vmatpush.bf16.msra.mxu0 %v664
    %1461 = vmatpush.bf16.msra.mxu0 %v660
    %1462 = vmatpush.bf16.msra.mxu0 %v656
    %1463 = vmatmul.bf16.gmra.mxu0 %v1428
    %v1464 = vpop.f32.mrf.mxu0
    %v1465 = vadd.f32 0.0, %v1464
    %v1466 = vpop.f32.mrf.mxu0
    %1467 = vdwg.mxu0
    %1468 = vmatpush.bf16.msra.mxu0 %v685
    %1469 = vmatpush.bf16.msra.mxu0 %v681
    %1470 = vmatpush.bf16.msra.mxu0 %v677
    %1471 = vmatpush.bf16.msra.mxu0 %v673
    %1472 = vmatpush.bf16.msra.mxu0 %v669
    %1473 = vmatpush.bf16.msra.mxu0 %v665
    %1474 = vmatpush.bf16.msra.mxu0 %v661
    %1475 = vmatpush.bf16.msra.mxu0 %v657
    %1476 = vmatmul.bf16.gmra.mxu0 %v1428
    %v1477 = vpop.f32.mrf.mxu0
    %v1478 = vadd.f32 0.0, %v1477
    %v1479 = vpop.f32.mrf.mxu0
    %1480 = vdwg.mxu0
    %v1481 = vadd.f32 %v1424, %v1439
    %v1482 = vadd.f32 %v1425, %v1452
    %v1483 = vadd.f32 %v1426, %v1465
    %v1484 = vadd.f32 %v1427, %v1478
    %v1485 = vxor.u32 %v1481, 2147483648
    %v1486 = vmul.f32 %v1485, 1.442695
    %v1487 = vpow.pop %v1486
    %v1488 = vadd.f32 %v1487, 1.0
    %v1489 = vrcp.pop %v1488
    %v1490 = vmul.f32 %v1488, %v1489
    %v1491 = vsub.f32 1.0, %v1490
    %v1492 = vmul.f32 %v1489, %v1491
    %v1493 = vadd.f32 %v1489, %v1492
    %vm1494 = vweird.f32 %v1488
    %vm1495 = vweird.f32 %v1489
    %vm1496 = vmor %vm1494, %vm1495
    %v1497 = vsel %vm1496, %v1489, %v1493
    %v1498 = vand.u32 2147483647, %v1488
    %vm1499 = vcmp.eq.f32.partialorder %v1498, 8.507059e+37
    %v1500 = vand.u32 %v1488, 2147483648
    %v1501 = vor.u32 1.1754944e-38, %v1500
    %v1502 = vsel %vm1499, %v1501, %v1497
    %v1503 = vmul.f32 1.0, %v1502
    %v1504 = vxor.u32 %v1482, 2147483648
    %v1505 = vmul.f32 %v1504, 1.442695
    %v1506 = vpow.pop %v1505
    %v1507 = vadd.f32 %v1506, 1.0
    %v1508 = vrcp.pop %v1507
    %v1509 = vmul.f32 %v1507, %v1508
    %v1510 = vsub.f32 1.0, %v1509
    %v1511 = vmul.f32 %v1508, %v1510
    %v1512 = vadd.f32 %v1508, %v1511
    %vm1513 = vweird.f32 %v1507
    %vm1514 = vweird.f32 %v1508
    %vm1515 = vmor %vm1513, %vm1514
    %v1516 = vsel %vm1515, %v1508, %v1512
    %v1517 = vand.u32 2147483647, %v1507
    %vm1518 = vcmp.eq.f32.partialorder %v1517, 8.507059e+37
    %v1519 = vand.u32 %v1507, 2147483648
    %v1520 = vor.u32 1.1754944e-38, %v1519
    %v1521 = vsel %vm1518, %v1520, %v1516
    %v1522 = vmul.f32 1.0, %v1521
    %v1523 = vtanh.pop %v1483
    %v1524 = vxor.u32 %v1484, 2147483648
    %v1525 = vmul.f32 %v1524, 1.442695
    %v1526 = vpow.pop %v1525
    %v1527 = vadd.f32 %v1526, 1.0
    %v1528 = vrcp.pop %v1527
    %v1529 = vmul.f32 %v1527, %v1528
    %v1530 = vsub.f32 1.0, %v1529
    %v1531 = vmul.f32 %v1528, %v1530
    %v1532 = vadd.f32 %v1528, %v1531
    %vm1533 = vweird.f32 %v1527
    %vm1534 = vweird.f32 %v1528
    %vm1535 = vmor %vm1533, %vm1534
    %v1536 = vsel %vm1535, %v1528, %v1532
    %v1537 = vand.u32 2147483647, %v1527
    %vm1538 = vcmp.eq.f32.partialorder %v1537, 8.507059e+37
    %v1539 = vand.u32 %v1527, 2147483648
    %v1540 = vor.u32 1.1754944e-38, %v1539
    %v1541 = vsel %vm1538, %v1540, %v1536
    %v1542 = vmul.f32 1.0, %v1541
    %v1543 = vmul.f32 %v1522, %v1281
    %v1544 = vmul.f32 %v1503, %v1523
    %v1545 = vadd.f32 %v1543, %v1544
    %v1546 = vtanh.pop %v1545
    %v1547 = vmul.f32 %v1542, %v1546
    %v1548 = vsel %vm1422, 1, 0
    %1549 = vset.pattern.permute.xlu0 0
    %1550 = vperm.xlu0 %1549, %v1548
    %v1551 = vpop.permute.xlu0 %1550
    %vm1552 = vcmp.eq.s32.totalorder %v1551, 1
    %v1553 = vsel %vm1552, %v1547, 0.0
    %s1554 = scalar_lea.vmem %s8, 32
    %1555 = vst [vmem:[%s1554] sm:$0xff] %v1553
    %v1556 = vsel %vm1552, %v1547, %v1280
    %v1557 = vsel %vm1552, %v1545, %v1281
    %s1558 = scalar_lea.vmem %s7, 40
    %v1559 = vld [vmem:[%s1558] sm:$0xff]
    %vm1560 = vcmp.ne.s32.totalorder %v1559, 0
    %s1561 = scalar_lea.vmem [#allocation2], 320
    %v1562 = vld [vmem:[%s1561 + $0x20] sm:$0xff]
    %v1563 = vld [vmem:[%s1561 + $0x28] sm:$0xff]
    %v1564 = vld [vmem:[%s1561 + $0x30] sm:$0xff]
    %v1565 = vld [vmem:[%s1561 + $0x38] sm:$0xff]
    %v1566 = vpack.c.bf16 %v1418, %v1418
    %1567 = vmatpush.bf16.msra.mxu0 %v979
    %1568 = vmatpush.bf16.msra.mxu0 %v975
    %1569 = vmatpush.bf16.msra.mxu0 %v971
    %1570 = vmatpush.bf16.msra.mxu0 %v967
    %1571 = vmatpush.bf16.msra.mxu0 %v963
    %1572 = vmatpush.bf16.msra.mxu0 %v959
    %1573 = vmatpush.bf16.msra.mxu0 %v955
    %1574 = vmatpush.bf16.msra.mxu0 %v951
    %1575 = vmatmul.bf16.gmra.mxu0 %v1566
    %v1576 = vpop.f32.mrf.mxu0
    %v1577 = vadd.f32 0.0, %v1576
    %v1578 = vpop.f32.mrf.mxu0
    %1579 = vdwg.mxu0
    %1580 = vmatpush.bf16.msra.mxu0 %v980
    %1581 = vmatpush.bf16.msra.mxu0 %v976
    %1582 = vmatpush.bf16.msra.mxu0 %v972
    %1583 = vmatpush.bf16.msra.mxu0 %v968
    %1584 = vmatpush.bf16.msra.mxu0 %v964
    %1585 = vmatpush.bf16.msra.mxu0 %v960
    %1586 = vmatpush.bf16.msra.mxu0 %v956
    %1587 = vmatpush.bf16.msra.mxu0 %v952
    %1588 = vmatmul.bf16.gmra.mxu0 %v1566
    %v1589 = vpop.f32.mrf.mxu0
    %v1590 = vadd.f32 0.0, %v1589
    %v1591 = vpop.f32.mrf.mxu0
    %1592 = vdwg.mxu0
    %1593 = vmatpush.bf16.msra.mxu0 %v981
    %1594 = vmatpush.bf16.msra.mxu0 %v977
    %1595 = vmatpush.bf16.msra.mxu0 %v973
    %1596 = vmatpush.bf16.msra.mxu0 %v969
    %1597 = vmatpush.bf16.msra.mxu0 %v965
    %1598 = vmatpush.bf16.msra.mxu0 %v961
    %1599 = vmatpush.bf16.msra.mxu0 %v957
    %1600 = vmatpush.bf16.msra.mxu0 %v953
    %1601 = vmatmul.bf16.gmra.mxu0 %v1566
    %v1602 = vpop.f32.mrf.mxu0
    %v1603 = vadd.f32 0.0, %v1602
    %v1604 = vpop.f32.mrf.mxu0
    %1605 = vdwg.mxu0
    %1606 = vmatpush.bf16.msra.mxu0 %v982
    %1607 = vmatpush.bf16.msra.mxu0 %v978
    %1608 = vmatpush.bf16.msra.mxu0 %v974
    %1609 = vmatpush.bf16.msra.mxu0 %v970
    %1610 = vmatpush.bf16.msra.mxu0 %v966
    %1611 = vmatpush.bf16.msra.mxu0 %v962
    %1612 = vmatpush.bf16.msra.mxu0 %v958
    %1613 = vmatpush.bf16.msra.mxu0 %v954
    %1614 = vmatmul.bf16.gmra.mxu0 %v1566
    %v1615 = vpop.f32.mrf.mxu0
    %v1616 = vadd.f32 0.0, %v1615
    %v1617 = vpop.f32.mrf.mxu0
    %1618 = vdwg.mxu0
    %v1619 = vadd.f32 %v1562, %v1577
    %v1620 = vadd.f32 %v1563, %v1590
    %v1621 = vadd.f32 %v1564, %v1603
    %v1622 = vadd.f32 %v1565, %v1616
    %v1623 = vxor.u32 %v1619, 2147483648
    %v1624 = vmul.f32 %v1623, 1.442695
    %v1625 = vpow.pop %v1624
    %v1626 = vadd.f32 %v1625, 1.0
    %v1627 = vrcp.pop %v1626
    %v1628 = vmul.f32 %v1626, %v1627
    %v1629 = vsub.f32 1.0, %v1628
    %v1630 = vmul.f32 %v1627, %v1629
    %v1631 = vadd.f32 %v1627, %v1630
    %vm1632 = vweird.f32 %v1626
    %vm1633 = vweird.f32 %v1627
    %vm1634 = vmor %vm1632, %vm1633
    %v1635 = vsel %vm1634, %v1627, %v1631
    %v1636 = vand.u32 2147483647, %v1626
    %vm1637 = vcmp.eq.f32.partialorder %v1636, 8.507059e+37
    %v1638 = vand.u32 %v1626, 2147483648
    %v1639 = vor.u32 1.1754944e-38, %v1638
    %v1640 = vsel %vm1637, %v1639, %v1635
    %v1641 = vmul.f32 1.0, %v1640
    %v1642 = vxor.u32 %v1620, 2147483648
    %v1643 = vmul.f32 %v1642, 1.442695
    %v1644 = vpow.pop %v1643
    %v1645 = vadd.f32 %v1644, 1.0
    %v1646 = vrcp.pop %v1645
    %v1647 = vmul.f32 %v1645, %v1646
    %v1648 = vsub.f32 1.0, %v1647
    %v1649 = vmul.f32 %v1646, %v1648
    %v1650 = vadd.f32 %v1646, %v1649
    %vm1651 = vweird.f32 %v1645
    %vm1652 = vweird.f32 %v1646
    %vm1653 = vmor %vm1651, %vm1652
    %v1654 = vsel %vm1653, %v1646, %v1650
    %v1655 = vand.u32 2147483647, %v1645
    %vm1656 = vcmp.eq.f32.partialorder %v1655, 8.507059e+37
    %v1657 = vand.u32 %v1645, 2147483648
    %v1658 = vor.u32 1.1754944e-38, %v1657
    %v1659 = vsel %vm1656, %v1658, %v1654
    %v1660 = vmul.f32 1.0, %v1659
    %v1661 = vtanh.pop %v1621
    %v1662 = vxor.u32 %v1622, 2147483648
    %v1663 = vmul.f32 %v1662, 1.442695
    %v1664 = vpow.pop %v1663
    %v1665 = vadd.f32 %v1664, 1.0
    %v1666 = vrcp.pop %v1665
    %v1667 = vmul.f32 %v1665, %v1666
    %v1668 = vsub.f32 1.0, %v1667
    %v1669 = vmul.f32 %v1666, %v1668
    %v1670 = vadd.f32 %v1666, %v1669
    %vm1671 = vweird.f32 %v1665
    %vm1672 = vweird.f32 %v1666
    %vm1673 = vmor %vm1671, %vm1672
    %v1674 = vsel %vm1673, %v1666, %v1670
    %v1675 = vand.u32 2147483647, %v1665
    %vm1676 = vcmp.eq.f32.partialorder %v1675, 8.507059e+37
    %v1677 = vand.u32 %v1665, 2147483648
    %v1678 = vor.u32 1.1754944e-38, %v1677
    %v1679 = vsel %vm1676, %v1678, %v1674
    %v1680 = vmul.f32 1.0, %v1679
    %v1681 = vmul.f32 %v1660, %v1419
    %v1682 = vmul.f32 %v1641, %v1661
    %v1683 = vadd.f32 %v1681, %v1682
    %v1684 = vtanh.pop %v1683
    %v1685 = vmul.f32 %v1680, %v1684
    %v1686 = vsel %vm1560, 1, 0
    %1687 = vset.pattern.permute.xlu0 0
    %1688 = vperm.xlu0 %1687, %v1686
    %v1689 = vpop.permute.xlu0 %1688
    %vm1690 = vcmp.eq.s32.totalorder %v1689, 1
    %v1691 = vsel %vm1690, %v1685, 0.0
    %s1692 = scalar_lea.vmem %s8, 80
    %1693 = vst [vmem:[%s1692 + $0x8] sm:$0xff] %v1691
    %v1694 = vsel %vm1690, %v1685, %v1418
    %v1695 = vsel %vm1690, %v1683, %v1419
    %s1696 = scalar_lea.vmem %s7, 24
    %v1697 = vld [vmem:[%s1696] sm:$0xff]
    %vm1698 = vcmp.ne.s32.totalorder %v1697, 0
    %s1699 = scalar_lea.vmem [#allocation2], 192
    %v1700 = vld [vmem:[%s1699] sm:$0xff]
    %v1701 = vld [vmem:[%s1699 + $0x8] sm:$0xff]
    %v1702 = vld [vmem:[%s1699 + $0x10] sm:$0xff]
    %v1703 = vld [vmem:[%s1699 + $0x18] sm:$0xff]
    %v1704 = vpack.c.bf16 %v1556, %v1556
    %1705 = vmatpush.bf16.msra.mxu0 %v682
    %1706 = vmatpush.bf16.msra.mxu0 %v678
    %1707 = vmatpush.bf16.msra.mxu0 %v674
    %1708 = vmatpush.bf16.msra.mxu0 %v670
    %1709 = vmatpush.bf16.msra.mxu0 %v666
    %1710 = vmatpush.bf16.msra.mxu0 %v662
    %1711 = vmatpush.bf16.msra.mxu0 %v658
    %1712 = vmatpush.bf16.msra.mxu0 %v654
    %1713 = vmatmul.bf16.gmra.mxu0 %v1704
    %v1714 = vpop.f32.mrf.mxu0
    %v1715 = vadd.f32 0.0, %v1714
    %v1716 = vpop.f32.mrf.mxu0
    %1717 = vdwg.mxu0
    %1718 = vmatpush.bf16.msra.mxu0 %v683
    %1719 = vmatpush.bf16.msra.mxu0 %v679
    %1720 = vmatpush.bf16.msra.mxu0 %v675
    %1721 = vmatpush.bf16.msra.mxu0 %v671
    %1722 = vmatpush.bf16.msra.mxu0 %v667
    %1723 = vmatpush.bf16.msra.mxu0 %v663
    %1724 = vmatpush.bf16.msra.mxu0 %v659
    %1725 = vmatpush.bf16.msra.mxu0 %v655
    %1726 = vmatmul.bf16.gmra.mxu0 %v1704
    %v1727 = vpop.f32.mrf.mxu0
    %v1728 = vadd.f32 0.0, %v1727
    %v1729 = vpop.f32.mrf.mxu0
    %1730 = vdwg.mxu0
    %1731 = vmatpush.bf16.msra.mxu0 %v684
    %1732 = vmatpush.bf16.msra.mxu0 %v680
    %1733 = vmatpush.bf16.msra.mxu0 %v676
    %1734 = vmatpush.bf16.msra.mxu0 %v672
    %1735 = vmatpush.bf16.msra.mxu0 %v668
    %1736 = vmatpush.bf16.msra.mxu0 %v664
    %1737 = vmatpush.bf16.msra.mxu0 %v660
    %1738 = vmatpush.bf16.msra.mxu0 %v656
    %1739 = vmatmul.bf16.gmra.mxu0 %v1704
    %v1740 = vpop.f32.mrf.mxu0
    %v1741 = vadd.f32 0.0, %v1740
    %v1742 = vpop.f32.mrf.mxu0
    %1743 = vdwg.mxu0
    %1744 = vmatpush.bf16.msra.mxu0 %v685
    %1745 = vmatpush.bf16.msra.mxu0 %v681
    %1746 = vmatpush.bf16.msra.mxu0 %v677
    %1747 = vmatpush.bf16.msra.mxu0 %v673
    %1748 = vmatpush.bf16.msra.mxu0 %v669
    %1749 = vmatpush.bf16.msra.mxu0 %v665
    %1750 = vmatpush.bf16.msra.mxu0 %v661
    %1751 = vmatpush.bf16.msra.mxu0 %v657
    %1752 = vmatmul.bf16.gmra.mxu0 %v1704
    %v1753 = vpop.f32.mrf.mxu0
    %v1754 = vadd.f32 0.0, %v1753
    %v1755 = vpop.f32.mrf.mxu0
    %1756 = vdwg.mxu0
    %v1757 = vadd.f32 %v1700, %v1715
    %v1758 = vadd.f32 %v1701, %v1728
    %v1759 = vadd.f32 %v1702, %v1741
    %v1760 = vadd.f32 %v1703, %v1754
    %v1761 = vxor.u32 %v1757, 2147483648
    %v1762 = vmul.f32 %v1761, 1.442695
    %v1763 = vpow.pop %v1762
    %v1764 = vadd.f32 %v1763, 1.0
    %v1765 = vrcp.pop %v1764
    %v1766 = vmul.f32 %v1764, %v1765
    %v1767 = vsub.f32 1.0, %v1766
    %v1768 = vmul.f32 %v1765, %v1767
    %v1769 = vadd.f32 %v1765, %v1768
    %vm1770 = vweird.f32 %v1764
    %vm1771 = vweird.f32 %v1765
    %vm1772 = vmor %vm1770, %vm1771
    %v1773 = vsel %vm1772, %v1765, %v1769
    %v1774 = vand.u32 2147483647, %v1764
    %vm1775 = vcmp.eq.f32.partialorder %v1774, 8.507059e+37
    %v1776 = vand.u32 %v1764, 2147483648
    %v1777 = vor.u32 1.1754944e-38, %v1776
    %v1778 = vsel %vm1775, %v1777, %v1773
    %v1779 = vmul.f32 1.0, %v1778
    %v1780 = vxor.u32 %v1758, 2147483648
    %v1781 = vmul.f32 %v1780, 1.442695
    %v1782 = vpow.pop %v1781
    %v1783 = vadd.f32 %v1782, 1.0
    %v1784 = vrcp.pop %v1783
    %v1785 = vmul.f32 %v1783, %v1784
    %v1786 = vsub.f32 1.0, %v1785
    %v1787 = vmul.f32 %v1784, %v1786
    %v1788 = vadd.f32 %v1784, %v1787
    %vm1789 = vweird.f32 %v1783
    %vm1790 = vweird.f32 %v1784
    %vm1791 = vmor %vm1789, %vm1790
    %v1792 = vsel %vm1791, %v1784, %v1788
    %v1793 = vand.u32 2147483647, %v1783
    %vm1794 = vcmp.eq.f32.partialorder %v1793, 8.507059e+37
    %v1795 = vand.u32 %v1783, 2147483648
    %v1796 = vor.u32 1.1754944e-38, %v1795
    %v1797 = vsel %vm1794, %v1796, %v1792
    %v1798 = vmul.f32 1.0, %v1797
    %v1799 = vtanh.pop %v1759
    %v1800 = vxor.u32 %v1760, 2147483648
    %v1801 = vmul.f32 %v1800, 1.442695
    %v1802 = vpow.pop %v1801
    %v1803 = vadd.f32 %v1802, 1.0
    %v1804 = vrcp.pop %v1803
    %v1805 = vmul.f32 %v1803, %v1804
    %v1806 = vsub.f32 1.0, %v1805
    %v1807 = vmul.f32 %v1804, %v1806
    %v1808 = vadd.f32 %v1804, %v1807
    %vm1809 = vweird.f32 %v1803
    %vm1810 = vweird.f32 %v1804
    %vm1811 = vmor %vm1809, %vm1810
    %v1812 = vsel %vm1811, %v1804, %v1808
    %v1813 = vand.u32 2147483647, %v1803
    %vm1814 = vcmp.eq.f32.partialorder %v1813, 8.507059e+37
    %v1815 = vand.u32 %v1803, 2147483648
    %v1816 = vor.u32 1.1754944e-38, %v1815
    %v1817 = vsel %vm1814, %v1816, %v1812
    %v1818 = vmul.f32 1.0, %v1817
    %v1819 = vmul.f32 %v1798, %v1557
    %v1820 = vmul.f32 %v1779, %v1799
    %v1821 = vadd.f32 %v1819, %v1820
    %v1822 = vtanh.pop %v1821
    %v1823 = vmul.f32 %v1818, %v1822
    %v1824 = vsel %vm1698, 1, 0
    %1825 = vset.pattern.permute.xlu0 0
    %1826 = vperm.xlu0 %1825, %v1824
    %v1827 = vpop.permute.xlu0 %1826
    %vm1828 = vcmp.eq.s32.totalorder %v1827, 1
    %v1829 = vsel %vm1828, %v1823, 0.0
    %s1830 = scalar_lea.vmem %s8, 48
    %1831 = vst [vmem:[%s1830] sm:$0xff] %v1829
    %v1832 = vsel %vm1828, %v1823, %v1556
    %v1833 = vsel %vm1828, %v1821, %v1557
    %s1834 = scalar_lea.vmem %s7, 32
    %v1835 = vld [vmem:[%s1834] sm:$0xff]
    %vm1836 = vcmp.ne.s32.totalorder %v1835, 0
    %s1837 = scalar_lea.vmem [#allocation2], 256
    %v1838 = vld [vmem:[%s1837 + $0x20] sm:$0xff]
    %v1839 = vld [vmem:[%s1837 + $0x28] sm:$0xff]
    %v1840 = vld [vmem:[%s1837 + $0x30] sm:$0xff]
    %v1841 = vld [vmem:[%s1837 + $0x38] sm:$0xff]
    %v1842 = vpack.c.bf16 %v1694, %v1694
    %1843 = vmatpush.bf16.msra.mxu0 %v979
    %1844 = vmatpush.bf16.msra.mxu0 %v975
    %1845 = vmatpush.bf16.msra.mxu0 %v971
    %1846 = vmatpush.bf16.msra.mxu0 %v967
    %1847 = vmatpush.bf16.msra.mxu0 %v963
    %1848 = vmatpush.bf16.msra.mxu0 %v959
    %1849 = vmatpush.bf16.msra.mxu0 %v955
    %1850 = vmatpush.bf16.msra.mxu0 %v951
    %1851 = vmatmul.bf16.gmra.mxu0 %v1842
    %v1852 = vpop.f32.mrf.mxu0
    %v1853 = vadd.f32 0.0, %v1852
    %v1854 = vpop.f32.mrf.mxu0
    %1855 = vdwg.mxu0
    %1856 = vmatpush.bf16.msra.mxu0 %v980
    %1857 = vmatpush.bf16.msra.mxu0 %v976
    %1858 = vmatpush.bf16.msra.mxu0 %v972
    %1859 = vmatpush.bf16.msra.mxu0 %v968
    %1860 = vmatpush.bf16.msra.mxu0 %v964
    %1861 = vmatpush.bf16.msra.mxu0 %v960
    %1862 = vmatpush.bf16.msra.mxu0 %v956
    %1863 = vmatpush.bf16.msra.mxu0 %v952
    %1864 = vmatmul.bf16.gmra.mxu0 %v1842
    %v1865 = vpop.f32.mrf.mxu0
    %v1866 = vadd.f32 0.0, %v1865
    %v1867 = vpop.f32.mrf.mxu0
    %1868 = vdwg.mxu0
    %1869 = vmatpush.bf16.msra.mxu0 %v981
    %1870 = vmatpush.bf16.msra.mxu0 %v977
    %1871 = vmatpush.bf16.msra.mxu0 %v973
    %1872 = vmatpush.bf16.msra.mxu0 %v969
    %1873 = vmatpush.bf16.msra.mxu0 %v965
    %1874 = vmatpush.bf16.msra.mxu0 %v961
    %1875 = vmatpush.bf16.msra.mxu0 %v957
    %1876 = vmatpush.bf16.msra.mxu0 %v953
    %1877 = vmatmul.bf16.gmra.mxu0 %v1842
    %v1878 = vpop.f32.mrf.mxu0
    %v1879 = vadd.f32 0.0, %v1878
    %v1880 = vpop.f32.mrf.mxu0
    %1881 = vdwg.mxu0
    %1882 = vmatpush.bf16.msra.mxu0 %v982
    %1883 = vmatpush.bf16.msra.mxu0 %v978
    %1884 = vmatpush.bf16.msra.mxu0 %v974
    %1885 = vmatpush.bf16.msra.mxu0 %v970
    %1886 = vmatpush.bf16.msra.mxu0 %v966
    %1887 = vmatpush.bf16.msra.mxu0 %v962
    %1888 = vmatpush.bf16.msra.mxu0 %v958
    %1889 = vmatpush.bf16.msra.mxu0 %v954
    %1890 = vmatmul.bf16.gmra.mxu0 %v1842
    %v1891 = vpop.f32.mrf.mxu0
    %v1892 = vadd.f32 0.0, %v1891
    %v1893 = vpop.f32.mrf.mxu0
    %1894 = vdwg.mxu0
    %v1895 = vadd.f32 %v1838, %v1853
    %v1896 = vadd.f32 %v1839, %v1866
    %v1897 = vadd.f32 %v1840, %v1879
    %v1898 = vadd.f32 %v1841, %v1892
    %v1899 = vxor.u32 %v1895, 2147483648
    %v1900 = vmul.f32 %v1899, 1.442695
    %v1901 = vpow.pop %v1900
    %v1902 = vadd.f32 %v1901, 1.0
    %v1903 = vrcp.pop %v1902
    %v1904 = vmul.f32 %v1902, %v1903
    %v1905 = vsub.f32 1.0, %v1904
    %v1906 = vmul.f32 %v1903, %v1905
    %v1907 = vadd.f32 %v1903, %v1906
    %vm1908 = vweird.f32 %v1902
    %vm1909 = vweird.f32 %v1903
    %vm1910 = vmor %vm1908, %vm1909
    %v1911 = vsel %vm1910, %v1903, %v1907
    %v1912 = vand.u32 2147483647, %v1902
    %vm1913 = vcmp.eq.f32.partialorder %v1912, 8.507059e+37
    %v1914 = vand.u32 %v1902, 2147483648
    %v1915 = vor.u32 1.1754944e-38, %v1914
    %v1916 = vsel %vm1913, %v1915, %v1911
    %v1917 = vmul.f32 1.0, %v1916
    %v1918 = vxor.u32 %v1896, 2147483648
    %v1919 = vmul.f32 %v1918, 1.442695
    %v1920 = vpow.pop %v1919
    %v1921 = vadd.f32 %v1920, 1.0
    %v1922 = vrcp.pop %v1921
    %v1923 = vmul.f32 %v1921, %v1922
    %v1924 = vsub.f32 1.0, %v1923
    %v1925 = vmul.f32 %v1922, %v1924
    %v1926 = vadd.f32 %v1922, %v1925
    %vm1927 = vweird.f32 %v1921
    %vm1928 = vweird.f32 %v1922
    %vm1929 = vmor %vm1927, %vm1928
    %v1930 = vsel %vm1929, %v1922, %v1926
    %v1931 = vand.u32 2147483647, %v1921
    %vm1932 = vcmp.eq.f32.partialorder %v1931, 8.507059e+37
    %v1933 = vand.u32 %v1921, 2147483648
    %v1934 = vor.u32 1.1754944e-38, %v1933
    %v1935 = vsel %vm1932, %v1934, %v1930
    %v1936 = vmul.f32 1.0, %v1935
    %v1937 = vtanh.pop %v1897
    %v1938 = vxor.u32 %v1898, 2147483648
    %v1939 = vmul.f32 %v1938, 1.442695
    %v1940 = vpow.pop %v1939
    %v1941 = vadd.f32 %v1940, 1.0
    %v1942 = vrcp.pop %v1941
    %v1943 = vmul.f32 %v1941, %v1942
    %v1944 = vsub.f32 1.0, %v1943
    %v1945 = vmul.f32 %v1942, %v1944
    %v1946 = vadd.f32 %v1942, %v1945
    %vm1947 = vweird.f32 %v1941
    %vm1948 = vweird.f32 %v1942
    %vm1949 = vmor %vm1947, %vm1948
    %v1950 = vsel %vm1949, %v1942, %v1946
    %v1951 = vand.u32 2147483647, %v1941
    %vm1952 = vcmp.eq.f32.partialorder %v1951, 8.507059e+37
    %v1953 = vand.u32 %v1941, 2147483648
    %v1954 = vor.u32 1.1754944e-38, %v1953
    %v1955 = vsel %vm1952, %v1954, %v1950
    %v1956 = vmul.f32 1.0, %v1955
    %v1957 = vmul.f32 %v1936, %v1695
    %v1958 = vmul.f32 %v1917, %v1937
    %v1959 = vadd.f32 %v1957, %v1958
    %v1960 = vtanh.pop %v1959
    %v1961 = vmul.f32 %v1956, %v1960
    %v1962 = vsel %vm1836, 1, 0
    %1963 = vset.pattern.permute.xlu0 0
    %1964 = vperm.xlu0 %1963, %v1962
    %v1965 = vpop.permute.xlu0 %1964
    %vm1966 = vcmp.eq.s32.totalorder %v1965, 1
    %v1967 = vsel %vm1966, %v1961, 0.0
    %s1968 = scalar_lea.vmem %s8, 64
    %1969 = vst [vmem:[%s1968 + $0x8] sm:$0xff] %v1967
    %v1970 = vsel %vm1966, %v1961, %v1694
    %v1971 = vsel %vm1966, %v1959, %v1695
    %v1972 = vld [vmem:[%s1834] sm:$0xff]
    %vm1973 = vcmp.ne.s32.totalorder %v1972, 0
    %v1974 = vld [vmem:[%s1837] sm:$0xff]
    %v1975 = vld [vmem:[%s1837 + $0x8] sm:$0xff]
    %v1976 = vld [vmem:[%s1837 + $0x10] sm:$0xff]
    %v1977 = vld [vmem:[%s1837 + $0x18] sm:$0xff]
    %v1978 = vpack.c.bf16 %v1832, %v1832
    %1979 = vmatpush.bf16.msra.mxu0 %v682
    %1980 = vmatpush.bf16.msra.mxu0 %v678
    %1981 = vmatpush.bf16.msra.mxu0 %v674
    %1982 = vmatpush.bf16.msra.mxu0 %v670
    %1983 = vmatpush.bf16.msra.mxu0 %v666
    %1984 = vmatpush.bf16.msra.mxu0 %v662
    %1985 = vmatpush.bf16.msra.mxu0 %v658
    %1986 = vmatpush.bf16.msra.mxu0 %v654
    %1987 = vmatmul.bf16.gmra.mxu0 %v1978
    %v1988 = vpop.f32.mrf.mxu0
    %v1989 = vadd.f32 0.0, %v1988
    %v1990 = vpop.f32.mrf.mxu0
    %1991 = vdwg.mxu0
    %1992 = vmatpush.bf16.msra.mxu0 %v683
    %1993 = vmatpush.bf16.msra.mxu0 %v679
    %1994 = vmatpush.bf16.msra.mxu0 %v675
    %1995 = vmatpush.bf16.msra.mxu0 %v671
    %1996 = vmatpush.bf16.msra.mxu0 %v667
    %1997 = vmatpush.bf16.msra.mxu0 %v663
    %1998 = vmatpush.bf16.msra.mxu0 %v659
    %1999 = vmatpush.bf16.msra.mxu0 %v655
    %2000 = vmatmul.bf16.gmra.mxu0 %v1978
    %v2001 = vpop.f32.mrf.mxu0
    %v2002 = vadd.f32 0.0, %v2001
    %v2003 = vpop.f32.mrf.mxu0
    %2004 = vdwg.mxu0
    %2005 = vmatpush.bf16.msra.mxu0 %v684
    %2006 = vmatpush.bf16.msra.mxu0 %v680
    %2007 = vmatpush.bf16.msra.mxu0 %v676
    %2008 = vmatpush.bf16.msra.mxu0 %v672
    %2009 = vmatpush.bf16.msra.mxu0 %v668
    %2010 = vmatpush.bf16.msra.mxu0 %v664
    %2011 = vmatpush.bf16.msra.mxu0 %v660
    %2012 = vmatpush.bf16.msra.mxu0 %v656
    %2013 = vmatmul.bf16.gmra.mxu0 %v1978
    %v2014 = vpop.f32.mrf.mxu0
    %v2015 = vadd.f32 0.0, %v2014
    %v2016 = vpop.f32.mrf.mxu0
    %2017 = vdwg.mxu0
    %2018 = vmatpush.bf16.msra.mxu0 %v685
    %2019 = vmatpush.bf16.msra.mxu0 %v681
    %2020 = vmatpush.bf16.msra.mxu0 %v677
    %2021 = vmatpush.bf16.msra.mxu0 %v673
    %2022 = vmatpush.bf16.msra.mxu0 %v669
    %2023 = vmatpush.bf16.msra.mxu0 %v665
    %2024 = vmatpush.bf16.msra.mxu0 %v661
    %2025 = vmatpush.bf16.msra.mxu0 %v657
    %2026 = vmatmul.bf16.gmra.mxu0 %v1978
    %v2027 = vpop.f32.mrf.mxu0
    %v2028 = vadd.f32 0.0, %v2027
    %v2029 = vpop.f32.mrf.mxu0
    %2030 = vdwg.mxu0
    %v2031 = vadd.f32 %v1974, %v1989
    %v2032 = vadd.f32 %v1975, %v2002
    %v2033 = vadd.f32 %v1976, %v2015
    %v2034 = vadd.f32 %v1977, %v2028
    %v2035 = vxor.u32 %v2031, 2147483648
    %v2036 = vmul.f32 %v2035, 1.442695
    %v2037 = vpow.pop %v2036
    %v2038 = vadd.f32 %v2037, 1.0
    %v2039 = vrcp.pop %v2038
    %v2040 = vmul.f32 %v2038, %v2039
    %v2041 = vsub.f32 1.0, %v2040
    %v2042 = vmul.f32 %v2039, %v2041
    %v2043 = vadd.f32 %v2039, %v2042
    %vm2044 = vweird.f32 %v2038
    %vm2045 = vweird.f32 %v2039
    %vm2046 = vmor %vm2044, %vm2045
    %v2047 = vsel %vm2046, %v2039, %v2043
    %v2048 = vand.u32 2147483647, %v2038
    %vm2049 = vcmp.eq.f32.partialorder %v2048, 8.507059e+37
    %v2050 = vand.u32 %v2038, 2147483648
    %v2051 = vor.u32 1.1754944e-38, %v2050
    %v2052 = vsel %vm2049, %v2051, %v2047
    %v2053 = vmul.f32 1.0, %v2052
    %v2054 = vxor.u32 %v2032, 2147483648
    %v2055 = vmul.f32 %v2054, 1.442695
    %v2056 = vpow.pop %v2055
    %v2057 = vadd.f32 %v2056, 1.0
    %v2058 = vrcp.pop %v2057
    %v2059 = vmul.f32 %v2057, %v2058
    %v2060 = vsub.f32 1.0, %v2059
    %v2061 = vmul.f32 %v2058, %v2060
    %v2062 = vadd.f32 %v2058, %v2061
    %vm2063 = vweird.f32 %v2057
    %vm2064 = vweird.f32 %v2058
    %vm2065 = vmor %vm2063, %vm2064
    %v2066 = vsel %vm2065, %v2058, %v2062
    %v2067 = vand.u32 2147483647, %v2057
    %vm2068 = vcmp.eq.f32.partialorder %v2067, 8.507059e+37
    %v2069 = vand.u32 %v2057, 2147483648
    %v2070 = vor.u32 1.1754944e-38, %v2069
    %v2071 = vsel %vm2068, %v2070, %v2066
    %v2072 = vmul.f32 1.0, %v2071
    %v2073 = vtanh.pop %v2033
    %v2074 = vxor.u32 %v2034, 2147483648
    %v2075 = vmul.f32 %v2074, 1.442695
    %v2076 = vpow.pop %v2075
    %v2077 = vadd.f32 %v2076, 1.0
    %v2078 = vrcp.pop %v2077
    %v2079 = vmul.f32 %v2077, %v2078
    %v2080 = vsub.f32 1.0, %v2079
    %v2081 = vmul.f32 %v2078, %v2080
    %v2082 = vadd.f32 %v2078, %v2081
    %vm2083 = vweird.f32 %v2077
    %vm2084 = vweird.f32 %v2078
    %vm2085 = vmor %vm2083, %vm2084
    %v2086 = vsel %vm2085, %v2078, %v2082
    %v2087 = vand.u32 2147483647, %v2077
    %vm2088 = vcmp.eq.f32.partialorder %v2087, 8.507059e+37
    %v2089 = vand.u32 %v2077, 2147483648
    %v2090 = vor.u32 1.1754944e-38, %v2089
    %v2091 = vsel %vm2088, %v2090, %v2086
    %v2092 = vmul.f32 1.0, %v2091
    %v2093 = vmul.f32 %v2072, %v1833
    %v2094 = vmul.f32 %v2053, %v2073
    %v2095 = vadd.f32 %v2093, %v2094
    %v2096 = vtanh.pop %v2095
    %v2097 = vmul.f32 %v2092, %v2096
    %v2098 = vsel %vm1973, 1, 0
    %2099 = vset.pattern.permute.xlu0 0
    %2100 = vperm.xlu0 %2099, %v2098
    %v2101 = vpop.permute.xlu0 %2100
    %vm2102 = vcmp.eq.s32.totalorder %v2101, 1
    %v2103 = vsel %vm2102, %v2097, 0.0
    %2104 = vst [vmem:[%s1968] sm:$0xff] %v2103
    %v2105 = vsel %vm2102, %v2097, %v1832
    %v2106 = vsel %vm2102, %v2095, %v1833
    %v2107 = vld [vmem:[%s1696] sm:$0xff]
    %vm2108 = vcmp.ne.s32.totalorder %v2107, 0
    %v2109 = vld [vmem:[%s1699 + $0x20] sm:$0xff]
    %v2110 = vld [vmem:[%s1699 + $0x28] sm:$0xff]
    %v2111 = vld [vmem:[%s1699 + $0x30] sm:$0xff]
    %v2112 = vld [vmem:[%s1699 + $0x38] sm:$0xff]
    %v2113 = vpack.c.bf16 %v1970, %v1970
    %2114 = vmatpush.bf16.msra.mxu0 %v979
    %2115 = vmatpush.bf16.msra.mxu0 %v975
    %2116 = vmatpush.bf16.msra.mxu0 %v971
    %2117 = vmatpush.bf16.msra.mxu0 %v967
    %2118 = vmatpush.bf16.msra.mxu0 %v963
    %2119 = vmatpush.bf16.msra.mxu0 %v959
    %2120 = vmatpush.bf16.msra.mxu0 %v955
    %2121 = vmatpush.bf16.msra.mxu0 %v951
    %2122 = vmatmul.bf16.gmra.mxu0 %v2113
    %v2123 = vpop.f32.mrf.mxu0
    %v2124 = vadd.f32 0.0, %v2123
    %v2125 = vpop.f32.mrf.mxu0
    %2126 = vdwg.mxu0
    %2127 = vmatpush.bf16.msra.mxu0 %v980
    %2128 = vmatpush.bf16.msra.mxu0 %v976
    %2129 = vmatpush.bf16.msra.mxu0 %v972
    %2130 = vmatpush.bf16.msra.mxu0 %v968
    %2131 = vmatpush.bf16.msra.mxu0 %v964
    %2132 = vmatpush.bf16.msra.mxu0 %v960
    %2133 = vmatpush.bf16.msra.mxu0 %v956
    %2134 = vmatpush.bf16.msra.mxu0 %v952
    %2135 = vmatmul.bf16.gmra.mxu0 %v2113
    %v2136 = vpop.f32.mrf.mxu0
    %v2137 = vadd.f32 0.0, %v2136
    %v2138 = vpop.f32.mrf.mxu0
    %2139 = vdwg.mxu0
    %2140 = vmatpush.bf16.msra.mxu0 %v981
    %2141 = vmatpush.bf16.msra.mxu0 %v977
    %2142 = vmatpush.bf16.msra.mxu0 %v973
    %2143 = vmatpush.bf16.msra.mxu0 %v969
    %2144 = vmatpush.bf16.msra.mxu0 %v965
    %2145 = vmatpush.bf16.msra.mxu0 %v961
    %2146 = vmatpush.bf16.msra.mxu0 %v957
    %2147 = vmatpush.bf16.msra.mxu0 %v953
    %2148 = vmatmul.bf16.gmra.mxu0 %v2113
    %v2149 = vpop.f32.mrf.mxu0
    %v2150 = vadd.f32 0.0, %v2149
    %v2151 = vpop.f32.mrf.mxu0
    %2152 = vdwg.mxu0
    %2153 = vmatpush.bf16.msra.mxu0 %v982
    %2154 = vmatpush.bf16.msra.mxu0 %v978
    %2155 = vmatpush.bf16.msra.mxu0 %v974
    %2156 = vmatpush.bf16.msra.mxu0 %v970
    %2157 = vmatpush.bf16.msra.mxu0 %v966
    %2158 = vmatpush.bf16.msra.mxu0 %v962
    %2159 = vmatpush.bf16.msra.mxu0 %v958
    %2160 = vmatpush.bf16.msra.mxu0 %v954
    %2161 = vmatmul.bf16.gmra.mxu0 %v2113
    %v2162 = vpop.f32.mrf.mxu0
    %v2163 = vadd.f32 0.0, %v2162
    %v2164 = vpop.f32.mrf.mxu0
    %2165 = vdwg.mxu0
    %v2166 = vadd.f32 %v2109, %v2124
    %v2167 = vadd.f32 %v2110, %v2137
    %v2168 = vadd.f32 %v2111, %v2150
    %v2169 = vadd.f32 %v2112, %v2163
    %v2170 = vxor.u32 %v2166, 2147483648
    %v2171 = vmul.f32 %v2170, 1.442695
    %v2172 = vpow.pop %v2171
    %v2173 = vadd.f32 %v2172, 1.0
    %v2174 = vrcp.pop %v2173
    %v2175 = vmul.f32 %v2173, %v2174
    %v2176 = vsub.f32 1.0, %v2175
    %v2177 = vmul.f32 %v2174, %v2176
    %v2178 = vadd.f32 %v2174, %v2177
    %vm2179 = vweird.f32 %v2173
    %vm2180 = vweird.f32 %v2174
    %vm2181 = vmor %vm2179, %vm2180
    %v2182 = vsel %vm2181, %v2174, %v2178
    %v2183 = vand.u32 2147483647, %v2173
    %vm2184 = vcmp.eq.f32.partialorder %v2183, 8.507059e+37
    %v2185 = vand.u32 %v2173, 2147483648
    %v2186 = vor.u32 1.1754944e-38, %v2185
    %v2187 = vsel %vm2184, %v2186, %v2182
    %v2188 = vmul.f32 1.0, %v2187
    %v2189 = vxor.u32 %v2167, 2147483648
    %v2190 = vmul.f32 %v2189, 1.442695
    %v2191 = vpow.pop %v2190
    %v2192 = vadd.f32 %v2191, 1.0
    %v2193 = vrcp.pop %v2192
    %v2194 = vmul.f32 %v2192, %v2193
    %v2195 = vsub.f32 1.0, %v2194
    %v2196 = vmul.f32 %v2193, %v2195
    %v2197 = vadd.f32 %v2193, %v2196
    %vm2198 = vweird.f32 %v2192
    %vm2199 = vweird.f32 %v2193
    %vm2200 = vmor %vm2198, %vm2199
    %v2201 = vsel %vm2200, %v2193, %v2197
    %v2202 = vand.u32 2147483647, %v2192
    %vm2203 = vcmp.eq.f32.partialorder %v2202, 8.507059e+37
    %v2204 = vand.u32 %v2192, 2147483648
    %v2205 = vor.u32 1.1754944e-38, %v2204
    %v2206 = vsel %vm2203, %v2205, %v2201
    %v2207 = vmul.f32 1.0, %v2206
    %v2208 = vtanh.pop %v2168
    %v2209 = vxor.u32 %v2169, 2147483648
    %v2210 = vmul.f32 %v2209, 1.442695
    %v2211 = vpow.pop %v2210
    %v2212 = vadd.f32 %v2211, 1.0
    %v2213 = vrcp.pop %v2212
    %v2214 = vmul.f32 %v2212, %v2213
    %v2215 = vsub.f32 1.0, %v2214
    %v2216 = vmul.f32 %v2213, %v2215
    %v2217 = vadd.f32 %v2213, %v2216
    %vm2218 = vweird.f32 %v2212
    %vm2219 = vweird.f32 %v2213
    %vm2220 = vmor %vm2218, %vm2219
    %v2221 = vsel %vm2220, %v2213, %v2217
    %v2222 = vand.u32 2147483647, %v2212
    %vm2223 = vcmp.eq.f32.partialorder %v2222, 8.507059e+37
    %v2224 = vand.u32 %v2212, 2147483648
    %v2225 = vor.u32 1.1754944e-38, %v2224
    %v2226 = vsel %vm2223, %v2225, %v2221
    %v2227 = vmul.f32 1.0, %v2226
    %v2228 = vmul.f32 %v2207, %v1971
    %v2229 = vmul.f32 %v2188, %v2208
    %v2230 = vadd.f32 %v2228, %v2229
    %v2231 = vtanh.pop %v2230
    %v2232 = vmul.f32 %v2227, %v2231
    %v2233 = vsel %vm2108, 1, 0
    %2234 = vset.pattern.permute.xlu0 0
    %2235 = vperm.xlu0 %2234, %v2233
    %v2236 = vpop.permute.xlu0 %2235
    %vm2237 = vcmp.eq.s32.totalorder %v2236, 1
    %v2238 = vsel %vm2237, %v2232, 0.0
    %2239 = vst [vmem:[%s1830 + $0x8] sm:$0xff] %v2238
    %v2240 = vsel %vm2237, %v2232, %v1970
    %v2241 = vsel %vm2237, %v2230, %v1971
    %v2242 = vld [vmem:[%s1558] sm:$0xff]
    %vm2243 = vcmp.ne.s32.totalorder %v2242, 0
    %v2244 = vld [vmem:[%s1561] sm:$0xff]
    %v2245 = vld [vmem:[%s1561 + $0x8] sm:$0xff]
    %v2246 = vld [vmem:[%s1561 + $0x10] sm:$0xff]
    %v2247 = vld [vmem:[%s1561 + $0x18] sm:$0xff]
    %v2248 = vpack.c.bf16 %v2105, %v2105
    %2249 = vmatpush.bf16.msra.mxu0 %v682
    %2250 = vmatpush.bf16.msra.mxu0 %v678
    %2251 = vmatpush.bf16.msra.mxu0 %v674
    %2252 = vmatpush.bf16.msra.mxu0 %v670
    %2253 = vmatpush.bf16.msra.mxu0 %v666
    %2254 = vmatpush.bf16.msra.mxu0 %v662
    %2255 = vmatpush.bf16.msra.mxu0 %v658
    %2256 = vmatpush.bf16.msra.mxu0 %v654
    %2257 = vmatmul.bf16.gmra.mxu0 %v2248
    %v2258 = vpop.f32.mrf.mxu0
    %v2259 = vadd.f32 0.0, %v2258
    %v2260 = vpop.f32.mrf.mxu0
    %2261 = vdwg.mxu0
    %2262 = vmatpush.bf16.msra.mxu0 %v683
    %2263 = vmatpush.bf16.msra.mxu0 %v679
    %2264 = vmatpush.bf16.msra.mxu0 %v675
    %2265 = vmatpush.bf16.msra.mxu0 %v671
    %2266 = vmatpush.bf16.msra.mxu0 %v667
    %2267 = vmatpush.bf16.msra.mxu0 %v663
    %2268 = vmatpush.bf16.msra.mxu0 %v659
    %2269 = vmatpush.bf16.msra.mxu0 %v655
    %2270 = vmatmul.bf16.gmra.mxu0 %v2248
    %v2271 = vpop.f32.mrf.mxu0
    %v2272 = vadd.f32 0.0, %v2271
    %v2273 = vpop.f32.mrf.mxu0
    %2274 = vdwg.mxu0
    %2275 = vmatpush.bf16.msra.mxu0 %v684
    %2276 = vmatpush.bf16.msra.mxu0 %v680
    %2277 = vmatpush.bf16.msra.mxu0 %v676
    %2278 = vmatpush.bf16.msra.mxu0 %v672
    %2279 = vmatpush.bf16.msra.mxu0 %v668
    %2280 = vmatpush.bf16.msra.mxu0 %v664
    %2281 = vmatpush.bf16.msra.mxu0 %v660
    %2282 = vmatpush.bf16.msra.mxu0 %v656
    %2283 = vmatmul.bf16.gmra.mxu0 %v2248
    %v2284 = vpop.f32.mrf.mxu0
    %v2285 = vadd.f32 0.0, %v2284
    %v2286 = vpop.f32.mrf.mxu0
    %2287 = vdwg.mxu0
    %2288 = vmatpush.bf16.msra.mxu0 %v685
    %2289 = vmatpush.bf16.msra.mxu0 %v681
    %2290 = vmatpush.bf16.msra.mxu0 %v677
    %2291 = vmatpush.bf16.msra.mxu0 %v673
    %2292 = vmatpush.bf16.msra.mxu0 %v669
    %2293 = vmatpush.bf16.msra.mxu0 %v665
    %2294 = vmatpush.bf16.msra.mxu0 %v661
    %2295 = vmatpush.bf16.msra.mxu0 %v657
    %2296 = vmatmul.bf16.gmra.mxu0 %v2248
    %v2297 = vpop.f32.mrf.mxu0
    %v2298 = vadd.f32 0.0, %v2297
    %v2299 = vpop.f32.mrf.mxu0
    %2300 = vdwg.mxu0
    %v2301 = vadd.f32 %v2244, %v2259
    %v2302 = vadd.f32 %v2245, %v2272
    %v2303 = vadd.f32 %v2246, %v2285
    %v2304 = vadd.f32 %v2247, %v2298
    %v2305 = vxor.u32 %v2301, 2147483648
    %v2306 = vmul.f32 %v2305, 1.442695
    %v2307 = vpow.pop %v2306
    %v2308 = vadd.f32 %v2307, 1.0
    %v2309 = vrcp.pop %v2308
    %v2310 = vmul.f32 %v2308, %v2309
    %v2311 = vsub.f32 1.0, %v2310
    %v2312 = vmul.f32 %v2309, %v2311
    %v2313 = vadd.f32 %v2309, %v2312
    %vm2314 = vweird.f32 %v2308
    %vm2315 = vweird.f32 %v2309
    %vm2316 = vmor %vm2314, %vm2315
    %v2317 = vsel %vm2316, %v2309, %v2313
    %v2318 = vand.u32 2147483647, %v2308
    %vm2319 = vcmp.eq.f32.partialorder %v2318, 8.507059e+37
    %v2320 = vand.u32 %v2308, 2147483648
    %v2321 = vor.u32 1.1754944e-38, %v2320
    %v2322 = vsel %vm2319, %v2321, %v2317
    %v2323 = vmul.f32 1.0, %v2322
    %v2324 = vxor.u32 %v2302, 2147483648
    %v2325 = vmul.f32 %v2324, 1.442695
    %v2326 = vpow.pop %v2325
    %v2327 = vadd.f32 %v2326, 1.0
    %v2328 = vrcp.pop %v2327
    %v2329 = vmul.f32 %v2327, %v2328
    %v2330 = vsub.f32 1.0, %v2329
    %v2331 = vmul.f32 %v2328, %v2330
    %v2332 = vadd.f32 %v2328, %v2331
    %vm2333 = vweird.f32 %v2327
    %vm2334 = vweird.f32 %v2328
    %vm2335 = vmor %vm2333, %vm2334
    %v2336 = vsel %vm2335, %v2328, %v2332
    %v2337 = vand.u32 2147483647, %v2327
    %vm2338 = vcmp.eq.f32.partialorder %v2337, 8.507059e+37
    %v2339 = vand.u32 %v2327, 2147483648
    %v2340 = vor.u32 1.1754944e-38, %v2339
    %v2341 = vsel %vm2338, %v2340, %v2336
    %v2342 = vmul.f32 1.0, %v2341
    %v2343 = vtanh.pop %v2303
    %v2344 = vxor.u32 %v2304, 2147483648
    %v2345 = vmul.f32 %v2344, 1.442695
    %v2346 = vpow.pop %v2345
    %v2347 = vadd.f32 %v2346, 1.0
    %v2348 = vrcp.pop %v2347
    %v2349 = vmul.f32 %v2347, %v2348
    %v2350 = vsub.f32 1.0, %v2349
    %v2351 = vmul.f32 %v2348, %v2350
    %v2352 = vadd.f32 %v2348, %v2351
    %vm2353 = vweird.f32 %v2347
    %vm2354 = vweird.f32 %v2348
    %vm2355 = vmor %vm2353, %vm2354
    %v2356 = vsel %vm2355, %v2348, %v2352
    %v2357 = vand.u32 2147483647, %v2347
    %vm2358 = vcmp.eq.f32.partialorder %v2357, 8.507059e+37
    %v2359 = vand.u32 %v2347, 2147483648
    %v2360 = vor.u32 1.1754944e-38, %v2359
    %v2361 = vsel %vm2358, %v2360, %v2356
    %v2362 = vmul.f32 1.0, %v2361
    %v2363 = vmul.f32 %v2342, %v2106
    %v2364 = vmul.f32 %v2323, %v2343
    %v2365 = vadd.f32 %v2363, %v2364
    %v2366 = vtanh.pop %v2365
    %v2367 = vmul.f32 %v2362, %v2366
    %v2368 = vsel %vm2243, 1, 0
    %2369 = vset.pattern.permute.xlu0 0
    %2370 = vperm.xlu0 %2369, %v2368
    %v2371 = vpop.permute.xlu0 %2370
    %vm2372 = vcmp.eq.s32.totalorder %v2371, 1
    %v2373 = vsel %vm2372, %v2367, 0.0
    %2374 = vst [vmem:[%s1692] sm:$0xff] %v2373
    %v2375 = vsel %vm2372, %v2367, %v2105
    %v2376 = vsel %vm2372, %v2365, %v2106
    %v2377 = vld [vmem:[%s1420] sm:$0xff]
    %vm2378 = vcmp.ne.s32.totalorder %v2377, 0
    %v2379 = vld [vmem:[%s1423 + $0x20] sm:$0xff]
    %v2380 = vld [vmem:[%s1423 + $0x28] sm:$0xff]
    %v2381 = vld [vmem:[%s1423 + $0x30] sm:$0xff]
    %v2382 = vld [vmem:[%s1423 + $0x38] sm:$0xff]
    %v2383 = vpack.c.bf16 %v2240, %v2240
    %2384 = vmatpush.bf16.msra.mxu0 %v979
    %2385 = vmatpush.bf16.msra.mxu0 %v975
    %2386 = vmatpush.bf16.msra.mxu0 %v971
    %2387 = vmatpush.bf16.msra.mxu0 %v967
    %2388 = vmatpush.bf16.msra.mxu0 %v963
    %2389 = vmatpush.bf16.msra.mxu0 %v959
    %2390 = vmatpush.bf16.msra.mxu0 %v955
    %2391 = vmatpush.bf16.msra.mxu0 %v951
    %2392 = vmatmul.bf16.gmra.mxu0 %v2383
    %v2393 = vpop.f32.mrf.mxu0
    %v2394 = vadd.f32 0.0, %v2393
    %v2395 = vpop.f32.mrf.mxu0
    %2396 = vdwg.mxu0
    %2397 = vmatpush.bf16.msra.mxu0 %v980
    %2398 = vmatpush.bf16.msra.mxu0 %v976
    %2399 = vmatpush.bf16.msra.mxu0 %v972
    %2400 = vmatpush.bf16.msra.mxu0 %v968
    %2401 = vmatpush.bf16.msra.mxu0 %v964
    %2402 = vmatpush.bf16.msra.mxu0 %v960
    %2403 = vmatpush.bf16.msra.mxu0 %v956
    %2404 = vmatpush.bf16.msra.mxu0 %v952
    %2405 = vmatmul.bf16.gmra.mxu0 %v2383
    %v2406 = vpop.f32.mrf.mxu0
    %v2407 = vadd.f32 0.0, %v2406
    %v2408 = vpop.f32.mrf.mxu0
    %2409 = vdwg.mxu0
    %2410 = vmatpush.bf16.msra.mxu0 %v981
    %2411 = vmatpush.bf16.msra.mxu0 %v977
    %2412 = vmatpush.bf16.msra.mxu0 %v973
    %2413 = vmatpush.bf16.msra.mxu0 %v969
    %2414 = vmatpush.bf16.msra.mxu0 %v965
    %2415 = vmatpush.bf16.msra.mxu0 %v961
    %2416 = vmatpush.bf16.msra.mxu0 %v957
    %2417 = vmatpush.bf16.msra.mxu0 %v953
    %2418 = vmatmul.bf16.gmra.mxu0 %v2383
    %v2419 = vpop.f32.mrf.mxu0
    %v2420 = vadd.f32 0.0, %v2419
    %v2421 = vpop.f32.mrf.mxu0
    %2422 = vdwg.mxu0
    %2423 = vmatpush.bf16.msra.mxu0 %v982
    %2424 = vmatpush.bf16.msra.mxu0 %v978
    %2425 = vmatpush.bf16.msra.mxu0 %v974
    %2426 = vmatpush.bf16.msra.mxu0 %v970
    %2427 = vmatpush.bf16.msra.mxu0 %v966
    %2428 = vmatpush.bf16.msra.mxu0 %v962
    %2429 = vmatpush.bf16.msra.mxu0 %v958
    %2430 = vmatpush.bf16.msra.mxu0 %v954
    %2431 = vmatmul.bf16.gmra.mxu0 %v2383
    %v2432 = vpop.f32.mrf.mxu0
    %v2433 = vadd.f32 0.0, %v2432
    %v2434 = vpop.f32.mrf.mxu0
    %2435 = vdwg.mxu0
    %v2436 = vadd.f32 %v2379, %v2394
    %v2437 = vadd.f32 %v2380, %v2407
    %v2438 = vadd.f32 %v2381, %v2420
    %v2439 = vadd.f32 %v2382, %v2433
    %v2440 = vxor.u32 %v2436, 2147483648
    %v2441 = vmul.f32 %v2440, 1.442695
    %v2442 = vpow.pop %v2441
    %v2443 = vadd.f32 %v2442, 1.0
    %v2444 = vrcp.pop %v2443
    %v2445 = vmul.f32 %v2443, %v2444
    %v2446 = vsub.f32 1.0, %v2445
    %v2447 = vmul.f32 %v2444, %v2446
    %v2448 = vadd.f32 %v2444, %v2447
    %vm2449 = vweird.f32 %v2443
    %vm2450 = vweird.f32 %v2444
    %vm2451 = vmor %vm2449, %vm2450
    %v2452 = vsel %vm2451, %v2444, %v2448
    %v2453 = vand.u32 2147483647, %v2443
    %vm2454 = vcmp.eq.f32.partialorder %v2453, 8.507059e+37
    %v2455 = vand.u32 %v2443, 2147483648
    %v2456 = vor.u32 1.1754944e-38, %v2455
    %v2457 = vsel %vm2454, %v2456, %v2452
    %v2458 = vmul.f32 1.0, %v2457
    %v2459 = vxor.u32 %v2437, 2147483648
    %v2460 = vmul.f32 %v2459, 1.442695
    %v2461 = vpow.pop %v2460
    %v2462 = vadd.f32 %v2461, 1.0
    %v2463 = vrcp.pop %v2462
    %v2464 = vmul.f32 %v2462, %v2463
    %v2465 = vsub.f32 1.0, %v2464
    %v2466 = vmul.f32 %v2463, %v2465
    %v2467 = vadd.f32 %v2463, %v2466
    %vm2468 = vweird.f32 %v2462
    %vm2469 = vweird.f32 %v2463
    %vm2470 = vmor %vm2468, %vm2469
    %v2471 = vsel %vm2470, %v2463, %v2467
    %v2472 = vand.u32 2147483647, %v2462
    %vm2473 = vcmp.eq.f32.partialorder %v2472, 8.507059e+37
    %v2474 = vand.u32 %v2462, 2147483648
    %v2475 = vor.u32 1.1754944e-38, %v2474
    %v2476 = vsel %vm2473, %v2475, %v2471
    %v2477 = vmul.f32 1.0, %v2476
    %v2478 = vtanh.pop %v2438
    %v2479 = vxor.u32 %v2439, 2147483648
    %v2480 = vmul.f32 %v2479, 1.442695
    %v2481 = vpow.pop %v2480
    %v2482 = vadd.f32 %v2481, 1.0
    %v2483 = vrcp.pop %v2482
    %v2484 = vmul.f32 %v2482, %v2483
    %v2485 = vsub.f32 1.0, %v2484
    %v2486 = vmul.f32 %v2483, %v2485
    %v2487 = vadd.f32 %v2483, %v2486
    %vm2488 = vweird.f32 %v2482
    %vm2489 = vweird.f32 %v2483
    %vm2490 = vmor %vm2488, %vm2489
    %v2491 = vsel %vm2490, %v2483, %v2487
    %v2492 = vand.u32 2147483647, %v2482
    %vm2493 = vcmp.eq.f32.partialorder %v2492, 8.507059e+37
    %v2494 = vand.u32 %v2482, 2147483648
    %v2495 = vor.u32 1.1754944e-38, %v2494
    %v2496 = vsel %vm2493, %v2495, %v2491
    %v2497 = vmul.f32 1.0, %v2496
    %v2498 = vmul.f32 %v2477, %v2241
    %v2499 = vmul.f32 %v2458, %v2478
    %v2500 = vadd.f32 %v2498, %v2499
    %v2501 = vtanh.pop %v2500
    %v2502 = vmul.f32 %v2497, %v2501
    %v2503 = vsel %vm2378, 1, 0
    %2504 = vset.pattern.permute.xlu0 0
    %2505 = vperm.xlu0 %2504, %v2503
    %v2506 = vpop.permute.xlu0 %2505
    %vm2507 = vcmp.eq.s32.totalorder %v2506, 1
    %v2508 = vsel %vm2507, %v2502, 0.0
    %2509 = vst [vmem:[%s1554 + $0x8] sm:$0xff] %v2508
    %v2510 = vsel %vm2507, %v2502, %v2240
    %v2511 = vsel %vm2507, %v2500, %v2241
    %v2512 = vld [vmem:[%s1282] sm:$0xff]
    %vm2513 = vcmp.ne.s32.totalorder %v2512, 0
    %v2514 = vld [vmem:[%s1285] sm:$0xff]
    %v2515 = vld [vmem:[%s1285 + $0x8] sm:$0xff]
    %v2516 = vld [vmem:[%s1285 + $0x10] sm:$0xff]
    %v2517 = vld [vmem:[%s1285 + $0x18] sm:$0xff]
    %v2518 = vpack.c.bf16 %v2375, %v2375
    %2519 = vmatpush.bf16.msra.mxu0 %v682
    %2520 = vmatpush.bf16.msra.mxu0 %v678
    %2521 = vmatpush.bf16.msra.mxu0 %v674
    %2522 = vmatpush.bf16.msra.mxu0 %v670
    %2523 = vmatpush.bf16.msra.mxu0 %v666
    %2524 = vmatpush.bf16.msra.mxu0 %v662
    %2525 = vmatpush.bf16.msra.mxu0 %v658
    %2526 = vmatpush.bf16.msra.mxu0 %v654
    %2527 = vmatmul.bf16.gmra.mxu0 %v2518
    %v2528 = vpop.f32.mrf.mxu0
    %v2529 = vadd.f32 0.0, %v2528
    %v2530 = vpop.f32.mrf.mxu0
    %2531 = vdwg.mxu0
    %2532 = vmatpush.bf16.msra.mxu0 %v683
    %2533 = vmatpush.bf16.msra.mxu0 %v679
    %2534 = vmatpush.bf16.msra.mxu0 %v675
    %2535 = vmatpush.bf16.msra.mxu0 %v671
    %2536 = vmatpush.bf16.msra.mxu0 %v667
    %2537 = vmatpush.bf16.msra.mxu0 %v663
    %2538 = vmatpush.bf16.msra.mxu0 %v659
    %2539 = vmatpush.bf16.msra.mxu0 %v655
    %2540 = vmatmul.bf16.gmra.mxu0 %v2518
    %v2541 = vpop.f32.mrf.mxu0
    %v2542 = vadd.f32 0.0, %v2541
    %v2543 = vpop.f32.mrf.mxu0
    %2544 = vdwg.mxu0
    %2545 = vmatpush.bf16.msra.mxu0 %v684
    %2546 = vmatpush.bf16.msra.mxu0 %v680
    %2547 = vmatpush.bf16.msra.mxu0 %v676
    %2548 = vmatpush.bf16.msra.mxu0 %v672
    %2549 = vmatpush.bf16.msra.mxu0 %v668
    %2550 = vmatpush.bf16.msra.mxu0 %v664
    %2551 = vmatpush.bf16.msra.mxu0 %v660
    %2552 = vmatpush.bf16.msra.mxu0 %v656
    %2553 = vmatmul.bf16.gmra.mxu0 %v2518
    %v2554 = vpop.f32.mrf.mxu0
    %v2555 = vadd.f32 0.0, %v2554
    %v2556 = vpop.f32.mrf.mxu0
    %2557 = vdwg.mxu0
    %2558 = vmatpush.bf16.msra.mxu0 %v685
    %2559 = vmatpush.bf16.msra.mxu0 %v681
    %2560 = vmatpush.bf16.msra.mxu0 %v677
    %2561 = vmatpush.bf16.msra.mxu0 %v673
    %2562 = vmatpush.bf16.msra.mxu0 %v669
    %2563 = vmatpush.bf16.msra.mxu0 %v665
    %2564 = vmatpush.bf16.msra.mxu0 %v661
    %2565 = vmatpush.bf16.msra.mxu0 %v657
    %2566 = vmatmul.bf16.gmra.mxu0 %v2518
    %v2567 = vpop.f32.mrf.mxu0
    %v2568 = vadd.f32 0.0, %v2567
    %v2569 = vpop.f32.mrf.mxu0
    %2570 = vdwg.mxu0
    %v2571 = vadd.f32 %v2514, %v2529
    %v2572 = vadd.f32 %v2515, %v2542
    %v2573 = vadd.f32 %v2516, %v2555
    %v2574 = vadd.f32 %v2517, %v2568
    %v2575 = vxor.u32 %v2571, 2147483648
    %v2576 = vmul.f32 %v2575, 1.442695
    %v2577 = vpow.pop %v2576
    %v2578 = vadd.f32 %v2577, 1.0
    %v2579 = vrcp.pop %v2578
    %v2580 = vmul.f32 %v2578, %v2579
    %v2581 = vsub.f32 1.0, %v2580
    %v2582 = vmul.f32 %v2579, %v2581
    %v2583 = vadd.f32 %v2579, %v2582
    %vm2584 = vweird.f32 %v2578
    %vm2585 = vweird.f32 %v2579
    %vm2586 = vmor %vm2584, %vm2585
    %v2587 = vsel %vm2586, %v2579, %v2583
    %v2588 = vand.u32 2147483647, %v2578
    %vm2589 = vcmp.eq.f32.partialorder %v2588, 8.507059e+37
    %v2590 = vand.u32 %v2578, 2147483648
    %v2591 = vor.u32 1.1754944e-38, %v2590
    %v2592 = vsel %vm2589, %v2591, %v2587
    %v2593 = vmul.f32 1.0, %v2592
    %v2594 = vxor.u32 %v2572, 2147483648
    %v2595 = vmul.f32 %v2594, 1.442695
    %v2596 = vpow.pop %v2595
    %v2597 = vadd.f32 %v2596, 1.0
    %v2598 = vrcp.pop %v2597
    %v2599 = vmul.f32 %v2597, %v2598
    %v2600 = vsub.f32 1.0, %v2599
    %v2601 = vmul.f32 %v2598, %v2600
    %v2602 = vadd.f32 %v2598, %v2601
    %vm2603 = vweird.f32 %v2597
    %vm2604 = vweird.f32 %v2598
    %vm2605 = vmor %vm2603, %vm2604
    %v2606 = vsel %vm2605, %v2598, %v2602
    %v2607 = vand.u32 2147483647, %v2597
    %vm2608 = vcmp.eq.f32.partialorder %v2607, 8.507059e+37
    %v2609 = vand.u32 %v2597, 2147483648
    %v2610 = vor.u32 1.1754944e-38, %v2609
    %v2611 = vsel %vm2608, %v2610, %v2606
    %v2612 = vmul.f32 1.0, %v2611
    %v2613 = vtanh.pop %v2573
    %v2614 = vxor.u32 %v2574, 2147483648
    %v2615 = vmul.f32 %v2614, 1.442695
    %v2616 = vpow.pop %v2615
    %v2617 = vadd.f32 %v2616, 1.0
    %v2618 = vrcp.pop %v2617
    %v2619 = vmul.f32 %v2617, %v2618
    %v2620 = vsub.f32 1.0, %v2619
    %v2621 = vmul.f32 %v2618, %v2620
    %v2622 = vadd.f32 %v2618, %v2621
    %vm2623 = vweird.f32 %v2617
    %vm2624 = vweird.f32 %v2618
    %vm2625 = vmor %vm2623, %vm2624
    %v2626 = vsel %vm2625, %v2618, %v2622
    %v2627 = vand.u32 2147483647, %v2617
    %vm2628 = vcmp.eq.f32.partialorder %v2627, 8.507059e+37
    %v2629 = vand.u32 %v2617, 2147483648
    %v2630 = vor.u32 1.1754944e-38, %v2629
    %v2631 = vsel %vm2628, %v2630, %v2626
    %v2632 = vmul.f32 1.0, %v2631
    %v2633 = vmul.f32 %v2612, %v2376
    %v2634 = vmul.f32 %v2593, %v2613
    %v2635 = vadd.f32 %v2633, %v2634
    %v2636 = vtanh.pop %v2635
    %v2637 = vmul.f32 %v2632, %v2636
    %v2638 = vsel %vm2513, 1, 0
    %2639 = vset.pattern.permute.xlu0 0
    %2640 = vperm.xlu0 %2639, %v2638
    %v2641 = vpop.permute.xlu0 %2640
    %vm2642 = vcmp.eq.s32.totalorder %v2641, 1
    %v2643 = vsel %vm2642, %v2637, 0.0
    %2644 = vst [vmem:[%s1416] sm:$0xff] %v2643
    %v2645 = vsel %vm2642, %v2637, %v2375
    %v2646 = vsel %vm2642, %v2635, %v2376
    %v2647 = vld [vmem:[%s1144] sm:$0xff]
    %vm2648 = vcmp.ne.s32.totalorder %v2647, 0
    %v2649 = vld [vmem:[%s1147 + $0x20] sm:$0xff]
    %v2650 = vld [vmem:[%s1147 + $0x28] sm:$0xff]
    %v2651 = vld [vmem:[%s1147 + $0x30] sm:$0xff]
    %v2652 = vld [vmem:[%s1147 + $0x38] sm:$0xff]
    %v2653 = vpack.c.bf16 %v2510, %v2510
    %2654 = vmatpush.bf16.msra.mxu0 %v979
    %2655 = vmatpush.bf16.msra.mxu0 %v975
    %2656 = vmatpush.bf16.msra.mxu0 %v971
    %2657 = vmatpush.bf16.msra.mxu0 %v967
    %2658 = vmatpush.bf16.msra.mxu0 %v963
    %2659 = vmatpush.bf16.msra.mxu0 %v959
    %2660 = vmatpush.bf16.msra.mxu0 %v955
    %2661 = vmatpush.bf16.msra.mxu0 %v951
    %2662 = vmatmul.bf16.gmra.mxu0 %v2653
    %v2663 = vpop.f32.mrf.mxu0
    %v2664 = vadd.f32 0.0, %v2663
    %v2665 = vpop.f32.mrf.mxu0
    %2666 = vdwg.mxu0
    %2667 = vmatpush.bf16.msra.mxu0 %v980
    %2668 = vmatpush.bf16.msra.mxu0 %v976
    %2669 = vmatpush.bf16.msra.mxu0 %v972
    %2670 = vmatpush.bf16.msra.mxu0 %v968
    %2671 = vmatpush.bf16.msra.mxu0 %v964
    %2672 = vmatpush.bf16.msra.mxu0 %v960
    %2673 = vmatpush.bf16.msra.mxu0 %v956
    %2674 = vmatpush.bf16.msra.mxu0 %v952
    %2675 = vmatmul.bf16.gmra.mxu0 %v2653
    %v2676 = vpop.f32.mrf.mxu0
    %v2677 = vadd.f32 0.0, %v2676
    %v2678 = vpop.f32.mrf.mxu0
    %2679 = vdwg.mxu0
    %2680 = vmatpush.bf16.msra.mxu0 %v981
    %2681 = vmatpush.bf16.msra.mxu0 %v977
    %2682 = vmatpush.bf16.msra.mxu0 %v973
    %2683 = vmatpush.bf16.msra.mxu0 %v969
    %2684 = vmatpush.bf16.msra.mxu0 %v965
    %2685 = vmatpush.bf16.msra.mxu0 %v961
    %2686 = vmatpush.bf16.msra.mxu0 %v957
    %2687 = vmatpush.bf16.msra.mxu0 %v953
    %2688 = vmatmul.bf16.gmra.mxu0 %v2653
    %v2689 = vpop.f32.mrf.mxu0
    %v2690 = vadd.f32 0.0, %v2689
    %v2691 = vpop.f32.mrf.mxu0
    %2692 = vdwg.mxu0
    %2693 = vmatpush.bf16.msra.mxu0 %v982
    %2694 = vmatpush.bf16.msra.mxu0 %v978
    %2695 = vmatpush.bf16.msra.mxu0 %v974
    %2696 = vmatpush.bf16.msra.mxu0 %v970
    %2697 = vmatpush.bf16.msra.mxu0 %v966
    %2698 = vmatpush.bf16.msra.mxu0 %v962
    %2699 = vmatpush.bf16.msra.mxu0 %v958
    %2700 = vmatpush.bf16.msra.mxu0 %v954
    %2701 = vmatmul.bf16.gmra.mxu0 %v2653
    %v2702 = vpop.f32.mrf.mxu0
    %v2703 = vadd.f32 0.0, %v2702
    %v2704 = vpop.f32.mrf.mxu0
    %2705 = vdwg.mxu0
    %v2706 = vadd.f32 %v2649, %v2664
    %v2707 = vadd.f32 %v2650, %v2677
    %v2708 = vadd.f32 %v2651, %v2690
    %v2709 = vadd.f32 %v2652, %v2703
    %v2710 = vxor.u32 %v2706, 2147483648
    %v2711 = vmul.f32 %v2710, 1.442695
    %v2712 = vpow.pop %v2711
    %v2713 = vadd.f32 %v2712, 1.0
    %v2714 = vrcp.pop %v2713
    %v2715 = vmul.f32 %v2713, %v2714
    %v2716 = vsub.f32 1.0, %v2715
    %v2717 = vmul.f32 %v2714, %v2716
    %v2718 = vadd.f32 %v2714, %v2717
    %vm2719 = vweird.f32 %v2713
    %vm2720 = vweird.f32 %v2714
    %vm2721 = vmor %vm2719, %vm2720
    %v2722 = vsel %vm2721, %v2714, %v2718
    %v2723 = vand.u32 2147483647, %v2713
    %vm2724 = vcmp.eq.f32.partialorder %v2723, 8.507059e+37
    %v2725 = vand.u32 %v2713, 2147483648
    %v2726 = vor.u32 1.1754944e-38, %v2725
    %v2727 = vsel %vm2724, %v2726, %v2722
    %v2728 = vmul.f32 1.0, %v2727
    %v2729 = vxor.u32 %v2707, 2147483648
    %v2730 = vmul.f32 %v2729, 1.442695
    %v2731 = vpow.pop %v2730
    %v2732 = vadd.f32 %v2731, 1.0
    %v2733 = vrcp.pop %v2732
    %v2734 = vmul.f32 %v2732, %v2733
    %v2735 = vsub.f32 1.0, %v2734
    %v2736 = vmul.f32 %v2733, %v2735
    %v2737 = vadd.f32 %v2733, %v2736
    %vm2738 = vweird.f32 %v2732
    %vm2739 = vweird.f32 %v2733
    %vm2740 = vmor %vm2738, %vm2739
    %v2741 = vsel %vm2740, %v2733, %v2737
    %v2742 = vand.u32 2147483647, %v2732
    %vm2743 = vcmp.eq.f32.partialorder %v2742, 8.507059e+37
    %v2744 = vand.u32 %v2732, 2147483648
    %v2745 = vor.u32 1.1754944e-38, %v2744
    %v2746 = vsel %vm2743, %v2745, %v2741
    %v2747 = vmul.f32 1.0, %v2746
    %v2748 = vtanh.pop %v2708
    %v2749 = vxor.u32 %v2709, 2147483648
    %v2750 = vmul.f32 %v2749, 1.442695
    %v2751 = vpow.pop %v2750
    %v2752 = vadd.f32 %v2751, 1.0
    %v2753 = vrcp.pop %v2752
    %v2754 = vmul.f32 %v2752, %v2753
    %v2755 = vsub.f32 1.0, %v2754
    %v2756 = vmul.f32 %v2753, %v2755
    %v2757 = vadd.f32 %v2753, %v2756
    %vm2758 = vweird.f32 %v2752
    %vm2759 = vweird.f32 %v2753
    %vm2760 = vmor %vm2758, %vm2759
    %v2761 = vsel %vm2760, %v2753, %v2757
    %v2762 = vand.u32 2147483647, %v2752
    %vm2763 = vcmp.eq.f32.partialorder %v2762, 8.507059e+37
    %v2764 = vand.u32 %v2752, 2147483648
    %v2765 = vor.u32 1.1754944e-38, %v2764
    %v2766 = vsel %vm2763, %v2765, %v2761
    %v2767 = vmul.f32 1.0, %v2766
    %v2768 = vmul.f32 %v2747, %v2511
    %v2769 = vmul.f32 %v2728, %v2748
    %v2770 = vadd.f32 %v2768, %v2769
    %v2771 = vtanh.pop %v2770
    %v2772 = vmul.f32 %v2767, %v2771
    %v2773 = vsel %vm2648, 1, 0
    %2774 = vset.pattern.permute.xlu0 0
    %2775 = vperm.xlu0 %2774, %v2773
    %v2776 = vpop.permute.xlu0 %2775
    %vm2777 = vcmp.eq.s32.totalorder %v2776, 1
    %v2778 = vsel %vm2777, %v2772, 0.0
    %2779 = vst [vmem:[%s1278 + $0x8] sm:$0xff] %v2778
    %v2780 = vsel %vm2777, %v2772, %v2510
    %v2781 = vsel %vm2777, %v2770, %v2511
    %v2782 = vld [vmem:[%s846] sm:$0xff]
    %vm2783 = vcmp.ne.s32.totalorder %v2782, 0
    %v2784 = vld [vmem:[%s849] sm:$0xff]
    %v2785 = vld [vmem:[%s849 + $0x8] sm:$0xff]
    %v2786 = vld [vmem:[%s849 + $0x10] sm:$0xff]
    %v2787 = vld [vmem:[%s849 + $0x18] sm:$0xff]
    %v2788 = vpack.c.bf16 %v2645, %v2645
    %2789 = vmatpush.bf16.msra.mxu0 %v682
    %2790 = vmatpush.bf16.msra.mxu0 %v678
    %2791 = vmatpush.bf16.msra.mxu0 %v674
    %2792 = vmatpush.bf16.msra.mxu0 %v670
    %2793 = vmatpush.bf16.msra.mxu0 %v666
    %2794 = vmatpush.bf16.msra.mxu0 %v662
    %2795 = vmatpush.bf16.msra.mxu0 %v658
    %2796 = vmatpush.bf16.msra.mxu0 %v654
    %2797 = vmatmul.bf16.gmra.mxu0 %v2788
    %v2798 = vpop.f32.mrf.mxu0
    %v2799 = vadd.f32 0.0, %v2798
    %v2800 = vpop.f32.mrf.mxu0
    %2801 = vdwg.mxu0
    %2802 = vmatpush.bf16.msra.mxu0 %v683
    %2803 = vmatpush.bf16.msra.mxu0 %v679
    %2804 = vmatpush.bf16.msra.mxu0 %v675
    %2805 = vmatpush.bf16.msra.mxu0 %v671
    %2806 = vmatpush.bf16.msra.mxu0 %v667
    %2807 = vmatpush.bf16.msra.mxu0 %v663
    %2808 = vmatpush.bf16.msra.mxu0 %v659
    %2809 = vmatpush.bf16.msra.mxu0 %v655
    %2810 = vmatmul.bf16.gmra.mxu0 %v2788
    %v2811 = vpop.f32.mrf.mxu0
    %v2812 = vadd.f32 0.0, %v2811
    %v2813 = vpop.f32.mrf.mxu0
    %2814 = vdwg.mxu0
    %2815 = vmatpush.bf16.msra.mxu0 %v684
    %2816 = vmatpush.bf16.msra.mxu0 %v680
    %2817 = vmatpush.bf16.msra.mxu0 %v676
    %2818 = vmatpush.bf16.msra.mxu0 %v672
    %2819 = vmatpush.bf16.msra.mxu0 %v668
    %2820 = vmatpush.bf16.msra.mxu0 %v664
    %2821 = vmatpush.bf16.msra.mxu0 %v660
    %2822 = vmatpush.bf16.msra.mxu0 %v656
    %2823 = vmatmul.bf16.gmra.mxu0 %v2788
    %v2824 = vpop.f32.mrf.mxu0
    %v2825 = vadd.f32 0.0, %v2824
    %v2826 = vpop.f32.mrf.mxu0
    %2827 = vdwg.mxu0
    %2828 = vmatpush.bf16.msra.mxu0 %v685
    %2829 = vmatpush.bf16.msra.mxu0 %v681
    %2830 = vmatpush.bf16.msra.mxu0 %v677
    %2831 = vmatpush.bf16.msra.mxu0 %v673
    %2832 = vmatpush.bf16.msra.mxu0 %v669
    %2833 = vmatpush.bf16.msra.mxu0 %v665
    %2834 = vmatpush.bf16.msra.mxu0 %v661
    %2835 = vmatpush.bf16.msra.mxu0 %v657
    %2836 = vmatmul.bf16.gmra.mxu0 %v2788
    %v2837 = vpop.f32.mrf.mxu0
    %v2838 = vadd.f32 0.0, %v2837
    %v2839 = vpop.f32.mrf.mxu0
    %2840 = vdwg.mxu0
    %v2841 = vadd.f32 %v2784, %v2799
    %v2842 = vadd.f32 %v2785, %v2812
    %v2843 = vadd.f32 %v2786, %v2825
    %v2844 = vadd.f32 %v2787, %v2838
    %v2845 = vxor.u32 %v2841, 2147483648
    %v2846 = vmul.f32 %v2845, 1.442695
    %v2847 = vpow.pop %v2846
    %v2848 = vadd.f32 %v2847, 1.0
    %v2849 = vrcp.pop %v2848
    %v2850 = vmul.f32 %v2848, %v2849
    %v2851 = vsub.f32 1.0, %v2850
    %v2852 = vmul.f32 %v2849, %v2851
    %v2853 = vadd.f32 %v2849, %v2852
    %vm2854 = vweird.f32 %v2848
    %vm2855 = vweird.f32 %v2849
    %vm2856 = vmor %vm2854, %vm2855
    %v2857 = vsel %vm2856, %v2849, %v2853
    %v2858 = vand.u32 2147483647, %v2848
    %vm2859 = vcmp.eq.f32.partialorder %v2858, 8.507059e+37
    %v2860 = vand.u32 %v2848, 2147483648
    %v2861 = vor.u32 1.1754944e-38, %v2860
    %v2862 = vsel %vm2859, %v2861, %v2857
    %v2863 = vmul.f32 1.0, %v2862
    %v2864 = vxor.u32 %v2842, 2147483648
    %v2865 = vmul.f32 %v2864, 1.442695
    %v2866 = vpow.pop %v2865
    %v2867 = vadd.f32 %v2866, 1.0
    %v2868 = vrcp.pop %v2867
    %v2869 = vmul.f32 %v2867, %v2868
    %v2870 = vsub.f32 1.0, %v2869
    %v2871 = vmul.f32 %v2868, %v2870
    %v2872 = vadd.f32 %v2868, %v2871
    %vm2873 = vweird.f32 %v2867
    %vm2874 = vweird.f32 %v2868
    %vm2875 = vmor %vm2873, %vm2874
    %v2876 = vsel %vm2875, %v2868, %v2872
    %v2877 = vand.u32 2147483647, %v2867
    %vm2878 = vcmp.eq.f32.partialorder %v2877, 8.507059e+37
    %v2879 = vand.u32 %v2867, 2147483648
    %v2880 = vor.u32 1.1754944e-38, %v2879
    %v2881 = vsel %vm2878, %v2880, %v2876
    %v2882 = vmul.f32 1.0, %v2881
    %v2883 = vtanh.pop %v2843
    %v2884 = vxor.u32 %v2844, 2147483648
    %v2885 = vmul.f32 %v2884, 1.442695
    %v2886 = vpow.pop %v2885
    %v2887 = vadd.f32 %v2886, 1.0
    %v2888 = vrcp.pop %v2887
    %v2889 = vmul.f32 %v2887, %v2888
    %v2890 = vsub.f32 1.0, %v2889
    %v2891 = vmul.f32 %v2888, %v2890
    %v2892 = vadd.f32 %v2888, %v2891
    %vm2893 = vweird.f32 %v2887
    %vm2894 = vweird.f32 %v2888
    %vm2895 = vmor %vm2893, %vm2894
    %v2896 = vsel %vm2895, %v2888, %v2892
    %v2897 = vand.u32 2147483647, %v2887
    %vm2898 = vcmp.eq.f32.partialorder %v2897, 8.507059e+37
    %v2899 = vand.u32 %v2887, 2147483648
    %v2900 = vor.u32 1.1754944e-38, %v2899
    %v2901 = vsel %vm2898, %v2900, %v2896
    %v2902 = vmul.f32 1.0, %v2901
    %v2903 = vmul.f32 %v2882, %v2646
    %v2904 = vmul.f32 %v2863, %v2883
    %v2905 = vadd.f32 %v2903, %v2904
    %v2906 = vtanh.pop %v2905
    %v2907 = vmul.f32 %v2902, %v2906
    %v2908 = vsel %vm2783, 1, 0
    %2909 = vset.pattern.permute.xlu0 0
    %2910 = vperm.xlu0 %2909, %v2908
    %v2911 = vpop.permute.xlu0 %2910
    %vm2912 = vcmp.eq.s32.totalorder %v2911, 1
    %v2913 = vsel %vm2912, %v2907, 0.0
    %2914 = vst [vmem:[%s1140] sm:$0xff] %v2913
    %v2915 = vld [vmem:[%s7] sm:$0xff]
    %vm2916 = vcmp.ne.s32.totalorder %v2915, 0
    %v2917 = vld [vmem:[#allocation2 + $0x20] sm:$0xff]
    %v2918 = vld [vmem:[#allocation2 + $0x28] sm:$0xff]
    %v2919 = vld [vmem:[#allocation2 + $0x30] sm:$0xff]
    %v2920 = vld [vmem:[#allocation2 + $0x38] sm:$0xff]
    %v2921 = vpack.c.bf16 %v2780, %v2780
    %2922 = vmatpush.bf16.msra.mxu0 %v979
    %2923 = vmatpush.bf16.msra.mxu0 %v975
    %2924 = vmatpush.bf16.msra.mxu0 %v971
    %2925 = vmatpush.bf16.msra.mxu0 %v967
    %2926 = vmatpush.bf16.msra.mxu0 %v963
    %2927 = vmatpush.bf16.msra.mxu0 %v959
    %2928 = vmatpush.bf16.msra.mxu0 %v955
    %2929 = vmatpush.bf16.msra.mxu0 %v951
    %2930 = vmatmul.bf16.gmra.mxu0 %v2921
    %v2931 = vpop.f32.mrf.mxu0
    %v2932 = vadd.f32 0.0, %v2931
    %v2933 = vpop.f32.mrf.mxu0
    %2934 = vdwg.mxu0
    %2935 = vmatpush.bf16.msra.mxu0 %v980
    %2936 = vmatpush.bf16.msra.mxu0 %v976
    %2937 = vmatpush.bf16.msra.mxu0 %v972
    %2938 = vmatpush.bf16.msra.mxu0 %v968
    %2939 = vmatpush.bf16.msra.mxu0 %v964
    %2940 = vmatpush.bf16.msra.mxu0 %v960
    %2941 = vmatpush.bf16.msra.mxu0 %v956
    %2942 = vmatpush.bf16.msra.mxu0 %v952
    %2943 = vmatmul.bf16.gmra.mxu0 %v2921
    %v2944 = vpop.f32.mrf.mxu0
    %v2945 = vadd.f32 0.0, %v2944
    %v2946 = vpop.f32.mrf.mxu0
    %2947 = vdwg.mxu0
    %2948 = vmatpush.bf16.msra.mxu0 %v981
    %2949 = vmatpush.bf16.msra.mxu0 %v977
    %2950 = vmatpush.bf16.msra.mxu0 %v973
    %2951 = vmatpush.bf16.msra.mxu0 %v969
    %2952 = vmatpush.bf16.msra.mxu0 %v965
    %2953 = vmatpush.bf16.msra.mxu0 %v961
    %2954 = vmatpush.bf16.msra.mxu0 %v957
    %2955 = vmatpush.bf16.msra.mxu0 %v953
    %2956 = vmatmul.bf16.gmra.mxu0 %v2921
    %v2957 = vpop.f32.mrf.mxu0
    %v2958 = vadd.f32 0.0, %v2957
    %v2959 = vpop.f32.mrf.mxu0
    %2960 = vdwg.mxu0
    %2961 = vmatpush.bf16.msra.mxu0 %v982
    %2962 = vmatpush.bf16.msra.mxu0 %v978
    %2963 = vmatpush.bf16.msra.mxu0 %v974
    %2964 = vmatpush.bf16.msra.mxu0 %v970
    %2965 = vmatpush.bf16.msra.mxu0 %v966
    %2966 = vmatpush.bf16.msra.mxu0 %v962
    %2967 = vmatpush.bf16.msra.mxu0 %v958
    %2968 = vmatpush.bf16.msra.mxu0 %v954
    %2969 = vmatmul.bf16.gmra.mxu0 %v2921
    %v2970 = vpop.f32.mrf.mxu0
    %v2971 = vadd.f32 0.0, %v2970
    %v2972 = vpop.f32.mrf.mxu0
    %2973 = vdwg.mxu0
    %v2974 = vadd.f32 %v2917, %v2932
    %v2975 = vadd.f32 %v2918, %v2945
    %v2976 = vadd.f32 %v2919, %v2958
    %v2977 = vadd.f32 %v2920, %v2971
    %v2978 = vxor.u32 %v2974, 2147483648
    %v2979 = vmul.f32 %v2978, 1.442695
    %v2980 = vpow.pop %v2979
    %v2981 = vadd.f32 %v2980, 1.0
    %v2982 = vrcp.pop %v2981
    %v2983 = vmul.f32 %v2981, %v2982
    %v2984 = vsub.f32 1.0, %v2983
    %v2985 = vmul.f32 %v2982, %v2984
    %v2986 = vadd.f32 %v2982, %v2985
    %vm2987 = vweird.f32 %v2981
    %vm2988 = vweird.f32 %v2982
    %vm2989 = vmor %vm2987, %vm2988
    %v2990 = vsel %vm2989, %v2982, %v2986
    %v2991 = vand.u32 2147483647, %v2981
    %vm2992 = vcmp.eq.f32.partialorder %v2991, 8.507059e+37
    %v2993 = vand.u32 %v2981, 2147483648
    %v2994 = vor.u32 1.1754944e-38, %v2993
    %v2995 = vsel %vm2992, %v2994, %v2990
    %v2996 = vmul.f32 1.0, %v2995
    %v2997 = vxor.u32 %v2975, 2147483648
    %v2998 = vmul.f32 %v2997, 1.442695
    %v2999 = vpow.pop %v2998
    %v3000 = vadd.f32 %v2999, 1.0
    %v3001 = vrcp.pop %v3000
    %v3002 = vmul.f32 %v3000, %v3001
    %v3003 = vsub.f32 1.0, %v3002
    %v3004 = vmul.f32 %v3001, %v3003
    %v3005 = vadd.f32 %v3001, %v3004
    %vm3006 = vweird.f32 %v3000
    %vm3007 = vweird.f32 %v3001
    %vm3008 = vmor %vm3006, %vm3007
    %v3009 = vsel %vm3008, %v3001, %v3005
    %v3010 = vand.u32 2147483647, %v3000
    %vm3011 = vcmp.eq.f32.partialorder %v3010, 8.507059e+37
    %v3012 = vand.u32 %v3000, 2147483648
    %v3013 = vor.u32 1.1754944e-38, %v3012
    %v3014 = vsel %vm3011, %v3013, %v3009
    %v3015 = vmul.f32 1.0, %v3014
    %v3016 = vtanh.pop %v2976
    %v3017 = vxor.u32 %v2977, 2147483648
    %v3018 = vmul.f32 %v3017, 1.442695
    %v3019 = vpow.pop %v3018
    %v3020 = vadd.f32 %v3019, 1.0
    %v3021 = vrcp.pop %v3020
    %v3022 = vmul.f32 %v3020, %v3021
    %v3023 = vsub.f32 1.0, %v3022
    %v3024 = vmul.f32 %v3021, %v3023
    %v3025 = vadd.f32 %v3021, %v3024
    %vm3026 = vweird.f32 %v3020
    %vm3027 = vweird.f32 %v3021
    %vm3028 = vmor %vm3026, %vm3027
    %v3029 = vsel %vm3028, %v3021, %v3025
    %v3030 = vand.u32 2147483647, %v3020
    %vm3031 = vcmp.eq.f32.partialorder %v3030, 8.507059e+37
    %v3032 = vand.u32 %v3020, 2147483648
    %v3033 = vor.u32 1.1754944e-38, %v3032
    %v3034 = vsel %vm3031, %v3033, %v3029
    %v3035 = vmul.f32 1.0, %v3034
    %v3036 = vmul.f32 %v3015, %v2781
    %v3037 = vmul.f32 %v2996, %v3016
    %v3038 = vadd.f32 %v3036, %v3037
    %v3039 = vtanh.pop %v3038
    %v3040 = vmul.f32 %v3035, %v3039
    %v3041 = vsel %vm2916, 1, 0
    %3042 = vset.pattern.permute.xlu0 0
    %3043 = vperm.xlu0 %3042, %v3041
    %v3044 = vpop.permute.xlu0 %3043
    %vm3045 = vcmp.eq.s32.totalorder %v3044, 1
    %v3046 = vsel %vm3045, %v3040, 0.0
    %3047 = vst [vmem:[%s8 + $0x8] sm:$0xff] %v3046
    // Predicated region
    $region38: #{bilstm_forward.2} parent=1 // pred_check
      _
    $region39: #{bilstm_forward.2} parent=1 // pred_check_branch
      %3049 = sbr.rel (0) target = $region41
    $region40: #{bilstm_forward.2} parent=1 // pred_region
      _
    $region41: #{bilstm_forward.2} parent=1 // pred_fallthru
      _
    // Predicated region
    $region42: #{bilstm_forward.2} parent=1 // pred_check
      _
    $region43: #{bilstm_forward.2} parent=1 // pred_check_branch
      %3051 = sbr.rel (0) target = $region45
    $region44: #{bilstm_forward.2} parent=1 // pred_region
      _
    $region45: #{bilstm_forward.2} parent=1 // pred_fallthru
      _
    %3052 = vsyncpa [#allocation4], 1

// kernel: bilstm_forward.3
$region0: #{bilstm_forward.3}
  #allocation0 [shape = 'u32[]', space=smem, size = 0x4, offset = 0x4, fixed_abs, tag = 'smem constant byte address 0x4 - core index']
  #allocation1 [shape = 'u32[72,128]{1,0:T(1,128)}', space=vmem, size = 0x9000, scoped, tag = 'internal scratch']
  #allocation2 [shape = 'f32[8,8,1024]{2,1,0:T(8,128)}', space=vmem, size = 0x40000, scoped, tag = 'scratch operand']
  #allocation3 [shape = 'f32[8,8,256]{2,1,0:T(8,128)}', space=vmem, size = 0x10000, scoped, tag = 'scratch operand']
  %s0 = inlined_call_operand.vmem [shape: f32[8,8,256], index: 0, kind: input, shape index: {}]
  %s1 = inlined_call_operand.hbm [shape: bf16[256,1024], index: 1, kind: input, shape index: {}]
  %s2 = inlined_call_operand.vmem [shape: f32[1,1024], index: 2, kind: input, shape index: {}]
  %s3 = inlined_call_operand.vmem [shape: bf16[128,512], index: 3, kind: input, shape index: {}]
  %s4 = inlined_call_operand.hbm [shape: bf16[128,512], index: 4, kind: input, shape index: {}]
  %s5 = inlined_call_operand.vmem [shape: f32[2,8,128], index: 5, kind: input, shape index: {}]
  %s6 = inlined_call_operand.vmem [shape: f32[2,8,128], index: 6, kind: input, shape index: {}]
  %s7 = inlined_call_operand.vmem [shape: s32[8,8,1], index: 7, kind: input, shape index: {}]
  %s8 = inlined_call_operand.hbm [shape: bf16[256,128], index: 8, kind: input, shape index: {}]
  %s9 = inlined_call_operand.vmem [shape: f32[1,128], index: 9, kind: input, shape index: {}]
  %s10 = inlined_call_operand.vmem [shape: f32[8,8,128], index: 10, kind: output, shape index: {}]
  %s11 = sld [smem:[#allocation0]]
  $region62: #{bilstm_forward.3} parent=0
    _
  %s13 = ssub.s32 1, %s11
  %s14 = scalar_select 0, %s13, %s11
  $region1: #{bilstm_forward.3} parent=0
    #allocation4 [shape = 'u8[524288]{0}', space=vmem, size = 0x80000, scoped, tag = 'input window, operand 1, single buffered']
    #allocation5 [shape = 's32[1]{0}', space=sflag, size = 0x4, scoped, tag = 'scoped memory for bilstm_forward.3']
    #allocation6 [shape = 'u8[131072]{0}', space=vmem, size = 0x20000, scoped, tag = 'input window, operand 4, single buffered']
    #allocation7 [shape = 's32[1]{0}', space=sflag, size = 0x4, scoped, tag = 'scoped memory for bilstm_forward.3']
    #allocation8 [shape = 'u8[65536]{0}', space=vmem, size = 0x10000, scoped, tag = 'input window, operand 8, single buffered']
    %15 = vsyncpa [#allocation5], 0
    %16 = vsyncpa [#allocation7], 0
    // Predicated region
    $region2: #{bilstm_forward.3} parent=1 // pred_check
      _
    $region3: #{bilstm_forward.3} parent=1 // pred_check_branch
      %18 = sbr.rel (0) target = $region5
    $region4: #{bilstm_forward.3} parent=1 // pred_region
      _
    $region5: #{bilstm_forward.3} parent=1 // pred_fallthru
      _
    // Predicated region
    $region6: #{bilstm_forward.3} parent=1 // pred_check
      _
    $region7: #{bilstm_forward.3} parent=1 // pred_check_branch
      %20 = sbr.rel (0) target = $region9
    $region8: #{bilstm_forward.3} parent=1 // pred_region
      %22 = vsyncadd [#allocation5], 0
      %s23 = sshll.u32 %s1, 4
      %s24 = int_to_ptr.hbm [resolvable:$true] %s23
      %s25 = sshll.u32 [#allocation4], 4
      %s26 = int_to_ptr.vmem [resolvable:$true] %s25
      %31 = dma.hbm_to_vmem [thread:$0]  %s24, 16384, %s26, [#allocation5], 512, 512, 32
    $region9: #{bilstm_forward.3} parent=1 // pred_fallthru
      _
    // Predicated region
    $region10: #{bilstm_forward.3} parent=1 // pred_check
      _
    $region11: #{bilstm_forward.3} parent=1 // pred_check_branch
      %33 = sbr.rel (0) target = $region13
    $region12: #{bilstm_forward.3} parent=1 // pred_region
      _
    $region13: #{bilstm_forward.3} parent=1 // pred_fallthru
      _
    // Predicated region
    $region14: #{bilstm_forward.3} parent=1 // pred_check
      _
    $region15: #{bilstm_forward.3} parent=1 // pred_check_branch
      %35 = sbr.rel (0) target = $region17
    $region16: #{bilstm_forward.3} parent=1 // pred_region
      _
    $region17: #{bilstm_forward.3} parent=1 // pred_fallthru
      _
    // Predicated region
    $region18: #{bilstm_forward.3} parent=1 // pred_check
      _
    $region19: #{bilstm_forward.3} parent=1 // pred_check_branch
      %37 = sbr.rel (0) target = $region21
    $region20: #{bilstm_forward.3} parent=1 // pred_region
      %39 = vsyncadd [#allocation7], 0
      %s40 = sshll.u32 %s4, 4
      %s41 = int_to_ptr.hbm [resolvable:$true] %s40
      %s42 = sshll.u32 [#allocation6], 4
      %s43 = int_to_ptr.vmem [resolvable:$true] %s42
      %48 = dma.hbm_to_vmem [thread:$0]  %s41, 4096, %s43, [#allocation7], 256, 256, 16
    $region21: #{bilstm_forward.3} parent=1 // pred_fallthru
      _
    // Predicated region
    $region22: #{bilstm_forward.3} parent=1 // pred_check
      _
    $region23: #{bilstm_forward.3} parent=1 // pred_check_branch
      %50 = sbr.rel (0) target = $region25
    $region24: #{bilstm_forward.3} parent=1 // pred_region
      _
    $region25: #{bilstm_forward.3} parent=1 // pred_fallthru
      _
    // Predicated region
    $region26: #{bilstm_forward.3} parent=1 // pred_check
      _
    $region27: #{bilstm_forward.3} parent=1 // pred_check_branch
      %52 = sbr.rel (0) target = $region29
    $region28: #{bilstm_forward.3} parent=1 // pred_region
      _
    $region29: #{bilstm_forward.3} parent=1 // pred_fallthru
      _
    // Predicated region
    $region30: #{bilstm_forward.3} parent=1 // pred_check
      _
    $region31: #{bilstm_forward.3} parent=1 // pred_check_branch
      %54 = sbr.rel (0) target = $region33
    $region32: #{bilstm_forward.3} parent=1 // pred_region
      _
    $region33: #{bilstm_forward.3} parent=1 // pred_fallthru
      _
    // Predicated region
    $region34: #{bilstm_forward.3} parent=1 // pred_check
      _
    $region35: #{bilstm_forward.3} parent=1 // pred_check_branch
      %56 = sbr.rel (0) target = $region37
    $region36: #{bilstm_forward.3} parent=1 // pred_region
      %58 = vsyncadd [#allocation7], 0
      %s59 = sshll.u32 %s8, 4
      %s60 = int_to_ptr.hbm [resolvable:$true] %s59
      %s61 = sshll.u32 [#allocation8], 4
      %s62 = int_to_ptr.vmem [resolvable:$true] %s61
      %67 = dma.hbm_to_vmem [thread:$0]  %s60, 2048, %s62, [#allocation7], 64, 64, 4
    $region37: #{bilstm_forward.3} parent=1 // pred_fallthru
      _
    // Predicated region
    $region38: #{bilstm_forward.3} parent=1 // pred_check
      _
    $region39: #{bilstm_forward.3} parent=1 // pred_check_branch
      %69 = sbr.rel (0) target = $region41
    $region40: #{bilstm_forward.3} parent=1 // pred_region
      _
    $region41: #{bilstm_forward.3} parent=1 // pred_fallthru
      _
    // Predicated region
    $region42: #{bilstm_forward.3} parent=1 // pred_check
      _
    $region43: #{bilstm_forward.3} parent=1 // pred_check_branch
      %71 = sbr.rel (0) target = $region45
    $region44: #{bilstm_forward.3} parent=1 // pred_region
      %73 = dma.done [#allocation5], 16384
    $region45: #{bilstm_forward.3} parent=1 // pred_fallthru
      _
    // Predicated region
    $region46: #{bilstm_forward.3} parent=1 // pred_check
      _
    $region47: #{bilstm_forward.3} parent=1 // pred_check_branch
      %75 = sbr.rel (0) target = $region49
    $region48: #{bilstm_forward.3} parent=1 // pred_region
      %77 = dma.done [#allocation7], 4096
    $region49: #{bilstm_forward.3} parent=1 // pred_fallthru
      _
    // Predicated region
    $region50: #{bilstm_forward.3} parent=1 // pred_check
      _
    $region51: #{bilstm_forward.3} parent=1 // pred_check_branch
      %79 = sbr.rel (0) target = $region53
    $region52: #{bilstm_forward.3} parent=1 // pred_region
      %81 = dma.done [#allocation7], 2048
    $region53: #{bilstm_forward.3} parent=1 // pred_fallthru
      _
    %v82 = vld [vmem:[%s0] sm:$0xff]
    %v83 = vld [vmem:[%s0 + $0x8] sm:$0xff]
    %v84 = vld [vmem:[%s0 + $0x10] sm:$0xff]
    %v85 = vld [vmem:[%s0 + $0x18] sm:$0xff]
    %v86 = vld [vmem:[%s0 + $0x20] sm:$0xff]
    %v87 = vld [vmem:[%s0 + $0x28] sm:$0xff]
    %v88 = vld [vmem:[%s0 + $0x30] sm:$0xff]
    %v89 = vld [vmem:[%s0 + $0x38] sm:$0xff]
    %v90 = vld [vmem:[%s0 + $0x40] sm:$0xff]
    %v91 = vld [vmem:[%s0 + $0x48] sm:$0xff]
    %v92 = vld [vmem:[%s0 + $0x50] sm:$0xff]
    %v93 = vld [vmem:[%s0 + $0x58] sm:$0xff]
    %v94 = vld [vmem:[%s0 + $0x60] sm:$0xff]
    %v95 = vld [vmem:[%s0 + $0x68] sm:$0xff]
    %v96 = vld [vmem:[%s0 + $0x70] sm:$0xff]
    %v97 = vld [vmem:[%s0 + $0x78] sm:$0xff]
    %v98 = vpack.c.bf16 %v84, %v82
    %v99 = vpack.c.bf16 %v85, %v83
    %v100 = vpack.c.bf16 %v88, %v86
    %v101 = vpack.c.bf16 %v89, %v87
    %v102 = vpack.c.bf16 %v92, %v90
    %v103 = vpack.c.bf16 %v93, %v91
    %v104 = vpack.c.bf16 %v96, %v94
    %v105 = vpack.c.bf16 %v97, %v95
    %v106 = vld [vmem:[#allocation4] sm:$0xff]
    %v107 = vld [vmem:[#allocation4 + $0x8] sm:$0xff]
    %v108 = vld [vmem:[#allocation4 + $0x10] sm:$0xff]
    %v109 = vld [vmem:[#allocation4 + $0x18] sm:$0xff]
    %v110 = vld [vmem:[#allocation4 + $0x20] sm:$0xff]
    %v111 = vld [vmem:[#allocation4 + $0x28] sm:$0xff]
    %v112 = vld [vmem:[#allocation4 + $0x30] sm:$0xff]
    %v113 = vld [vmem:[#allocation4 + $0x38] sm:$0xff]
    %v114 = vld [vmem:[#allocation4 + $0x40] sm:$0xff]
    %v115 = vld [vmem:[#allocation4 + $0x48] sm:$0xff]
    %v116 = vld [vmem:[#allocation4 + $0x50] sm:$0xff]
    %v117 = vld [vmem:[#allocation4 + $0x58] sm:$0xff]
    %v118 = vld [vmem:[#allocation4 + $0x60] sm:$0xff]
    %v119 = vld [vmem:[#allocation4 + $0x68] sm:$0xff]
    %v120 = vld [vmem:[#allocation4 + $0x70] sm:$0xff]
    %v121 = vld [vmem:[#allocation4 + $0x78] sm:$0xff]
    %v122 = vld [vmem:[#allocation4 + $0x80] sm:$0xff]
    %v123 = vld [vmem:[#allocation4 + $0x88] sm:$0xff]
    %v124 = vld [vmem:[#allocation4 + $0x90] sm:$0xff]
    %v125 = vld [vmem:[#allocation4 + $0x98] sm:$0xff]
    %v126 = vld [vmem:[#allocation4 + $0xa0] sm:$0xff]
    %v127 = vld [vmem:[#allocation4 + $0xa8] sm:$0xff]
    %v128 = vld [vmem:[#allocation4 + $0xb0] sm:$0xff]
    %v129 = vld [vmem:[#allocation4 + $0xb8] sm:$0xff]
    %v130 = vld [vmem:[#allocation4 + $0xc0] sm:$0xff]
    %v131 = vld [vmem:[#allocation4 + $0xc8] sm:$0xff]
    %v132 = vld [vmem:[#allocation4 + $0xd0] sm:$0xff]
    %v133 = vld [vmem:[#allocation4 + $0xd8] sm:$0xff]
    %v134 = vld [vmem:[#allocation4 + $0xe0] sm:$0xff]
    %v135 = vld [vmem:[#allocation4 + $0xe8] sm:$0xff]
    %v136 = vld [vmem:[#allocation4 + $0xf0] sm:$0xff]
    %v137 = vld [vmem:[#allocation4 + $0xf8] sm:$0xff]
    %v138 = vld [vmem:[#allocation4 + $0x100] sm:$0xff]
    %v139 = vld [vmem:[#allocation4 + $0x108] sm:$0xff]
    %v140 = vld [vmem:[#allocation4 + $0x110] sm:$0xff]
    %v141 = vld [vmem:[#allocation4 + $0x118] sm:$0xff]
    %v142 = vld [vmem:[#allocation4 + $0x120] sm:$0xff]
    %v143 = vld [vmem:[#allocation4 + $0x128] sm:$0xff]
    %v144 = vld [vmem:[#allocation4 + $0x130] sm:$0xff]
    %v145 = vld [vmem:[#allocation4 + $0x138] sm:$0xff]
    %v146 = vld [vmem:[#allocation4 + $0x140] sm:$0xff]
    %v147 = vld [vmem:[#allocation4 + $0x148] sm:$0xff]
    %v148 = vld [vmem:[#allocation4 + $0x150] sm:$0xff]
    %v149 = vld [vmem:[#allocation4 + $0x158] sm:$0xff]
    %v150 = vld [vmem:[#allocation4 + $0x160] sm:$0xff]
    %v151 = vld [vmem:[#allocation4 + $0x168] sm:$0xff]
    %v152 = vld [vmem:[#allocation4 + $0x170] sm:$0xff]
    %v153 = vld [vmem:[#allocation4 + $0x178] sm:$0xff]
    %v154 = vld [vmem:[#allocation4 + $0x180] sm:$0xff]
    %v155 = vld [vmem:[#allocation4 + $0x188] sm:$0xff]
    %v156 = vld [vmem:[#allocation4 + $0x190] sm:$0xff]
    %v157 = vld [vmem:[#allocation4 + $0x198] sm:$0xff]
    %v158 = vld [vmem:[#allocation4 + $0x1a0] sm:$0xff]
    %v159 = vld [vmem:[#allocation4 + $0x1a8] sm:$0xff]
    %v160 = vld [vmem:[#allocation4 + $0x1b0] sm:$0xff]
    %v161 = vld [vmem:[#allocation4 + $0x1b8] sm:$0xff]
    %v162 = vld [vmem:[#allocation4 + $0x1c0] sm:$0xff]
    %v163 = vld [vmem:[#allocation4 + $0x1c8] sm:$0xff]
    %v164 = vld [vmem:[#allocation4 + $0x1d0] sm:$0xff]
    %v165 = vld [vmem:[#allocation4 + $0x1d8] sm:$0xff]
    %v166 = vld [vmem:[#allocation4 + $0x1e0] sm:$0xff]
    %v167 = vld [vmem:[#allocation4 + $0x1e8] sm:$0xff]
    %v168 = vld [vmem:[#allocation4 + $0x1f0] sm:$0xff]
    %v169 = vld [vmem:[#allocation4 + $0x1f8] sm:$0xff]
    %v170 = vld [vmem:[#allocation4 + $0x200] sm:$0xff]
    %v171 = vld [vmem:[#allocation4 + $0x208] sm:$0xff]
    %v172 = vld [vmem:[#allocation4 + $0x210] sm:$0xff]
    %v173 = vld [vmem:[#allocation4 + $0x218] sm:$0xff]
    %v174 = vld [vmem:[#allocation4 + $0x220] sm:$0xff]
    %v175 = vld [vmem:[#allocation4 + $0x228] sm:$0xff]
    %v176 = vld [vmem:[#allocation4 + $0x230] sm:$0xff]
    %v177 = vld [vmem:[#allocation4 + $0x238] sm:$0xff]
    %v178 = vld [vmem:[#allocation4 + $0x240] sm:$0xff]
    %v179 = vld [vmem:[#allocation4 + $0x248] sm:$0xff]
    %v180 = vld [vmem:[#allocation4 + $0x250] sm:$0xff]
    %v181 = vld [vmem:[#allocation4 + $0x258] sm:$0xff]
    %v182 = vld [vmem:[#allocation4 + $0x260] sm:$0xff]
    %v183 = vld [vmem:[#allocation4 + $0x268] sm:$0xff]
    %v184 = vld [vmem:[#allocation4 + $0x270] sm:$0xff]
    %v185 = vld [vmem:[#allocation4 + $0x278] sm:$0xff]
    %v186 = vld [vmem:[#allocation4 + $0x280] sm:$0xff]
    %v187 = vld [vmem:[#allocation4 + $0x288] sm:$0xff]
    %v188 = vld [vmem:[#allocation4 + $0x290] sm:$0xff]
    %v189 = vld [vmem:[#allocation4 + $0x298] sm:$0xff]
    %v190 = vld [vmem:[#allocation4 + $0x2a0] sm:$0xff]
    %v191 = vld [vmem:[#allocation4 + $0x2a8] sm:$0xff]
    %v192 = vld [vmem:[#allocation4 + $0x2b0] sm:$0xff]
    %v193 = vld [vmem:[#allocation4 + $0x2b8] sm:$0xff]
    %v194 = vld [vmem:[#allocation4 + $0x2c0] sm:$0xff]
    %v195 = vld [vmem:[#allocation4 + $0x2c8] sm:$0xff]
    %v196 = vld [vmem:[#allocation4 + $0x2d0] sm:$0xff]
    %v197 = vld [vmem:[#allocation4 + $0x2d8] sm:$0xff]
    %v198 = vld [vmem:[#allocation4 + $0x2e0] sm:$0xff]
    %v199 = vld [vmem:[#allocation4 + $0x2e8] sm:$0xff]
    %v200 = vld [vmem:[#allocation4 + $0x2f0] sm:$0xff]
    %v201 = vld [vmem:[#allocation4 + $0x2f8] sm:$0xff]
    %v202 = vld [vmem:[#allocation4 + $0x300] sm:$0xff]
    %v203 = vld [vmem:[#allocation4 + $0x308] sm:$0xff]
    %v204 = vld [vmem:[#allocation4 + $0x310] sm:$0xff]
    %v205 = vld [vmem:[#allocation4 + $0x318] sm:$0xff]
    %v206 = vld [vmem:[#allocation4 + $0x320] sm:$0xff]
    %v207 = vld [vmem:[#allocation4 + $0x328] sm:$0xff]
    %v208 = vld [vmem:[#allocation4 + $0x330] sm:$0xff]
    %v209 = vld [vmem:[#allocation4 + $0x338] sm:$0xff]
    %v210 = vld [vmem:[#allocation4 + $0x340] sm:$0xff]
    %v211 = vld [vmem:[#allocation4 + $0x348] sm:$0xff]
    %v212 = vld [vmem:[#allocation4 + $0x350] sm:$0xff]
    %v213 = vld [vmem:[#allocation4 + $0x358] sm:$0xff]
    %v214 = vld [vmem:[#allocation4 + $0x360] sm:$0xff]
    %v215 = vld [vmem:[#allocation4 + $0x368] sm:$0xff]
    %v216 = vld [vmem:[#allocation4 + $0x370] sm:$0xff]
    %v217 = vld [vmem:[#allocation4 + $0x378] sm:$0xff]
    %v218 = vld [vmem:[#allocation4 + $0x380] sm:$0xff]
    %v219 = vld [vmem:[#allocation4 + $0x388] sm:$0xff]
    %v220 = vld [vmem:[#allocation4 + $0x390] sm:$0xff]
    %v221 = vld [vmem:[#allocation4 + $0x398] sm:$0xff]
    %v222 = vld [vmem:[#allocation4 + $0x3a0] sm:$0xff]
    %v223 = vld [vmem:[#allocation4 + $0x3a8] sm:$0xff]
    %v224 = vld [vmem:[#allocation4 + $0x3b0] sm:$0xff]
    %v225 = vld [vmem:[#allocation4 + $0x3b8] sm:$0xff]
    %v226 = vld [vmem:[#allocation4 + $0x3c0] sm:$0xff]
    %v227 = vld [vmem:[#allocation4 + $0x3c8] sm:$0xff]
    %v228 = vld [vmem:[#allocation4 + $0x3d0] sm:$0xff]
    %v229 = vld [vmem:[#allocation4 + $0x3d8] sm:$0xff]
    %v230 = vld [vmem:[#allocation4 + $0x3e0] sm:$0xff]
    %v231 = vld [vmem:[#allocation4 + $0x3e8] sm:$0xff]
    %v232 = vld [vmem:[#allocation4 + $0x3f0] sm:$0xff]
    %v233 = vld [vmem:[#allocation4 + $0x3f8] sm:$0xff]
    %v234 = vld [vmem:[%s2] sm:$0xff]
    %v236 = vperm.slane %v234, 0
    %v237 = vperm.slane %v234, 1
    %v238 = vperm.slane %v234, 2
    %v239 = vperm.slane %v234, 3
    %v240 = vperm.slane %v234, 4
    %v241 = vperm.slane %v234, 5
    %v242 = vperm.slane %v234, 6
    %v243 = vperm.slane %v234, 7
    %v380 = vunpack.c.l.b16 %v106
    %v381 = vunpack.c.h.b16 %v106
    %v382 = vunpack.c.l.b16 %v107
    %v383 = vunpack.c.h.b16 %v107
    %v384 = vunpack.c.l.b16 %v108
    %v385 = vunpack.c.h.b16 %v108
    %v386 = vunpack.c.l.b16 %v109
    %v387 = vunpack.c.h.b16 %v109
    %v388 = vunpack.c.l.b16 %v110
    %v389 = vunpack.c.h.b16 %v110
    %v390 = vunpack.c.l.b16 %v111
    %v391 = vunpack.c.h.b16 %v111
    %v392 = vunpack.c.l.b16 %v112
    %v393 = vunpack.c.h.b16 %v112
    %v394 = vunpack.c.l.b16 %v113
    %v395 = vunpack.c.h.b16 %v113
    %v396 = vunpack.c.l.b16 %v114
    %v397 = vunpack.c.h.b16 %v114
    %v398 = vunpack.c.l.b16 %v115
    %v399 = vunpack.c.h.b16 %v115
    %v400 = vunpack.c.l.b16 %v116
    %v401 = vunpack.c.h.b16 %v116
    %v402 = vunpack.c.l.b16 %v117
    %v403 = vunpack.c.h.b16 %v117
    %v404 = vunpack.c.l.b16 %v118
    %v405 = vunpack.c.h.b16 %v118
    %v406 = vunpack.c.l.b16 %v119
    %v407 = vunpack.c.h.b16 %v119
    %v408 = vunpack.c.l.b16 %v120
    %v409 = vunpack.c.h.b16 %v120
    %v410 = vunpack.c.l.b16 %v121
    %v411 = vunpack.c.h.b16 %v121
    %v412 = vunpack.c.l.b16 %v122
    %v413 = vunpack.c.h.b16 %v122
    %v414 = vunpack.c.l.b16 %v123
    %v415 = vunpack.c.h.b16 %v123
    %v416 = vunpack.c.l.b16 %v124
    %v417 = vunpack.c.h.b16 %v124
    %v418 = vunpack.c.l.b16 %v125
    %v419 = vunpack.c.h.b16 %v125
    %v420 = vunpack.c.l.b16 %v126
    %v421 = vunpack.c.h.b16 %v126
    %v422 = vunpack.c.l.b16 %v127
    %v423 = vunpack.c.h.b16 %v127
    %v424 = vunpack.c.l.b16 %v128
    %v425 = vunpack.c.h.b16 %v128
    %v426 = vunpack.c.l.b16 %v129
    %v427 = vunpack.c.h.b16 %v129
    %v428 = vunpack.c.l.b16 %v130
    %v429 = vunpack.c.h.b16 %v130
    %v430 = vunpack.c.l.b16 %v131
    %v431 = vunpack.c.h.b16 %v131
    %v432 = vunpack.c.l.b16 %v132
    %v433 = vunpack.c.h.b16 %v132
    %v434 = vunpack.c.l.b16 %v133
    %v435 = vunpack.c.h.b16 %v133
    %v436 = vunpack.c.l.b16 %v134
    %v437 = vunpack.c.h.b16 %v134
    %v438 = vunpack.c.l.b16 %v135
    %v439 = vunpack.c.h.b16 %v135
    %v440 = vunpack.c.l.b16 %v136
    %v441 = vunpack.c.h.b16 %v136
    %v442 = vunpack.c.l.b16 %v137
    %v443 = vunpack.c.h.b16 %v137
    %v444 = vunpack.c.l.b16 %v138
    %v445 = vunpack.c.h.b16 %v138
    %v446 = vunpack.c.l.b16 %v139
    %v447 = vunpack.c.h.b16 %v139
    %v448 = vunpack.c.l.b16 %v140
    %v449 = vunpack.c.h.b16 %v140
    %v450 = vunpack.c.l.b16 %v141
    %v451 = vunpack.c.h.b16 %v141
    %v452 = vunpack.c.l.b16 %v142
    %v453 = vunpack.c.h.b16 %v142
    %v454 = vunpack.c.l.b16 %v143
    %v455 = vunpack.c.h.b16 %v143
    %v456 = vunpack.c.l.b16 %v144
    %v457 = vunpack.c.h.b16 %v144
    %v458 = vunpack.c.l.b16 %v145
    %v459 = vunpack.c.h.b16 %v145
    %v460 = vunpack.c.l.b16 %v146
    %v461 = vunpack.c.h.b16 %v146
    %v462 = vunpack.c.l.b16 %v147
    %v463 = vunpack.c.h.b16 %v147
    %v464 = vunpack.c.l.b16 %v148
    %v465 = vunpack.c.h.b16 %v148
    %v466 = vunpack.c.l.b16 %v149
    %v467 = vunpack.c.h.b16 %v149
    %v468 = vunpack.c.l.b16 %v150
    %v469 = vunpack.c.h.b16 %v150
    %v470 = vunpack.c.l.b16 %v151
    %v471 = vunpack.c.h.b16 %v151
    %v472 = vunpack.c.l.b16 %v152
    %v473 = vunpack.c.h.b16 %v152
    %v474 = vunpack.c.l.b16 %v153
    %v475 = vunpack.c.h.b16 %v153
    %v476 = vunpack.c.l.b16 %v154
    %v477 = vunpack.c.h.b16 %v154
    %v478 = vunpack.c.l.b16 %v155
    %v479 = vunpack.c.h.b16 %v155
    %v480 = vunpack.c.l.b16 %v156
    %v481 = vunpack.c.h.b16 %v156
    %v482 = vunpack.c.l.b16 %v157
    %v483 = vunpack.c.h.b16 %v157
    %v484 = vunpack.c.l.b16 %v158
    %v485 = vunpack.c.h.b16 %v158
    %v486 = vunpack.c.l.b16 %v159
    %v487 = vunpack.c.h.b16 %v159
    %v488 = vunpack.c.l.b16 %v160
    %v489 = vunpack.c.h.b16 %v160
    %v490 = vunpack.c.l.b16 %v161
    %v491 = vunpack.c.h.b16 %v161
    %v492 = vunpack.c.l.b16 %v162
    %v493 = vunpack.c.h.b16 %v162
    %v494 = vunpack.c.l.b16 %v163
    %v495 = vunpack.c.h.b16 %v163
    %v496 = vunpack.c.l.b16 %v164
    %v497 = vunpack.c.h.b16 %v164
    %v498 = vunpack.c.l.b16 %v165
    %v499 = vunpack.c.h.b16 %v165
    %v500 = vunpack.c.l.b16 %v166
    %v501 = vunpack.c.h.b16 %v166
    %v502 = vunpack.c.l.b16 %v167
    %v503 = vunpack.c.h.b16 %v167
    %v504 = vunpack.c.l.b16 %v168
    %v505 = vunpack.c.h.b16 %v168
    %v506 = vunpack.c.l.b16 %v169
    %v507 = vunpack.c.h.b16 %v169
    %v508 = vunpack.c.l.b16 %v170
    %v509 = vunpack.c.h.b16 %v170
    %v510 = vunpack.c.l.b16 %v171
    %v511 = vunpack.c.h.b16 %v171
    %v512 = vunpack.c.l.b16 %v172
    %v513 = vunpack.c.h.b16 %v172
    %v514 = vunpack.c.l.b16 %v173
    %v515 = vunpack.c.h.b16 %v173
    %v516 = vunpack.c.l.b16 %v174
    %v517 = vunpack.c.h.b16 %v174
    %v518 = vunpack.c.l.b16 %v175
    %v519 = vunpack.c.h.b16 %v175
    %v520 = vunpack.c.l.b16 %v176
    %v521 = vunpack.c.h.b16 %v176
    %v522 = vunpack.c.l.b16 %v177
    %v523 = vunpack.c.h.b16 %v177
    %v524 = vunpack.c.l.b16 %v178
    %v525 = vunpack.c.h.b16 %v178
    %v526 = vunpack.c.l.b16 %v179
    %v527 = vunpack.c.h.b16 %v179
    %v528 = vunpack.c.l.b16 %v180
    %v529 = vunpack.c.h.b16 %v180
    %v530 = vunpack.c.l.b16 %v181
    %v531 = vunpack.c.h.b16 %v181
    %v532 = vunpack.c.l.b16 %v182
    %v533 = vunpack.c.h.b16 %v182
    %v534 = vunpack.c.l.b16 %v183
    %v535 = vunpack.c.h.b16 %v183
    %v536 = vunpack.c.l.b16 %v184
    %v537 = vunpack.c.h.b16 %v184
    %v538 = vunpack.c.l.b16 %v185
    %v539 = vunpack.c.h.b16 %v185
    %v540 = vunpack.c.l.b16 %v186
    %v541 = vunpack.c.h.b16 %v186
    %v542 = vunpack.c.l.b16 %v187
    %v543 = vunpack.c.h.b16 %v187
    %v544 = vunpack.c.l.b16 %v188
    %v545 = vunpack.c.h.b16 %v188
    %v546 = vunpack.c.l.b16 %v189
    %v547 = vunpack.c.h.b16 %v189
    %v548 = vunpack.c.l.b16 %v190
    %v549 = vunpack.c.h.b16 %v190
    %v550 = vunpack.c.l.b16 %v191
    %v551 = vunpack.c.h.b16 %v191
    %v552 = vunpack.c.l.b16 %v192
    %v553 = vunpack.c.h.b16 %v192
    %v554 = vunpack.c.l.b16 %v193
    %v555 = vunpack.c.h.b16 %v193
    %v556 = vunpack.c.l.b16 %v194
    %v557 = vunpack.c.h.b16 %v194
    %v558 = vunpack.c.l.b16 %v195
    %v559 = vunpack.c.h.b16 %v195
    %v560 = vunpack.c.l.b16 %v196
    %v561 = vunpack.c.h.b16 %v196
    %v562 = vunpack.c.l.b16 %v197
    %v563 = vunpack.c.h.b16 %v197
    %v564 = vunpack.c.l.b16 %v198
    %v565 = vunpack.c.h.b16 %v198
    %v566 = vunpack.c.l.b16 %v199
    %v567 = vunpack.c.h.b16 %v199
    %v568 = vunpack.c.l.b16 %v200
    %v569 = vunpack.c.h.b16 %v200
    %v570 = vunpack.c.l.b16 %v201
    %v571 = vunpack.c.h.b16 %v201
    %v572 = vunpack.c.l.b16 %v202
    %v573 = vunpack.c.h.b16 %v202
    %v574 = vunpack.c.l.b16 %v203
    %v575 = vunpack.c.h.b16 %v203
    %v576 = vunpack.c.l.b16 %v204
    %v577 = vunpack.c.h.b16 %v204
    %v578 = vunpack.c.l.b16 %v205
    %v579 = vunpack.c.h.b16 %v205
    %v580 = vunpack.c.l.b16 %v206
    %v581 = vunpack.c.h.b16 %v206
    %v582 = vunpack.c.l.b16 %v207
    %v583 = vunpack.c.h.b16 %v207
    %v584 = vunpack.c.l.b16 %v208
    %v585 = vunpack.c.h.b16 %v208
    %v586 = vunpack.c.l.b16 %v209
    %v587 = vunpack.c.h.b16 %v209
    %v588 = vunpack.c.l.b16 %v210
    %v589 = vunpack.c.h.b16 %v210
    %v590 = vunpack.c.l.b16 %v211
    %v591 = vunpack.c.h.b16 %v211
    %v592 = vunpack.c.l.b16 %v212
    %v593 = vunpack.c.h.b16 %v212
    %v594 = vunpack.c.l.b16 %v213
    %v595 = vunpack.c.h.b16 %v213
    %v596 = vunpack.c.l.b16 %v214
    %v597 = vunpack.c.h.b16 %v214
    %v598 = vunpack.c.l.b16 %v215
    %v599 = vunpack.c.h.b16 %v215
    %v600 = vunpack.c.l.b16 %v216
    %v601 = vunpack.c.h.b16 %v216
    %v602 = vunpack.c.l.b16 %v217
    %v603 = vunpack.c.h.b16 %v217
    %v604 = vunpack.c.l.b16 %v218
    %v605 = vunpack.c.h.b16 %v218
    %v606 = vunpack.c.l.b16 %v219
    %v607 = vunpack.c.h.b16 %v219
    %v608 = vunpack.c.l.b16 %v220
    %v609 = vunpack.c.h.b16 %v220
    %v610 = vunpack.c.l.b16 %v221
    %v611 = vunpack.c.h.b16 %v221
    %v612 = vunpack.c.l.b16 %v222
    %v613 = vunpack.c.h.b16 %v222
    %v614 = vunpack.c.l.b16 %v223
    %v615 = vunpack.c.h.b16 %v223
    %v616 = vunpack.c.l.b16 %v224
    %v617 = vunpack.c.h.b16 %v224
    %v618 = vunpack.c.l.b16 %v225
    %v619 = vunpack.c.h.b16 %v225
    %v620 = vunpack.c.l.b16 %v226
    %v621 = vunpack.c.h.b16 %v226
    %v622 = vunpack.c.l.b16 %v227
    %v623 = vunpack.c.h.b16 %v227
    %v624 = vunpack.c.l.b16 %v228
    %v625 = vunpack.c.h.b16 %v228
    %v626 = vunpack.c.l.b16 %v229
    %v627 = vunpack.c.h.b16 %v229
    %v628 = vunpack.c.l.b16 %v230
    %v629 = vunpack.c.h.b16 %v230
    %v630 = vunpack.c.l.b16 %v231
    %v631 = vunpack.c.h.b16 %v231
    %v632 = vunpack.c.l.b16 %v232
    %v633 = vunpack.c.h.b16 %v232
    %v634 = vunpack.c.l.b16 %v233
    %v635 = vunpack.c.h.b16 %v233
    %v636 = vpack.c.b16 %v388, %v380
    %v637 = vpack.c.b16 %v389, %v381
    %v638 = vpack.c.b16 %v390, %v382
    %v639 = vpack.c.b16 %v391, %v383
    %v640 = vpack.c.b16 %v392, %v384
    %v641 = vpack.c.b16 %v393, %v385
    %v642 = vpack.c.b16 %v394, %v386
    %v643 = vpack.c.b16 %v395, %v387
    %v644 = vpack.c.b16 %v404, %v396
    %v645 = vpack.c.b16 %v405, %v397
    %v646 = vpack.c.b16 %v406, %v398
    %v647 = vpack.c.b16 %v407, %v399
    %v648 = vpack.c.b16 %v408, %v400
    %v649 = vpack.c.b16 %v409, %v401
    %v650 = vpack.c.b16 %v410, %v402
    %v651 = vpack.c.b16 %v411, %v403
    %v652 = vpack.c.b16 %v420, %v412
    %v653 = vpack.c.b16 %v421, %v413
    %v654 = vpack.c.b16 %v422, %v414
    %v655 = vpack.c.b16 %v423, %v415
    %v656 = vpack.c.b16 %v424, %v416
    %v657 = vpack.c.b16 %v425, %v417
    %v658 = vpack.c.b16 %v426, %v418
    %v659 = vpack.c.b16 %v427, %v419
    %v660 = vpack.c.b16 %v436, %v428
    %v661 = vpack.c.b16 %v437, %v429
    %v662 = vpack.c.b16 %v438, %v430
    %v663 = vpack.c.b16 %v439, %v431
    %v664 = vpack.c.b16 %v440, %v432
    %v665 = vpack.c.b16 %v441, %v433
    %v666 = vpack.c.b16 %v442, %v434
    %v667 = vpack.c.b16 %v443, %v435
    %v668 = vpack.c.b16 %v452, %v444
    %v669 = vpack.c.b16 %v453, %v445
    %v670 = vpack.c.b16 %v454, %v446
    %v671 = vpack.c.b16 %v455, %v447
    %v672 = vpack.c.b16 %v456, %v448
    %v673 = vpack.c.b16 %v457, %v449
    %v674 = vpack.c.b16 %v458, %v450
    %v675 = vpack.c.b16 %v459, %v451
    %v676 = vpack.c.b16 %v468, %v460
    %v677 = vpack.c.b16 %v469, %v461
    %v678 = vpack.c.b16 %v470, %v462
    %v679 = vpack.c.b16 %v471, %v463
    %v680 = vpack.c.b16 %v472, %v464
    %v681 = vpack.c.b16 %v473, %v465
    %v682 = vpack.c.b16 %v474, %v466
    %v683 = vpack.c.b16 %v475, %v467
    %v684 = vpack.c.b16 %v484, %v476
    %v685 = vpack.c.b16 %v485, %v477
    %v686 = vpack.c.b16 %v486, %v478
    %v687 = vpack.c.b16 %v487, %v479
    %v688 = vpack.c.b16 %v488, %v480
    %v689 = vpack.c.b16 %v489, %v481
    %v690 = vpack.c.b16 %v490, %v482
    %v691 = vpack.c.b16 %v491, %v483
    %v692 = vpack.c.b16 %v500, %v492
    %v693 = vpack.c.b16 %v501, %v493
    %v694 = vpack.c.b16 %v502, %v494
    %v695 = vpack.c.b16 %v503, %v495
    %v696 = vpack.c.b16 %v504, %v496
    %v697 = vpack.c.b16 %v505, %v497
    %v698 = vpack.c.b16 %v506, %v498
    %v699 = vpack.c.b16 %v507, %v499
    %v700 = vpack.c.b16 %v516, %v508
    %v701 = vpack.c.b16 %v517, %v509
    %v702 = vpack.c.b16 %v518, %v510
    %v703 = vpack.c.b16 %v519, %v511
    %v704 = vpack.c.b16 %v520, %v512
    %v705 = vpack.c.b16 %v521, %v513
    %v706 = vpack.c.b16 %v522, %v514
    %v707 = vpack.c.b16 %v523, %v515
    %v708 = vpack.c.b16 %v532, %v524
    %v709 = vpack.c.b16 %v533, %v525
    %v710 = vpack.c.b16 %v534, %v526
    %v711 = vpack.c.b16 %v535, %v527
    %v712 = vpack.c.b16 %v536, %v528
    %v713 = vpack.c.b16 %v537, %v529
    %v714 = vpack.c.b16 %v538, %v530
    %v715 = vpack.c.b16 %v539, %v531
    %v716 = vpack.c.b16 %v548, %v540
    %v717 = vpack.c.b16 %v549, %v541
    %v718 = vpack.c.b16 %v550, %v542
    %v719 = vpack.c.b16 %v551, %v543
    %v720 = vpack.c.b16 %v552, %v544
    %v721 = vpack.c.b16 %v553, %v545
    %v722 = vpack.c.b16 %v554, %v546
    %v723 = vpack.c.b16 %v555, %v547
    %v724 = vpack.c.b16 %v564, %v556
    %v725 = vpack.c.b16 %v565, %v557
    %v726 = vpack.c.b16 %v566, %v558
    %v727 = vpack.c.b16 %v567, %v559
    %v728 = vpack.c.b16 %v568, %v560
    %v729 = vpack.c.b16 %v569, %v561
    %v730 = vpack.c.b16 %v570, %v562
    %v731 = vpack.c.b16 %v571, %v563
    %v732 = vpack.c.b16 %v580, %v572
    %v733 = vpack.c.b16 %v581, %v573
    %v734 = vpack.c.b16 %v582, %v574
    %v735 = vpack.c.b16 %v583, %v575
    %v736 = vpack.c.b16 %v584, %v576
    %v737 = vpack.c.b16 %v585, %v577
    %v738 = vpack.c.b16 %v586, %v578
    %v739 = vpack.c.b16 %v587, %v579
    %v740 = vpack.c.b16 %v596, %v588
    %v741 = vpack.c.b16 %v597, %v589
    %v742 = vpack.c.b16 %v598, %v590
    %v743 = vpack.c.b16 %v599, %v591
    %v744 = vpack.c.b16 %v600, %v592
    %v745 = vpack.c.b16 %v601, %v593
    %v746 = vpack.c.b16 %v602, %v594
    %v747 = vpack.c.b16 %v603, %v595
    %v748 = vpack.c.b16 %v612, %v604
    %v749 = vpack.c.b16 %v613, %v605
    %v750 = vpack.c.b16 %v614, %v606
    %v751 = vpack.c.b16 %v615, %v607
    %v752 = vpack.c.b16 %v616, %v608
    %v753 = vpack.c.b16 %v617, %v609
    %v754 = vpack.c.b16 %v618, %v610
    %v755 = vpack.c.b16 %v619, %v611
    %v756 = vpack.c.b16 %v628, %v620
    %v757 = vpack.c.b16 %v629, %v621
    %v758 = vpack.c.b16 %v630, %v622
    %v759 = vpack.c.b16 %v631, %v623
    %v760 = vpack.c.b16 %v632, %v624
    %v761 = vpack.c.b16 %v633, %v625
    %v762 = vpack.c.b16 %v634, %v626
    %v763 = vpack.c.b16 %v635, %v627
    %892 = vmatpush.bf16.msra.mxu0 %v692
    %893 = vmatpush.bf16.msra.mxu0 %v684
    %894 = vmatpush.bf16.msra.mxu0 %v676
    %895 = vmatpush.bf16.msra.mxu0 %v668
    %896 = vmatpush.bf16.msra.mxu0 %v660
    %897 = vmatpush.bf16.msra.mxu0 %v652
    %898 = vmatpush.bf16.msra.mxu0 %v644
    %899 = vmatpush.bf16.msra.mxu0 %v636
    %900 = vmatmul.bf16.gmra.mxu0 %v98
    %v901 = vpop.f32.mrf.mxu0
    %v902 = vadd.f32 %v236, %v901
    %v903 = vpop.f32.mrf.mxu0
    %v904 = vadd.f32 %v236, %v903
    %905 = vmatmul.bf16.gmra.mxu0 %v100
    %v906 = vpop.f32.mrf.mxu0
    %v907 = vadd.f32 %v236, %v906
    %v908 = vpop.f32.mrf.mxu0
    %v909 = vadd.f32 %v236, %v908
    %910 = vmatmul.bf16.gmra.mxu0 %v102
    %v911 = vpop.f32.mrf.mxu0
    %v912 = vadd.f32 %v236, %v911
    %v913 = vpop.f32.mrf.mxu0
    %v914 = vadd.f32 %v236, %v913
    %915 = vmatmul.bf16.gmra.mxu0 %v104
    %v916 = vpop.f32.mrf.mxu0
    %v917 = vadd.f32 %v236, %v916
    %v918 = vpop.f32.mrf.mxu0
    %v919 = vadd.f32 %v236, %v918
    %920 = vdwg.mxu0
    %921 = vmatpush.bf16.msra.mxu0 %v756
    %922 = vmatpush.bf16.msra.mxu0 %v748
    %923 = vmatpush.bf16.msra.mxu0 %v740
    %924 = vmatpush.bf16.msra.mxu0 %v732
    %925 = vmatpush.bf16.msra.mxu0 %v724
    %926 = vmatpush.bf16.msra.mxu0 %v716
    %927 = vmatpush.bf16.msra.mxu0 %v708
    %928 = vmatpush.bf16.msra.mxu0 %v700
    %929 = vmatmul.bf16.gmra.mxu0 %v99
    %v930 = vpop.f32.mrf.mxu0
    %v931 = vadd.f32 %v902, %v930
    %v932 = vpop.f32.mrf.mxu0
    %v933 = vadd.f32 %v904, %v932
    %934 = vmatmul.bf16.gmra.mxu0 %v101
    %v935 = vpop.f32.mrf.mxu0
    %v936 = vadd.f32 %v907, %v935
    %v937 = vpop.f32.mrf.mxu0
    %v938 = vadd.f32 %v909, %v937
    %939 = vmatmul.bf16.gmra.mxu0 %v103
    %v940 = vpop.f32.mrf.mxu0
    %v941 = vadd.f32 %v912, %v940
    %v942 = vpop.f32.mrf.mxu0
    %v943 = vadd.f32 %v914, %v942
    %944 = vmatmul.bf16.gmra.mxu0 %v105
    %v945 = vpop.f32.mrf.mxu0
    %v946 = vadd.f32 %v917, %v945
    %v947 = vpop.f32.mrf.mxu0
    %v948 = vadd.f32 %v919, %v947
    %949 = vdwg.mxu0
    %950 = vmatpush.bf16.msra.mxu0 %v693
    %951 = vmatpush.bf16.msra.mxu0 %v685
    %952 = vmatpush.bf16.msra.mxu0 %v677
    %953 = vmatpush.bf16.msra.mxu0 %v669
    %954 = vmatpush.bf16.msra.mxu0 %v661
    %955 = vmatpush.bf16.msra.mxu0 %v653
    %956 = vmatpush.bf16.msra.mxu0 %v645
    %957 = vmatpush.bf16.msra.mxu0 %v637
    %958 = vmatmul.bf16.gmra.mxu0 %v98
    %v959 = vpop.f32.mrf.mxu0
    %v960 = vadd.f32 %v237, %v959
    %v961 = vpop.f32.mrf.mxu0
    %v962 = vadd.f32 %v237, %v961
    %963 = vmatmul.bf16.gmra.mxu0 %v100
    %v964 = vpop.f32.mrf.mxu0
    %v965 = vadd.f32 %v237, %v964
    %v966 = vpop.f32.mrf.mxu0
    %v967 = vadd.f32 %v237, %v966
    %968 = vmatmul.bf16.gmra.mxu0 %v102
    %v969 = vpop.f32.mrf.mxu0
    %v970 = vadd.f32 %v237, %v969
    %v971 = vpop.f32.mrf.mxu0
    %v972 = vadd.f32 %v237, %v971
    %973 = vmatmul.bf16.gmra.mxu0 %v104
    %v974 = vpop.f32.mrf.mxu0
    %v975 = vadd.f32 %v237, %v974
    %v976 = vpop.f32.mrf.mxu0
    %v977 = vadd.f32 %v237, %v976
    %978 = vdwg.mxu0
    %979 = vmatpush.bf16.msra.mxu0 %v757
    %980 = vmatpush.bf16.msra.mxu0 %v749
    %981 = vmatpush.bf16.msra.mxu0 %v741
    %982 = vmatpush.bf16.msra.mxu0 %v733
    %983 = vmatpush.bf16.msra.mxu0 %v725
    %984 = vmatpush.bf16.msra.mxu0 %v717
    %985 = vmatpush.bf16.msra.mxu0 %v709
    %986 = vmatpush.bf16.msra.mxu0 %v701
    %987 = vmatmul.bf16.gmra.mxu0 %v99
    %v988 = vpop.f32.mrf.mxu0
    %v989 = vadd.f32 %v960, %v988
    %v990 = vpop.f32.mrf.mxu0
    %v991 = vadd.f32 %v962, %v990
    %992 = vmatmul.bf16.gmra.mxu0 %v101
    %v993 = vpop.f32.mrf.mxu0
    %v994 = vadd.f32 %v965, %v993
    %v995 = vpop.f32.mrf.mxu0
    %v996 = vadd.f32 %v967, %v995
    %997 = vmatmul.bf16.gmra.mxu0 %v103
    %v998 = vpop.f32.mrf.mxu0
    %v999 = vadd.f32 %v970, %v998
    %v1000 = vpop.f32.mrf.mxu0
    %v1001 = vadd.f32 %v972, %v1000
    %1002 = vmatmul.bf16.gmra.mxu0 %v105
    %v1003 = vpop.f32.mrf.mxu0
    %v1004 = vadd.f32 %v975, %v1003
    %v1005 = vpop.f32.mrf.mxu0
    %v1006 = vadd.f32 %v977, %v1005
    %1007 = vdwg.mxu0
    %1008 = vmatpush.bf16.msra.mxu0 %v694
    %1009 = vmatpush.bf16.msra.mxu0 %v686
    %1010 = vmatpush.bf16.msra.mxu0 %v678
    %1011 = vmatpush.bf16.msra.mxu0 %v670
    %1012 = vmatpush.bf16.msra.mxu0 %v662
    %1013 = vmatpush.bf16.msra.mxu0 %v654
    %1014 = vmatpush.bf16.msra.mxu0 %v646
    %1015 = vmatpush.bf16.msra.mxu0 %v638
    %1016 = vmatmul.bf16.gmra.mxu0 %v98
    %v1017 = vpop.f32.mrf.mxu0
    %v1018 = vadd.f32 %v238, %v1017
    %v1019 = vpop.f32.mrf.mxu0
    %v1020 = vadd.f32 %v238, %v1019
    %1021 = vmatmul.bf16.gmra.mxu0 %v100
    %v1022 = vpop.f32.mrf.mxu0
    %v1023 = vadd.f32 %v238, %v1022
    %v1024 = vpop.f32.mrf.mxu0
    %v1025 = vadd.f32 %v238, %v1024
    %1026 = vmatmul.bf16.gmra.mxu0 %v102
    %v1027 = vpop.f32.mrf.mxu0
    %v1028 = vadd.f32 %v238, %v1027
    %v1029 = vpop.f32.mrf.mxu0
    %v1030 = vadd.f32 %v238, %v1029
    %1031 = vmatmul.bf16.gmra.mxu0 %v104
    %v1032 = vpop.f32.mrf.mxu0
    %v1033 = vadd.f32 %v238, %v1032
    %v1034 = vpop.f32.mrf.mxu0
    %v1035 = vadd.f32 %v238, %v1034
    %1036 = vdwg.mxu0
    %1037 = vmatpush.bf16.msra.mxu0 %v758
    %1038 = vmatpush.bf16.msra.mxu0 %v750
    %1039 = vmatpush.bf16.msra.mxu0 %v742
    %1040 = vmatpush.bf16.msra.mxu0 %v734
    %1041 = vmatpush.bf16.msra.mxu0 %v726
    %1042 = vmatpush.bf16.msra.mxu0 %v718
    %1043 = vmatpush.bf16.msra.mxu0 %v710
    %1044 = vmatpush.bf16.msra.mxu0 %v702
    %1045 = vmatmul.bf16.gmra.mxu0 %v99
    %v1046 = vpop.f32.mrf.mxu0
    %v1047 = vadd.f32 %v1018, %v1046
    %v1048 = vpop.f32.mrf.mxu0
    %v1049 = vadd.f32 %v1020, %v1048
    %1050 = vmatmul.bf16.gmra.mxu0 %v101
    %v1051 = vpop.f32.mrf.mxu0
    %v1052 = vadd.f32 %v1023, %v1051
    %v1053 = vpop.f32.mrf.mxu0
    %v1054 = vadd.f32 %v1025, %v1053
    %1055 = vmatmul.bf16.gmra.mxu0 %v103
    %v1056 = vpop.f32.mrf.mxu0
    %v1057 = vadd.f32 %v1028, %v1056
    %v1058 = vpop.f32.mrf.mxu0
    %v1059 = vadd.f32 %v1030, %v1058
    %1060 = vmatmul.bf16.gmra.mxu0 %v105
    %v1061 = vpop.f32.mrf.mxu0
    %v1062 = vadd.f32 %v1033, %v1061
    %v1063 = vpop.f32.mrf.mxu0
    %v1064 = vadd.f32 %v1035, %v1063
    %1065 = vdwg.mxu0
    %1066 = vmatpush.bf16.msra.mxu0 %v695
    %1067 = vmatpush.bf16.msra.mxu0 %v687
    %1068 = vmatpush.bf16.msra.mxu0 %v679
    %1069 = vmatpush.bf16.msra.mxu0 %v671
    %1070 = vmatpush.bf16.msra.mxu0 %v663
    %1071 = vmatpush.bf16.msra.mxu0 %v655
    %1072 = vmatpush.bf16.msra.mxu0 %v647
    %1073 = vmatpush.bf16.msra.mxu0 %v639
    %1074 = vmatmul.bf16.gmra.mxu0 %v98
    %v1075 = vpop.f32.mrf.mxu0
    %v1076 = vadd.f32 %v239, %v1075
    %v1077 = vpop.f32.mrf.mxu0
    %v1078 = vadd.f32 %v239, %v1077
    %1079 = vmatmul.bf16.gmra.mxu0 %v100
    %v1080 = vpop.f32.mrf.mxu0
    %v1081 = vadd.f32 %v239, %v1080
    %v1082 = vpop.f32.mrf.mxu0
    %v1083 = vadd.f32 %v239, %v1082
    %1084 = vmatmul.bf16.gmra.mxu0 %v102
    %v1085 = vpop.f32.mrf.mxu0
    %v1086 = vadd.f32 %v239, %v1085
    %v1087 = vpop.f32.mrf.mxu0
    %v1088 = vadd.f32 %v239, %v1087
    %1089 = vmatmul.bf16.gmra.mxu0 %v104
    %v1090 = vpop.f32.mrf.mxu0
    %v1091 = vadd.f32 %v239, %v1090
    %v1092 = vpop.f32.mrf.mxu0
    %v1093 = vadd.f32 %v239, %v1092
    %1094 = vdwg.mxu0
    %1095 = vmatpush.bf16.msra.mxu0 %v759
    %1096 = vmatpush.bf16.msra.mxu0 %v751
    %1097 = vmatpush.bf16.msra.mxu0 %v743
    %1098 = vmatpush.bf16.msra.mxu0 %v735
    %1099 = vmatpush.bf16.msra.mxu0 %v727
    %1100 = vmatpush.bf16.msra.mxu0 %v719
    %1101 = vmatpush.bf16.msra.mxu0 %v711
    %1102 = vmatpush.bf16.msra.mxu0 %v703
    %1103 = vmatmul.bf16.gmra.mxu0 %v99
    %v1104 = vpop.f32.mrf.mxu0
    %v1105 = vadd.f32 %v1076, %v1104
    %v1106 = vpop.f32.mrf.mxu0
    %v1107 = vadd.f32 %v1078, %v1106
    %1108 = vmatmul.bf16.gmra.mxu0 %v101
    %v1109 = vpop.f32.mrf.mxu0
    %v1110 = vadd.f32 %v1081, %v1109
    %v1111 = vpop.f32.mrf.mxu0
    %v1112 = vadd.f32 %v1083, %v1111
    %1113 = vmatmul.bf16.gmra.mxu0 %v103
    %v1114 = vpop.f32.mrf.mxu0
    %v1115 = vadd.f32 %v1086, %v1114
    %v1116 = vpop.f32.mrf.mxu0
    %v1117 = vadd.f32 %v1088, %v1116
    %1118 = vmatmul.bf16.gmra.mxu0 %v105
    %v1119 = vpop.f32.mrf.mxu0
    %v1120 = vadd.f32 %v1091, %v1119
    %v1121 = vpop.f32.mrf.mxu0
    %v1122 = vadd.f32 %v1093, %v1121
    %1123 = vdwg.mxu0
    %1124 = vmatpush.bf16.msra.mxu0 %v696
    %1125 = vmatpush.bf16.msra.mxu0 %v688
    %1126 = vmatpush.bf16.msra.mxu0 %v680
    %1127 = vmatpush.bf16.msra.mxu0 %v672
    %1128 = vmatpush.bf16.msra.mxu0 %v664
    %1129 = vmatpush.bf16.msra.mxu0 %v656
    %1130 = vmatpush.bf16.msra.mxu0 %v648
    %1131 = vmatpush.bf16.msra.mxu0 %v640
    %1132 = vmatmul.bf16.gmra.mxu0 %v98
    %v1133 = vpop.f32.mrf.mxu0
    %v1134 = vadd.f32 %v240, %v1133
    %v1135 = vpop.f32.mrf.mxu0
    %v1136 = vadd.f32 %v240, %v1135
    %1137 = vmatmul.bf16.gmra.mxu0 %v100
    %v1138 = vpop.f32.mrf.mxu0
    %v1139 = vadd.f32 %v240, %v1138
    %v1140 = vpop.f32.mrf.mxu0
    %v1141 = vadd.f32 %v240, %v1140
    %1142 = vmatmul.bf16.gmra.mxu0 %v102
    %v1143 = vpop.f32.mrf.mxu0
    %v1144 = vadd.f32 %v240, %v1143
    %v1145 = vpop.f32.mrf.mxu0
    %v1146 = vadd.f32 %v240, %v1145
    %1147 = vmatmul.bf16.gmra.mxu0 %v104
    %v1148 = vpop.f32.mrf.mxu0
    %v1149 = vadd.f32 %v240, %v1148
    %v1150 = vpop.f32.mrf.mxu0
    %v1151 = vadd.f32 %v240, %v1150
    %1152 = vdwg.mxu0
    %1153 = vmatpush.bf16.msra.mxu0 %v760
    %1154 = vmatpush.bf16.msra.mxu0 %v752
    %1155 = vmatpush.bf16.msra.mxu0 %v744
    %1156 = vmatpush.bf16.msra.mxu0 %v736
    %1157 = vmatpush.bf16.msra.mxu0 %v728
    %1158 = vmatpush.bf16.msra.mxu0 %v720
    %1159 = vmatpush.bf16.msra.mxu0 %v712
    %1160 = vmatpush.bf16.msra.mxu0 %v704
    %1161 = vmatmul.bf16.gmra.mxu0 %v99
    %v1162 = vpop.f32.mrf.mxu0
    %v1163 = vadd.f32 %v1134, %v1162
    %v1164 = vpop.f32.mrf.mxu0
    %v1165 = vadd.f32 %v1136, %v1164
    %1166 = vmatmul.bf16.gmra.mxu0 %v101
    %v1167 = vpop.f32.mrf.mxu0
    %v1168 = vadd.f32 %v1139, %v1167
    %v1169 = vpop.f32.mrf.mxu0
    %v1170 = vadd.f32 %v1141, %v1169
    %1171 = vmatmul.bf16.gmra.mxu0 %v103
    %v1172 = vpop.f32.mrf.mxu0
    %v1173 = vadd.f32 %v1144, %v1172
    %v1174 = vpop.f32.mrf.mxu0
    %v1175 = vadd.f32 %v1146, %v1174
    %1176 = vmatmul.bf16.gmra.mxu0 %v105
    %v1177 = vpop.f32.mrf.mxu0
    %v1178 = vadd.f32 %v1149, %v1177
    %v1179 = vpop.f32.mrf.mxu0
    %v1180 = vadd.f32 %v1151, %v1179
    %1181 = vdwg.mxu0
    %1182 = vmatpush.bf16.msra.mxu0 %v697
    %1183 = vmatpush.bf16.msra.mxu0 %v689
    %1184 = vmatpush.bf16.msra.mxu0 %v681
    %1185 = vmatpush.bf16.msra.mxu0 %v673
    %1186 = vmatpush.bf16.msra.mxu0 %v665
    %1187 = vmatpush.bf16.msra.mxu0 %v657
    %1188 = vmatpush.bf16.msra.mxu0 %v649
    %1189 = vmatpush.bf16.msra.mxu0 %v641
    %1190 = vmatmul.bf16.gmra.mxu0 %v98
    %v1191 = vpop.f32.mrf.mxu0
    %v1192 = vadd.f32 %v241, %v1191
    %v1193 = vpop.f32.mrf.mxu0
    %v1194 = vadd.f32 %v241, %v1193
    %1195 = vmatmul.bf16.gmra.mxu0 %v100
    %v1196 = vpop.f32.mrf.mxu0
    %v1197 = vadd.f32 %v241, %v1196
    %v1198 = vpop.f32.mrf.mxu0
    %v1199 = vadd.f32 %v241, %v1198
    %1200 = vmatmul.bf16.gmra.mxu0 %v102
    %v1201 = vpop.f32.mrf.mxu0
    %v1202 = vadd.f32 %v241, %v1201
    %v1203 = vpop.f32.mrf.mxu0
    %v1204 = vadd.f32 %v241, %v1203
    %1205 = vmatmul.bf16.gmra.mxu0 %v104
    %v1206 = vpop.f32.mrf.mxu0
    %v1207 = vadd.f32 %v241, %v1206
    %v1208 = vpop.f32.mrf.mxu0
    %v1209 = vadd.f32 %v241, %v1208
    %1210 = vdwg.mxu0
    %1211 = vmatpush.bf16.msra.mxu0 %v761
    %1212 = vmatpush.bf16.msra.mxu0 %v753
    %1213 = vmatpush.bf16.msra.mxu0 %v745
    %1214 = vmatpush.bf16.msra.mxu0 %v737
    %1215 = vmatpush.bf16.msra.mxu0 %v729
    %1216 = vmatpush.bf16.msra.mxu0 %v721
    %1217 = vmatpush.bf16.msra.mxu0 %v713
    %1218 = vmatpush.bf16.msra.mxu0 %v705
    %1219 = vmatmul.bf16.gmra.mxu0 %v99
    %v1220 = vpop.f32.mrf.mxu0
    %v1221 = vadd.f32 %v1192, %v1220
    %v1222 = vpop.f32.mrf.mxu0
    %v1223 = vadd.f32 %v1194, %v1222
    %1224 = vmatmul.bf16.gmra.mxu0 %v101
    %v1225 = vpop.f32.mrf.mxu0
    %v1226 = vadd.f32 %v1197, %v1225
    %v1227 = vpop.f32.mrf.mxu0
    %v1228 = vadd.f32 %v1199, %v1227
    %1229 = vmatmul.bf16.gmra.mxu0 %v103
    %v1230 = vpop.f32.mrf.mxu0
    %v1231 = vadd.f32 %v1202, %v1230
    %v1232 = vpop.f32.mrf.mxu0
    %v1233 = vadd.f32 %v1204, %v1232
    %1234 = vmatmul.bf16.gmra.mxu0 %v105
    %v1235 = vpop.f32.mrf.mxu0
    %v1236 = vadd.f32 %v1207, %v1235
    %v1237 = vpop.f32.mrf.mxu0
    %v1238 = vadd.f32 %v1209, %v1237
    %1239 = vdwg.mxu0
    %1240 = vmatpush.bf16.msra.mxu0 %v698
    %1241 = vmatpush.bf16.msra.mxu0 %v690
    %1242 = vmatpush.bf16.msra.mxu0 %v682
    %1243 = vmatpush.bf16.msra.mxu0 %v674
    %1244 = vmatpush.bf16.msra.mxu0 %v666
    %1245 = vmatpush.bf16.msra.mxu0 %v658
    %1246 = vmatpush.bf16.msra.mxu0 %v650
    %1247 = vmatpush.bf16.msra.mxu0 %v642
    %1248 = vmatmul.bf16.gmra.mxu0 %v98
    %v1249 = vpop.f32.mrf.mxu0
    %v1250 = vadd.f32 %v242, %v1249
    %v1251 = vpop.f32.mrf.mxu0
    %v1252 = vadd.f32 %v242, %v1251
    %1253 = vmatmul.bf16.gmra.mxu0 %v100
    %v1254 = vpop.f32.mrf.mxu0
    %v1255 = vadd.f32 %v242, %v1254
    %v1256 = vpop.f32.mrf.mxu0
    %v1257 = vadd.f32 %v242, %v1256
    %1258 = vmatmul.bf16.gmra.mxu0 %v102
    %v1259 = vpop.f32.mrf.mxu0
    %v1260 = vadd.f32 %v242, %v1259
    %v1261 = vpop.f32.mrf.mxu0
    %v1262 = vadd.f32 %v242, %v1261
    %1263 = vmatmul.bf16.gmra.mxu0 %v104
    %v1264 = vpop.f32.mrf.mxu0
    %v1265 = vadd.f32 %v242, %v1264
    %v1266 = vpop.f32.mrf.mxu0
    %v1267 = vadd.f32 %v242, %v1266
    %1268 = vdwg.mxu0
    %1269 = vmatpush.bf16.msra.mxu0 %v762
    %1270 = vmatpush.bf16.msra.mxu0 %v754
    %1271 = vmatpush.bf16.msra.mxu0 %v746
    %1272 = vmatpush.bf16.msra.mxu0 %v738
    %1273 = vmatpush.bf16.msra.mxu0 %v730
    %1274 = vmatpush.bf16.msra.mxu0 %v722
    %1275 = vmatpush.bf16.msra.mxu0 %v714
    %1276 = vmatpush.bf16.msra.mxu0 %v706
    %1277 = vmatmul.bf16.gmra.mxu0 %v99
    %v1278 = vpop.f32.mrf.mxu0
    %v1279 = vadd.f32 %v1250, %v1278
    %v1280 = vpop.f32.mrf.mxu0
    %v1281 = vadd.f32 %v1252, %v1280
    %1282 = vmatmul.bf16.gmra.mxu0 %v101
    %v1283 = vpop.f32.mrf.mxu0
    %v1284 = vadd.f32 %v1255, %v1283
    %v1285 = vpop.f32.mrf.mxu0
    %v1286 = vadd.f32 %v1257, %v1285
    %1287 = vmatmul.bf16.gmra.mxu0 %v103
    %v1288 = vpop.f32.mrf.mxu0
    %v1289 = vadd.f32 %v1260, %v1288
    %v1290 = vpop.f32.mrf.mxu0
    %v1291 = vadd.f32 %v1262, %v1290
    %1292 = vmatmul.bf16.gmra.mxu0 %v105
    %v1293 = vpop.f32.mrf.mxu0
    %v1294 = vadd.f32 %v1265, %v1293
    %v1295 = vpop.f32.mrf.mxu0
    %v1296 = vadd.f32 %v1267, %v1295
    %1297 = vdwg.mxu0
    %1298 = vmatpush.bf16.msra.mxu0 %v699
    %1299 = vmatpush.bf16.msra.mxu0 %v691
    %1300 = vmatpush.bf16.msra.mxu0 %v683
    %1301 = vmatpush.bf16.msra.mxu0 %v675
    %1302 = vmatpush.bf16.msra.mxu0 %v667
    %1303 = vmatpush.bf16.msra.mxu0 %v659
    %1304 = vmatpush.bf16.msra.mxu0 %v651
    %1305 = vmatpush.bf16.msra.mxu0 %v643
    %1306 = vmatmul.bf16.gmra.mxu0 %v98
    %v1307 = vpop.f32.mrf.mxu0
    %v1308 = vadd.f32 %v243, %v1307
    %v1309 = vpop.f32.mrf.mxu0
    %v1310 = vadd.f32 %v243, %v1309
    %1311 = vmatmul.bf16.gmra.mxu0 %v100
    %v1312 = vpop.f32.mrf.mxu0
    %v1313 = vadd.f32 %v243, %v1312
    %v1314 = vpop.f32.mrf.mxu0
    %v1315 = vadd.f32 %v243, %v1314
    %1316 = vmatmul.bf16.gmra.mxu0 %v102
    %v1317 = vpop.f32.mrf.mxu0
    %v1318 = vadd.f32 %v243, %v1317
    %v1319 = vpop.f32.mrf.mxu0
    %v1320 = vadd.f32 %v243, %v1319
    %1321 = vmatmul.bf16.gmra.mxu0 %v104
    %v1322 = vpop.f32.mrf.mxu0
    %v1323 = vadd.f32 %v243, %v1322
    %v1324 = vpop.f32.mrf.mxu0
    %v1325 = vadd.f32 %v243, %v1324
    %1326 = vdwg.mxu0
    %1327 = vmatpush.bf16.msra.mxu0 %v763
    %1328 = vmatpush.bf16.msra.mxu0 %v755
    %1329 = vmatpush.bf16.msra.mxu0 %v747
    %1330 = vmatpush.bf16.msra.mxu0 %v739
    %1331 = vmatpush.bf16.msra.mxu0 %v731
    %1332 = vmatpush.bf16.msra.mxu0 %v723
    %1333 = vmatpush.bf16.msra.mxu0 %v715
    %1334 = vmatpush.bf16.msra.mxu0 %v707
    %1335 = vmatmul.bf16.gmra.mxu0 %v99
    %v1336 = vpop.f32.mrf.mxu0
    %v1337 = vadd.f32 %v1308, %v1336
    %v1338 = vpop.f32.mrf.mxu0
    %v1339 = vadd.f32 %v1310, %v1338
    %1340 = vmatmul.bf16.gmra.mxu0 %v101
    %v1341 = vpop.f32.mrf.mxu0
    %v1342 = vadd.f32 %v1313, %v1341
    %v1343 = vpop.f32.mrf.mxu0
    %v1344 = vadd.f32 %v1315, %v1343
    %1345 = vmatmul.bf16.gmra.mxu0 %v103
    %v1346 = vpop.f32.mrf.mxu0
    %v1347 = vadd.f32 %v1318, %v1346
    %v1348 = vpop.f32.mrf.mxu0
    %v1349 = vadd.f32 %v1320, %v1348
    %1350 = vmatmul.bf16.gmra.mxu0 %v105
    %v1351 = vpop.f32.mrf.mxu0
    %v1352 = vadd.f32 %v1323, %v1351
    %v1353 = vpop.f32.mrf.mxu0
    %v1354 = vadd.f32 %v1325, %v1353
    %1355 = vdwg.mxu0
    %1356 = vst [vmem:[#allocation2] sm:$0xff] %v931
    %1357 = vst [vmem:[#allocation2 + $0x8] sm:$0xff] %v989
    %1358 = vst [vmem:[#allocation2 + $0x10] sm:$0xff] %v1047
    %1359 = vst [vmem:[#allocation2 + $0x18] sm:$0xff] %v1105
    %1360 = vst [vmem:[#allocation2 + $0x20] sm:$0xff] %v1163
    %1361 = vst [vmem:[#allocation2 + $0x28] sm:$0xff] %v1221
    %1362 = vst [vmem:[#allocation2 + $0x30] sm:$0xff] %v1279
    %1363 = vst [vmem:[#allocation2 + $0x38] sm:$0xff] %v1337
    %1364 = vst [vmem:[#allocation2 + $0x40] sm:$0xff] %v933
    %1365 = vst [vmem:[#allocation2 + $0x48] sm:$0xff] %v991
    %1366 = vst [vmem:[#allocation2 + $0x50] sm:$0xff] %v1049
    %1367 = vst [vmem:[#allocation2 + $0x58] sm:$0xff] %v1107
    %1368 = vst [vmem:[#allocation2 + $0x60] sm:$0xff] %v1165
    %1369 = vst [vmem:[#allocation2 + $0x68] sm:$0xff] %v1223
    %1370 = vst [vmem:[#allocation2 + $0x70] sm:$0xff] %v1281
    %1371 = vst [vmem:[#allocation2 + $0x78] sm:$0xff] %v1339
    %1372 = vst [vmem:[#allocation2 + $0x80] sm:$0xff] %v936
    %1373 = vst [vmem:[#allocation2 + $0x88] sm:$0xff] %v994
    %1374 = vst [vmem:[#allocation2 + $0x90] sm:$0xff] %v1052
    %1375 = vst [vmem:[#allocation2 + $0x98] sm:$0xff] %v1110
    %1376 = vst [vmem:[#allocation2 + $0xa0] sm:$0xff] %v1168
    %1377 = vst [vmem:[#allocation2 + $0xa8] sm:$0xff] %v1226
    %1378 = vst [vmem:[#allocation2 + $0xb0] sm:$0xff] %v1284
    %1379 = vst [vmem:[#allocation2 + $0xb8] sm:$0xff] %v1342
    %1380 = vst [vmem:[#allocation2 + $0xc0] sm:$0xff] %v938
    %1381 = vst [vmem:[#allocation2 + $0xc8] sm:$0xff] %v996
    %1382 = vst [vmem:[#allocation2 + $0xd0] sm:$0xff] %v1054
    %1383 = vst [vmem:[#allocation2 + $0xd8] sm:$0xff] %v1112
    %1384 = vst [vmem:[#allocation2 + $0xe0] sm:$0xff] %v1170
    %1385 = vst [vmem:[#allocation2 + $0xe8] sm:$0xff] %v1228
    %1386 = vst [vmem:[#allocation2 + $0xf0] sm:$0xff] %v1286
    %1387 = vst [vmem:[#allocation2 + $0xf8] sm:$0xff] %v1344
    %1388 = vst [vmem:[#allocation2 + $0x100] sm:$0xff] %v941
    %1389 = vst [vmem:[#allocation2 + $0x108] sm:$0xff] %v999
    %1390 = vst [vmem:[#allocation2 + $0x110] sm:$0xff] %v1057
    %1391 = vst [vmem:[#allocation2 + $0x118] sm:$0xff] %v1115
    %1392 = vst [vmem:[#allocation2 + $0x120] sm:$0xff] %v1173
    %1393 = vst [vmem:[#allocation2 + $0x128] sm:$0xff] %v1231
    %1394 = vst [vmem:[#allocation2 + $0x130] sm:$0xff] %v1289
    %1395 = vst [vmem:[#allocation2 + $0x138] sm:$0xff] %v1347
    %1396 = vst [vmem:[#allocation2 + $0x140] sm:$0xff] %v943
    %1397 = vst [vmem:[#allocation2 + $0x148] sm:$0xff] %v1001
    %1398 = vst [vmem:[#allocation2 + $0x150] sm:$0xff] %v1059
    %1399 = vst [vmem:[#allocation2 + $0x158] sm:$0xff] %v1117
    %1400 = vst [vmem:[#allocation2 + $0x160] sm:$0xff] %v1175
    %1401 = vst [vmem:[#allocation2 + $0x168] sm:$0xff] %v1233
    %1402 = vst [vmem:[#allocation2 + $0x170] sm:$0xff] %v1291
    %1403 = vst [vmem:[#allocation2 + $0x178] sm:$0xff] %v1349
    %1404 = vst [vmem:[#allocation2 + $0x180] sm:$0xff] %v946
    %1405 = vst [vmem:[#allocation2 + $0x188] sm:$0xff] %v1004
    %1406 = vst [vmem:[#allocation2 + $0x190] sm:$0xff] %v1062
    %1407 = vst [vmem:[#allocation2 + $0x198] sm:$0xff] %v1120
    %1408 = vst [vmem:[#allocation2 + $0x1a0] sm:$0xff] %v1178
    %1409 = vst [vmem:[#allocation2 + $0x1a8] sm:$0xff] %v1236
    %1410 = vst [vmem:[#allocation2 + $0x1b0] sm:$0xff] %v1294
    %1411 = vst [vmem:[#allocation2 + $0x1b8] sm:$0xff] %v1352
    %1412 = vst [vmem:[#allocation2 + $0x1c0] sm:$0xff] %v948
    %1413 = vst [vmem:[#allocation2 + $0x1c8] sm:$0xff] %v1006
    %1414 = vst [vmem:[#allocation2 + $0x1d0] sm:$0xff] %v1064
    %1415 = vst [vmem:[#allocation2 + $0x1d8] sm:$0xff] %v1122
    %1416 = vst [vmem:[#allocation2 + $0x1e0] sm:$0xff] %v1180
    %1417 = vst [vmem:[#allocation2 + $0x1e8] sm:$0xff] %v1238
    %1418 = vst [vmem:[#allocation2 + $0x1f0] sm:$0xff] %v1296
    %1419 = vst [vmem:[#allocation2 + $0x1f8] sm:$0xff] %v1354
    %v1420 = vld [vmem:[%s3] sm:$0xff]
    %v1421 = vld [vmem:[%s3 + $0x8] sm:$0xff]
    %v1422 = vld [vmem:[%s3 + $0x10] sm:$0xff]
    %v1423 = vld [vmem:[%s3 + $0x18] sm:$0xff]
    %v1424 = vld [vmem:[%s3 + $0x20] sm:$0xff]
    %v1425 = vld [vmem:[%s3 + $0x28] sm:$0xff]
    %v1426 = vld [vmem:[%s3 + $0x30] sm:$0xff]
    %v1427 = vld [vmem:[%s3 + $0x38] sm:$0xff]
    %v1428 = vld [vmem:[%s3 + $0x40] sm:$0xff]
    %v1429 = vld [vmem:[%s3 + $0x48] sm:$0xff]
    %v1430 = vld [vmem:[%s3 + $0x50] sm:$0xff]
    %v1431 = vld [vmem:[%s3 + $0x58] sm:$0xff]
    %v1432 = vld [vmem:[%s3 + $0x60] sm:$0xff]
    %v1433 = vld [vmem:[%s3 + $0x68] sm:$0xff]
    %v1434 = vld [vmem:[%s3 + $0x70] sm:$0xff]
    %v1435 = vld [vmem:[%s3 + $0x78] sm:$0xff]
    %v1436 = vld [vmem:[%s3 + $0x80] sm:$0xff]
    %v1437 = vld [vmem:[%s3 + $0x88] sm:$0xff]
    %v1438 = vld [vmem:[%s3 + $0x90] sm:$0xff]
    %v1439 = vld [vmem:[%s3 + $0x98] sm:$0xff]
    %v1440 = vld [vmem:[%s3 + $0xa0] sm:$0xff]
    %v1441 = vld [vmem:[%s3 + $0xa8] sm:$0xff]
    %v1442 = vld [vmem:[%s3 + $0xb0] sm:$0xff]
    %v1443 = vld [vmem:[%s3 + $0xb8] sm:$0xff]
    %v1444 = vld [vmem:[%s3 + $0xc0] sm:$0xff]
    %v1445 = vld [vmem:[%s3 + $0xc8] sm:$0xff]
    %v1446 = vld [vmem:[%s3 + $0xd0] sm:$0xff]
    %v1447 = vld [vmem:[%s3 + $0xd8] sm:$0xff]
    %v1448 = vld [vmem:[%s3 + $0xe0] sm:$0xff]
    %v1449 = vld [vmem:[%s3 + $0xe8] sm:$0xff]
    %v1450 = vld [vmem:[%s3 + $0xf0] sm:$0xff]
    %v1451 = vld [vmem:[%s3 + $0xf8] sm:$0xff]
    %v1452 = vld [vmem:[#allocation6] sm:$0xff]
    %v1453 = vld [vmem:[#allocation6 + $0x8] sm:$0xff]
    %v1454 = vld [vmem:[#allocation6 + $0x10] sm:$0xff]
    %v1455 = vld [vmem:[#allocation6 + $0x18] sm:$0xff]
    %v1456 = vld [vmem:[#allocation6 + $0x20] sm:$0xff]
    %v1457 = vld [vmem:[#allocation6 + $0x28] sm:$0xff]
    %v1458 = vld [vmem:[#allocation6 + $0x30] sm:$0xff]
    %v1459 = vld [vmem:[#allocation6 + $0x38] sm:$0xff]
    %v1460 = vld [vmem:[#allocation6 + $0x40] sm:$0xff]
    %v1461 = vld [vmem:[#allocation6 + $0x48] sm:$0xff]
    %v1462 = vld [vmem:[#allocation6 + $0x50] sm:$0xff]
    %v1463 = vld [vmem:[#allocation6 + $0x58] sm:$0xff]
    %v1464 = vld [vmem:[#allocation6 + $0x60] sm:$0xff]
    %v1465 = vld [vmem:[#allocation6 + $0x68] sm:$0xff]
    %v1466 = vld [vmem:[#allocation6 + $0x70] sm:$0xff]
    %v1467 = vld [vmem:[#allocation6 + $0x78] sm:$0xff]
    %v1468 = vld [vmem:[#allocation6 + $0x80] sm:$0xff]
    %v1469 = vld [vmem:[#allocation6 + $0x88] sm:$0xff]
    %v1470 = vld [vmem:[#allocation6 + $0x90] sm:$0xff]
    %v1471 = vld [vmem:[#allocation6 + $0x98] sm:$0xff]
    %v1472 = vld [vmem:[#allocation6 + $0xa0] sm:$0xff]
    %v1473 = vld [vmem:[#allocation6 + $0xa8] sm:$0xff]
    %v1474 = vld [vmem:[#allocation6 + $0xb0] sm:$0xff]
    %v1475 = vld [vmem:[#allocation6 + $0xb8] sm:$0xff]
    %v1476 = vld [vmem:[#allocation6 + $0xc0] sm:$0xff]
    %v1477 = vld [vmem:[#allocation6 + $0xc8] sm:$0xff]
    %v1478 = vld [vmem:[#allocation6 + $0xd0] sm:$0xff]
    %v1479 = vld [vmem:[#allocation6 + $0xd8] sm:$0xff]
    %v1480 = vld [vmem:[#allocation6 + $0xe0] sm:$0xff]
    %v1481 = vld [vmem:[#allocation6 + $0xe8] sm:$0xff]
    %v1482 = vld [vmem:[#allocation6 + $0xf0] sm:$0xff]
    %v1483 = vld [vmem:[#allocation6 + $0xf8] sm:$0xff]
    %v1484 = vld [vmem:[%s5] sm:$0xff]
    %v1485 = vld [vmem:[%s6] sm:$0xff]
    %s1486 = scalar_lea.vmem %s5, 8
    %v1487 = vld [vmem:[%s1486] sm:$0xff]
    %s1488 = scalar_lea.vmem %s6, 8
    %v1489 = vld [vmem:[%s1488] sm:$0xff]
    %v1490 = vld [vmem:[%s7] sm:$0xff]
    %vm1491 = vcmp.ne.s32.totalorder %v1490, 0
    %v1492 = vld [vmem:[#allocation2] sm:$0xff]
    %v1493 = vld [vmem:[#allocation2 + $0x8] sm:$0xff]
    %v1494 = vld [vmem:[#allocation2 + $0x10] sm:$0xff]
    %v1495 = vld [vmem:[#allocation2 + $0x18] sm:$0xff]
    %v1496 = vpack.c.bf16 %v1484, %v1484
    %v1529 = vunpack.c.l.b16 %v1420
    %v1530 = vunpack.c.h.b16 %v1420
    %v1531 = vunpack.c.l.b16 %v1421
    %v1532 = vunpack.c.h.b16 %v1421
    %v1533 = vunpack.c.l.b16 %v1422
    %v1534 = vunpack.c.h.b16 %v1422
    %v1535 = vunpack.c.l.b16 %v1423
    %v1536 = vunpack.c.h.b16 %v1423
    %v1537 = vunpack.c.l.b16 %v1424
    %v1538 = vunpack.c.h.b16 %v1424
    %v1539 = vunpack.c.l.b16 %v1425
    %v1540 = vunpack.c.h.b16 %v1425
    %v1541 = vunpack.c.l.b16 %v1426
    %v1542 = vunpack.c.h.b16 %v1426
    %v1543 = vunpack.c.l.b16 %v1427
    %v1544 = vunpack.c.h.b16 %v1427
    %v1545 = vunpack.c.l.b16 %v1428
    %v1546 = vunpack.c.h.b16 %v1428
    %v1547 = vunpack.c.l.b16 %v1429
    %v1548 = vunpack.c.h.b16 %v1429
    %v1549 = vunpack.c.l.b16 %v1430
    %v1550 = vunpack.c.h.b16 %v1430
    %v1551 = vunpack.c.l.b16 %v1431
    %v1552 = vunpack.c.h.b16 %v1431
    %v1553 = vunpack.c.l.b16 %v1432
    %v1554 = vunpack.c.h.b16 %v1432
    %v1555 = vunpack.c.l.b16 %v1433
    %v1556 = vunpack.c.h.b16 %v1433
    %v1557 = vunpack.c.l.b16 %v1434
    %v1558 = vunpack.c.h.b16 %v1434
    %v1559 = vunpack.c.l.b16 %v1435
    %v1560 = vunpack.c.h.b16 %v1435
    %v1561 = vunpack.c.l.b16 %v1436
    %v1562 = vunpack.c.h.b16 %v1436
    %v1563 = vunpack.c.l.b16 %v1437
    %v1564 = vunpack.c.h.b16 %v1437
    %v1565 = vunpack.c.l.b16 %v1438
    %v1566 = vunpack.c.h.b16 %v1438
    %v1567 = vunpack.c.l.b16 %v1439
    %v1568 = vunpack.c.h.b16 %v1439
    %v1569 = vunpack.c.l.b16 %v1440
    %v1570 = vunpack.c.h.b16 %v1440
    %v1571 = vunpack.c.l.b16 %v1441
    %v1572 = vunpack.c.h.b16 %v1441
    %v1573 = vunpack.c.l.b16 %v1442
    %v1574 = vunpack.c.h.b16 %v1442
    %v1575 = vunpack.c.l.b16 %v1443
    %v1576 = vunpack.c.h.b16 %v1443
    %v1577 = vunpack.c.l.b16 %v1444
    %v1578 = vunpack.c.h.b16 %v1444
    %v1579 = vunpack.c.l.b16 %v1445
    %v1580 = vunpack.c.h.b16 %v1445
    %v1581 = vunpack.c.l.b16 %v1446
    %v1582 = vunpack.c.h.b16 %v1446
    %v1583 = vunpack.c.l.b16 %v1447
    %v1584 = vunpack.c.h.b16 %v1447
    %v1585 = vunpack.c.l.b16 %v1448
    %v1586 = vunpack.c.h.b16 %v1448
    %v1587 = vunpack.c.l.b16 %v1449
    %v1588 = vunpack.c.h.b16 %v1449
    %v1589 = vunpack.c.l.b16 %v1450
    %v1590 = vunpack.c.h.b16 %v1450
    %v1591 = vunpack.c.l.b16 %v1451
    %v1592 = vunpack.c.h.b16 %v1451
    %v1593 = vpack.c.b16 %v1533, %v1529
    %v1594 = vpack.c.b16 %v1534, %v1530
    %v1595 = vpack.c.b16 %v1535, %v1531
    %v1596 = vpack.c.b16 %v1536, %v1532
    %v1597 = vpack.c.b16 %v1541, %v1537
    %v1598 = vpack.c.b16 %v1542, %v1538
    %v1599 = vpack.c.b16 %v1543, %v1539
    %v1600 = vpack.c.b16 %v1544, %v1540
    %v1601 = vpack.c.b16 %v1549, %v1545
    %v1602 = vpack.c.b16 %v1550, %v1546
    %v1603 = vpack.c.b16 %v1551, %v1547
    %v1604 = vpack.c.b16 %v1552, %v1548
    %v1605 = vpack.c.b16 %v1557, %v1553
    %v1606 = vpack.c.b16 %v1558, %v1554
    %v1607 = vpack.c.b16 %v1559, %v1555
    %v1608 = vpack.c.b16 %v1560, %v1556
    %v1609 = vpack.c.b16 %v1565, %v1561
    %v1610 = vpack.c.b16 %v1566, %v1562
    %v1611 = vpack.c.b16 %v1567, %v1563
    %v1612 = vpack.c.b16 %v1568, %v1564
    %v1613 = vpack.c.b16 %v1573, %v1569
    %v1614 = vpack.c.b16 %v1574, %v1570
    %v1615 = vpack.c.b16 %v1575, %v1571
    %v1616 = vpack.c.b16 %v1576, %v1572
    %v1617 = vpack.c.b16 %v1581, %v1577
    %v1618 = vpack.c.b16 %v1582, %v1578
    %v1619 = vpack.c.b16 %v1583, %v1579
    %v1620 = vpack.c.b16 %v1584, %v1580
    %v1621 = vpack.c.b16 %v1589, %v1585
    %v1622 = vpack.c.b16 %v1590, %v1586
    %v1623 = vpack.c.b16 %v1591, %v1587
    %v1624 = vpack.c.b16 %v1592, %v1588
    %1657 = vmatpush.bf16.msra.mxu0 %v1621
    %1658 = vmatpush.bf16.msra.mxu0 %v1617
    %1659 = vmatpush.bf16.msra.mxu0 %v1613
    %1660 = vmatpush.bf16.msra.mxu0 %v1609
    %1661 = vmatpush.bf16.msra.mxu0 %v1605
    %1662 = vmatpush.bf16.msra.mxu0 %v1601
    %1663 = vmatpush.bf16.msra.mxu0 %v1597
    %1664 = vmatpush.bf16.msra.mxu0 %v1593
    %1665 = vmatmul.bf16.gmra.mxu0 %v1496
    %v1666 = vpop.f32.mrf.mxu0
    %v1667 = vadd.f32 0.0, %v1666
    %v1668 = vpop.f32.mrf.mxu0
    %1669 = vdwg.mxu0
    %1670 = vmatpush.bf16.msra.mxu0 %v1622
    %1671 = vmatpush.bf16.msra.mxu0 %v1618
    %1672 = vmatpush.bf16.msra.mxu0 %v1614
    %1673 = vmatpush.bf16.msra.mxu0 %v1610
    %1674 = vmatpush.bf16.msra.mxu0 %v1606
    %1675 = vmatpush.bf16.msra.mxu0 %v1602
    %1676 = vmatpush.bf16.msra.mxu0 %v1598
    %1677 = vmatpush.bf16.msra.mxu0 %v1594
    %1678 = vmatmul.bf16.gmra.mxu0 %v1496
    %v1679 = vpop.f32.mrf.mxu0
    %v1680 = vadd.f32 0.0, %v1679
    %v1681 = vpop.f32.mrf.mxu0
    %1682 = vdwg.mxu0
    %1683 = vmatpush.bf16.msra.mxu0 %v1623
    %1684 = vmatpush.bf16.msra.mxu0 %v1619
    %1685 = vmatpush.bf16.msra.mxu0 %v1615
    %1686 = vmatpush.bf16.msra.mxu0 %v1611
    %1687 = vmatpush.bf16.msra.mxu0 %v1607
    %1688 = vmatpush.bf16.msra.mxu0 %v1603
    %1689 = vmatpush.bf16.msra.mxu0 %v1599
    %1690 = vmatpush.bf16.msra.mxu0 %v1595
    %1691 = vmatmul.bf16.gmra.mxu0 %v1496
    %v1692 = vpop.f32.mrf.mxu0
    %v1693 = vadd.f32 0.0, %v1692
    %v1694 = vpop.f32.mrf.mxu0
    %1695 = vdwg.mxu0
    %1696 = vmatpush.bf16.msra.mxu0 %v1624
    %1697 = vmatpush.bf16.msra.mxu0 %v1620
    %1698 = vmatpush.bf16.msra.mxu0 %v1616
    %1699 = vmatpush.bf16.msra.mxu0 %v1612
    %1700 = vmatpush.bf16.msra.mxu0 %v1608
    %1701 = vmatpush.bf16.msra.mxu0 %v1604
    %1702 = vmatpush.bf16.msra.mxu0 %v1600
    %1703 = vmatpush.bf16.msra.mxu0 %v1596
    %1704 = vmatmul.bf16.gmra.mxu0 %v1496
    %v1705 = vpop.f32.mrf.mxu0
    %v1706 = vadd.f32 0.0, %v1705
    %v1707 = vpop.f32.mrf.mxu0
    %1708 = vdwg.mxu0
    %v1709 = vadd.f32 %v1492, %v1667
    %v1710 = vadd.f32 %v1493, %v1680
    %v1711 = vadd.f32 %v1494, %v1693
    %v1712 = vadd.f32 %v1495, %v1706
    %v1713 = vxor.u32 %v1709, 2147483648
    %v1714 = vmul.f32 %v1713, 1.442695
    %v1715 = vpow.pop %v1714
    %v1716 = vadd.f32 %v1715, 1.0
    %v1717 = vrcp.pop %v1716
    %v1718 = vmul.f32 %v1716, %v1717
    %v1719 = vsub.f32 1.0, %v1718
    %v1720 = vmul.f32 %v1717, %v1719
    %v1721 = vadd.f32 %v1717, %v1720
    %vm1722 = vweird.f32 %v1716
    %vm1723 = vweird.f32 %v1717
    %vm1724 = vmor %vm1722, %vm1723
    %v1725 = vsel %vm1724, %v1717, %v1721
    %v1726 = vand.u32 2147483647, %v1716
    %vm1727 = vcmp.eq.f32.partialorder %v1726, 8.507059e+37
    %v1728 = vand.u32 %v1716, 2147483648
    %v1729 = vor.u32 1.1754944e-38, %v1728
    %v1730 = vsel %vm1727, %v1729, %v1725
    %v1731 = vmul.f32 1.0, %v1730
    %v1732 = vxor.u32 %v1710, 2147483648
    %v1733 = vmul.f32 %v1732, 1.442695
    %v1734 = vpow.pop %v1733
    %v1735 = vadd.f32 %v1734, 1.0
    %v1736 = vrcp.pop %v1735
    %v1737 = vmul.f32 %v1735, %v1736
    %v1738 = vsub.f32 1.0, %v1737
    %v1739 = vmul.f32 %v1736, %v1738
    %v1740 = vadd.f32 %v1736, %v1739
    %vm1741 = vweird.f32 %v1735
    %vm1742 = vweird.f32 %v1736
    %vm1743 = vmor %vm1741, %vm1742
    %v1744 = vsel %vm1743, %v1736, %v1740
    %v1745 = vand.u32 2147483647, %v1735
    %vm1746 = vcmp.eq.f32.partialorder %v1745, 8.507059e+37
    %v1747 = vand.u32 %v1735, 2147483648
    %v1748 = vor.u32 1.1754944e-38, %v1747
    %v1749 = vsel %vm1746, %v1748, %v1744
    %v1750 = vmul.f32 1.0, %v1749
    %v1751 = vtanh.pop %v1711
    %v1752 = vxor.u32 %v1712, 2147483648
    %v1753 = vmul.f32 %v1752, 1.442695
    %v1754 = vpow.pop %v1753
    %v1755 = vadd.f32 %v1754, 1.0
    %v1756 = vrcp.pop %v1755
    %v1757 = vmul.f32 %v1755, %v1756
    %v1758 = vsub.f32 1.0, %v1757
    %v1759 = vmul.f32 %v1756, %v1758
    %v1760 = vadd.f32 %v1756, %v1759
    %vm1761 = vweird.f32 %v1755
    %vm1762 = vweird.f32 %v1756
    %vm1763 = vmor %vm1761, %vm1762
    %v1764 = vsel %vm1763, %v1756, %v1760
    %v1765 = vand.u32 2147483647, %v1755
    %vm1766 = vcmp.eq.f32.partialorder %v1765, 8.507059e+37
    %v1767 = vand.u32 %v1755, 2147483648
    %v1768 = vor.u32 1.1754944e-38, %v1767
    %v1769 = vsel %vm1766, %v1768, %v1764
    %v1770 = vmul.f32 1.0, %v1769
    %v1771 = vmul.f32 %v1750, %v1485
    %v1772 = vmul.f32 %v1731, %v1751
    %v1773 = vadd.f32 %v1771, %v1772
    %v1774 = vtanh.pop %v1773
    %v1775 = vmul.f32 %v1770, %v1774
    %v1776 = vsel %vm1491, 1, 0
    %1777 = vset.pattern.permute.xlu0 0
    %1778 = vperm.xlu0 %1777, %v1776
    %v1779 = vpop.permute.xlu0 %1778
    %vm1780 = vcmp.eq.s32.totalorder %v1779, 1
    %v1781 = vsel %vm1780, %v1775, 0.0
    %1782 = vst [vmem:[#allocation3] sm:$0xff] %v1781
    %v1783 = vsel %vm1780, %v1775, %v1484
    %v1784 = vsel %vm1780, %v1773, %v1485
    %s1785 = scalar_lea.vmem %s7, 56
    %v1786 = vld [vmem:[%s1785] sm:$0xff]
    %vm1787 = vcmp.ne.s32.totalorder %v1786, 0
    %s1788 = scalar_lea.vmem [#allocation2], 448
    %v1789 = vld [vmem:[%s1788 + $0x20] sm:$0xff]
    %v1790 = vld [vmem:[%s1788 + $0x28] sm:$0xff]
    %v1791 = vld [vmem:[%s1788 + $0x30] sm:$0xff]
    %v1792 = vld [vmem:[%s1788 + $0x38] sm:$0xff]
    %v1793 = vpack.c.bf16 %v1487, %v1487
    %v1826 = vunpack.c.l.b16 %v1452
    %v1827 = vunpack.c.h.b16 %v1452
    %v1828 = vunpack.c.l.b16 %v1453
    %v1829 = vunpack.c.h.b16 %v1453
    %v1830 = vunpack.c.l.b16 %v1454
    %v1831 = vunpack.c.h.b16 %v1454
    %v1832 = vunpack.c.l.b16 %v1455
    %v1833 = vunpack.c.h.b16 %v1455
    %v1834 = vunpack.c.l.b16 %v1456
    %v1835 = vunpack.c.h.b16 %v1456
    %v1836 = vunpack.c.l.b16 %v1457
    %v1837 = vunpack.c.h.b16 %v1457
    %v1838 = vunpack.c.l.b16 %v1458
    %v1839 = vunpack.c.h.b16 %v1458
    %v1840 = vunpack.c.l.b16 %v1459
    %v1841 = vunpack.c.h.b16 %v1459
    %v1842 = vunpack.c.l.b16 %v1460
    %v1843 = vunpack.c.h.b16 %v1460
    %v1844 = vunpack.c.l.b16 %v1461
    %v1845 = vunpack.c.h.b16 %v1461
    %v1846 = vunpack.c.l.b16 %v1462
    %v1847 = vunpack.c.h.b16 %v1462
    %v1848 = vunpack.c.l.b16 %v1463
    %v1849 = vunpack.c.h.b16 %v1463
    %v1850 = vunpack.c.l.b16 %v1464
    %v1851 = vunpack.c.h.b16 %v1464
    %v1852 = vunpack.c.l.b16 %v1465
    %v1853 = vunpack.c.h.b16 %v1465
    %v1854 = vunpack.c.l.b16 %v1466
    %v1855 = vunpack.c.h.b16 %v1466
    %v1856 = vunpack.c.l.b16 %v1467
    %v1857 = vunpack.c.h.b16 %v1467
    %v1858 = vunpack.c.l.b16 %v1468
    %v1859 = vunpack.c.h.b16 %v1468
    %v1860 = vunpack.c.l.b16 %v1469
    %v1861 = vunpack.c.h.b16 %v1469
    %v1862 = vunpack.c.l.b16 %v1470
    %v1863 = vunpack.c.h.b16 %v1470
    %v1864 = vunpack.c.l.b16 %v1471
    %v1865 = vunpack.c.h.b16 %v1471
    %v1866 = vunpack.c.l.b16 %v1472
    %v1867 = vunpack.c.h.b16 %v1472
    %v1868 = vunpack.c.l.b16 %v1473
    %v1869 = vunpack.c.h.b16 %v1473
    %v1870 = vunpack.c.l.b16 %v1474
    %v1871 = vunpack.c.h.b16 %v1474
    %v1872 = vunpack.c.l.b16 %v1475
    %v1873 = vunpack.c.h.b16 %v1475
    %v1874 = vunpack.c.l.b16 %v1476
    %v1875 = vunpack.c.h.b16 %v1476
    %v1876 = vunpack.c.l.b16 %v1477
    %v1877 = vunpack.c.h.b16 %v1477
    %v1878 = vunpack.c.l.b16 %v1478
    %v1879 = vunpack.c.h.b16 %v1478
    %v1880 = vunpack.c.l.b16 %v1479
    %v1881 = vunpack.c.h.b16 %v1479
    %v1882 = vunpack.c.l.b16 %v1480
    %v1883 = vunpack.c.h.b16 %v1480
    %v1884 = vunpack.c.l.b16 %v1481
    %v1885 = vunpack.c.h.b16 %v1481
    %v1886 = vunpack.c.l.b16 %v1482
    %v1887 = vunpack.c.h.b16 %v1482
    %v1888 = vunpack.c.l.b16 %v1483
    %v1889 = vunpack.c.h.b16 %v1483
    %v1890 = vpack.c.b16 %v1830, %v1826
    %v1891 = vpack.c.b16 %v1831, %v1827
    %v1892 = vpack.c.b16 %v1832, %v1828
    %v1893 = vpack.c.b16 %v1833, %v1829
    %v1894 = vpack.c.b16 %v1838, %v1834
    %v1895 = vpack.c.b16 %v1839, %v1835
    %v1896 = vpack.c.b16 %v1840, %v1836
    %v1897 = vpack.c.b16 %v1841, %v1837
    %v1898 = vpack.c.b16 %v1846, %v1842
    %v1899 = vpack.c.b16 %v1847, %v1843
    %v1900 = vpack.c.b16 %v1848, %v1844
    %v1901 = vpack.c.b16 %v1849, %v1845
    %v1902 = vpack.c.b16 %v1854, %v1850
    %v1903 = vpack.c.b16 %v1855, %v1851
    %v1904 = vpack.c.b16 %v1856, %v1852
    %v1905 = vpack.c.b16 %v1857, %v1853
    %v1906 = vpack.c.b16 %v1862, %v1858
    %v1907 = vpack.c.b16 %v1863, %v1859
    %v1908 = vpack.c.b16 %v1864, %v1860
    %v1909 = vpack.c.b16 %v1865, %v1861
    %v1910 = vpack.c.b16 %v1870, %v1866
    %v1911 = vpack.c.b16 %v1871, %v1867
    %v1912 = vpack.c.b16 %v1872, %v1868
    %v1913 = vpack.c.b16 %v1873, %v1869
    %v1914 = vpack.c.b16 %v1878, %v1874
    %v1915 = vpack.c.b16 %v1879, %v1875
    %v1916 = vpack.c.b16 %v1880, %v1876
    %v1917 = vpack.c.b16 %v1881, %v1877
    %v1918 = vpack.c.b16 %v1886, %v1882
    %v1919 = vpack.c.b16 %v1887, %v1883
    %v1920 = vpack.c.b16 %v1888, %v1884
    %v1921 = vpack.c.b16 %v1889, %v1885
    %1954 = vmatpush.bf16.msra.mxu0 %v1918
    %1955 = vmatpush.bf16.msra.mxu0 %v1914
    %1956 = vmatpush.bf16.msra.mxu0 %v1910
    %1957 = vmatpush.bf16.msra.mxu0 %v1906
    %1958 = vmatpush.bf16.msra.mxu0 %v1902
    %1959 = vmatpush.bf16.msra.mxu0 %v1898
    %1960 = vmatpush.bf16.msra.mxu0 %v1894
    %1961 = vmatpush.bf16.msra.mxu0 %v1890
    %1962 = vmatmul.bf16.gmra.mxu0 %v1793
    %v1963 = vpop.f32.mrf.mxu0
    %v1964 = vadd.f32 0.0, %v1963
    %v1965 = vpop.f32.mrf.mxu0
    %1966 = vdwg.mxu0
    %1967 = vmatpush.bf16.msra.mxu0 %v1919
    %1968 = vmatpush.bf16.msra.mxu0 %v1915
    %1969 = vmatpush.bf16.msra.mxu0 %v1911
    %1970 = vmatpush.bf16.msra.mxu0 %v1907
    %1971 = vmatpush.bf16.msra.mxu0 %v1903
    %1972 = vmatpush.bf16.msra.mxu0 %v1899
    %1973 = vmatpush.bf16.msra.mxu0 %v1895
    %1974 = vmatpush.bf16.msra.mxu0 %v1891
    %1975 = vmatmul.bf16.gmra.mxu0 %v1793
    %v1976 = vpop.f32.mrf.mxu0
    %v1977 = vadd.f32 0.0, %v1976
    %v1978 = vpop.f32.mrf.mxu0
    %1979 = vdwg.mxu0
    %1980 = vmatpush.bf16.msra.mxu0 %v1920
    %1981 = vmatpush.bf16.msra.mxu0 %v1916
    %1982 = vmatpush.bf16.msra.mxu0 %v1912
    %1983 = vmatpush.bf16.msra.mxu0 %v1908
    %1984 = vmatpush.bf16.msra.mxu0 %v1904
    %1985 = vmatpush.bf16.msra.mxu0 %v1900
    %1986 = vmatpush.bf16.msra.mxu0 %v1896
    %1987 = vmatpush.bf16.msra.mxu0 %v1892
    %1988 = vmatmul.bf16.gmra.mxu0 %v1793
    %v1989 = vpop.f32.mrf.mxu0
    %v1990 = vadd.f32 0.0, %v1989
    %v1991 = vpop.f32.mrf.mxu0
    %1992 = vdwg.mxu0
    %1993 = vmatpush.bf16.msra.mxu0 %v1921
    %1994 = vmatpush.bf16.msra.mxu0 %v1917
    %1995 = vmatpush.bf16.msra.mxu0 %v1913
    %1996 = vmatpush.bf16.msra.mxu0 %v1909
    %1997 = vmatpush.bf16.msra.mxu0 %v1905
    %1998 = vmatpush.bf16.msra.mxu0 %v1901
    %1999 = vmatpush.bf16.msra.mxu0 %v1897
    %2000 = vmatpush.bf16.msra.mxu0 %v1893
    %2001 = vmatmul.bf16.gmra.mxu0 %v1793
    %v2002 = vpop.f32.mrf.mxu0
    %v2003 = vadd.f32 0.0, %v2002
    %v2004 = vpop.f32.mrf.mxu0
    %2005 = vdwg.mxu0
    %v2006 = vadd.f32 %v1789, %v1964
    %v2007 = vadd.f32 %v1790, %v1977
    %v2008 = vadd.f32 %v1791, %v1990
    %v2009 = vadd.f32 %v1792, %v2003
    %v2010 = vxor.u32 %v2006, 2147483648
    %v2011 = vmul.f32 %v2010, 1.442695
    %v2012 = vpow.pop %v2011
    %v2013 = vadd.f32 %v2012, 1.0
    %v2014 = vrcp.pop %v2013
    %v2015 = vmul.f32 %v2013, %v2014
    %v2016 = vsub.f32 1.0, %v2015
    %v2017 = vmul.f32 %v2014, %v2016
    %v2018 = vadd.f32 %v2014, %v2017
    %vm2019 = vweird.f32 %v2013
    %vm2020 = vweird.f32 %v2014
    %vm2021 = vmor %vm2019, %vm2020
    %v2022 = vsel %vm2021, %v2014, %v2018
    %v2023 = vand.u32 2147483647, %v2013
    %vm2024 = vcmp.eq.f32.partialorder %v2023, 8.507059e+37
    %v2025 = vand.u32 %v2013, 2147483648
    %v2026 = vor.u32 1.1754944e-38, %v2025
    %v2027 = vsel %vm2024, %v2026, %v2022
    %v2028 = vmul.f32 1.0, %v2027
    %v2029 = vxor.u32 %v2007, 2147483648
    %v2030 = vmul.f32 %v2029, 1.442695
    %v2031 = vpow.pop %v2030
    %v2032 = vadd.f32 %v2031, 1.0
    %v2033 = vrcp.pop %v2032
    %v2034 = vmul.f32 %v2032, %v2033
    %v2035 = vsub.f32 1.0, %v2034
    %v2036 = vmul.f32 %v2033, %v2035
    %v2037 = vadd.f32 %v2033, %v2036
    %vm2038 = vweird.f32 %v2032
    %vm2039 = vweird.f32 %v2033
    %vm2040 = vmor %vm2038, %vm2039
    %v2041 = vsel %vm2040, %v2033, %v2037
    %v2042 = vand.u32 2147483647, %v2032
    %vm2043 = vcmp.eq.f32.partialorder %v2042, 8.507059e+37
    %v2044 = vand.u32 %v2032, 2147483648
    %v2045 = vor.u32 1.1754944e-38, %v2044
    %v2046 = vsel %vm2043, %v2045, %v2041
    %v2047 = vmul.f32 1.0, %v2046
    %v2048 = vtanh.pop %v2008
    %v2049 = vxor.u32 %v2009, 2147483648
    %v2050 = vmul.f32 %v2049, 1.442695
    %v2051 = vpow.pop %v2050
    %v2052 = vadd.f32 %v2051, 1.0
    %v2053 = vrcp.pop %v2052
    %v2054 = vmul.f32 %v2052, %v2053
    %v2055 = vsub.f32 1.0, %v2054
    %v2056 = vmul.f32 %v2053, %v2055
    %v2057 = vadd.f32 %v2053, %v2056
    %vm2058 = vweird.f32 %v2052
    %vm2059 = vweird.f32 %v2053
    %vm2060 = vmor %vm2058, %vm2059
    %v2061 = vsel %vm2060, %v2053, %v2057
    %v2062 = vand.u32 2147483647, %v2052
    %vm2063 = vcmp.eq.f32.partialorder %v2062, 8.507059e+37
    %v2064 = vand.u32 %v2052, 2147483648
    %v2065 = vor.u32 1.1754944e-38, %v2064
    %v2066 = vsel %vm2063, %v2065, %v2061
    %v2067 = vmul.f32 1.0, %v2066
    %v2068 = vmul.f32 %v2047, %v1489
    %v2069 = vmul.f32 %v2028, %v2048
    %v2070 = vadd.f32 %v2068, %v2069
    %v2071 = vtanh.pop %v2070
    %v2072 = vmul.f32 %v2067, %v2071
    %v2073 = vsel %vm1787, 1, 0
    %2074 = vset.pattern.permute.xlu0 0
    %2075 = vperm.xlu0 %2074, %v2073
    %v2076 = vpop.permute.xlu0 %2075
    %vm2077 = vcmp.eq.s32.totalorder %v2076, 1
    %v2078 = vsel %vm2077, %v2072, 0.0
    %s2079 = scalar_lea.vmem [#allocation3], 112
    %2080 = vst [vmem:[%s2079 + $0x8] sm:$0xff] %v2078
    %v2081 = vsel %vm2077, %v2072, %v1487
    %v2082 = vsel %vm2077, %v2070, %v1489
    %s2083 = scalar_lea.vmem %s7, 8
    %v2084 = vld [vmem:[%s2083] sm:$0xff]
    %vm2085 = vcmp.ne.s32.totalorder %v2084, 0
    %s2086 = scalar_lea.vmem [#allocation2], 64
    %v2087 = vld [vmem:[%s2086] sm:$0xff]
    %v2088 = vld [vmem:[%s2086 + $0x8] sm:$0xff]
    %v2089 = vld [vmem:[%s2086 + $0x10] sm:$0xff]
    %v2090 = vld [vmem:[%s2086 + $0x18] sm:$0xff]
    %v2091 = vpack.c.bf16 %v1783, %v1783
    %2092 = vmatpush.bf16.msra.mxu0 %v1621
    %2093 = vmatpush.bf16.msra.mxu0 %v1617
    %2094 = vmatpush.bf16.msra.mxu0 %v1613
    %2095 = vmatpush.bf16.msra.mxu0 %v1609
    %2096 = vmatpush.bf16.msra.mxu0 %v1605
    %2097 = vmatpush.bf16.msra.mxu0 %v1601
    %2098 = vmatpush.bf16.msra.mxu0 %v1597
    %2099 = vmatpush.bf16.msra.mxu0 %v1593
    %2100 = vmatmul.bf16.gmra.mxu0 %v2091
    %v2101 = vpop.f32.mrf.mxu0
    %v2102 = vadd.f32 0.0, %v2101
    %v2103 = vpop.f32.mrf.mxu0
    %2104 = vdwg.mxu0
    %2105 = vmatpush.bf16.msra.mxu0 %v1622
    %2106 = vmatpush.bf16.msra.mxu0 %v1618
    %2107 = vmatpush.bf16.msra.mxu0 %v1614
    %2108 = vmatpush.bf16.msra.mxu0 %v1610
    %2109 = vmatpush.bf16.msra.mxu0 %v1606
    %2110 = vmatpush.bf16.msra.mxu0 %v1602
    %2111 = vmatpush.bf16.msra.mxu0 %v1598
    %2112 = vmatpush.bf16.msra.mxu0 %v1594
    %2113 = vmatmul.bf16.gmra.mxu0 %v2091
    %v2114 = vpop.f32.mrf.mxu0
    %v2115 = vadd.f32 0.0, %v2114
    %v2116 = vpop.f32.mrf.mxu0
    %2117 = vdwg.mxu0
    %2118 = vmatpush.bf16.msra.mxu0 %v1623
    %2119 = vmatpush.bf16.msra.mxu0 %v1619
    %2120 = vmatpush.bf16.msra.mxu0 %v1615
    %2121 = vmatpush.bf16.msra.mxu0 %v1611
    %2122 = vmatpush.bf16.msra.mxu0 %v1607
    %2123 = vmatpush.bf16.msra.mxu0 %v1603
    %2124 = vmatpush.bf16.msra.mxu0 %v1599
    %2125 = vmatpush.bf16.msra.mxu0 %v1595
    %2126 = vmatmul.bf16.gmra.mxu0 %v2091
    %v2127 = vpop.f32.mrf.mxu0
    %v2128 = vadd.f32 0.0, %v2127
    %v2129 = vpop.f32.mrf.mxu0
    %2130 = vdwg.mxu0
    %2131 = vmatpush.bf16.msra.mxu0 %v1624
    %2132 = vmatpush.bf16.msra.mxu0 %v1620
    %2133 = vmatpush.bf16.msra.mxu0 %v1616
    %2134 = vmatpush.bf16.msra.mxu0 %v1612
    %2135 = vmatpush.bf16.msra.mxu0 %v1608
    %2136 = vmatpush.bf16.msra.mxu0 %v1604
    %2137 = vmatpush.bf16.msra.mxu0 %v1600
    %2138 = vmatpush.bf16.msra.mxu0 %v1596
    %2139 = vmatmul.bf16.gmra.mxu0 %v2091
    %v2140 = vpop.f32.mrf.mxu0
    %v2141 = vadd.f32 0.0, %v2140
    %v2142 = vpop.f32.mrf.mxu0
    %2143 = vdwg.mxu0
    %v2144 = vadd.f32 %v2087, %v2102
    %v2145 = vadd.f32 %v2088, %v2115
    %v2146 = vadd.f32 %v2089, %v2128
    %v2147 = vadd.f32 %v2090, %v2141
    %v2148 = vxor.u32 %v2144, 2147483648
    %v2149 = vmul.f32 %v2148, 1.442695
    %v2150 = vpow.pop %v2149
    %v2151 = vadd.f32 %v2150, 1.0
    %v2152 = vrcp.pop %v2151
    %v2153 = vmul.f32 %v2151, %v2152
    %v2154 = vsub.f32 1.0, %v2153
    %v2155 = vmul.f32 %v2152, %v2154
    %v2156 = vadd.f32 %v2152, %v2155
    %vm2157 = vweird.f32 %v2151
    %vm2158 = vweird.f32 %v2152
    %vm2159 = vmor %vm2157, %vm2158
    %v2160 = vsel %vm2159, %v2152, %v2156
    %v2161 = vand.u32 2147483647, %v2151
    %vm2162 = vcmp.eq.f32.partialorder %v2161, 8.507059e+37
    %v2163 = vand.u32 %v2151, 2147483648
    %v2164 = vor.u32 1.1754944e-38, %v2163
    %v2165 = vsel %vm2162, %v2164, %v2160
    %v2166 = vmul.f32 1.0, %v2165
    %v2167 = vxor.u32 %v2145, 2147483648
    %v2168 = vmul.f32 %v2167, 1.442695
    %v2169 = vpow.pop %v2168
    %v2170 = vadd.f32 %v2169, 1.0
    %v2171 = vrcp.pop %v2170
    %v2172 = vmul.f32 %v2170, %v2171
    %v2173 = vsub.f32 1.0, %v2172
    %v2174 = vmul.f32 %v2171, %v2173
    %v2175 = vadd.f32 %v2171, %v2174
    %vm2176 = vweird.f32 %v2170
    %vm2177 = vweird.f32 %v2171
    %vm2178 = vmor %vm2176, %vm2177
    %v2179 = vsel %vm2178, %v2171, %v2175
    %v2180 = vand.u32 2147483647, %v2170
    %vm2181 = vcmp.eq.f32.partialorder %v2180, 8.507059e+37
    %v2182 = vand.u32 %v2170, 2147483648
    %v2183 = vor.u32 1.1754944e-38, %v2182
    %v2184 = vsel %vm2181, %v2183, %v2179
    %v2185 = vmul.f32 1.0, %v2184
    %v2186 = vtanh.pop %v2146
    %v2187 = vxor.u32 %v2147, 2147483648
    %v2188 = vmul.f32 %v2187, 1.442695
    %v2189 = vpow.pop %v2188
    %v2190 = vadd.f32 %v2189, 1.0
    %v2191 = vrcp.pop %v2190
    %v2192 = vmul.f32 %v2190, %v2191
    %v2193 = vsub.f32 1.0, %v2192
    %v2194 = vmul.f32 %v2191, %v2193
    %v2195 = vadd.f32 %v2191, %v2194
    %vm2196 = vweird.f32 %v2190
    %vm2197 = vweird.f32 %v2191
    %vm2198 = vmor %vm2196, %vm2197
    %v2199 = vsel %vm2198, %v2191, %v2195
    %v2200 = vand.u32 2147483647, %v2190
    %vm2201 = vcmp.eq.f32.partialorder %v2200, 8.507059e+37
    %v2202 = vand.u32 %v2190, 2147483648
    %v2203 = vor.u32 1.1754944e-38, %v2202
    %v2204 = vsel %vm2201, %v2203, %v2199
    %v2205 = vmul.f32 1.0, %v2204
    %v2206 = vmul.f32 %v2185, %v1784
    %v2207 = vmul.f32 %v2166, %v2186
    %v2208 = vadd.f32 %v2206, %v2207
    %v2209 = vtanh.pop %v2208
    %v2210 = vmul.f32 %v2205, %v2209
    %v2211 = vsel %vm2085, 1, 0
    %2212 = vset.pattern.permute.xlu0 0
    %2213 = vperm.xlu0 %2212, %v2211
    %v2214 = vpop.permute.xlu0 %2213
    %vm2215 = vcmp.eq.s32.totalorder %v2214, 1
    %v2216 = vsel %vm2215, %v2210, 0.0
    %s2217 = scalar_lea.vmem [#allocation3], 16
    %2218 = vst [vmem:[%s2217] sm:$0xff] %v2216
    %v2219 = vsel %vm2215, %v2210, %v1783
    %v2220 = vsel %vm2215, %v2208, %v1784
    %s2221 = scalar_lea.vmem %s7, 48
    %v2222 = vld [vmem:[%s2221] sm:$0xff]
    %vm2223 = vcmp.ne.s32.totalorder %v2222, 0
    %s2224 = scalar_lea.vmem [#allocation2], 384
    %v2225 = vld [vmem:[%s2224 + $0x20] sm:$0xff]
    %v2226 = vld [vmem:[%s2224 + $0x28] sm:$0xff]
    %v2227 = vld [vmem:[%s2224 + $0x30] sm:$0xff]
    %v2228 = vld [vmem:[%s2224 + $0x38] sm:$0xff]
    %v2229 = vpack.c.bf16 %v2081, %v2081
    %2230 = vmatpush.bf16.msra.mxu0 %v1918
    %2231 = vmatpush.bf16.msra.mxu0 %v1914
    %2232 = vmatpush.bf16.msra.mxu0 %v1910
    %2233 = vmatpush.bf16.msra.mxu0 %v1906
    %2234 = vmatpush.bf16.msra.mxu0 %v1902
    %2235 = vmatpush.bf16.msra.mxu0 %v1898
    %2236 = vmatpush.bf16.msra.mxu0 %v1894
    %2237 = vmatpush.bf16.msra.mxu0 %v1890
    %2238 = vmatmul.bf16.gmra.mxu0 %v2229
    %v2239 = vpop.f32.mrf.mxu0
    %v2240 = vadd.f32 0.0, %v2239
    %v2241 = vpop.f32.mrf.mxu0
    %2242 = vdwg.mxu0
    %2243 = vmatpush.bf16.msra.mxu0 %v1919
    %2244 = vmatpush.bf16.msra.mxu0 %v1915
    %2245 = vmatpush.bf16.msra.mxu0 %v1911
    %2246 = vmatpush.bf16.msra.mxu0 %v1907
    %2247 = vmatpush.bf16.msra.mxu0 %v1903
    %2248 = vmatpush.bf16.msra.mxu0 %v1899
    %2249 = vmatpush.bf16.msra.mxu0 %v1895
    %2250 = vmatpush.bf16.msra.mxu0 %v1891
    %2251 = vmatmul.bf16.gmra.mxu0 %v2229
    %v2252 = vpop.f32.mrf.mxu0
    %v2253 = vadd.f32 0.0, %v2252
    %v2254 = vpop.f32.mrf.mxu0
    %2255 = vdwg.mxu0
    %2256 = vmatpush.bf16.msra.mxu0 %v1920
    %2257 = vmatpush.bf16.msra.mxu0 %v1916
    %2258 = vmatpush.bf16.msra.mxu0 %v1912
    %2259 = vmatpush.bf16.msra.mxu0 %v1908
    %2260 = vmatpush.bf16.msra.mxu0 %v1904
    %2261 = vmatpush.bf16.msra.mxu0 %v1900
    %2262 = vmatpush.bf16.msra.mxu0 %v1896
    %2263 = vmatpush.bf16.msra.mxu0 %v1892
    %2264 = vmatmul.bf16.gmra.mxu0 %v2229
    %v2265 = vpop.f32.mrf.mxu0
    %v2266 = vadd.f32 0.0, %v2265
    %v2267 = vpop.f32.mrf.mxu0
    %2268 = vdwg.mxu0
    %2269 = vmatpush.bf16.msra.mxu0 %v1921
    %2270 = vmatpush.bf16.msra.mxu0 %v1917
    %2271 = vmatpush.bf16.msra.mxu0 %v1913
    %2272 = vmatpush.bf16.msra.mxu0 %v1909
    %2273 = vmatpush.bf16.msra.mxu0 %v1905
    %2274 = vmatpush.bf16.msra.mxu0 %v1901
    %2275 = vmatpush.bf16.msra.mxu0 %v1897
    %2276 = vmatpush.bf16.msra.mxu0 %v1893
    %2277 = vmatmul.bf16.gmra.mxu0 %v2229
    %v2278 = vpop.f32.mrf.mxu0
    %v2279 = vadd.f32 0.0, %v2278
    %v2280 = vpop.f32.mrf.mxu0
    %2281 = vdwg.mxu0
    %v2282 = vadd.f32 %v2225, %v2240
    %v2283 = vadd.f32 %v2226, %v2253
    %v2284 = vadd.f32 %v2227, %v2266
    %v2285 = vadd.f32 %v2228, %v2279
    %v2286 = vxor.u32 %v2282, 2147483648
    %v2287 = vmul.f32 %v2286, 1.442695
    %v2288 = vpow.pop %v2287
    %v2289 = vadd.f32 %v2288, 1.0
    %v2290 = vrcp.pop %v2289
    %v2291 = vmul.f32 %v2289, %v2290
    %v2292 = vsub.f32 1.0, %v2291
    %v2293 = vmul.f32 %v2290, %v2292
    %v2294 = vadd.f32 %v2290, %v2293
    %vm2295 = vweird.f32 %v2289
    %vm2296 = vweird.f32 %v2290
    %vm2297 = vmor %vm2295, %vm2296
    %v2298 = vsel %vm2297, %v2290, %v2294
    %v2299 = vand.u32 2147483647, %v2289
    %vm2300 = vcmp.eq.f32.partialorder %v2299, 8.507059e+37
    %v2301 = vand.u32 %v2289, 2147483648
    %v2302 = vor.u32 1.1754944e-38, %v2301
    %v2303 = vsel %vm2300, %v2302, %v2298
    %v2304 = vmul.f32 1.0, %v2303
    %v2305 = vxor.u32 %v2283, 2147483648
    %v2306 = vmul.f32 %v2305, 1.442695
    %v2307 = vpow.pop %v2306
    %v2308 = vadd.f32 %v2307, 1.0
    %v2309 = vrcp.pop %v2308
    %v2310 = vmul.f32 %v2308, %v2309
    %v2311 = vsub.f32 1.0, %v2310
    %v2312 = vmul.f32 %v2309, %v2311
    %v2313 = vadd.f32 %v2309, %v2312
    %vm2314 = vweird.f32 %v2308
    %vm2315 = vweird.f32 %v2309
    %vm2316 = vmor %vm2314, %vm2315
    %v2317 = vsel %vm2316, %v2309, %v2313
    %v2318 = vand.u32 2147483647, %v2308
    %vm2319 = vcmp.eq.f32.partialorder %v2318, 8.507059e+37
    %v2320 = vand.u32 %v2308, 2147483648
    %v2321 = vor.u32 1.1754944e-38, %v2320
    %v2322 = vsel %vm2319, %v2321, %v2317
    %v2323 = vmul.f32 1.0, %v2322
    %v2324 = vtanh.pop %v2284
    %v2325 = vxor.u32 %v2285, 2147483648
    %v2326 = vmul.f32 %v2325, 1.442695
    %v2327 = vpow.pop %v2326
    %v2328 = vadd.f32 %v2327, 1.0
    %v2329 = vrcp.pop %v2328
    %v2330 = vmul.f32 %v2328, %v2329
    %v2331 = vsub.f32 1.0, %v2330
    %v2332 = vmul.f32 %v2329, %v2331
    %v2333 = vadd.f32 %v2329, %v2332
    %vm2334 = vweird.f32 %v2328
    %vm2335 = vweird.f32 %v2329
    %vm2336 = vmor %vm2334, %vm2335
    %v2337 = vsel %vm2336, %v2329, %v2333
    %v2338 = vand.u32 2147483647, %v2328
    %vm2339 = vcmp.eq.f32.partialorder %v2338, 8.507059e+37
    %v2340 = vand.u32 %v2328, 2147483648
    %v2341 = vor.u32 1.1754944e-38, %v2340
    %v2342 = vsel %vm2339, %v2341, %v2337
    %v2343 = vmul.f32 1.0, %v2342
    %v2344 = vmul.f32 %v2323, %v2082
    %v2345 = vmul.f32 %v2304, %v2324
    %v2346 = vadd.f32 %v2344, %v2345
    %v2347 = vtanh.pop %v2346
    %v2348 = vmul.f32 %v2343, %v2347
    %v2349 = vsel %vm2223, 1, 0
    %2350 = vset.pattern.permute.xlu0 0
    %2351 = vperm.xlu0 %2350, %v2349
    %v2352 = vpop.permute.xlu0 %2351
    %vm2353 = vcmp.eq.s32.totalorder %v2352, 1
    %v2354 = vsel %vm2353, %v2348, 0.0
    %s2355 = scalar_lea.vmem [#allocation3], 96
    %2356 = vst [vmem:[%s2355 + $0x8] sm:$0xff] %v2354
    %v2357 = vsel %vm2353, %v2348, %v2081
    %v2358 = vsel %vm2353, %v2346, %v2082
    %s2359 = scalar_lea.vmem %s7, 16
    %v2360 = vld [vmem:[%s2359] sm:$0xff]
    %vm2361 = vcmp.ne.s32.totalorder %v2360, 0
    %s2362 = scalar_lea.vmem [#allocation2], 128
    %v2363 = vld [vmem:[%s2362] sm:$0xff]
    %v2364 = vld [vmem:[%s2362 + $0x8] sm:$0xff]
    %v2365 = vld [vmem:[%s2362 + $0x10] sm:$0xff]
    %v2366 = vld [vmem:[%s2362 + $0x18] sm:$0xff]
    %v2367 = vpack.c.bf16 %v2219, %v2219
    %2368 = vmatpush.bf16.msra.mxu0 %v1621
    %2369 = vmatpush.bf16.msra.mxu0 %v1617
    %2370 = vmatpush.bf16.msra.mxu0 %v1613
    %2371 = vmatpush.bf16.msra.mxu0 %v1609
    %2372 = vmatpush.bf16.msra.mxu0 %v1605
    %2373 = vmatpush.bf16.msra.mxu0 %v1601
    %2374 = vmatpush.bf16.msra.mxu0 %v1597
    %2375 = vmatpush.bf16.msra.mxu0 %v1593
    %2376 = vmatmul.bf16.gmra.mxu0 %v2367
    %v2377 = vpop.f32.mrf.mxu0
    %v2378 = vadd.f32 0.0, %v2377
    %v2379 = vpop.f32.mrf.mxu0
    %2380 = vdwg.mxu0
    %2381 = vmatpush.bf16.msra.mxu0 %v1622
    %2382 = vmatpush.bf16.msra.mxu0 %v1618
    %2383 = vmatpush.bf16.msra.mxu0 %v1614
    %2384 = vmatpush.bf16.msra.mxu0 %v1610
    %2385 = vmatpush.bf16.msra.mxu0 %v1606
    %2386 = vmatpush.bf16.msra.mxu0 %v1602
    %2387 = vmatpush.bf16.msra.mxu0 %v1598
    %2388 = vmatpush.bf16.msra.mxu0 %v1594
    %2389 = vmatmul.bf16.gmra.mxu0 %v2367
    %v2390 = vpop.f32.mrf.mxu0
    %v2391 = vadd.f32 0.0, %v2390
    %v2392 = vpop.f32.mrf.mxu0
    %2393 = vdwg.mxu0
    %2394 = vmatpush.bf16.msra.mxu0 %v1623
    %2395 = vmatpush.bf16.msra.mxu0 %v1619
    %2396 = vmatpush.bf16.msra.mxu0 %v1615
    %2397 = vmatpush.bf16.msra.mxu0 %v1611
    %2398 = vmatpush.bf16.msra.mxu0 %v1607
    %2399 = vmatpush.bf16.msra.mxu0 %v1603
    %2400 = vmatpush.bf16.msra.mxu0 %v1599
    %2401 = vmatpush.bf16.msra.mxu0 %v1595
    %2402 = vmatmul.bf16.gmra.mxu0 %v2367
    %v2403 = vpop.f32.mrf.mxu0
    %v2404 = vadd.f32 0.0, %v2403
    %v2405 = vpop.f32.mrf.mxu0
    %2406 = vdwg.mxu0
    %2407 = vmatpush.bf16.msra.mxu0 %v1624
    %2408 = vmatpush.bf16.msra.mxu0 %v1620
    %2409 = vmatpush.bf16.msra.mxu0 %v1616
    %2410 = vmatpush.bf16.msra.mxu0 %v1612
    %2411 = vmatpush.bf16.msra.mxu0 %v1608
    %2412 = vmatpush.bf16.msra.mxu0 %v1604
    %2413 = vmatpush.bf16.msra.mxu0 %v1600
    %2414 = vmatpush.bf16.msra.mxu0 %v1596
    %2415 = vmatmul.bf16.gmra.mxu0 %v2367
    %v2416 = vpop.f32.mrf.mxu0
    %v2417 = vadd.f32 0.0, %v2416
    %v2418 = vpop.f32.mrf.mxu0
    %2419 = vdwg.mxu0
    %v2420 = vadd.f32 %v2363, %v2378
    %v2421 = vadd.f32 %v2364, %v2391
    %v2422 = vadd.f32 %v2365, %v2404
    %v2423 = vadd.f32 %v2366, %v2417
    %v2424 = vxor.u32 %v2420, 2147483648
    %v2425 = vmul.f32 %v2424, 1.442695
    %v2426 = vpow.pop %v2425
    %v2427 = vadd.f32 %v2426, 1.0
    %v2428 = vrcp.pop %v2427
    %v2429 = vmul.f32 %v2427, %v2428
    %v2430 = vsub.f32 1.0, %v2429
    %v2431 = vmul.f32 %v2428, %v2430
    %v2432 = vadd.f32 %v2428, %v2431
    %vm2433 = vweird.f32 %v2427
    %vm2434 = vweird.f32 %v2428
    %vm2435 = vmor %vm2433, %vm2434
    %v2436 = vsel %vm2435, %v2428, %v2432
    %v2437 = vand.u32 2147483647, %v2427
    %vm2438 = vcmp.eq.f32.partialorder %v2437, 8.507059e+37
    %v2439 = vand.u32 %v2427, 2147483648
    %v2440 = vor.u32 1.1754944e-38, %v2439
    %v2441 = vsel %vm2438, %v2440, %v2436
    %v2442 = vmul.f32 1.0, %v2441
    %v2443 = vxor.u32 %v2421, 2147483648
    %v2444 = vmul.f32 %v2443, 1.442695
    %v2445 = vpow.pop %v2444
    %v2446 = vadd.f32 %v2445, 1.0
    %v2447 = vrcp.pop %v2446
    %v2448 = vmul.f32 %v2446, %v2447
    %v2449 = vsub.f32 1.0, %v2448
    %v2450 = vmul.f32 %v2447, %v2449
    %v2451 = vadd.f32 %v2447, %v2450
    %vm2452 = vweird.f32 %v2446
    %vm2453 = vweird.f32 %v2447
    %vm2454 = vmor %vm2452, %vm2453
    %v2455 = vsel %vm2454, %v2447, %v2451
    %v2456 = vand.u32 2147483647, %v2446
    %vm2457 = vcmp.eq.f32.partialorder %v2456, 8.507059e+37
    %v2458 = vand.u32 %v2446, 2147483648
    %v2459 = vor.u32 1.1754944e-38, %v2458
    %v2460 = vsel %vm2457, %v2459, %v2455
    %v2461 = vmul.f32 1.0, %v2460
    %v2462 = vtanh.pop %v2422
    %v2463 = vxor.u32 %v2423, 2147483648
    %v2464 = vmul.f32 %v2463, 1.442695
    %v2465 = vpow.pop %v2464
    %v2466 = vadd.f32 %v2465, 1.0
    %v2467 = vrcp.pop %v2466
    %v2468 = vmul.f32 %v2466, %v2467
    %v2469 = vsub.f32 1.0, %v2468
    %v2470 = vmul.f32 %v2467, %v2469
    %v2471 = vadd.f32 %v2467, %v2470
    %vm2472 = vweird.f32 %v2466
    %vm2473 = vweird.f32 %v2467
    %vm2474 = vmor %vm2472, %vm2473
    %v2475 = vsel %vm2474, %v2467, %v2471
    %v2476 = vand.u32 2147483647, %v2466
    %vm2477 = vcmp.eq.f32.partialorder %v2476, 8.507059e+37
    %v2478 = vand.u32 %v2466, 2147483648
    %v2479 = vor.u32 1.1754944e-38, %v2478
    %v2480 = vsel %vm2477, %v2479, %v2475
    %v2481 = vmul.f32 1.0, %v2480
    %v2482 = vmul.f32 %v2461, %v2220
    %v2483 = vmul.f32 %v2442, %v2462
    %v2484 = vadd.f32 %v2482, %v2483
    %v2485 = vtanh.pop %v2484
    %v2486 = vmul.f32 %v2481, %v2485
    %v2487 = vsel %vm2361, 1, 0
    %2488 = vset.pattern.permute.xlu0 0
    %2489 = vperm.xlu0 %2488, %v2487
    %v2490 = vpop.permute.xlu0 %2489
    %vm2491 = vcmp.eq.s32.totalorder %v2490, 1
    %v2492 = vsel %vm2491, %v2486, 0.0
    %s2493 = scalar_lea.vmem [#allocation3], 32
    %2494 = vst [vmem:[%s2493] sm:$0xff] %v2492
    %v2495 = vsel %vm2491, %v2486, %v2219
    %v2496 = vsel %vm2491, %v2484, %v2220
    %s2497 = scalar_lea.vmem %s7, 40
    %v2498 = vld [vmem:[%s2497] sm:$0xff]
    %vm2499 = vcmp.ne.s32.totalorder %v2498, 0
    %s2500 = scalar_lea.vmem [#allocation2], 320
    %v2501 = vld [vmem:[%s2500 + $0x20] sm:$0xff]
    %v2502 = vld [vmem:[%s2500 + $0x28] sm:$0xff]
    %v2503 = vld [vmem:[%s2500 + $0x30] sm:$0xff]
    %v2504 = vld [vmem:[%s2500 + $0x38] sm:$0xff]
    %v2505 = vpack.c.bf16 %v2357, %v2357
    %2506 = vmatpush.bf16.msra.mxu0 %v1918
    %2507 = vmatpush.bf16.msra.mxu0 %v1914
    %2508 = vmatpush.bf16.msra.mxu0 %v1910
    %2509 = vmatpush.bf16.msra.mxu0 %v1906
    %2510 = vmatpush.bf16.msra.mxu0 %v1902
    %2511 = vmatpush.bf16.msra.mxu0 %v1898
    %2512 = vmatpush.bf16.msra.mxu0 %v1894
    %2513 = vmatpush.bf16.msra.mxu0 %v1890
    %2514 = vmatmul.bf16.gmra.mxu0 %v2505
    %v2515 = vpop.f32.mrf.mxu0
    %v2516 = vadd.f32 0.0, %v2515
    %v2517 = vpop.f32.mrf.mxu0
    %2518 = vdwg.mxu0
    %2519 = vmatpush.bf16.msra.mxu0 %v1919
    %2520 = vmatpush.bf16.msra.mxu0 %v1915
    %2521 = vmatpush.bf16.msra.mxu0 %v1911
    %2522 = vmatpush.bf16.msra.mxu0 %v1907
    %2523 = vmatpush.bf16.msra.mxu0 %v1903
    %2524 = vmatpush.bf16.msra.mxu0 %v1899
    %2525 = vmatpush.bf16.msra.mxu0 %v1895
    %2526 = vmatpush.bf16.msra.mxu0 %v1891
    %2527 = vmatmul.bf16.gmra.mxu0 %v2505
    %v2528 = vpop.f32.mrf.mxu0
    %v2529 = vadd.f32 0.0, %v2528
    %v2530 = vpop.f32.mrf.mxu0
    %2531 = vdwg.mxu0
    %2532 = vmatpush.bf16.msra.mxu0 %v1920
    %2533 = vmatpush.bf16.msra.mxu0 %v1916
    %2534 = vmatpush.bf16.msra.mxu0 %v1912
    %2535 = vmatpush.bf16.msra.mxu0 %v1908
    %2536 = vmatpush.bf16.msra.mxu0 %v1904
    %2537 = vmatpush.bf16.msra.mxu0 %v1900
    %2538 = vmatpush.bf16.msra.mxu0 %v1896
    %2539 = vmatpush.bf16.msra.mxu0 %v1892
    %2540 = vmatmul.bf16.gmra.mxu0 %v2505
    %v2541 = vpop.f32.mrf.mxu0
    %v2542 = vadd.f32 0.0, %v2541
    %v2543 = vpop.f32.mrf.mxu0
    %2544 = vdwg.mxu0
    %2545 = vmatpush.bf16.msra.mxu0 %v1921
    %2546 = vmatpush.bf16.msra.mxu0 %v1917
    %2547 = vmatpush.bf16.msra.mxu0 %v1913
    %2548 = vmatpush.bf16.msra.mxu0 %v1909
    %2549 = vmatpush.bf16.msra.mxu0 %v1905
    %2550 = vmatpush.bf16.msra.mxu0 %v1901
    %2551 = vmatpush.bf16.msra.mxu0 %v1897
    %2552 = vmatpush.bf16.msra.mxu0 %v1893
    %2553 = vmatmul.bf16.gmra.mxu0 %v2505
    %v2554 = vpop.f32.mrf.mxu0
    %v2555 = vadd.f32 0.0, %v2554
    %v2556 = vpop.f32.mrf.mxu0
    %2557 = vdwg.mxu0
    %v2558 = vadd.f32 %v2501, %v2516
    %v2559 = vadd.f32 %v2502, %v2529
    %v2560 = vadd.f32 %v2503, %v2542
    %v2561 = vadd.f32 %v2504, %v2555
    %v2562 = vxor.u32 %v2558, 2147483648
    %v2563 = vmul.f32 %v2562, 1.442695
    %v2564 = vpow.pop %v2563
    %v2565 = vadd.f32 %v2564, 1.0
    %v2566 = vrcp.pop %v2565
    %v2567 = vmul.f32 %v2565, %v2566
    %v2568 = vsub.f32 1.0, %v2567
    %v2569 = vmul.f32 %v2566, %v2568
    %v2570 = vadd.f32 %v2566, %v2569
    %vm2571 = vweird.f32 %v2565
    %vm2572 = vweird.f32 %v2566
    %vm2573 = vmor %vm2571, %vm2572
    %v2574 = vsel %vm2573, %v2566, %v2570
    %v2575 = vand.u32 2147483647, %v2565
    %vm2576 = vcmp.eq.f32.partialorder %v2575, 8.507059e+37
    %v2577 = vand.u32 %v2565, 2147483648
    %v2578 = vor.u32 1.1754944e-38, %v2577
    %v2579 = vsel %vm2576, %v2578, %v2574
    %v2580 = vmul.f32 1.0, %v2579
    %v2581 = vxor.u32 %v2559, 2147483648
    %v2582 = vmul.f32 %v2581, 1.442695
    %v2583 = vpow.pop %v2582
    %v2584 = vadd.f32 %v2583, 1.0
    %v2585 = vrcp.pop %v2584
    %v2586 = vmul.f32 %v2584, %v2585
    %v2587 = vsub.f32 1.0, %v2586
    %v2588 = vmul.f32 %v2585, %v2587
    %v2589 = vadd.f32 %v2585, %v2588
    %vm2590 = vweird.f32 %v2584
    %vm2591 = vweird.f32 %v2585
    %vm2592 = vmor %vm2590, %vm2591
    %v2593 = vsel %vm2592, %v2585, %v2589
    %v2594 = vand.u32 2147483647, %v2584
    %vm2595 = vcmp.eq.f32.partialorder %v2594, 8.507059e+37
    %v2596 = vand.u32 %v2584, 2147483648
    %v2597 = vor.u32 1.1754944e-38, %v2596
    %v2598 = vsel %vm2595, %v2597, %v2593
    %v2599 = vmul.f32 1.0, %v2598
    %v2600 = vtanh.pop %v2560
    %v2601 = vxor.u32 %v2561, 2147483648
    %v2602 = vmul.f32 %v2601, 1.442695
    %v2603 = vpow.pop %v2602
    %v2604 = vadd.f32 %v2603, 1.0
    %v2605 = vrcp.pop %v2604
    %v2606 = vmul.f32 %v2604, %v2605
    %v2607 = vsub.f32 1.0, %v2606
    %v2608 = vmul.f32 %v2605, %v2607
    %v2609 = vadd.f32 %v2605, %v2608
    %vm2610 = vweird.f32 %v2604
    %vm2611 = vweird.f32 %v2605
    %vm2612 = vmor %vm2610, %vm2611
    %v2613 = vsel %vm2612, %v2605, %v2609
    %v2614 = vand.u32 2147483647, %v2604
    %vm2615 = vcmp.eq.f32.partialorder %v2614, 8.507059e+37
    %v2616 = vand.u32 %v2604, 2147483648
    %v2617 = vor.u32 1.1754944e-38, %v2616
    %v2618 = vsel %vm2615, %v2617, %v2613
    %v2619 = vmul.f32 1.0, %v2618
    %v2620 = vmul.f32 %v2599, %v2358
    %v2621 = vmul.f32 %v2580, %v2600
    %v2622 = vadd.f32 %v2620, %v2621
    %v2623 = vtanh.pop %v2622
    %v2624 = vmul.f32 %v2619, %v2623
    %v2625 = vsel %vm2499, 1, 0
    %2626 = vset.pattern.permute.xlu0 0
    %2627 = vperm.xlu0 %2626, %v2625
    %v2628 = vpop.permute.xlu0 %2627
    %vm2629 = vcmp.eq.s32.totalorder %v2628, 1
    %v2630 = vsel %vm2629, %v2624, 0.0
    %s2631 = scalar_lea.vmem [#allocation3], 80
    %2632 = vst [vmem:[%s2631 + $0x8] sm:$0xff] %v2630
    %v2633 = vsel %vm2629, %v2624, %v2357
    %v2634 = vsel %vm2629, %v2622, %v2358
    %s2635 = scalar_lea.vmem %s7, 24
    %v2636 = vld [vmem:[%s2635] sm:$0xff]
    %vm2637 = vcmp.ne.s32.totalorder %v2636, 0
    %s2638 = scalar_lea.vmem [#allocation2], 192
    %v2639 = vld [vmem:[%s2638] sm:$0xff]
    %v2640 = vld [vmem:[%s2638 + $0x8] sm:$0xff]
    %v2641 = vld [vmem:[%s2638 + $0x10] sm:$0xff]
    %v2642 = vld [vmem:[%s2638 + $0x18] sm:$0xff]
    %v2643 = vpack.c.bf16 %v2495, %v2495
    %2644 = vmatpush.bf16.msra.mxu0 %v1621
    %2645 = vmatpush.bf16.msra.mxu0 %v1617
    %2646 = vmatpush.bf16.msra.mxu0 %v1613
    %2647 = vmatpush.bf16.msra.mxu0 %v1609
    %2648 = vmatpush.bf16.msra.mxu0 %v1605
    %2649 = vmatpush.bf16.msra.mxu0 %v1601
    %2650 = vmatpush.bf16.msra.mxu0 %v1597
    %2651 = vmatpush.bf16.msra.mxu0 %v1593
    %2652 = vmatmul.bf16.gmra.mxu0 %v2643
    %v2653 = vpop.f32.mrf.mxu0
    %v2654 = vadd.f32 0.0, %v2653
    %v2655 = vpop.f32.mrf.mxu0
    %2656 = vdwg.mxu0
    %2657 = vmatpush.bf16.msra.mxu0 %v1622
    %2658 = vmatpush.bf16.msra.mxu0 %v1618
    %2659 = vmatpush.bf16.msra.mxu0 %v1614
    %2660 = vmatpush.bf16.msra.mxu0 %v1610
    %2661 = vmatpush.bf16.msra.mxu0 %v1606
    %2662 = vmatpush.bf16.msra.mxu0 %v1602
    %2663 = vmatpush.bf16.msra.mxu0 %v1598
    %2664 = vmatpush.bf16.msra.mxu0 %v1594
    %2665 = vmatmul.bf16.gmra.mxu0 %v2643
    %v2666 = vpop.f32.mrf.mxu0
    %v2667 = vadd.f32 0.0, %v2666
    %v2668 = vpop.f32.mrf.mxu0
    %2669 = vdwg.mxu0
    %2670 = vmatpush.bf16.msra.mxu0 %v1623
    %2671 = vmatpush.bf16.msra.mxu0 %v1619
    %2672 = vmatpush.bf16.msra.mxu0 %v1615
    %2673 = vmatpush.bf16.msra.mxu0 %v1611
    %2674 = vmatpush.bf16.msra.mxu0 %v1607
    %2675 = vmatpush.bf16.msra.mxu0 %v1603
    %2676 = vmatpush.bf16.msra.mxu0 %v1599
    %2677 = vmatpush.bf16.msra.mxu0 %v1595
    %2678 = vmatmul.bf16.gmra.mxu0 %v2643
    %v2679 = vpop.f32.mrf.mxu0
    %v2680 = vadd.f32 0.0, %v2679
    %v2681 = vpop.f32.mrf.mxu0
    %2682 = vdwg.mxu0
    %2683 = vmatpush.bf16.msra.mxu0 %v1624
    %2684 = vmatpush.bf16.msra.mxu0 %v1620
    %2685 = vmatpush.bf16.msra.mxu0 %v1616
    %2686 = vmatpush.bf16.msra.mxu0 %v1612
    %2687 = vmatpush.bf16.msra.mxu0 %v1608
    %2688 = vmatpush.bf16.msra.mxu0 %v1604
    %2689 = vmatpush.bf16.msra.mxu0 %v1600
    %2690 = vmatpush.bf16.msra.mxu0 %v1596
    %2691 = vmatmul.bf16.gmra.mxu0 %v2643
    %v2692 = vpop.f32.mrf.mxu0
    %v2693 = vadd.f32 0.0, %v2692
    %v2694 = vpop.f32.mrf.mxu0
    %2695 = vdwg.mxu0
    %v2696 = vadd.f32 %v2639, %v2654
    %v2697 = vadd.f32 %v2640, %v2667
    %v2698 = vadd.f32 %v2641, %v2680
    %v2699 = vadd.f32 %v2642, %v2693
    %v2700 = vxor.u32 %v2696, 2147483648
    %v2701 = vmul.f32 %v2700, 1.442695
    %v2702 = vpow.pop %v2701
    %v2703 = vadd.f32 %v2702, 1.0
    %v2704 = vrcp.pop %v2703
    %v2705 = vmul.f32 %v2703, %v2704
    %v2706 = vsub.f32 1.0, %v2705
    %v2707 = vmul.f32 %v2704, %v2706
    %v2708 = vadd.f32 %v2704, %v2707
    %vm2709 = vweird.f32 %v2703
    %vm2710 = vweird.f32 %v2704
    %vm2711 = vmor %vm2709, %vm2710
    %v2712 = vsel %vm2711, %v2704, %v2708
    %v2713 = vand.u32 2147483647, %v2703
    %vm2714 = vcmp.eq.f32.partialorder %v2713, 8.507059e+37
    %v2715 = vand.u32 %v2703, 2147483648
    %v2716 = vor.u32 1.1754944e-38, %v2715
    %v2717 = vsel %vm2714, %v2716, %v2712
    %v2718 = vmul.f32 1.0, %v2717
    %v2719 = vxor.u32 %v2697, 2147483648
    %v2720 = vmul.f32 %v2719, 1.442695
    %v2721 = vpow.pop %v2720
    %v2722 = vadd.f32 %v2721, 1.0
    %v2723 = vrcp.pop %v2722
    %v2724 = vmul.f32 %v2722, %v2723
    %v2725 = vsub.f32 1.0, %v2724
    %v2726 = vmul.f32 %v2723, %v2725
    %v2727 = vadd.f32 %v2723, %v2726
    %vm2728 = vweird.f32 %v2722
    %vm2729 = vweird.f32 %v2723
    %vm2730 = vmor %vm2728, %vm2729
    %v2731 = vsel %vm2730, %v2723, %v2727
    %v2732 = vand.u32 2147483647, %v2722
    %vm2733 = vcmp.eq.f32.partialorder %v2732, 8.507059e+37
    %v2734 = vand.u32 %v2722, 2147483648
    %v2735 = vor.u32 1.1754944e-38, %v2734
    %v2736 = vsel %vm2733, %v2735, %v2731
    %v2737 = vmul.f32 1.0, %v2736
    %v2738 = vtanh.pop %v2698
    %v2739 = vxor.u32 %v2699, 2147483648
    %v2740 = vmul.f32 %v2739, 1.442695
    %v2741 = vpow.pop %v2740
    %v2742 = vadd.f32 %v2741, 1.0
    %v2743 = vrcp.pop %v2742
    %v2744 = vmul.f32 %v2742, %v2743
    %v2745 = vsub.f32 1.0, %v2744
    %v2746 = vmul.f32 %v2743, %v2745
    %v2747 = vadd.f32 %v2743, %v2746
    %vm2748 = vweird.f32 %v2742
    %vm2749 = vweird.f32 %v2743
    %vm2750 = vmor %vm2748, %vm2749
    %v2751 = vsel %vm2750, %v2743, %v2747
    %v2752 = vand.u32 2147483647, %v2742
    %vm2753 = vcmp.eq.f32.partialorder %v2752, 8.507059e+37
    %v2754 = vand.u32 %v2742, 2147483648
    %v2755 = vor.u32 1.1754944e-38, %v2754
    %v2756 = vsel %vm2753, %v2755, %v2751
    %v2757 = vmul.f32 1.0, %v2756
    %v2758 = vmul.f32 %v2737, %v2496
    %v2759 = vmul.f32 %v2718, %v2738
    %v2760 = vadd.f32 %v2758, %v2759
    %v2761 = vtanh.pop %v2760
    %v2762 = vmul.f32 %v2757, %v2761
    %v2763 = vsel %vm2637, 1, 0
    %2764 = vset.pattern.permute.xlu0 0
    %2765 = vperm.xlu0 %2764, %v2763
    %v2766 = vpop.permute.xlu0 %2765
    %vm2767 = vcmp.eq.s32.totalorder %v2766, 1
    %v2768 = vsel %vm2767, %v2762, 0.0
    %s2769 = scalar_lea.vmem [#allocation3], 48
    %2770 = vst [vmem:[%s2769] sm:$0xff] %v2768
    %v2771 = vsel %vm2767, %v2762, %v2495
    %v2772 = vsel %vm2767, %v2760, %v2496
    %s2773 = scalar_lea.vmem %s7, 32
    %v2774 = vld [vmem:[%s2773] sm:$0xff]
    %vm2775 = vcmp.ne.s32.totalorder %v2774, 0
    %s2776 = scalar_lea.vmem [#allocation2], 256
    %v2777 = vld [vmem:[%s2776 + $0x20] sm:$0xff]
    %v2778 = vld [vmem:[%s2776 + $0x28] sm:$0xff]
    %v2779 = vld [vmem:[%s2776 + $0x30] sm:$0xff]
    %v2780 = vld [vmem:[%s2776 + $0x38] sm:$0xff]
    %v2781 = vpack.c.bf16 %v2633, %v2633
    %2782 = vmatpush.bf16.msra.mxu0 %v1918
    %2783 = vmatpush.bf16.msra.mxu0 %v1914
    %2784 = vmatpush.bf16.msra.mxu0 %v1910
    %2785 = vmatpush.bf16.msra.mxu0 %v1906
    %2786 = vmatpush.bf16.msra.mxu0 %v1902
    %2787 = vmatpush.bf16.msra.mxu0 %v1898
    %2788 = vmatpush.bf16.msra.mxu0 %v1894
    %2789 = vmatpush.bf16.msra.mxu0 %v1890
    %2790 = vmatmul.bf16.gmra.mxu0 %v2781
    %v2791 = vpop.f32.mrf.mxu0
    %v2792 = vadd.f32 0.0, %v2791
    %v2793 = vpop.f32.mrf.mxu0
    %2794 = vdwg.mxu0
    %2795 = vmatpush.bf16.msra.mxu0 %v1919
    %2796 = vmatpush.bf16.msra.mxu0 %v1915
    %2797 = vmatpush.bf16.msra.mxu0 %v1911
    %2798 = vmatpush.bf16.msra.mxu0 %v1907
    %2799 = vmatpush.bf16.msra.mxu0 %v1903
    %2800 = vmatpush.bf16.msra.mxu0 %v1899
    %2801 = vmatpush.bf16.msra.mxu0 %v1895
    %2802 = vmatpush.bf16.msra.mxu0 %v1891
    %2803 = vmatmul.bf16.gmra.mxu0 %v2781
    %v2804 = vpop.f32.mrf.mxu0
    %v2805 = vadd.f32 0.0, %v2804
    %v2806 = vpop.f32.mrf.mxu0
    %2807 = vdwg.mxu0
    %2808 = vmatpush.bf16.msra.mxu0 %v1920
    %2809 = vmatpush.bf16.msra.mxu0 %v1916
    %2810 = vmatpush.bf16.msra.mxu0 %v1912
    %2811 = vmatpush.bf16.msra.mxu0 %v1908
    %2812 = vmatpush.bf16.msra.mxu0 %v1904
    %2813 = vmatpush.bf16.msra.mxu0 %v1900
    %2814 = vmatpush.bf16.msra.mxu0 %v1896
    %2815 = vmatpush.bf16.msra.mxu0 %v1892
    %2816 = vmatmul.bf16.gmra.mxu0 %v2781
    %v2817 = vpop.f32.mrf.mxu0
    %v2818 = vadd.f32 0.0, %v2817
    %v2819 = vpop.f32.mrf.mxu0
    %2820 = vdwg.mxu0
    %2821 = vmatpush.bf16.msra.mxu0 %v1921
    %2822 = vmatpush.bf16.msra.mxu0 %v1917
    %2823 = vmatpush.bf16.msra.mxu0 %v1913
    %2824 = vmatpush.bf16.msra.mxu0 %v1909
    %2825 = vmatpush.bf16.msra.mxu0 %v1905
    %2826 = vmatpush.bf16.msra.mxu0 %v1901
    %2827 = vmatpush.bf16.msra.mxu0 %v1897
    %2828 = vmatpush.bf16.msra.mxu0 %v1893
    %2829 = vmatmul.bf16.gmra.mxu0 %v2781
    %v2830 = vpop.f32.mrf.mxu0
    %v2831 = vadd.f32 0.0, %v2830
    %v2832 = vpop.f32.mrf.mxu0
    %2833 = vdwg.mxu0
    %v2834 = vadd.f32 %v2777, %v2792
    %v2835 = vadd.f32 %v2778, %v2805
    %v2836 = vadd.f32 %v2779, %v2818
    %v2837 = vadd.f32 %v2780, %v2831
    %v2838 = vxor.u32 %v2834, 2147483648
    %v2839 = vmul.f32 %v2838, 1.442695
    %v2840 = vpow.pop %v2839
    %v2841 = vadd.f32 %v2840, 1.0
    %v2842 = vrcp.pop %v2841
    %v2843 = vmul.f32 %v2841, %v2842
    %v2844 = vsub.f32 1.0, %v2843
    %v2845 = vmul.f32 %v2842, %v2844
    %v2846 = vadd.f32 %v2842, %v2845
    %vm2847 = vweird.f32 %v2841
    %vm2848 = vweird.f32 %v2842
    %vm2849 = vmor %vm2847, %vm2848
    %v2850 = vsel %vm2849, %v2842, %v2846
    %v2851 = vand.u32 2147483647, %v2841
    %vm2852 = vcmp.eq.f32.partialorder %v2851, 8.507059e+37
    %v2853 = vand.u32 %v2841, 2147483648
    %v2854 = vor.u32 1.1754944e-38, %v2853
    %v2855 = vsel %vm2852, %v2854, %v2850
    %v2856 = vmul.f32 1.0, %v2855
    %v2857 = vxor.u32 %v2835, 2147483648
    %v2858 = vmul.f32 %v2857, 1.442695
    %v2859 = vpow.pop %v2858
    %v2860 = vadd.f32 %v2859, 1.0
    %v2861 = vrcp.pop %v2860
    %v2862 = vmul.f32 %v2860, %v2861
    %v2863 = vsub.f32 1.0, %v2862
    %v2864 = vmul.f32 %v2861, %v2863
    %v2865 = vadd.f32 %v2861, %v2864
    %vm2866 = vweird.f32 %v2860
    %vm2867 = vweird.f32 %v2861
    %vm2868 = vmor %vm2866, %vm2867
    %v2869 = vsel %vm2868, %v2861, %v2865
    %v2870 = vand.u32 2147483647, %v2860
    %vm2871 = vcmp.eq.f32.partialorder %v2870, 8.507059e+37
    %v2872 = vand.u32 %v2860, 2147483648
    %v2873 = vor.u32 1.1754944e-38, %v2872
    %v2874 = vsel %vm2871, %v2873, %v2869
    %v2875 = vmul.f32 1.0, %v2874
    %v2876 = vtanh.pop %v2836
    %v2877 = vxor.u32 %v2837, 2147483648
    %v2878 = vmul.f32 %v2877, 1.442695
    %v2879 = vpow.pop %v2878
    %v2880 = vadd.f32 %v2879, 1.0
    %v2881 = vrcp.pop %v2880
    %v2882 = vmul.f32 %v2880, %v2881
    %v2883 = vsub.f32 1.0, %v2882
    %v2884 = vmul.f32 %v2881, %v2883
    %v2885 = vadd.f32 %v2881, %v2884
    %vm2886 = vweird.f32 %v2880
    %vm2887 = vweird.f32 %v2881
    %vm2888 = vmor %vm2886, %vm2887
    %v2889 = vsel %vm2888, %v2881, %v2885
    %v2890 = vand.u32 2147483647, %v2880
    %vm2891 = vcmp.eq.f32.partialorder %v2890, 8.507059e+37
    %v2892 = vand.u32 %v2880, 2147483648
    %v2893 = vor.u32 1.1754944e-38, %v2892
    %v2894 = vsel %vm2891, %v2893, %v2889
    %v2895 = vmul.f32 1.0, %v2894
    %v2896 = vmul.f32 %v2875, %v2634
    %v2897 = vmul.f32 %v2856, %v2876
    %v2898 = vadd.f32 %v2896, %v2897
    %v2899 = vtanh.pop %v2898
    %v2900 = vmul.f32 %v2895, %v2899
    %v2901 = vsel %vm2775, 1, 0
    %2902 = vset.pattern.permute.xlu0 0
    %2903 = vperm.xlu0 %2902, %v2901
    %v2904 = vpop.permute.xlu0 %2903
    %vm2905 = vcmp.eq.s32.totalorder %v2904, 1
    %v2906 = vsel %vm2905, %v2900, 0.0
    %s2907 = scalar_lea.vmem [#allocation3], 64
    %2908 = vst [vmem:[%s2907 + $0x8] sm:$0xff] %v2906
    %v2909 = vsel %vm2905, %v2900, %v2633
    %v2910 = vsel %vm2905, %v2898, %v2634
    %v2911 = vld [vmem:[%s2773] sm:$0xff]
    %vm2912 = vcmp.ne.s32.totalorder %v2911, 0
    %v2913 = vld [vmem:[%s2776] sm:$0xff]
    %v2914 = vld [vmem:[%s2776 + $0x8] sm:$0xff]
    %v2915 = vld [vmem:[%s2776 + $0x10] sm:$0xff]
    %v2916 = vld [vmem:[%s2776 + $0x18] sm:$0xff]
    %v2917 = vpack.c.bf16 %v2771, %v2771
    %2918 = vmatpush.bf16.msra.mxu0 %v1621
    %2919 = vmatpush.bf16.msra.mxu0 %v1617
    %2920 = vmatpush.bf16.msra.mxu0 %v1613
    %2921 = vmatpush.bf16.msra.mxu0 %v1609
    %2922 = vmatpush.bf16.msra.mxu0 %v1605
    %2923 = vmatpush.bf16.msra.mxu0 %v1601
    %2924 = vmatpush.bf16.msra.mxu0 %v1597
    %2925 = vmatpush.bf16.msra.mxu0 %v1593
    %2926 = vmatmul.bf16.gmra.mxu0 %v2917
    %v2927 = vpop.f32.mrf.mxu0
    %v2928 = vadd.f32 0.0, %v2927
    %v2929 = vpop.f32.mrf.mxu0
    %2930 = vdwg.mxu0
    %2931 = vmatpush.bf16.msra.mxu0 %v1622
    %2932 = vmatpush.bf16.msra.mxu0 %v1618
    %2933 = vmatpush.bf16.msra.mxu0 %v1614
    %2934 = vmatpush.bf16.msra.mxu0 %v1610
    %2935 = vmatpush.bf16.msra.mxu0 %v1606
    %2936 = vmatpush.bf16.msra.mxu0 %v1602
    %2937 = vmatpush.bf16.msra.mxu0 %v1598
    %2938 = vmatpush.bf16.msra.mxu0 %v1594
    %2939 = vmatmul.bf16.gmra.mxu0 %v2917
    %v2940 = vpop.f32.mrf.mxu0
    %v2941 = vadd.f32 0.0, %v2940
    %v2942 = vpop.f32.mrf.mxu0
    %2943 = vdwg.mxu0
    %2944 = vmatpush.bf16.msra.mxu0 %v1623
    %2945 = vmatpush.bf16.msra.mxu0 %v1619
    %2946 = vmatpush.bf16.msra.mxu0 %v1615
    %2947 = vmatpush.bf16.msra.mxu0 %v1611
    %2948 = vmatpush.bf16.msra.mxu0 %v1607
    %2949 = vmatpush.bf16.msra.mxu0 %v1603
    %2950 = vmatpush.bf16.msra.mxu0 %v1599
    %2951 = vmatpush.bf16.msra.mxu0 %v1595
    %2952 = vmatmul.bf16.gmra.mxu0 %v2917
    %v2953 = vpop.f32.mrf.mxu0
    %v2954 = vadd.f32 0.0, %v2953
    %v2955 = vpop.f32.mrf.mxu0
    %2956 = vdwg.mxu0
    %2957 = vmatpush.bf16.msra.mxu0 %v1624
    %2958 = vmatpush.bf16.msra.mxu0 %v1620
    %2959 = vmatpush.bf16.msra.mxu0 %v1616
    %2960 = vmatpush.bf16.msra.mxu0 %v1612
    %2961 = vmatpush.bf16.msra.mxu0 %v1608
    %2962 = vmatpush.bf16.msra.mxu0 %v1604
    %2963 = vmatpush.bf16.msra.mxu0 %v1600
    %2964 = vmatpush.bf16.msra.mxu0 %v1596
    %2965 = vmatmul.bf16.gmra.mxu0 %v2917
    %v2966 = vpop.f32.mrf.mxu0
    %v2967 = vadd.f32 0.0, %v2966
    %v2968 = vpop.f32.mrf.mxu0
    %2969 = vdwg.mxu0
    %v2970 = vadd.f32 %v2913, %v2928
    %v2971 = vadd.f32 %v2914, %v2941
    %v2972 = vadd.f32 %v2915, %v2954
    %v2973 = vadd.f32 %v2916, %v2967
    %v2974 = vxor.u32 %v2970, 2147483648
    %v2975 = vmul.f32 %v2974, 1.442695
    %v2976 = vpow.pop %v2975
    %v2977 = vadd.f32 %v2976, 1.0
    %v2978 = vrcp.pop %v2977
    %v2979 = vmul.f32 %v2977, %v2978
    %v2980 = vsub.f32 1.0, %v2979
    %v2981 = vmul.f32 %v2978, %v2980
    %v2982 = vadd.f32 %v2978, %v2981
    %vm2983 = vweird.f32 %v2977
    %vm2984 = vweird.f32 %v2978
    %vm2985 = vmor %vm2983, %vm2984
    %v2986 = vsel %vm2985, %v2978, %v2982
    %v2987 = vand.u32 2147483647, %v2977
    %vm2988 = vcmp.eq.f32.partialorder %v2987, 8.507059e+37
    %v2989 = vand.u32 %v2977, 2147483648
    %v2990 = vor.u32 1.1754944e-38, %v2989
    %v2991 = vsel %vm2988, %v2990, %v2986
    %v2992 = vmul.f32 1.0, %v2991
    %v2993 = vxor.u32 %v2971, 2147483648
    %v2994 = vmul.f32 %v2993, 1.442695
    %v2995 = vpow.pop %v2994
    %v2996 = vadd.f32 %v2995, 1.0
    %v2997 = vrcp.pop %v2996
    %v2998 = vmul.f32 %v2996, %v2997
    %v2999 = vsub.f32 1.0, %v2998
    %v3000 = vmul.f32 %v2997, %v2999
    %v3001 = vadd.f32 %v2997, %v3000
    %vm3002 = vweird.f32 %v2996
    %vm3003 = vweird.f32 %v2997
    %vm3004 = vmor %vm3002, %vm3003
    %v3005 = vsel %vm3004, %v2997, %v3001
    %v3006 = vand.u32 2147483647, %v2996
    %vm3007 = vcmp.eq.f32.partialorder %v3006, 8.507059e+37
    %v3008 = vand.u32 %v2996, 2147483648
    %v3009 = vor.u32 1.1754944e-38, %v3008
    %v3010 = vsel %vm3007, %v3009, %v3005
    %v3011 = vmul.f32 1.0, %v3010
    %v3012 = vtanh.pop %v2972
    %v3013 = vxor.u32 %v2973, 2147483648
    %v3014 = vmul.f32 %v3013, 1.442695
    %v3015 = vpow.pop %v3014
    %v3016 = vadd.f32 %v3015, 1.0
    %v3017 = vrcp.pop %v3016
    %v3018 = vmul.f32 %v3016, %v3017
    %v3019 = vsub.f32 1.0, %v3018
    %v3020 = vmul.f32 %v3017, %v3019
    %v3021 = vadd.f32 %v3017, %v3020
    %vm3022 = vweird.f32 %v3016
    %vm3023 = vweird.f32 %v3017
    %vm3024 = vmor %vm3022, %vm3023
    %v3025 = vsel %vm3024, %v3017, %v3021
    %v3026 = vand.u32 2147483647, %v3016
    %vm3027 = vcmp.eq.f32.partialorder %v3026, 8.507059e+37
    %v3028 = vand.u32 %v3016, 2147483648
    %v3029 = vor.u32 1.1754944e-38, %v3028
    %v3030 = vsel %vm3027, %v3029, %v3025
    %v3031 = vmul.f32 1.0, %v3030
    %v3032 = vmul.f32 %v3011, %v2772
    %v3033 = vmul.f32 %v2992, %v3012
    %v3034 = vadd.f32 %v3032, %v3033
    %v3035 = vtanh.pop %v3034
    %v3036 = vmul.f32 %v3031, %v3035
    %v3037 = vsel %vm2912, 1, 0
    %3038 = vset.pattern.permute.xlu0 0
    %3039 = vperm.xlu0 %3038, %v3037
    %v3040 = vpop.permute.xlu0 %3039
    %vm3041 = vcmp.eq.s32.totalorder %v3040, 1
    %v3042 = vsel %vm3041, %v3036, 0.0
    %3043 = vst [vmem:[%s2907] sm:$0xff] %v3042
    %v3044 = vsel %vm3041, %v3036, %v2771
    %v3045 = vsel %vm3041, %v3034, %v2772
    %v3046 = vld [vmem:[%s2635] sm:$0xff]
    %vm3047 = vcmp.ne.s32.totalorder %v3046, 0
    %v3048 = vld [vmem:[%s2638 + $0x20] sm:$0xff]
    %v3049 = vld [vmem:[%s2638 + $0x28] sm:$0xff]
    %v3050 = vld [vmem:[%s2638 + $0x30] sm:$0xff]
    %v3051 = vld [vmem:[%s2638 + $0x38] sm:$0xff]
    %v3052 = vpack.c.bf16 %v2909, %v2909
    %3053 = vmatpush.bf16.msra.mxu0 %v1918
    %3054 = vmatpush.bf16.msra.mxu0 %v1914
    %3055 = vmatpush.bf16.msra.mxu0 %v1910
    %3056 = vmatpush.bf16.msra.mxu0 %v1906
    %3057 = vmatpush.bf16.msra.mxu0 %v1902
    %3058 = vmatpush.bf16.msra.mxu0 %v1898
    %3059 = vmatpush.bf16.msra.mxu0 %v1894
    %3060 = vmatpush.bf16.msra.mxu0 %v1890
    %3061 = vmatmul.bf16.gmra.mxu0 %v3052
    %v3062 = vpop.f32.mrf.mxu0
    %v3063 = vadd.f32 0.0, %v3062
    %v3064 = vpop.f32.mrf.mxu0
    %3065 = vdwg.mxu0
    %3066 = vmatpush.bf16.msra.mxu0 %v1919
    %3067 = vmatpush.bf16.msra.mxu0 %v1915
    %3068 = vmatpush.bf16.msra.mxu0 %v1911
    %3069 = vmatpush.bf16.msra.mxu0 %v1907
    %3070 = vmatpush.bf16.msra.mxu0 %v1903
    %3071 = vmatpush.bf16.msra.mxu0 %v1899
    %3072 = vmatpush.bf16.msra.mxu0 %v1895
    %3073 = vmatpush.bf16.msra.mxu0 %v1891
    %3074 = vmatmul.bf16.gmra.mxu0 %v3052
    %v3075 = vpop.f32.mrf.mxu0
    %v3076 = vadd.f32 0.0, %v3075
    %v3077 = vpop.f32.mrf.mxu0
    %3078 = vdwg.mxu0
    %3079 = vmatpush.bf16.msra.mxu0 %v1920
    %3080 = vmatpush.bf16.msra.mxu0 %v1916
    %3081 = vmatpush.bf16.msra.mxu0 %v1912
    %3082 = vmatpush.bf16.msra.mxu0 %v1908
    %3083 = vmatpush.bf16.msra.mxu0 %v1904
    %3084 = vmatpush.bf16.msra.mxu0 %v1900
    %3085 = vmatpush.bf16.msra.mxu0 %v1896
    %3086 = vmatpush.bf16.msra.mxu0 %v1892
    %3087 = vmatmul.bf16.gmra.mxu0 %v3052
    %v3088 = vpop.f32.mrf.mxu0
    %v3089 = vadd.f32 0.0, %v3088
    %v3090 = vpop.f32.mrf.mxu0
    %3091 = vdwg.mxu0
    %3092 = vmatpush.bf16.msra.mxu0 %v1921
    %3093 = vmatpush.bf16.msra.mxu0 %v1917
    %3094 = vmatpush.bf16.msra.mxu0 %v1913
    %3095 = vmatpush.bf16.msra.mxu0 %v1909
    %3096 = vmatpush.bf16.msra.mxu0 %v1905
    %3097 = vmatpush.bf16.msra.mxu0 %v1901
    %3098 = vmatpush.bf16.msra.mxu0 %v1897
    %3099 = vmatpush.bf16.msra.mxu0 %v1893
    %3100 = vmatmul.bf16.gmra.mxu0 %v3052
    %v3101 = vpop.f32.mrf.mxu0
    %v3102 = vadd.f32 0.0, %v3101
    %v3103 = vpop.f32.mrf.mxu0
    %3104 = vdwg.mxu0
    %v3105 = vadd.f32 %v3048, %v3063
    %v3106 = vadd.f32 %v3049, %v3076
    %v3107 = vadd.f32 %v3050, %v3089
    %v3108 = vadd.f32 %v3051, %v3102
    %v3109 = vxor.u32 %v3105, 2147483648
    %v3110 = vmul.f32 %v3109, 1.442695
    %v3111 = vpow.pop %v3110
    %v3112 = vadd.f32 %v3111, 1.0
    %v3113 = vrcp.pop %v3112
    %v3114 = vmul.f32 %v3112, %v3113
    %v3115 = vsub.f32 1.0, %v3114
    %v3116 = vmul.f32 %v3113, %v3115
    %v3117 = vadd.f32 %v3113, %v3116
    %vm3118 = vweird.f32 %v3112
    %vm3119 = vweird.f32 %v3113
    %vm3120 = vmor %vm3118, %vm3119
    %v3121 = vsel %vm3120, %v3113, %v3117
    %v3122 = vand.u32 2147483647, %v3112
    %vm3123 = vcmp.eq.f32.partialorder %v3122, 8.507059e+37
    %v3124 = vand.u32 %v3112, 2147483648
    %v3125 = vor.u32 1.1754944e-38, %v3124
    %v3126 = vsel %vm3123, %v3125, %v3121
    %v3127 = vmul.f32 1.0, %v3126
    %v3128 = vxor.u32 %v3106, 2147483648
    %v3129 = vmul.f32 %v3128, 1.442695
    %v3130 = vpow.pop %v3129
    %v3131 = vadd.f32 %v3130, 1.0
    %v3132 = vrcp.pop %v3131
    %v3133 = vmul.f32 %v3131, %v3132
    %v3134 = vsub.f32 1.0, %v3133
    %v3135 = vmul.f32 %v3132, %v3134
    %v3136 = vadd.f32 %v3132, %v3135
    %vm3137 = vweird.f32 %v3131
    %vm3138 = vweird.f32 %v3132
    %vm3139 = vmor %vm3137, %vm3138
    %v3140 = vsel %vm3139, %v3132, %v3136
    %v3141 = vand.u32 2147483647, %v3131
    %vm3142 = vcmp.eq.f32.partialorder %v3141, 8.507059e+37
    %v3143 = vand.u32 %v3131, 2147483648
    %v3144 = vor.u32 1.1754944e-38, %v3143
    %v3145 = vsel %vm3142, %v3144, %v3140
    %v3146 = vmul.f32 1.0, %v3145
    %v3147 = vtanh.pop %v3107
    %v3148 = vxor.u32 %v3108, 2147483648
    %v3149 = vmul.f32 %v3148, 1.442695
    %v3150 = vpow.pop %v3149
    %v3151 = vadd.f32 %v3150, 1.0
    %v3152 = vrcp.pop %v3151
    %v3153 = vmul.f32 %v3151, %v3152
    %v3154 = vsub.f32 1.0, %v3153
    %v3155 = vmul.f32 %v3152, %v3154
    %v3156 = vadd.f32 %v3152, %v3155
    %vm3157 = vweird.f32 %v3151
    %vm3158 = vweird.f32 %v3152
    %vm3159 = vmor %vm3157, %vm3158
    %v3160 = vsel %vm3159, %v3152, %v3156
    %v3161 = vand.u32 2147483647, %v3151
    %vm3162 = vcmp.eq.f32.partialorder %v3161, 8.507059e+37
    %v3163 = vand.u32 %v3151, 2147483648
    %v3164 = vor.u32 1.1754944e-38, %v3163
    %v3165 = vsel %vm3162, %v3164, %v3160
    %v3166 = vmul.f32 1.0, %v3165
    %v3167 = vmul.f32 %v3146, %v2910
    %v3168 = vmul.f32 %v3127, %v3147
    %v3169 = vadd.f32 %v3167, %v3168
    %v3170 = vtanh.pop %v3169
    %v3171 = vmul.f32 %v3166, %v3170
    %v3172 = vsel %vm3047, 1, 0
    %3173 = vset.pattern.permute.xlu0 0
    %3174 = vperm.xlu0 %3173, %v3172
    %v3175 = vpop.permute.xlu0 %3174
    %vm3176 = vcmp.eq.s32.totalorder %v3175, 1
    %v3177 = vsel %vm3176, %v3171, 0.0
    %3178 = vst [vmem:[%s2769 + $0x8] sm:$0xff] %v3177
    %v3179 = vsel %vm3176, %v3171, %v2909
    %v3180 = vsel %vm3176, %v3169, %v2910
    %v3181 = vld [vmem:[%s2497] sm:$0xff]
    %vm3182 = vcmp.ne.s32.totalorder %v3181, 0
    %v3183 = vld [vmem:[%s2500] sm:$0xff]
    %v3184 = vld [vmem:[%s2500 + $0x8] sm:$0xff]
    %v3185 = vld [vmem:[%s2500 + $0x10] sm:$0xff]
    %v3186 = vld [vmem:[%s2500 + $0x18] sm:$0xff]
    %v3187 = vpack.c.bf16 %v3044, %v3044
    %3188 = vmatpush.bf16.msra.mxu0 %v1621
    %3189 = vmatpush.bf16.msra.mxu0 %v1617
    %3190 = vmatpush.bf16.msra.mxu0 %v1613
    %3191 = vmatpush.bf16.msra.mxu0 %v1609
    %3192 = vmatpush.bf16.msra.mxu0 %v1605
    %3193 = vmatpush.bf16.msra.mxu0 %v1601
    %3194 = vmatpush.bf16.msra.mxu0 %v1597
    %3195 = vmatpush.bf16.msra.mxu0 %v1593
    %3196 = vmatmul.bf16.gmra.mxu0 %v3187
    %v3197 = vpop.f32.mrf.mxu0
    %v3198 = vadd.f32 0.0, %v3197
    %v3199 = vpop.f32.mrf.mxu0
    %3200 = vdwg.mxu0
    %3201 = vmatpush.bf16.msra.mxu0 %v1622
    %3202 = vmatpush.bf16.msra.mxu0 %v1618
    %3203 = vmatpush.bf16.msra.mxu0 %v1614
    %3204 = vmatpush.bf16.msra.mxu0 %v1610
    %3205 = vmatpush.bf16.msra.mxu0 %v1606
    %3206 = vmatpush.bf16.msra.mxu0 %v1602
    %3207 = vmatpush.bf16.msra.mxu0 %v1598
    %3208 = vmatpush.bf16.msra.mxu0 %v1594
    %3209 = vmatmul.bf16.gmra.mxu0 %v3187
    %v3210 = vpop.f32.mrf.mxu0
    %v3211 = vadd.f32 0.0, %v3210
    %v3212 = vpop.f32.mrf.mxu0
    %3213 = vdwg.mxu0
    %3214 = vmatpush.bf16.msra.mxu0 %v1623
    %3215 = vmatpush.bf16.msra.mxu0 %v1619
    %3216 = vmatpush.bf16.msra.mxu0 %v1615
    %3217 = vmatpush.bf16.msra.mxu0 %v1611
    %3218 = vmatpush.bf16.msra.mxu0 %v1607
    %3219 = vmatpush.bf16.msra.mxu0 %v1603
    %3220 = vmatpush.bf16.msra.mxu0 %v1599
    %3221 = vmatpush.bf16.msra.mxu0 %v1595
    %3222 = vmatmul.bf16.gmra.mxu0 %v3187
    %v3223 = vpop.f32.mrf.mxu0
    %v3224 = vadd.f32 0.0, %v3223
    %v3225 = vpop.f32.mrf.mxu0
    %3226 = vdwg.mxu0
    %3227 = vmatpush.bf16.msra.mxu0 %v1624
    %3228 = vmatpush.bf16.msra.mxu0 %v1620
    %3229 = vmatpush.bf16.msra.mxu0 %v1616
    %3230 = vmatpush.bf16.msra.mxu0 %v1612
    %3231 = vmatpush.bf16.msra.mxu0 %v1608
    %3232 = vmatpush.bf16.msra.mxu0 %v1604
    %3233 = vmatpush.bf16.msra.mxu0 %v1600
    %3234 = vmatpush.bf16.msra.mxu0 %v1596
    %3235 = vmatmul.bf16.gmra.mxu0 %v3187
    %v3236 = vpop.f32.mrf.mxu0
    %v3237 = vadd.f32 0.0, %v3236
    %v3238 = vpop.f32.mrf.mxu0
    %3239 = vdwg.mxu0
    %v3240 = vadd.f32 %v3183, %v3198
    %v3241 = vadd.f32 %v3184, %v3211
    %v3242 = vadd.f32 %v3185, %v3224
    %v3243 = vadd.f32 %v3186, %v3237
    %v3244 = vxor.u32 %v3240, 2147483648
    %v3245 = vmul.f32 %v3244, 1.442695
    %v3246 = vpow.pop %v3245
    %v3247 = vadd.f32 %v3246, 1.0
    %v3248 = vrcp.pop %v3247
    %v3249 = vmul.f32 %v3247, %v3248
    %v3250 = vsub.f32 1.0, %v3249
    %v3251 = vmul.f32 %v3248, %v3250
    %v3252 = vadd.f32 %v3248, %v3251
    %vm3253 = vweird.f32 %v3247
    %vm3254 = vweird.f32 %v3248
    %vm3255 = vmor %vm3253, %vm3254
    %v3256 = vsel %vm3255, %v3248, %v3252
    %v3257 = vand.u32 2147483647, %v3247
    %vm3258 = vcmp.eq.f32.partialorder %v3257, 8.507059e+37
    %v3259 = vand.u32 %v3247, 2147483648
    %v3260 = vor.u32 1.1754944e-38, %v3259
    %v3261 = vsel %vm3258, %v3260, %v3256
    %v3262 = vmul.f32 1.0, %v3261
    %v3263 = vxor.u32 %v3241, 2147483648
    %v3264 = vmul.f32 %v3263, 1.442695
    %v3265 = vpow.pop %v3264
    %v3266 = vadd.f32 %v3265, 1.0
    %v3267 = vrcp.pop %v3266
    %v3268 = vmul.f32 %v3266, %v3267
    %v3269 = vsub.f32 1.0, %v3268
    %v3270 = vmul.f32 %v3267, %v3269
    %v3271 = vadd.f32 %v3267, %v3270
    %vm3272 = vweird.f32 %v3266
    %vm3273 = vweird.f32 %v3267
    %vm3274 = vmor %vm3272, %vm3273
    %v3275 = vsel %vm3274, %v3267, %v3271
    %v3276 = vand.u32 2147483647, %v3266
    %vm3277 = vcmp.eq.f32.partialorder %v3276, 8.507059e+37
    %v3278 = vand.u32 %v3266, 2147483648
    %v3279 = vor.u32 1.1754944e-38, %v3278
    %v3280 = vsel %vm3277, %v3279, %v3275
    %v3281 = vmul.f32 1.0, %v3280
    %v3282 = vtanh.pop %v3242
    %v3283 = vxor.u32 %v3243, 2147483648
    %v3284 = vmul.f32 %v3283, 1.442695
    %v3285 = vpow.pop %v3284
    %v3286 = vadd.f32 %v3285, 1.0
    %v3287 = vrcp.pop %v3286
    %v3288 = vmul.f32 %v3286, %v3287
    %v3289 = vsub.f32 1.0, %v3288
    %v3290 = vmul.f32 %v3287, %v3289
    %v3291 = vadd.f32 %v3287, %v3290
    %vm3292 = vweird.f32 %v3286
    %vm3293 = vweird.f32 %v3287
    %vm3294 = vmor %vm3292, %vm3293
    %v3295 = vsel %vm3294, %v3287, %v3291
    %v3296 = vand.u32 2147483647, %v3286
    %vm3297 = vcmp.eq.f32.partialorder %v3296, 8.507059e+37
    %v3298 = vand.u32 %v3286, 2147483648
    %v3299 = vor.u32 1.1754944e-38, %v3298
    %v3300 = vsel %vm3297, %v3299, %v3295
    %v3301 = vmul.f32 1.0, %v3300
    %v3302 = vmul.f32 %v3281, %v3045
    %v3303 = vmul.f32 %v3262, %v3282
    %v3304 = vadd.f32 %v3302, %v3303
    %v3305 = vtanh.pop %v3304
    %v3306 = vmul.f32 %v3301, %v3305
    %v3307 = vsel %vm3182, 1, 0
    %3308 = vset.pattern.permute.xlu0 0
    %3309 = vperm.xlu0 %3308, %v3307
    %v3310 = vpop.permute.xlu0 %3309
    %vm3311 = vcmp.eq.s32.totalorder %v3310, 1
    %v3312 = vsel %vm3311, %v3306, 0.0
    %3313 = vst [vmem:[%s2631] sm:$0xff] %v3312
    %v3314 = vsel %vm3311, %v3306, %v3044
    %v3315 = vsel %vm3311, %v3304, %v3045
    %v3316 = vld [vmem:[%s2359] sm:$0xff]
    %vm3317 = vcmp.ne.s32.totalorder %v3316, 0
    %v3318 = vld [vmem:[%s2362 + $0x20] sm:$0xff]
    %v3319 = vld [vmem:[%s2362 + $0x28] sm:$0xff]
    %v3320 = vld [vmem:[%s2362 + $0x30] sm:$0xff]
    %v3321 = vld [vmem:[%s2362 + $0x38] sm:$0xff]
    %v3322 = vpack.c.bf16 %v3179, %v3179
    %3323 = vmatpush.bf16.msra.mxu0 %v1918
    %3324 = vmatpush.bf16.msra.mxu0 %v1914
    %3325 = vmatpush.bf16.msra.mxu0 %v1910
    %3326 = vmatpush.bf16.msra.mxu0 %v1906
    %3327 = vmatpush.bf16.msra.mxu0 %v1902
    %3328 = vmatpush.bf16.msra.mxu0 %v1898
    %3329 = vmatpush.bf16.msra.mxu0 %v1894
    %3330 = vmatpush.bf16.msra.mxu0 %v1890
    %3331 = vmatmul.bf16.gmra.mxu0 %v3322
    %v3332 = vpop.f32.mrf.mxu0
    %v3333 = vadd.f32 0.0, %v3332
    %v3334 = vpop.f32.mrf.mxu0
    %3335 = vdwg.mxu0
    %3336 = vmatpush.bf16.msra.mxu0 %v1919
    %3337 = vmatpush.bf16.msra.mxu0 %v1915
    %3338 = vmatpush.bf16.msra.mxu0 %v1911
    %3339 = vmatpush.bf16.msra.mxu0 %v1907
    %3340 = vmatpush.bf16.msra.mxu0 %v1903
    %3341 = vmatpush.bf16.msra.mxu0 %v1899
    %3342 = vmatpush.bf16.msra.mxu0 %v1895
    %3343 = vmatpush.bf16.msra.mxu0 %v1891
    %3344 = vmatmul.bf16.gmra.mxu0 %v3322
    %v3345 = vpop.f32.mrf.mxu0
    %v3346 = vadd.f32 0.0, %v3345
    %v3347 = vpop.f32.mrf.mxu0
    %3348 = vdwg.mxu0
    %3349 = vmatpush.bf16.msra.mxu0 %v1920
    %3350 = vmatpush.bf16.msra.mxu0 %v1916
    %3351 = vmatpush.bf16.msra.mxu0 %v1912
    %3352 = vmatpush.bf16.msra.mxu0 %v1908
    %3353 = vmatpush.bf16.msra.mxu0 %v1904
    %3354 = vmatpush.bf16.msra.mxu0 %v1900
    %3355 = vmatpush.bf16.msra.mxu0 %v1896
    %3356 = vmatpush.bf16.msra.mxu0 %v1892
    %3357 = vmatmul.bf16.gmra.mxu0 %v3322
    %v3358 = vpop.f32.mrf.mxu0
    %v3359 = vadd.f32 0.0, %v3358
    %v3360 = vpop.f32.mrf.mxu0
    %3361 = vdwg.mxu0
    %3362 = vmatpush.bf16.msra.mxu0 %v1921
    %3363 = vmatpush.bf16.msra.mxu0 %v1917
    %3364 = vmatpush.bf16.msra.mxu0 %v1913
    %3365 = vmatpush.bf16.msra.mxu0 %v1909
    %3366 = vmatpush.bf16.msra.mxu0 %v1905
    %3367 = vmatpush.bf16.msra.mxu0 %v1901
    %3368 = vmatpush.bf16.msra.mxu0 %v1897
    %3369 = vmatpush.bf16.msra.mxu0 %v1893
    %3370 = vmatmul.bf16.gmra.mxu0 %v3322
    %v3371 = vpop.f32.mrf.mxu0
    %v3372 = vadd.f32 0.0, %v3371
    %v3373 = vpop.f32.mrf.mxu0
    %3374 = vdwg.mxu0
    %v3375 = vadd.f32 %v3318, %v3333
    %v3376 = vadd.f32 %v3319, %v3346
    %v3377 = vadd.f32 %v3320, %v3359
    %v3378 = vadd.f32 %v3321, %v3372
    %v3379 = vxor.u32 %v3375, 2147483648
    %v3380 = vmul.f32 %v3379, 1.442695
    %v3381 = vpow.pop %v3380
    %v3382 = vadd.f32 %v3381, 1.0
    %v3383 = vrcp.pop %v3382
    %v3384 = vmul.f32 %v3382, %v3383
    %v3385 = vsub.f32 1.0, %v3384
    %v3386 = vmul.f32 %v3383, %v3385
    %v3387 = vadd.f32 %v3383, %v3386
    %vm3388 = vweird.f32 %v3382
    %vm3389 = vweird.f32 %v3383
    %vm3390 = vmor %vm3388, %vm3389
    %v3391 = vsel %vm3390, %v3383, %v3387
    %v3392 = vand.u32 2147483647, %v3382
    %vm3393 = vcmp.eq.f32.partialorder %v3392, 8.507059e+37
    %v3394 = vand.u32 %v3382, 2147483648
    %v3395 = vor.u32 1.1754944e-38, %v3394
    %v3396 = vsel %vm3393, %v3395, %v3391
    %v3397 = vmul.f32 1.0, %v3396
    %v3398 = vxor.u32 %v3376, 2147483648
    %v3399 = vmul.f32 %v3398, 1.442695
    %v3400 = vpow.pop %v3399
    %v3401 = vadd.f32 %v3400, 1.0
    %v3402 = vrcp.pop %v3401
    %v3403 = vmul.f32 %v3401, %v3402
    %v3404 = vsub.f32 1.0, %v3403
    %v3405 = vmul.f32 %v3402, %v3404
    %v3406 = vadd.f32 %v3402, %v3405
    %vm3407 = vweird.f32 %v3401
    %vm3408 = vweird.f32 %v3402
    %vm3409 = vmor %vm3407, %vm3408
    %v3410 = vsel %vm3409, %v3402, %v3406
    %v3411 = vand.u32 2147483647, %v3401
    %vm3412 = vcmp.eq.f32.partialorder %v3411, 8.507059e+37
    %v3413 = vand.u32 %v3401, 2147483648
    %v3414 = vor.u32 1.1754944e-38, %v3413
    %v3415 = vsel %vm3412, %v3414, %v3410
    %v3416 = vmul.f32 1.0, %v3415
    %v3417 = vtanh.pop %v3377
    %v3418 = vxor.u32 %v3378, 2147483648
    %v3419 = vmul.f32 %v3418, 1.442695
    %v3420 = vpow.pop %v3419
    %v3421 = vadd.f32 %v3420, 1.0
    %v3422 = vrcp.pop %v3421
    %v3423 = vmul.f32 %v3421, %v3422
    %v3424 = vsub.f32 1.0, %v3423
    %v3425 = vmul.f32 %v3422, %v3424
    %v3426 = vadd.f32 %v3422, %v3425
    %vm3427 = vweird.f32 %v3421
    %vm3428 = vweird.f32 %v3422
    %vm3429 = vmor %vm3427, %vm3428
    %v3430 = vsel %vm3429, %v3422, %v3426
    %v3431 = vand.u32 2147483647, %v3421
    %vm3432 = vcmp.eq.f32.partialorder %v3431, 8.507059e+37
    %v3433 = vand.u32 %v3421, 2147483648
    %v3434 = vor.u32 1.1754944e-38, %v3433
    %v3435 = vsel %vm3432, %v3434, %v3430
    %v3436 = vmul.f32 1.0, %v3435
    %v3437 = vmul.f32 %v3416, %v3180
    %v3438 = vmul.f32 %v3397, %v3417
    %v3439 = vadd.f32 %v3437, %v3438
    %v3440 = vtanh.pop %v3439
    %v3441 = vmul.f32 %v3436, %v3440
    %v3442 = vsel %vm3317, 1, 0
    %3443 = vset.pattern.permute.xlu0 0
    %3444 = vperm.xlu0 %3443, %v3442
    %v3445 = vpop.permute.xlu0 %3444
    %vm3446 = vcmp.eq.s32.totalorder %v3445, 1
    %v3447 = vsel %vm3446, %v3441, 0.0
    %3448 = vst [vmem:[%s2493 + $0x8] sm:$0xff] %v3447
    %v3449 = vsel %vm3446, %v3441, %v3179
    %v3450 = vsel %vm3446, %v3439, %v3180
    %v3451 = vld [vmem:[%s2221] sm:$0xff]
    %vm3452 = vcmp.ne.s32.totalorder %v3451, 0
    %v3453 = vld [vmem:[%s2224] sm:$0xff]
    %v3454 = vld [vmem:[%s2224 + $0x8] sm:$0xff]
    %v3455 = vld [vmem:[%s2224 + $0x10] sm:$0xff]
    %v3456 = vld [vmem:[%s2224 + $0x18] sm:$0xff]
    %v3457 = vpack.c.bf16 %v3314, %v3314
    %3458 = vmatpush.bf16.msra.mxu0 %v1621
    %3459 = vmatpush.bf16.msra.mxu0 %v1617
    %3460 = vmatpush.bf16.msra.mxu0 %v1613
    %3461 = vmatpush.bf16.msra.mxu0 %v1609
    %3462 = vmatpush.bf16.msra.mxu0 %v1605
    %3463 = vmatpush.bf16.msra.mxu0 %v1601
    %3464 = vmatpush.bf16.msra.mxu0 %v1597
    %3465 = vmatpush.bf16.msra.mxu0 %v1593
    %3466 = vmatmul.bf16.gmra.mxu0 %v3457
    %v3467 = vpop.f32.mrf.mxu0
    %v3468 = vadd.f32 0.0, %v3467
    %v3469 = vpop.f32.mrf.mxu0
    %3470 = vdwg.mxu0
    %3471 = vmatpush.bf16.msra.mxu0 %v1622
    %3472 = vmatpush.bf16.msra.mxu0 %v1618
    %3473 = vmatpush.bf16.msra.mxu0 %v1614
    %3474 = vmatpush.bf16.msra.mxu0 %v1610
    %3475 = vmatpush.bf16.msra.mxu0 %v1606
    %3476 = vmatpush.bf16.msra.mxu0 %v1602
    %3477 = vmatpush.bf16.msra.mxu0 %v1598
    %3478 = vmatpush.bf16.msra.mxu0 %v1594
    %3479 = vmatmul.bf16.gmra.mxu0 %v3457
    %v3480 = vpop.f32.mrf.mxu0
    %v3481 = vadd.f32 0.0, %v3480
    %v3482 = vpop.f32.mrf.mxu0
    %3483 = vdwg.mxu0
    %3484 = vmatpush.bf16.msra.mxu0 %v1623
    %3485 = vmatpush.bf16.msra.mxu0 %v1619
    %3486 = vmatpush.bf16.msra.mxu0 %v1615
    %3487 = vmatpush.bf16.msra.mxu0 %v1611
    %3488 = vmatpush.bf16.msra.mxu0 %v1607
    %3489 = vmatpush.bf16.msra.mxu0 %v1603
    %3490 = vmatpush.bf16.msra.mxu0 %v1599
    %3491 = vmatpush.bf16.msra.mxu0 %v1595
    %3492 = vmatmul.bf16.gmra.mxu0 %v3457
    %v3493 = vpop.f32.mrf.mxu0
    %v3494 = vadd.f32 0.0, %v3493
    %v3495 = vpop.f32.mrf.mxu0
    %3496 = vdwg.mxu0
    %3497 = vmatpush.bf16.msra.mxu0 %v1624
    %3498 = vmatpush.bf16.msra.mxu0 %v1620
    %3499 = vmatpush.bf16.msra.mxu0 %v1616
    %3500 = vmatpush.bf16.msra.mxu0 %v1612
    %3501 = vmatpush.bf16.msra.mxu0 %v1608
    %3502 = vmatpush.bf16.msra.mxu0 %v1604
    %3503 = vmatpush.bf16.msra.mxu0 %v1600
    %3504 = vmatpush.bf16.msra.mxu0 %v1596
    %3505 = vmatmul.bf16.gmra.mxu0 %v3457
    %v3506 = vpop.f32.mrf.mxu0
    %v3507 = vadd.f32 0.0, %v3506
    %v3508 = vpop.f32.mrf.mxu0
    %3509 = vdwg.mxu0
    %v3510 = vadd.f32 %v3453, %v3468
    %v3511 = vadd.f32 %v3454, %v3481
    %v3512 = vadd.f32 %v3455, %v3494
    %v3513 = vadd.f32 %v3456, %v3507
    %v3514 = vxor.u32 %v3510, 2147483648
    %v3515 = vmul.f32 %v3514, 1.442695
    %v3516 = vpow.pop %v3515
    %v3517 = vadd.f32 %v3516, 1.0
    %v3518 = vrcp.pop %v3517
    %v3519 = vmul.f32 %v3517, %v3518
    %v3520 = vsub.f32 1.0, %v3519
    %v3521 = vmul.f32 %v3518, %v3520
    %v3522 = vadd.f32 %v3518, %v3521
    %vm3523 = vweird.f32 %v3517
    %vm3524 = vweird.f32 %v3518
    %vm3525 = vmor %vm3523, %vm3524
    %v3526 = vsel %vm3525, %v3518, %v3522
    %v3527 = vand.u32 2147483647, %v3517
    %vm3528 = vcmp.eq.f32.partialorder %v3527, 8.507059e+37
    %v3529 = vand.u32 %v3517, 2147483648
    %v3530 = vor.u32 1.1754944e-38, %v3529
    %v3531 = vsel %vm3528, %v3530, %v3526
    %v3532 = vmul.f32 1.0, %v3531
    %v3533 = vxor.u32 %v3511, 2147483648
    %v3534 = vmul.f32 %v3533, 1.442695
    %v3535 = vpow.pop %v3534
    %v3536 = vadd.f32 %v3535, 1.0
    %v3537 = vrcp.pop %v3536
    %v3538 = vmul.f32 %v3536, %v3537
    %v3539 = vsub.f32 1.0, %v3538
    %v3540 = vmul.f32 %v3537, %v3539
    %v3541 = vadd.f32 %v3537, %v3540
    %vm3542 = vweird.f32 %v3536
    %vm3543 = vweird.f32 %v3537
    %vm3544 = vmor %vm3542, %vm3543
    %v3545 = vsel %vm3544, %v3537, %v3541
    %v3546 = vand.u32 2147483647, %v3536
    %vm3547 = vcmp.eq.f32.partialorder %v3546, 8.507059e+37
    %v3548 = vand.u32 %v3536, 2147483648
    %v3549 = vor.u32 1.1754944e-38, %v3548
    %v3550 = vsel %vm3547, %v3549, %v3545
    %v3551 = vmul.f32 1.0, %v3550
    %v3552 = vtanh.pop %v3512
    %v3553 = vxor.u32 %v3513, 2147483648
    %v3554 = vmul.f32 %v3553, 1.442695
    %v3555 = vpow.pop %v3554
    %v3556 = vadd.f32 %v3555, 1.0
    %v3557 = vrcp.pop %v3556
    %v3558 = vmul.f32 %v3556, %v3557
    %v3559 = vsub.f32 1.0, %v3558
    %v3560 = vmul.f32 %v3557, %v3559
    %v3561 = vadd.f32 %v3557, %v3560
    %vm3562 = vweird.f32 %v3556
    %vm3563 = vweird.f32 %v3557
    %vm3564 = vmor %vm3562, %vm3563
    %v3565 = vsel %vm3564, %v3557, %v3561
    %v3566 = vand.u32 2147483647, %v3556
    %vm3567 = vcmp.eq.f32.partialorder %v3566, 8.507059e+37
    %v3568 = vand.u32 %v3556, 2147483648
    %v3569 = vor.u32 1.1754944e-38, %v3568
    %v3570 = vsel %vm3567, %v3569, %v3565
    %v3571 = vmul.f32 1.0, %v3570
    %v3572 = vmul.f32 %v3551, %v3315
    %v3573 = vmul.f32 %v3532, %v3552
    %v3574 = vadd.f32 %v3572, %v3573
    %v3575 = vtanh.pop %v3574
    %v3576 = vmul.f32 %v3571, %v3575
    %v3577 = vsel %vm3452, 1, 0
    %3578 = vset.pattern.permute.xlu0 0
    %3579 = vperm.xlu0 %3578, %v3577
    %v3580 = vpop.permute.xlu0 %3579
    %vm3581 = vcmp.eq.s32.totalorder %v3580, 1
    %v3582 = vsel %vm3581, %v3576, 0.0
    %3583 = vst [vmem:[%s2355] sm:$0xff] %v3582
    %v3584 = vsel %vm3581, %v3576, %v3314
    %v3585 = vsel %vm3581, %v3574, %v3315
    %v3586 = vld [vmem:[%s2083] sm:$0xff]
    %vm3587 = vcmp.ne.s32.totalorder %v3586, 0
    %v3588 = vld [vmem:[%s2086 + $0x20] sm:$0xff]
    %v3589 = vld [vmem:[%s2086 + $0x28] sm:$0xff]
    %v3590 = vld [vmem:[%s2086 + $0x30] sm:$0xff]
    %v3591 = vld [vmem:[%s2086 + $0x38] sm:$0xff]
    %v3592 = vpack.c.bf16 %v3449, %v3449
    %3593 = vmatpush.bf16.msra.mxu0 %v1918
    %3594 = vmatpush.bf16.msra.mxu0 %v1914
    %3595 = vmatpush.bf16.msra.mxu0 %v1910
    %3596 = vmatpush.bf16.msra.mxu0 %v1906
    %3597 = vmatpush.bf16.msra.mxu0 %v1902
    %3598 = vmatpush.bf16.msra.mxu0 %v1898
    %3599 = vmatpush.bf16.msra.mxu0 %v1894
    %3600 = vmatpush.bf16.msra.mxu0 %v1890
    %3601 = vmatmul.bf16.gmra.mxu0 %v3592
    %v3602 = vpop.f32.mrf.mxu0
    %v3603 = vadd.f32 0.0, %v3602
    %v3604 = vpop.f32.mrf.mxu0
    %3605 = vdwg.mxu0
    %3606 = vmatpush.bf16.msra.mxu0 %v1919
    %3607 = vmatpush.bf16.msra.mxu0 %v1915
    %3608 = vmatpush.bf16.msra.mxu0 %v1911
    %3609 = vmatpush.bf16.msra.mxu0 %v1907
    %3610 = vmatpush.bf16.msra.mxu0 %v1903
    %3611 = vmatpush.bf16.msra.mxu0 %v1899
    %3612 = vmatpush.bf16.msra.mxu0 %v1895
    %3613 = vmatpush.bf16.msra.mxu0 %v1891
    %3614 = vmatmul.bf16.gmra.mxu0 %v3592
    %v3615 = vpop.f32.mrf.mxu0
    %v3616 = vadd.f32 0.0, %v3615
    %v3617 = vpop.f32.mrf.mxu0
    %3618 = vdwg.mxu0
    %3619 = vmatpush.bf16.msra.mxu0 %v1920
    %3620 = vmatpush.bf16.msra.mxu0 %v1916
    %3621 = vmatpush.bf16.msra.mxu0 %v1912
    %3622 = vmatpush.bf16.msra.mxu0 %v1908
    %3623 = vmatpush.bf16.msra.mxu0 %v1904
    %3624 = vmatpush.bf16.msra.mxu0 %v1900
    %3625 = vmatpush.bf16.msra.mxu0 %v1896
    %3626 = vmatpush.bf16.msra.mxu0 %v1892
    %3627 = vmatmul.bf16.gmra.mxu0 %v3592
    %v3628 = vpop.f32.mrf.mxu0
    %v3629 = vadd.f32 0.0, %v3628
    %v3630 = vpop.f32.mrf.mxu0
    %3631 = vdwg.mxu0
    %3632 = vmatpush.bf16.msra.mxu0 %v1921
    %3633 = vmatpush.bf16.msra.mxu0 %v1917
    %3634 = vmatpush.bf16.msra.mxu0 %v1913
    %3635 = vmatpush.bf16.msra.mxu0 %v1909
    %3636 = vmatpush.bf16.msra.mxu0 %v1905
    %3637 = vmatpush.bf16.msra.mxu0 %v1901
    %3638 = vmatpush.bf16.msra.mxu0 %v1897
    %3639 = vmatpush.bf16.msra.mxu0 %v1893
    %3640 = vmatmul.bf16.gmra.mxu0 %v3592
    %v3641 = vpop.f32.mrf.mxu0
    %v3642 = vadd.f32 0.0, %v3641
    %v3643 = vpop.f32.mrf.mxu0
    %3644 = vdwg.mxu0
    %v3645 = vadd.f32 %v3588, %v3603
    %v3646 = vadd.f32 %v3589, %v3616
    %v3647 = vadd.f32 %v3590, %v3629
    %v3648 = vadd.f32 %v3591, %v3642
    %v3649 = vxor.u32 %v3645, 2147483648
    %v3650 = vmul.f32 %v3649, 1.442695
    %v3651 = vpow.pop %v3650
    %v3652 = vadd.f32 %v3651, 1.0
    %v3653 = vrcp.pop %v3652
    %v3654 = vmul.f32 %v3652, %v3653
    %v3655 = vsub.f32 1.0, %v3654
    %v3656 = vmul.f32 %v3653, %v3655
    %v3657 = vadd.f32 %v3653, %v3656
    %vm3658 = vweird.f32 %v3652
    %vm3659 = vweird.f32 %v3653
    %vm3660 = vmor %vm3658, %vm3659
    %v3661 = vsel %vm3660, %v3653, %v3657
    %v3662 = vand.u32 2147483647, %v3652
    %vm3663 = vcmp.eq.f32.partialorder %v3662, 8.507059e+37
    %v3664 = vand.u32 %v3652, 2147483648
    %v3665 = vor.u32 1.1754944e-38, %v3664
    %v3666 = vsel %vm3663, %v3665, %v3661
    %v3667 = vmul.f32 1.0, %v3666
    %v3668 = vxor.u32 %v3646, 2147483648
    %v3669 = vmul.f32 %v3668, 1.442695
    %v3670 = vpow.pop %v3669
    %v3671 = vadd.f32 %v3670, 1.0
    %v3672 = vrcp.pop %v3671
    %v3673 = vmul.f32 %v3671, %v3672
    %v3674 = vsub.f32 1.0, %v3673
    %v3675 = vmul.f32 %v3672, %v3674
    %v3676 = vadd.f32 %v3672, %v3675
    %vm3677 = vweird.f32 %v3671
    %vm3678 = vweird.f32 %v3672
    %vm3679 = vmor %vm3677, %vm3678
    %v3680 = vsel %vm3679, %v3672, %v3676
    %v3681 = vand.u32 2147483647, %v3671
    %vm3682 = vcmp.eq.f32.partialorder %v3681, 8.507059e+37
    %v3683 = vand.u32 %v3671, 2147483648
    %v3684 = vor.u32 1.1754944e-38, %v3683
    %v3685 = vsel %vm3682, %v3684, %v3680
    %v3686 = vmul.f32 1.0, %v3685
    %v3687 = vtanh.pop %v3647
    %v3688 = vxor.u32 %v3648, 2147483648
    %v3689 = vmul.f32 %v3688, 1.442695
    %v3690 = vpow.pop %v3689
    %v3691 = vadd.f32 %v3690, 1.0
    %v3692 = vrcp.pop %v3691
    %v3693 = vmul.f32 %v3691, %v3692
    %v3694 = vsub.f32 1.0, %v3693
    %v3695 = vmul.f32 %v3692, %v3694
    %v3696 = vadd.f32 %v3692, %v3695
    %vm3697 = vweird.f32 %v3691
    %vm3698 = vweird.f32 %v3692
    %vm3699 = vmor %vm3697, %vm3698
    %v3700 = vsel %vm3699, %v3692, %v3696
    %v3701 = vand.u32 2147483647, %v3691
    %vm3702 = vcmp.eq.f32.partialorder %v3701, 8.507059e+37
    %v3703 = vand.u32 %v3691, 2147483648
    %v3704 = vor.u32 1.1754944e-38, %v3703
    %v3705 = vsel %vm3702, %v3704, %v3700
    %v3706 = vmul.f32 1.0, %v3705
    %v3707 = vmul.f32 %v3686, %v3450
    %v3708 = vmul.f32 %v3667, %v3687
    %v3709 = vadd.f32 %v3707, %v3708
    %v3710 = vtanh.pop %v3709
    %v3711 = vmul.f32 %v3706, %v3710
    %v3712 = vsel %vm3587, 1, 0
    %3713 = vset.pattern.permute.xlu0 0
    %3714 = vperm.xlu0 %3713, %v3712
    %v3715 = vpop.permute.xlu0 %3714
    %vm3716 = vcmp.eq.s32.totalorder %v3715, 1
    %v3717 = vsel %vm3716, %v3711, 0.0
    %3718 = vst [vmem:[%s2217 + $0x8] sm:$0xff] %v3717
    %v3719 = vsel %vm3716, %v3711, %v3449
    %v3720 = vsel %vm3716, %v3709, %v3450
    %v3721 = vld [vmem:[%s1785] sm:$0xff]
    %vm3722 = vcmp.ne.s32.totalorder %v3721, 0
    %v3723 = vld [vmem:[%s1788] sm:$0xff]
    %v3724 = vld [vmem:[%s1788 + $0x8] sm:$0xff]
    %v3725 = vld [vmem:[%s1788 + $0x10] sm:$0xff]
    %v3726 = vld [vmem:[%s1788 + $0x18] sm:$0xff]
    %v3727 = vpack.c.bf16 %v3584, %v3584
    %3728 = vmatpush.bf16.msra.mxu0 %v1621
    %3729 = vmatpush.bf16.msra.mxu0 %v1617
    %3730 = vmatpush.bf16.msra.mxu0 %v1613
    %3731 = vmatpush.bf16.msra.mxu0 %v1609
    %3732 = vmatpush.bf16.msra.mxu0 %v1605
    %3733 = vmatpush.bf16.msra.mxu0 %v1601
    %3734 = vmatpush.bf16.msra.mxu0 %v1597
    %3735 = vmatpush.bf16.msra.mxu0 %v1593
    %3736 = vmatmul.bf16.gmra.mxu0 %v3727
    %v3737 = vpop.f32.mrf.mxu0
    %v3738 = vadd.f32 0.0, %v3737
    %v3739 = vpop.f32.mrf.mxu0
    %3740 = vdwg.mxu0
    %3741 = vmatpush.bf16.msra.mxu0 %v1622
    %3742 = vmatpush.bf16.msra.mxu0 %v1618
    %3743 = vmatpush.bf16.msra.mxu0 %v1614
    %3744 = vmatpush.bf16.msra.mxu0 %v1610
    %3745 = vmatpush.bf16.msra.mxu0 %v1606
    %3746 = vmatpush.bf16.msra.mxu0 %v1602
    %3747 = vmatpush.bf16.msra.mxu0 %v1598
    %3748 = vmatpush.bf16.msra.mxu0 %v1594
    %3749 = vmatmul.bf16.gmra.mxu0 %v3727
    %v3750 = vpop.f32.mrf.mxu0
    %v3751 = vadd.f32 0.0, %v3750
    %v3752 = vpop.f32.mrf.mxu0
    %3753 = vdwg.mxu0
    %3754 = vmatpush.bf16.msra.mxu0 %v1623
    %3755 = vmatpush.bf16.msra.mxu0 %v1619
    %3756 = vmatpush.bf16.msra.mxu0 %v1615
    %3757 = vmatpush.bf16.msra.mxu0 %v1611
    %3758 = vmatpush.bf16.msra.mxu0 %v1607
    %3759 = vmatpush.bf16.msra.mxu0 %v1603
    %3760 = vmatpush.bf16.msra.mxu0 %v1599
    %3761 = vmatpush.bf16.msra.mxu0 %v1595
    %3762 = vmatmul.bf16.gmra.mxu0 %v3727
    %v3763 = vpop.f32.mrf.mxu0
    %v3764 = vadd.f32 0.0, %v3763
    %v3765 = vpop.f32.mrf.mxu0
    %3766 = vdwg.mxu0
    %3767 = vmatpush.bf16.msra.mxu0 %v1624
    %3768 = vmatpush.bf16.msra.mxu0 %v1620
    %3769 = vmatpush.bf16.msra.mxu0 %v1616
    %3770 = vmatpush.bf16.msra.mxu0 %v1612
    %3771 = vmatpush.bf16.msra.mxu0 %v1608
    %3772 = vmatpush.bf16.msra.mxu0 %v1604
    %3773 = vmatpush.bf16.msra.mxu0 %v1600
    %3774 = vmatpush.bf16.msra.mxu0 %v1596
    %3775 = vmatmul.bf16.gmra.mxu0 %v3727
    %v3776 = vpop.f32.mrf.mxu0
    %v3777 = vadd.f32 0.0, %v3776
    %v3778 = vpop.f32.mrf.mxu0
    %3779 = vdwg.mxu0
    %v3780 = vadd.f32 %v3723, %v3738
    %v3781 = vadd.f32 %v3724, %v3751
    %v3782 = vadd.f32 %v3725, %v3764
    %v3783 = vadd.f32 %v3726, %v3777
    %v3784 = vxor.u32 %v3780, 2147483648
    %v3785 = vmul.f32 %v3784, 1.442695
    %v3786 = vpow.pop %v3785
    %v3787 = vadd.f32 %v3786, 1.0
    %v3788 = vrcp.pop %v3787
    %v3789 = vmul.f32 %v3787, %v3788
    %v3790 = vsub.f32 1.0, %v3789
    %v3791 = vmul.f32 %v3788, %v3790
    %v3792 = vadd.f32 %v3788, %v3791
    %vm3793 = vweird.f32 %v3787
    %vm3794 = vweird.f32 %v3788
    %vm3795 = vmor %vm3793, %vm3794
    %v3796 = vsel %vm3795, %v3788, %v3792
    %v3797 = vand.u32 2147483647, %v3787
    %vm3798 = vcmp.eq.f32.partialorder %v3797, 8.507059e+37
    %v3799 = vand.u32 %v3787, 2147483648
    %v3800 = vor.u32 1.1754944e-38, %v3799
    %v3801 = vsel %vm3798, %v3800, %v3796
    %v3802 = vmul.f32 1.0, %v3801
    %v3803 = vxor.u32 %v3781, 2147483648
    %v3804 = vmul.f32 %v3803, 1.442695
    %v3805 = vpow.pop %v3804
    %v3806 = vadd.f32 %v3805, 1.0
    %v3807 = vrcp.pop %v3806
    %v3808 = vmul.f32 %v3806, %v3807
    %v3809 = vsub.f32 1.0, %v3808
    %v3810 = vmul.f32 %v3807, %v3809
    %v3811 = vadd.f32 %v3807, %v3810
    %vm3812 = vweird.f32 %v3806
    %vm3813 = vweird.f32 %v3807
    %vm3814 = vmor %vm3812, %vm3813
    %v3815 = vsel %vm3814, %v3807, %v3811
    %v3816 = vand.u32 2147483647, %v3806
    %vm3817 = vcmp.eq.f32.partialorder %v3816, 8.507059e+37
    %v3818 = vand.u32 %v3806, 2147483648
    %v3819 = vor.u32 1.1754944e-38, %v3818
    %v3820 = vsel %vm3817, %v3819, %v3815
    %v3821 = vmul.f32 1.0, %v3820
    %v3822 = vtanh.pop %v3782
    %v3823 = vxor.u32 %v3783, 2147483648
    %v3824 = vmul.f32 %v3823, 1.442695
    %v3825 = vpow.pop %v3824
    %v3826 = vadd.f32 %v3825, 1.0
    %v3827 = vrcp.pop %v3826
    %v3828 = vmul.f32 %v3826, %v3827
    %v3829 = vsub.f32 1.0, %v3828
    %v3830 = vmul.f32 %v3827, %v3829
    %v3831 = vadd.f32 %v3827, %v3830
    %vm3832 = vweird.f32 %v3826
    %vm3833 = vweird.f32 %v3827
    %vm3834 = vmor %vm3832, %vm3833
    %v3835 = vsel %vm3834, %v3827, %v3831
    %v3836 = vand.u32 2147483647, %v3826
    %vm3837 = vcmp.eq.f32.partialorder %v3836, 8.507059e+37
    %v3838 = vand.u32 %v3826, 2147483648
    %v3839 = vor.u32 1.1754944e-38, %v3838
    %v3840 = vsel %vm3837, %v3839, %v3835
    %v3841 = vmul.f32 1.0, %v3840
    %v3842 = vmul.f32 %v3821, %v3585
    %v3843 = vmul.f32 %v3802, %v3822
    %v3844 = vadd.f32 %v3842, %v3843
    %v3845 = vtanh.pop %v3844
    %v3846 = vmul.f32 %v3841, %v3845
    %v3847 = vsel %vm3722, 1, 0
    %3848 = vset.pattern.permute.xlu0 0
    %3849 = vperm.xlu0 %3848, %v3847
    %v3850 = vpop.permute.xlu0 %3849
    %vm3851 = vcmp.eq.s32.totalorder %v3850, 1
    %v3852 = vsel %vm3851, %v3846, 0.0
    %3853 = vst [vmem:[%s2079] sm:$0xff] %v3852
    %v3854 = vld [vmem:[%s7] sm:$0xff]
    %vm3855 = vcmp.ne.s32.totalorder %v3854, 0
    %v3856 = vld [vmem:[#allocation2 + $0x20] sm:$0xff]
    %v3857 = vld [vmem:[#allocation2 + $0x28] sm:$0xff]
    %v3858 = vld [vmem:[#allocation2 + $0x30] sm:$0xff]
    %v3859 = vld [vmem:[#allocation2 + $0x38] sm:$0xff]
    %v3860 = vpack.c.bf16 %v3719, %v3719
    %3861 = vmatpush.bf16.msra.mxu0 %v1918
    %3862 = vmatpush.bf16.msra.mxu0 %v1914
    %3863 = vmatpush.bf16.msra.mxu0 %v1910
    %3864 = vmatpush.bf16.msra.mxu0 %v1906
    %3865 = vmatpush.bf16.msra.mxu0 %v1902
    %3866 = vmatpush.bf16.msra.mxu0 %v1898
    %3867 = vmatpush.bf16.msra.mxu0 %v1894
    %3868 = vmatpush.bf16.msra.mxu0 %v1890
    %3869 = vmatmul.bf16.gmra.mxu0 %v3860
    %v3870 = vpop.f32.mrf.mxu0
    %v3871 = vadd.f32 0.0, %v3870
    %v3872 = vpop.f32.mrf.mxu0
    %3873 = vdwg.mxu0
    %3874 = vmatpush.bf16.msra.mxu0 %v1919
    %3875 = vmatpush.bf16.msra.mxu0 %v1915
    %3876 = vmatpush.bf16.msra.mxu0 %v1911
    %3877 = vmatpush.bf16.msra.mxu0 %v1907
    %3878 = vmatpush.bf16.msra.mxu0 %v1903
    %3879 = vmatpush.bf16.msra.mxu0 %v1899
    %3880 = vmatpush.bf16.msra.mxu0 %v1895
    %3881 = vmatpush.bf16.msra.mxu0 %v1891
    %3882 = vmatmul.bf16.gmra.mxu0 %v3860
    %v3883 = vpop.f32.mrf.mxu0
    %v3884 = vadd.f32 0.0, %v3883
    %v3885 = vpop.f32.mrf.mxu0
    %3886 = vdwg.mxu0
    %3887 = vmatpush.bf16.msra.mxu0 %v1920
    %3888 = vmatpush.bf16.msra.mxu0 %v1916
    %3889 = vmatpush.bf16.msra.mxu0 %v1912
    %3890 = vmatpush.bf16.msra.mxu0 %v1908
    %3891 = vmatpush.bf16.msra.mxu0 %v1904
    %3892 = vmatpush.bf16.msra.mxu0 %v1900
    %3893 = vmatpush.bf16.msra.mxu0 %v1896
    %3894 = vmatpush.bf16.msra.mxu0 %v1892
    %3895 = vmatmul.bf16.gmra.mxu0 %v3860
    %v3896 = vpop.f32.mrf.mxu0
    %v3897 = vadd.f32 0.0, %v3896
    %v3898 = vpop.f32.mrf.mxu0
    %3899 = vdwg.mxu0
    %3900 = vmatpush.bf16.msra.mxu0 %v1921
    %3901 = vmatpush.bf16.msra.mxu0 %v1917
    %3902 = vmatpush.bf16.msra.mxu0 %v1913
    %3903 = vmatpush.bf16.msra.mxu0 %v1909
    %3904 = vmatpush.bf16.msra.mxu0 %v1905
    %3905 = vmatpush.bf16.msra.mxu0 %v1901
    %3906 = vmatpush.bf16.msra.mxu0 %v1897
    %3907 = vmatpush.bf16.msra.mxu0 %v1893
    %3908 = vmatmul.bf16.gmra.mxu0 %v3860
    %v3909 = vpop.f32.mrf.mxu0
    %v3910 = vadd.f32 0.0, %v3909
    %v3911 = vpop.f32.mrf.mxu0
    %3912 = vdwg.mxu0
    %v3913 = vadd.f32 %v3856, %v3871
    %v3914 = vadd.f32 %v3857, %v3884
    %v3915 = vadd.f32 %v3858, %v3897
    %v3916 = vadd.f32 %v3859, %v3910
    %v3917 = vxor.u32 %v3913, 2147483648
    %v3918 = vmul.f32 %v3917, 1.442695
    %v3919 = vpow.pop %v3918
    %v3920 = vadd.f32 %v3919, 1.0
    %v3921 = vrcp.pop %v3920
    %v3922 = vmul.f32 %v3920, %v3921
    %v3923 = vsub.f32 1.0, %v3922
    %v3924 = vmul.f32 %v3921, %v3923
    %v3925 = vadd.f32 %v3921, %v3924
    %vm3926 = vweird.f32 %v3920
    %vm3927 = vweird.f32 %v3921
    %vm3928 = vmor %vm3926, %vm3927
    %v3929 = vsel %vm3928, %v3921, %v3925
    %v3930 = vand.u32 2147483647, %v3920
    %vm3931 = vcmp.eq.f32.partialorder %v3930, 8.507059e+37
    %v3932 = vand.u32 %v3920, 2147483648
    %v3933 = vor.u32 1.1754944e-38, %v3932
    %v3934 = vsel %vm3931, %v3933, %v3929
    %v3935 = vmul.f32 1.0, %v3934
    %v3936 = vxor.u32 %v3914, 2147483648
    %v3937 = vmul.f32 %v3936, 1.442695
    %v3938 = vpow.pop %v3937
    %v3939 = vadd.f32 %v3938, 1.0
    %v3940 = vrcp.pop %v3939
    %v3941 = vmul.f32 %v3939, %v3940
    %v3942 = vsub.f32 1.0, %v3941
    %v3943 = vmul.f32 %v3940, %v3942
    %v3944 = vadd.f32 %v3940, %v3943
    %vm3945 = vweird.f32 %v3939
    %vm3946 = vweird.f32 %v3940
    %vm3947 = vmor %vm3945, %vm3946
    %v3948 = vsel %vm3947, %v3940, %v3944
    %v3949 = vand.u32 2147483647, %v3939
    %vm3950 = vcmp.eq.f32.partialorder %v3949, 8.507059e+37
    %v3951 = vand.u32 %v3939, 2147483648
    %v3952 = vor.u32 1.1754944e-38, %v3951
    %v3953 = vsel %vm3950, %v3952, %v3948
    %v3954 = vmul.f32 1.0, %v3953
    %v3955 = vtanh.pop %v3915
    %v3956 = vxor.u32 %v3916, 2147483648
    %v3957 = vmul.f32 %v3956, 1.442695
    %v3958 = vpow.pop %v3957
    %v3959 = vadd.f32 %v3958, 1.0
    %v3960 = vrcp.pop %v3959
    %v3961 = vmul.f32 %v3959, %v3960
    %v3962 = vsub.f32 1.0, %v3961
    %v3963 = vmul.f32 %v3960, %v3962
    %v3964 = vadd.f32 %v3960, %v3963
    %vm3965 = vweird.f32 %v3959
    %vm3966 = vweird.f32 %v3960
    %vm3967 = vmor %vm3965, %vm3966
    %v3968 = vsel %vm3967, %v3960, %v3964
    %v3969 = vand.u32 2147483647, %v3959
    %vm3970 = vcmp.eq.f32.partialorder %v3969, 8.507059e+37
    %v3971 = vand.u32 %v3959, 2147483648
    %v3972 = vor.u32 1.1754944e-38, %v3971
    %v3973 = vsel %vm3970, %v3972, %v3968
    %v3974 = vmul.f32 1.0, %v3973
    %v3975 = vmul.f32 %v3954, %v3720
    %v3976 = vmul.f32 %v3935, %v3955
    %v3977 = vadd.f32 %v3975, %v3976
    %v3978 = vtanh.pop %v3977
    %v3979 = vmul.f32 %v3974, %v3978
    %v3980 = vsel %vm3855, 1, 0
    %3981 = vset.pattern.permute.xlu0 0
    %3982 = vperm.xlu0 %3981, %v3980
    %v3983 = vpop.permute.xlu0 %3982
    %vm3984 = vcmp.eq.s32.totalorder %v3983, 1
    %v3985 = vsel %vm3984, %v3979, 0.0
    %3986 = vst [vmem:[#allocation3 + $0x8] sm:$0xff] %v3985
    %v3987 = vld [vmem:[#allocation3] sm:$0xff]
    %v3988 = vld [vmem:[#allocation3 + $0x8] sm:$0xff]
    %v3989 = vld [vmem:[#allocation3 + $0x10] sm:$0xff]
    %v3990 = vld [vmem:[#allocation3 + $0x18] sm:$0xff]
    %v3991 = vld [vmem:[#allocation3 + $0x20] sm:$0xff]
    %v3992 = vld [vmem:[#allocation3 + $0x28] sm:$0xff]
    %v3993 = vld [vmem:[#allocation3 + $0x30] sm:$0xff]
    %v3994 = vld [vmem:[#allocation3 + $0x38] sm:$0xff]
    %v3995 = vld [vmem:[#allocation3 + $0x40] sm:$0xff]
    %v3996 = vld [vmem:[#allocation3 + $0x48] sm:$0xff]
    %v3997 = vld [vmem:[#allocation3 + $0x50] sm:$0xff]
    %v3998 = vld [vmem:[#allocation3 + $0x58] sm:$0xff]
    %v3999 = vld [vmem:[#allocation3 + $0x60] sm:$0xff]
    %v4000 = vld [vmem:[#allocation3 + $0x68] sm:$0xff]
    %v4001 = vld [vmem:[#allocation3 + $0x70] sm:$0xff]
    %v4002 = vld [vmem:[#allocation3 + $0x78] sm:$0xff]
    %v4003 = vpack.c.bf16 %v3989, %v3987
    %v4004 = vpack.c.bf16 %v3990, %v3988
    %v4005 = vpack.c.bf16 %v3993, %v3991
    %v4006 = vpack.c.bf16 %v3994, %v3992
    %v4007 = vpack.c.bf16 %v3997, %v3995
    %v4008 = vpack.c.bf16 %v3998, %v3996
    %v4009 = vpack.c.bf16 %v4001, %v3999
    %v4010 = vpack.c.bf16 %v4002, %v4000
    %v4011 = vld [vmem:[#allocation8] sm:$0xf]
    %v4012 = vld [vmem:[#allocation8 + $0x4] sm:$0xf]
    %v4013 = vld [vmem:[#allocation8 + $0x8] sm:$0xf]
    %v4014 = vld [vmem:[#allocation8 + $0xc] sm:$0xf]
    %v4015 = vld [vmem:[#allocation8 + $0x10] sm:$0xf]
    %v4016 = vld [vmem:[#allocation8 + $0x14] sm:$0xf]
    %v4017 = vld [vmem:[#allocation8 + $0x18] sm:$0xf]
    %v4018 = vld [vmem:[#allocation8 + $0x1c] sm:$0xf]
    %v4019 = vld [vmem:[#allocation8 + $0x20] sm:$0xf]
    %v4020 = vld [vmem:[#allocation8 + $0x24] sm:$0xf]
    %v4021 = vld [vmem:[#allocation8 + $0x28] sm:$0xf]
    %v4022 = vld [vmem:[#allocation8 + $0x2c] sm:$0xf]
    %v4023 = vld [vmem:[#allocation8 + $0x30] sm:$0xf]
    %v4024 = vld [vmem:[#allocation8 + $0x34] sm:$0xf]
    %v4025 = vld [vmem:[#allocation8 + $0x38] sm:$0xf]
    %v4026 = vld [vmem:[#allocation8 + $0x3c] sm:$0xf]
    %v4027 = vld [vmem:[#allocation8 + $0x40] sm:$0xf]
    %v4028 = vld [vmem:[#allocation8 + $0x44] sm:$0xf]
    %v4029 = vld [vmem:[#allocation8 + $0x48] sm:$0xf]
    %v4030 = vld [vmem:[#allocation8 + $0x4c] sm:$0xf]
    %v4031 = vld [vmem:[#allocation8 + $0x50] sm:$0xf]
    %v4032 = vld [vmem:[#allocation8 + $0x54] sm:$0xf]
    %v4033 = vld [vmem:[#allocation8 + $0x58] sm:$0xf]
    %v4034 = vld [vmem:[#allocation8 + $0x5c] sm:$0xf]
    %v4035 = vld [vmem:[#allocation8 + $0x60] sm:$0xf]
    %v4036 = vld [vmem:[#allocation8 + $0x64] sm:$0xf]
    %v4037 = vld [vmem:[#allocation8 + $0x68] sm:$0xf]
    %v4038 = vld [vmem:[#allocation8 + $0x6c] sm:$0xf]
    %v4039 = vld [vmem:[#allocation8 + $0x70] sm:$0xf]
    %v4040 = vld [vmem:[#allocation8 + $0x74] sm:$0xf]
    %v4041 = vld [vmem:[#allocation8 + $0x78] sm:$0xf]
    %v4042 = vld [vmem:[#allocation8 + $0x7c] sm:$0xf]
    %v4043 = vld [vmem:[%s9] sm:$0x1]
    %v4045 = vperm.slane %v4043, 0
    %v4079 = vunpack.c.l.b16 %v4011
    %v4080 = vunpack.c.l.b16 %v4012
    %v4081 = vunpack.c.l.b16 %v4013
    %v4082 = vunpack.c.l.b16 %v4014
    %v4083 = vunpack.c.l.b16 %v4015
    %v4084 = vunpack.c.l.b16 %v4016
    %v4085 = vunpack.c.l.b16 %v4017
    %v4086 = vunpack.c.l.b16 %v4018
    %v4087 = vunpack.c.l.b16 %v4019
    %v4088 = vunpack.c.l.b16 %v4020
    %v4089 = vunpack.c.l.b16 %v4021
    %v4090 = vunpack.c.l.b16 %v4022
    %v4091 = vunpack.c.l.b16 %v4023
    %v4092 = vunpack.c.l.b16 %v4024
    %v4093 = vunpack.c.l.b16 %v4025
    %v4094 = vunpack.c.l.b16 %v4026
    %v4095 = vunpack.c.l.b16 %v4027
    %v4096 = vunpack.c.l.b16 %v4028
    %v4097 = vunpack.c.l.b16 %v4029
    %v4098 = vunpack.c.l.b16 %v4030
    %v4099 = vunpack.c.l.b16 %v4031
    %v4100 = vunpack.c.l.b16 %v4032
    %v4101 = vunpack.c.l.b16 %v4033
    %v4102 = vunpack.c.l.b16 %v4034
    %v4103 = vunpack.c.l.b16 %v4035
    %v4104 = vunpack.c.l.b16 %v4036
    %v4105 = vunpack.c.l.b16 %v4037
    %v4106 = vunpack.c.l.b16 %v4038
    %v4107 = vunpack.c.l.b16 %v4039
    %v4108 = vunpack.c.l.b16 %v4040
    %v4109 = vunpack.c.l.b16 %v4041
    %v4110 = vunpack.c.l.b16 %v4042
    %v4111 = vpack.c.b16 %v4080, %v4079
    %v4112 = vpack.c.b16 %v4082, %v4081
    %v4113 = vpack.c.b16 %v4084, %v4083
    %v4114 = vpack.c.b16 %v4086, %v4085
    %v4115 = vpack.c.b16 %v4088, %v4087
    %v4116 = vpack.c.b16 %v4090, %v4089
    %v4117 = vpack.c.b16 %v4092, %v4091
    %v4118 = vpack.c.b16 %v4094, %v4093
    %v4119 = vpack.c.b16 %v4096, %v4095
    %v4120 = vpack.c.b16 %v4098, %v4097
    %v4121 = vpack.c.b16 %v4100, %v4099
    %v4122 = vpack.c.b16 %v4102, %v4101
    %v4123 = vpack.c.b16 %v4104, %v4103
    %v4124 = vpack.c.b16 %v4106, %v4105
    %v4125 = vpack.c.b16 %v4108, %v4107
    %v4126 = vpack.c.b16 %v4110, %v4109
    %4143 = vmatpush.bf16.msra.mxu0 %v4118
    %4144 = vmatpush.bf16.msra.mxu0 %v4117
    %4145 = vmatpush.bf16.msra.mxu0 %v4116
    %4146 = vmatpush.bf16.msra.mxu0 %v4115
    %4147 = vmatpush.bf16.msra.mxu0 %v4114
    %4148 = vmatpush.bf16.msra.mxu0 %v4113
    %4149 = vmatpush.bf16.msra.mxu0 %v4112
    %4150 = vmatpush.bf16.msra.mxu0 %v4111
    %4151 = vmatmul.bf16.gmra.mxu0 %v4003
    %v4152 = vpop.f32.mrf.mxu0
    %v4153 = vadd.f32 %v4045, %v4152
    %v4154 = vpop.f32.mrf.mxu0
    %v4155 = vadd.f32 %v4045, %v4154
    %4156 = vmatmul.bf16.gmra.mxu0 %v4005
    %v4157 = vpop.f32.mrf.mxu0
    %v4158 = vadd.f32 %v4045, %v4157
    %v4159 = vpop.f32.mrf.mxu0
    %v4160 = vadd.f32 %v4045, %v4159
    %4161 = vmatmul.bf16.gmra.mxu0 %v4007
    %v4162 = vpop.f32.mrf.mxu0
    %v4163 = vadd.f32 %v4045, %v4162
    %v4164 = vpop.f32.mrf.mxu0
    %v4165 = vadd.f32 %v4045, %v4164
    %4166 = vmatmul.bf16.gmra.mxu0 %v4009
    %v4167 = vpop.f32.mrf.mxu0
    %v4168 = vadd.f32 %v4045, %v4167
    %v4169 = vpop.f32.mrf.mxu0
    %v4170 = vadd.f32 %v4045, %v4169
    %4171 = vdwg.mxu0
    %4172 = vmatpush.bf16.msra.mxu0 %v4126
    %4173 = vmatpush.bf16.msra.mxu0 %v4125
    %4174 = vmatpush.bf16.msra.mxu0 %v4124
    %4175 = vmatpush.bf16.msra.mxu0 %v4123
    %4176 = vmatpush.bf16.msra.mxu0 %v4122
    %4177 = vmatpush.bf16.msra.mxu0 %v4121
    %4178 = vmatpush.bf16.msra.mxu0 %v4120
    %4179 = vmatpush.bf16.msra.mxu0 %v4119
    %4180 = vmatmul.bf16.gmra.mxu0 %v4004
    %v4181 = vpop.f32.mrf.mxu0
    %v4182 = vadd.f32 %v4153, %v4181
    %v4183 = vpop.f32.mrf.mxu0
    %v4184 = vadd.f32 %v4155, %v4183
    %4185 = vmatmul.bf16.gmra.mxu0 %v4006
    %v4186 = vpop.f32.mrf.mxu0
    %v4187 = vadd.f32 %v4158, %v4186
    %v4188 = vpop.f32.mrf.mxu0
    %v4189 = vadd.f32 %v4160, %v4188
    %4190 = vmatmul.bf16.gmra.mxu0 %v4008
    %v4191 = vpop.f32.mrf.mxu0
    %v4192 = vadd.f32 %v4163, %v4191
    %v4193 = vpop.f32.mrf.mxu0
    %v4194 = vadd.f32 %v4165, %v4193
    %4195 = vmatmul.bf16.gmra.mxu0 %v4010
    %v4196 = vpop.f32.mrf.mxu0
    %v4197 = vadd.f32 %v4168, %v4196
    %v4198 = vpop.f32.mrf.mxu0
    %v4199 = vadd.f32 %v4170, %v4198
    %4200 = vdwg.mxu0
    %4201 = vst [vmem:[%s10] sm:$0xff] %v4182
    %4202 = vst [vmem:[%s10 + $0x8] sm:$0xff] %v4184
    %4203 = vst [vmem:[%s10 + $0x10] sm:$0xff] %v4187
    %4204 = vst [vmem:[%s10 + $0x18] sm:$0xff] %v4189
    %4205 = vst [vmem:[%s10 + $0x20] sm:$0xff] %v4192
    %4206 = vst [vmem:[%s10 + $0x28] sm:$0xff] %v4194
    %4207 = vst [vmem:[%s10 + $0x30] sm:$0xff] %v4197
    %4208 = vst [vmem:[%s10 + $0x38] sm:$0xff] %v4199
    // Predicated region
    $region54: #{bilstm_forward.3} parent=1 // pred_check
      _
    $region55: #{bilstm_forward.3} parent=1 // pred_check_branch
      %4210 = sbr.rel (0) target = $region57
    $region56: #{bilstm_forward.3} parent=1 // pred_region
      _
    $region57: #{bilstm_forward.3} parent=1 // pred_fallthru
      _
    // Predicated region
    $region58: #{bilstm_forward.3} parent=1 // pred_check
      _
    $region59: #{bilstm_forward.3} parent=1 // pred_check_branch
      %4212 = sbr.rel (0) target = $region61
    $region60: #{bilstm_forward.3} parent=1 // pred_region
      _
    $region61: #{bilstm_forward.3} parent=1 // pred_fallthru
      _
    %4213 = vsyncpa [#allocation5], 1
    %4214 = vsyncpa [#allocation7], 1

</llo_original>
